<compile_context>
chip_gen: v7x
topology: tpu7x:2x2x1
jax: 0.10.0
libtpu: 0.0.40
codegen_flags: <defaults>
</compile_context>

<pallas_src>
import math
import functools

import jax
import jax.numpy as jnp
from jax.experimental import pallas as pl
from jax.experimental.pallas import tpu as pltpu

BN_EPS = 1e-5  # PyTorch BatchNorm2d default


def _round_up(x, m):
    return (x + m - 1) // m * m


# ----------------------------------------------------------------------------
# FC pass 1: partial BN statistics of y = x @ w.
#   x block: (blk, Din) any float dtype (cast to bf16 in-kernel),
#   w:       (Din, Dout) bf16,
#   part:    (1, 2, Dout) f32 = [[sum, sum_sq]] for this block.
# Padded rows (if any) are exact zeros, so they contribute nothing -- no mask.
# ----------------------------------------------------------------------------
def _fc_stats_kernel(x_ref, w_ref, part_ref):
    x = x_ref[...].astype(jnp.bfloat16)
    y = jnp.dot(x, w_ref[...], preferred_element_type=jnp.float32)
    s1 = jnp.sum(y, axis=0, keepdims=True)        # (1, Dout)
    s2 = jnp.sum(y * y, axis=0, keepdims=True)    # (1, Dout)
    part_ref[...] = jnp.concatenate([s1, s2], axis=0)[None]  # (1, 2, Dout)


# ----------------------------------------------------------------------------
# FC pass 2: recompute y = x @ w (cheaper than an f32 HBM round trip of y) and
# apply the precomputed BN affine (scale, shift) + ReLU.
# ----------------------------------------------------------------------------
def _fc_apply_kernel(x_ref, w_ref, scale_ref, shift_ref, o_ref):
    x = x_ref[...].astype(jnp.bfloat16)
    y = jnp.dot(x, w_ref[...], preferred_element_type=jnp.float32)
    z = y * scale_ref[...] + shift_ref[...]
    o_ref[...] = jnp.maximum(z, 0.0).astype(o_ref.dtype)


def fc_layer(x, w, b, gamma, beta, *, out_dtype=jnp.float32, out_scale=1.0,
             m_blk_target=8192):
    """x: [B, T, N, Din] -> [B, T, N, Dout]  (1x1 conv + BN(batch stats) + ReLU).

    The conv bias `b` is accepted (to mirror the PyTorch module) but unused:
    BN with batch statistics subtracts the batch mean, so a constant channel
    bias cancels exactly.  `out_scale` multiplies the (non-negative) ReLU
    output; it is folded into the affine (valid since out_scale > 0).
    """
    del b
    B, T, N, Din = x.shape
    Dout = w.shape[1]
    M = B * T * N

    xf = x.reshape(M, Din)
    if M <= m_blk_target:
        blk, M_pad, n_m = M, M, 1              # full-dim block: no padding needed
    else:
        blk = m_blk_target
        M_pad = _round_up(M, blk)
        n_m = M_pad // blk
        if M_pad != M:
            xf = jnp.pad(xf, ((0, M_pad - M), (0, 0)))

    wb = w.astype(jnp.bfloat16)

    # ---- pass 1: partial BN stats (no y written to HBM) ---------------------
    partial = pl.pallas_call(
        _fc_stats_kernel,
        out_shape=jax.ShapeDtypeStruct((n_m, 2, Dout), jnp.float32),
        grid=(n_m,),
        in_specs=[
            pl.BlockSpec((blk, Din), lambda i: (i, 0)),
            pl.BlockSpec((Din, Dout), lambda i: (0, 0)),
        ],
        out_specs=pl.BlockSpec((1, 2, Dout), lambda i: (i, 0, 0)),
        compiler_params=pltpu.CompilerParams(
            dimension_semantics=("parallel",)),
    )(xf, wb)

    # ---- tiny XLA epilogue: fold BN + optional scale into (scale, shift) ----
    stats = jnp.sum(partial, axis=0)                     # (2, Dout)
    mean = stats[0] / M
    var = jnp.maximum(stats[1] / M - mean * mean, 0.0)   # guard fp cancellation
    g_inv = gamma * jax.lax.rsqrt(var + BN_EPS)
    scale = (g_inv * out_scale).reshape(1, Dout).astype(jnp.float32)
    shift = ((beta - mean * g_inv) * out_scale).reshape(1, Dout).astype(jnp.float32)

    # ---- pass 2: recompute matmul + affine + ReLU ---------------------------
    out = pl.pallas_call(
        _fc_apply_kernel,
        out_shape=jax.ShapeDtypeStruct((M_pad, Dout), out_dtype),
        grid=(n_m,),
        in_specs=[
            pl.BlockSpec((blk, Din), lambda i: (i, 0)),
            pl.BlockSpec((Din, Dout), lambda i: (0, 0)),
            pl.BlockSpec((1, Dout), lambda i: (0, 0)),
            pl.BlockSpec((1, Dout), lambda i: (0, 0)),
        ],
        out_specs=pl.BlockSpec((blk, Dout), lambda i: (i, 0)),
        compiler_params=pltpu.CompilerParams(
            dimension_semantics=("parallel",)),
    )(xf, wb, scale, shift)

    if M_pad != M:
        out = out[:M]
    return out.reshape(B, T, N, Dout)


# ----------------------------------------------------------------------------
# Attention: one (batch, vertex-block) per grid step, all K heads in-kernel.
#   q: [1, P, n_blk, D], k/v: [1, H, n_blk, D]  ->  o: [1, P, n_blk, D]
# Inputs arrive in the module's native time-major layout; the cheap vertex-
# major swap is done in VMEM (leading-dim transposes), not via XLA in HBM.
# The 1/sqrt(d) scale is already folded into q (FC_q epilogue).
# ----------------------------------------------------------------------------
def _attn_kernel(q_ref, k_ref, v_ref, o_ref, *, K, d):
    q = jnp.swapaxes(q_ref[0], 0, 1)   # (n_blk, P, D)  bf16
    k = jnp.swapaxes(k_ref[0], 0, 1)   # (n_blk, H, D)  bf16
    v = jnp.swapaxes(v_ref[0], 0, 1)   # (n_blk, H, D)  bf16

    outs = []
    for h in range(K):  # K is small and static; unrolled
        lo = h * d
        qh = q[:, :, lo:lo + d]   # (n_blk, P, d)
        kh = k[:, :, lo:lo + d]   # (n_blk, H, d)
        vh = v[:, :, lo:lo + d]   # (n_blk, H, d)

        s = jnp.einsum("npd,ntd->npt", qh, kh,
                       preferred_element_type=jnp.float32)  # (n_blk, P, H)
        s = s - jnp.max(s, axis=-1, keepdims=True)
        p = jnp.exp(s)
        p = p * pl.reciprocal(jnp.sum(p, axis=-1, keepdims=True), approx=True)

        outs.append(jnp.einsum("npt,ntd->npd", p.astype(vh.dtype), vh,
                               preferred_element_type=jnp.float32))

    # Single lane-dense store over the full feature dim D = K*d, already in
    # the module's [P, N, D] order (no HBM transpose afterwards).
    o = jnp.concatenate(outs, axis=-1).astype(o_ref.dtype)  # (n_blk, P, D)
    o_ref[0] = jnp.swapaxes(o, 0, 1)                         # (P, n_blk, D)


def multihead_attention(q, k, v, *, K, d, n_blk_target=512):
    """q: [B, P, N, D], k/v: [B, H, N, D] -> [B, P, N, D] (bf16).

    Blocks directly over the vertex axis N of the native layouts; no XLA
    transposes on input or output.
    """
    B, P, N, D = q.shape
    H = k.shape[1]

    if N <= n_blk_target:
        n_blk, N_pad = N, N                 # full-dim block: no padding
    else:
        n_blk = n_blk_target                # multiple of 8
        N_pad = _round_up(N, n_blk)
        if N_pad != N:
            pad = ((0, 0), (0, 0), (0, N_pad - N), (0, 0))
            q = jnp.pad(q, pad)
            k = jnp.pad(k, pad)
            v = jnp.pad(v, pad)

    out = pl.pallas_call(
        functools.partial(_attn_kernel, K=K, d=d),
        out_shape=jax.ShapeDtypeStruct((B, P, N_pad, D), jnp.bfloat16),
        grid=(B, N_pad // n_blk),
        in_specs=[
            pl.BlockSpec((1, P, n_blk, D), lambda b, n: (b, 0, n, 0)),
            pl.BlockSpec((1, H, n_blk, D), lambda b, n: (b, 0, n, 0)),
            pl.BlockSpec((1, H, n_blk, D), lambda b, n: (b, 0, n, 0)),
        ],
        out_specs=pl.BlockSpec((1, P, n_blk, D), lambda b, n: (b, 0, n, 0)),
        compiler_params=pltpu.CompilerParams(
            dimension_semantics=("parallel", "parallel")),
    )(q, k, v)

    if N_pad != N:
        out = out[:, :, :N]
    return out


# ----------------------------------------------------------------------------
# Full transformAttention forward.
# ----------------------------------------------------------------------------
def transform_attention(X, STE_his, STE_pred, params, K, d):
    B, Hn, N, D = X.shape            # Hn = num_his
    P = STE_pred.shape[1]            # num_pred
    assert D == K * d

    scale = 1.0 / math.sqrt(d)
    # FC_q / FC_k / FC_v; 1/sqrt(d) folded into the query epilogue.
    q = fc_layer(STE_pred, *params["q"], out_dtype=jnp.bfloat16,
                 out_scale=scale)                               # [B, P, N, D]
    k = fc_layer(STE_his, *params["k"], out_dtype=jnp.bfloat16)  # [B, Hn, N, D]
    v = fc_layer(X, *params["v"], out_dtype=jnp.bfloat16)        # [B, Hn, N, D]

    # Attention directly on the native layouts; output already [B, P, N, D].
    att = multihead_attention(q, k, v, K=K, d=d)                 # bf16

    # Final FC is position-wise with BN over all positions.
    out = fc_layer(att, *params["o"], out_dtype=jnp.float32)     # [B, P, N, D]
    return out


# ----------------------------------------------------------------------------
# Deterministic parameter init (Xavier-uniform 1x1-conv weights, zero bias,
# BN affine gamma=1 / beta=0), mirroring conv2d_.__init__.
# ----------------------------------------------------------------------------
def init_params(key, D):
    params = {}
    names = ["q", "k", "v", "o"]
    keys = jax.random.split(key, len(names))
    bound = math.sqrt(6.0 / (D + D))  # xavier_uniform, fan_in = fan_out = D
    for name, kk in zip(names, keys):
        w = jax.random.uniform(kk, (D, D), jnp.float32, minval=-bound, maxval=bound)
        b = jnp.zeros((D,), jnp.float32)        # no-op under batch-stat BN
        gamma = jnp.ones((D,), jnp.float32)
        beta = jnp.zeros((D,), jnp.float32)
        params[name] = (w, b, gamma, beta)
    return params


if __name__ == "__main__":
    # X:        [B, num_his,  N, D]
    # STE_his:  [B, num_his,  N, D]
    # STE_pred: [B, num_pred, N, D]
    B, num_his, num_pred, N = 2, 8, 4, 16
    K, d = 4, 8
    D = K * d

    root = jax.random.PRNGKey(0)
    kx, kh, kp, kw = jax.random.split(root, 4)
    X = jax.random.normal(kx, (B, num_his, N, D), jnp.float32)
    STE_his = jax.random.normal(kh, (B, num_his, N, D), jnp.float32)
    STE_pred = jax.random.normal(kp, (B, num_pred, N, D), jnp.float32)

    params = init_params(kw, D)

    fwd = jax.jit(functools.partial(transform_attention, K=K, d=d))
    out = fwd(X, STE_his, STE_pred, params)
    jax.block_until_ready(out)

    assert out.shape == (B, num_pred, N, D), out.shape
    assert bool(jnp.all(jnp.isfinite(out)))
    print("KERNEL_OK")
</pallas_src>

<mosaic_0001>
module attributes {stable_mosaic.version = 11 : i64} {
  func.func @_fc_stats_kernel(%arg0: i32, %arg1: memref<256x32xf32, #tpu.memory_space<vmem>>, %arg2: memref<32x32xbf16, #tpu.memory_space<vmem>>, %arg3: memref<1x2x32xf32, #tpu.memory_space<vmem>>) attributes {dimension_semantics = [#tpu.dimension_semantics<parallel>], iteration_bounds = array<i64: 1>, scalar_prefetch = 0 : i64, scratch_operands = 0 : i64, tpu.core_type = #tpu.core_type<tc>, window_params = [{transform_indices = @transform_0, window_bounds = array<i64: 256, 32>}, {pipeline_mode = #tpu.pipeline_mode<synchronous>, transform_indices = @transform_1, window_bounds = array<i64: 32, 32>}, {transform_indices = @transform_2, window_bounds = array<i64: 1, 2, 32>}]} {
    %c0 = arith.constant 0 : index
    %c0_0 = arith.constant 0 : index
    %0 = vector.load %arg1[%c0, %c0_0] : memref<256x32xf32, #tpu.memory_space<vmem>>, vector<256x32xf32>
    %1 = arith.truncf %0 : vector<256x32xf32> to vector<256x32xbf16>
    %c0_1 = arith.constant 0 : index
    %c0_2 = arith.constant 0 : index
    %2 = vector.load %arg2[%c0_1, %c0_2] : memref<32x32xbf16, #tpu.memory_space<vmem>>, vector<32x32xbf16>
    %cst = arith.constant dense<0.000000e+00> : vector<256x32xf32>
    %3 = tpu.matmul %1, %2, %cst {dimension_numbers = #tpu.dot_dimension_numbers<[1], [0], [0], [1], [0, 0, 1, 1], [], []>} : vector<256x32xbf16>, vector<32x32xbf16>, vector<256x32xf32> -> vector<256x32xf32>
    %cst_3 = arith.constant dense<0.000000e+00> : vector<32xf32>
    %4 = vector.multi_reduction <add>, %3, %cst_3 [0] : vector<256x32xf32> to vector<32xf32>
    %5 = vector.shape_cast %4 : vector<32xf32> to vector<1x32xf32>
    %6 = arith.mulf %3, %3 : vector<256x32xf32>
    %cst_4 = arith.constant dense<0.000000e+00> : vector<32xf32>
    %7 = vector.multi_reduction <add>, %6, %cst_4 [0] : vector<256x32xf32> to vector<32xf32>
    %8 = vector.shape_cast %7 : vector<32xf32> to vector<1x32xf32>
    %9 = tpu.concatenate %5, %8 in 0 : vector<1x32xf32>, vector<1x32xf32> -> vector<2x32xf32>
    %10 = vector.shape_cast %9 : vector<2x32xf32> to vector<1x2x32xf32>
    %c0_5 = arith.constant 0 : index
    %c0_6 = arith.constant 0 : index
    %c0_7 = arith.constant 0 : index
    %11 = vector.load %arg3[%c0_5, %c0_6, %c0_7] : memref<1x2x32xf32, #tpu.memory_space<vmem>>, vector<1x2x32xf32>
    tpu.vector_store %arg3[%c0_5, %c0_6, %c0_7], %10 {strides = array<i32>} : memref<1x2x32xf32, #tpu.memory_space<vmem>>, vector<1x2x32xf32>,
    return
  }
  func.func @transform_0(%arg0: i32) -> (i32, i32) {
    %c0_i32 = arith.constant 0 : i32
    %c0_i32_0 = arith.constant 0 : i32
    return %arg0, %c0_i32 : i32, i32
  }
  func.func @transform_1(%arg0: i32) -> (i32, i32) {
    %c0_i32 = arith.constant 0 : i32
    %c0_i32_0 = arith.constant 0 : i32
    %c0_i32_1 = arith.constant 0 : i32
    return %c0_i32, %c0_i32_0 : i32, i32
  }
  func.func @transform_2(%arg0: i32) -> (i32, i32, i32) {
    %c0_i32 = arith.constant 0 : i32
    %c0_i32_0 = arith.constant 0 : i32
    %c0_i32_1 = arith.constant 0 : i32
    return %arg0, %c0_i32, %c0_i32_0 : i32, i32, i32
  }
}

module attributes {stable_mosaic.version = 11 : i64} {
  func.func @_fc_apply_kernel(%arg0: i32, %arg1: memref<256x32xf32, #tpu.memory_space<vmem>>, %arg2: memref<32x32xbf16, #tpu.memory_space<vmem>>, %arg3: memref<1x32xf32, #tpu.memory_space<vmem>>, %arg4: memref<1x32xf32, #tpu.memory_space<vmem>>, %arg5: memref<256x32xbf16, #tpu.memory_space<vmem>>) attributes {dimension_semantics = [#tpu.dimension_semantics<parallel>], iteration_bounds = array<i64: 1>, scalar_prefetch = 0 : i64, scratch_operands = 0 : i64, tpu.core_type = #tpu.core_type<tc>, window_params = [{transform_indices = @transform_0, window_bounds = array<i64: 256, 32>}, {pipeline_mode = #tpu.pipeline_mode<synchronous>, transform_indices = @transform_1, window_bounds = array<i64: 32, 32>}, {pipeline_mode = #tpu.pipeline_mode<synchronous>, transform_indices = @transform_2, window_bounds = array<i64: 1, 32>}, {pipeline_mode = #tpu.pipeline_mode<synchronous>, transform_indices = @transform_3, window_bounds = array<i64: 1, 32>}, {transform_indices = @transform_4, window_bounds = array<i64: 256, 32>}]} {
    %c0 = arith.constant 0 : index
    %c0_0 = arith.constant 0 : index
    %0 = vector.load %arg1[%c0, %c0_0] : memref<256x32xf32, #tpu.memory_space<vmem>>, vector<256x32xf32>
    %1 = arith.truncf %0 : vector<256x32xf32> to vector<256x32xbf16>
    %c0_1 = arith.constant 0 : index
    %c0_2 = arith.constant 0 : index
    %2 = vector.load %arg2[%c0_1, %c0_2] : memref<32x32xbf16, #tpu.memory_space<vmem>>, vector<32x32xbf16>
    %cst = arith.constant dense<0.000000e+00> : vector<256x32xf32>
    %3 = tpu.matmul %1, %2, %cst {dimension_numbers = #tpu.dot_dimension_numbers<[1], [0], [0], [1], [0, 0, 1, 1], [], []>} : vector<256x32xbf16>, vector<32x32xbf16>, vector<256x32xf32> -> vector<256x32xf32>
    %c0_3 = arith.constant 0 : index
    %c0_4 = arith.constant 0 : index
    %4 = vector.load %arg3[%c0_3, %c0_4] : memref<1x32xf32, #tpu.memory_space<vmem>>, vector<1x32xf32>
    %5 = vector.broadcast %4 : vector<1x32xf32> to vector<256x32xf32>
    %6 = arith.mulf %3, %5 : vector<256x32xf32>
    %c0_5 = arith.constant 0 : index
    %c0_6 = arith.constant 0 : index
    %7 = vector.load %arg4[%c0_5, %c0_6] : memref<1x32xf32, #tpu.memory_space<vmem>>, vector<1x32xf32>
    %8 = vector.broadcast %7 : vector<1x32xf32> to vector<256x32xf32>
    %9 = arith.addf %6, %8 : vector<256x32xf32>
    %cst_7 = arith.constant 0.000000e+00 : f32
    %10 = vector.broadcast %cst_7 : f32 to vector<256x32xf32>
    %11 = arith.maximumf %9, %10 : vector<256x32xf32>
    %12 = arith.truncf %11 : vector<256x32xf32> to vector<256x32xbf16>
    %c0_8 = arith.constant 0 : index
    %c0_9 = arith.constant 0 : index
    %13 = vector.load %arg5[%c0_8, %c0_9] : memref<256x32xbf16, #tpu.memory_space<vmem>>, vector<256x32xbf16>
    tpu.vector_store %arg5[%c0_8, %c0_9], %12 {strides = array<i32>} : memref<256x32xbf16, #tpu.memory_space<vmem>>, vector<256x32xbf16>,
    return
  }
  func.func @transform_0(%arg0: i32) -> (i32, i32) {
    %c0_i32 = arith.constant 0 : i32
    %c0_i32_0 = arith.constant 0 : i32
    return %arg0, %c0_i32 : i32, i32
  }
  func.func @transform_1(%arg0: i32) -> (i32, i32) {
    %c0_i32 = arith.constant 0 : i32
    %c0_i32_0 = arith.constant 0 : i32
    %c0_i32_1 = arith.constant 0 : i32
    return %c0_i32, %c0_i32_0 : i32, i32
  }
  func.func @transform_2(%arg0: i32) -> (i32, i32) {
    %c0_i32 = arith.constant 0 : i32
    %c0_i32_0 = arith.constant 0 : i32
    %c0_i32_1 = arith.constant 0 : i32
    return %c0_i32, %c0_i32_0 : i32, i32
  }
  func.func @transform_3(%arg0: i32) -> (i32, i32) {
    %c0_i32 = arith.constant 0 : i32
    %c0_i32_0 = arith.constant 0 : i32
    %c0_i32_1 = arith.constant 0 : i32
    return %c0_i32, %c0_i32_0 : i32, i32
  }
  func.func @transform_4(%arg0: i32) -> (i32, i32) {
    %c0_i32 = arith.constant 0 : i32
    %c0_i32_0 = arith.constant 0 : i32
    return %arg0, %c0_i32 : i32, i32
  }
}

module attributes {stable_mosaic.version = 11 : i64} {
  func.func @_fc_stats_kernel(%arg0: i32, %arg1: memref<256x32xf32, #tpu.memory_space<vmem>>, %arg2: memref<32x32xbf16, #tpu.memory_space<vmem>>, %arg3: memref<1x2x32xf32, #tpu.memory_space<vmem>>) attributes {dimension_semantics = [#tpu.dimension_semantics<parallel>], iteration_bounds = array<i64: 1>, scalar_prefetch = 0 : i64, scratch_operands = 0 : i64, tpu.core_type = #tpu.core_type<tc>, window_params = [{transform_indices = @transform_0, window_bounds = array<i64: 256, 32>}, {pipeline_mode = #tpu.pipeline_mode<synchronous>, transform_indices = @transform_1, window_bounds = array<i64: 32, 32>}, {transform_indices = @transform_2, window_bounds = array<i64: 1, 2, 32>}]} {
    %c0 = arith.constant 0 : index
    %c0_0 = arith.constant 0 : index
    %0 = vector.load %arg1[%c0, %c0_0] : memref<256x32xf32, #tpu.memory_space<vmem>>, vector<256x32xf32>
    %1 = arith.truncf %0 : vector<256x32xf32> to vector<256x32xbf16>
    %c0_1 = arith.constant 0 : index
    %c0_2 = arith.constant 0 : index
    %2 = vector.load %arg2[%c0_1, %c0_2] : memref<32x32xbf16, #tpu.memory_space<vmem>>, vector<32x32xbf16>
    %cst = arith.constant dense<0.000000e+00> : vector<256x32xf32>
    %3 = tpu.matmul %1, %2, %cst {dimension_numbers = #tpu.dot_dimension_numbers<[1], [0], [0], [1], [0, 0, 1, 1], [], []>} : vector<256x32xbf16>, vector<32x32xbf16>, vector<256x32xf32> -> vector<256x32xf32>
    %cst_3 = arith.constant dense<0.000000e+00> : vector<32xf32>
    %4 = vector.multi_reduction <add>, %3, %cst_3 [0] : vector<256x32xf32> to vector<32xf32>
    %5 = vector.shape_cast %4 : vector<32xf32> to vector<1x32xf32>
    %6 = arith.mulf %3, %3 : vector<256x32xf32>
    %cst_4 = arith.constant dense<0.000000e+00> : vector<32xf32>
    %7 = vector.multi_reduction <add>, %6, %cst_4 [0] : vector<256x32xf32> to vector<32xf32>
    %8 = vector.shape_cast %7 : vector<32xf32> to vector<1x32xf32>
    %9 = tpu.concatenate %5, %8 in 0 : vector<1x32xf32>, vector<1x32xf32> -> vector<2x32xf32>
    %10 = vector.shape_cast %9 : vector<2x32xf32> to vector<1x2x32xf32>
    %c0_5 = arith.constant 0 : index
    %c0_6 = arith.constant 0 : index
    %c0_7 = arith.constant 0 : index
    %11 = vector.load %arg3[%c0_5, %c0_6, %c0_7] : memref<1x2x32xf32, #tpu.memory_space<vmem>>, vector<1x2x32xf32>
    tpu.vector_store %arg3[%c0_5, %c0_6, %c0_7], %10 {strides = array<i32>} : memref<1x2x32xf32, #tpu.memory_space<vmem>>, vector<1x2x32xf32>,
    return
  }
  func.func @transform_0(%arg0: i32) -> (i32, i32) {
    %c0_i32 = arith.constant 0 : i32
    %c0_i32_0 = arith.constant 0 : i32
    return %arg0, %c0_i32 : i32, i32
  }
  func.func @transform_1(%arg0: i32) -> (i32, i32) {
    %c0_i32 = arith.constant 0 : i32
    %c0_i32_0 = arith.constant 0 : i32
    %c0_i32_1 = arith.constant 0 : i32
    return %c0_i32, %c0_i32_0 : i32, i32
  }
  func.func @transform_2(%arg0: i32) -> (i32, i32, i32) {
    %c0_i32 = arith.constant 0 : i32
    %c0_i32_0 = arith.constant 0 : i32
    %c0_i32_1 = arith.constant 0 : i32
    return %arg0, %c0_i32, %c0_i32_0 : i32, i32, i32
  }
}

module attributes {stable_mosaic.version = 11 : i64} {
  func.func @_fc_stats_kernel(%arg0: i32, %arg1: memref<128x32xf32, #tpu.memory_space<vmem>>, %arg2: memref<32x32xbf16, #tpu.memory_space<vmem>>, %arg3: memref<1x2x32xf32, #tpu.memory_space<vmem>>) attributes {dimension_semantics = [#tpu.dimension_semantics<parallel>], iteration_bounds = array<i64: 1>, scalar_prefetch = 0 : i64, scratch_operands = 0 : i64, tpu.core_type = #tpu.core_type<tc>, window_params = [{transform_indices = @transform_0, window_bounds = array<i64: 128, 32>}, {pipeline_mode = #tpu.pipeline_mode<synchronous>, transform_indices = @transform_1, window_bounds = array<i64: 32, 32>}, {transform_indices = @transform_2, window_bounds = array<i64: 1, 2, 32>}]} {
    %c0 = arith.constant 0 : index
    %c0_0 = arith.constant 0 : index
    %0 = vector.load %arg1[%c0, %c0_0] : memref<128x32xf32, #tpu.memory_space<vmem>>, vector<128x32xf32>
    %1 = arith.truncf %0 : vector<128x32xf32> to vector<128x32xbf16>
    %c0_1 = arith.constant 0 : index
    %c0_2 = arith.constant 0 : index
    %2 = vector.load %arg2[%c0_1, %c0_2] : memref<32x32xbf16, #tpu.memory_space<vmem>>, vector<32x32xbf16>
    %cst = arith.constant dense<0.000000e+00> : vector<128x32xf32>
    %3 = tpu.matmul %1, %2, %cst {dimension_numbers = #tpu.dot_dimension_numbers<[1], [0], [0], [1], [0, 0, 1, 1], [], []>} : vector<128x32xbf16>, vector<32x32xbf16>, vector<128x32xf32> -> vector<128x32xf32>
    %cst_3 = arith.constant dense<0.000000e+00> : vector<32xf32>
    %4 = vector.multi_reduction <add>, %3, %cst_3 [0] : vector<128x32xf32> to vector<32xf32>
    %5 = vector.shape_cast %4 : vector<32xf32> to vector<1x32xf32>
    %6 = arith.mulf %3, %3 : vector<128x32xf32>
    %cst_4 = arith.constant dense<0.000000e+00> : vector<32xf32>
    %7 = vector.multi_reduction <add>, %6, %cst_4 [0] : vector<128x32xf32> to vector<32xf32>
    %8 = vector.shape_cast %7 : vector<32xf32> to vector<1x32xf32>
    %9 = tpu.concatenate %5, %8 in 0 : vector<1x32xf32>, vector<1x32xf32> -> vector<2x32xf32>
    %10 = vector.shape_cast %9 : vector<2x32xf32> to vector<1x2x32xf32>
    %c0_5 = arith.constant 0 : index
    %c0_6 = arith.constant 0 : index
    %c0_7 = arith.constant 0 : index
    %11 = vector.load %arg3[%c0_5, %c0_6, %c0_7] : memref<1x2x32xf32, #tpu.memory_space<vmem>>, vector<1x2x32xf32>
    tpu.vector_store %arg3[%c0_5, %c0_6, %c0_7], %10 {strides = array<i32>} : memref<1x2x32xf32, #tpu.memory_space<vmem>>, vector<1x2x32xf32>,
    return
  }
  func.func @transform_0(%arg0: i32) -> (i32, i32) {
    %c0_i32 = arith.constant 0 : i32
    %c0_i32_0 = arith.constant 0 : i32
    return %arg0, %c0_i32 : i32, i32
  }
  func.func @transform_1(%arg0: i32) -> (i32, i32) {
    %c0_i32 = arith.constant 0 : i32
    %c0_i32_0 = arith.constant 0 : i32
    %c0_i32_1 = arith.constant 0 : i32
    return %c0_i32, %c0_i32_0 : i32, i32
  }
  func.func @transform_2(%arg0: i32) -> (i32, i32, i32) {
    %c0_i32 = arith.constant 0 : i32
    %c0_i32_0 = arith.constant 0 : i32
    %c0_i32_1 = arith.constant 0 : i32
    return %arg0, %c0_i32, %c0_i32_0 : i32, i32, i32
  }
}

module attributes {stable_mosaic.version = 11 : i64} {
  func.func @_fc_apply_kernel(%arg0: i32, %arg1: memref<128x32xf32, #tpu.memory_space<vmem>>, %arg2: memref<32x32xbf16, #tpu.memory_space<vmem>>, %arg3: memref<1x32xf32, #tpu.memory_space<vmem>>, %arg4: memref<1x32xf32, #tpu.memory_space<vmem>>, %arg5: memref<128x32xbf16, #tpu.memory_space<vmem>>) attributes {dimension_semantics = [#tpu.dimension_semantics<parallel>], iteration_bounds = array<i64: 1>, scalar_prefetch = 0 : i64, scratch_operands = 0 : i64, tpu.core_type = #tpu.core_type<tc>, window_params = [{transform_indices = @transform_0, window_bounds = array<i64: 128, 32>}, {pipeline_mode = #tpu.pipeline_mode<synchronous>, transform_indices = @transform_1, window_bounds = array<i64: 32, 32>}, {pipeline_mode = #tpu.pipeline_mode<synchronous>, transform_indices = @transform_2, window_bounds = array<i64: 1, 32>}, {pipeline_mode = #tpu.pipeline_mode<synchronous>, transform_indices = @transform_3, window_bounds = array<i64: 1, 32>}, {transform_indices = @transform_4, window_bounds = array<i64: 128, 32>}]} {
    %c0 = arith.constant 0 : index
    %c0_0 = arith.constant 0 : index
    %0 = vector.load %arg1[%c0, %c0_0] : memref<128x32xf32, #tpu.memory_space<vmem>>, vector<128x32xf32>
    %1 = arith.truncf %0 : vector<128x32xf32> to vector<128x32xbf16>
    %c0_1 = arith.constant 0 : index
    %c0_2 = arith.constant 0 : index
    %2 = vector.load %arg2[%c0_1, %c0_2] : memref<32x32xbf16, #tpu.memory_space<vmem>>, vector<32x32xbf16>
    %cst = arith.constant dense<0.000000e+00> : vector<128x32xf32>
    %3 = tpu.matmul %1, %2, %cst {dimension_numbers = #tpu.dot_dimension_numbers<[1], [0], [0], [1], [0, 0, 1, 1], [], []>} : vector<128x32xbf16>, vector<32x32xbf16>, vector<128x32xf32> -> vector<128x32xf32>
    %c0_3 = arith.constant 0 : index
    %c0_4 = arith.constant 0 : index
    %4 = vector.load %arg3[%c0_3, %c0_4] : memref<1x32xf32, #tpu.memory_space<vmem>>, vector<1x32xf32>
    %5 = vector.broadcast %4 : vector<1x32xf32> to vector<128x32xf32>
    %6 = arith.mulf %3, %5 : vector<128x32xf32>
    %c0_5 = arith.constant 0 : index
    %c0_6 = arith.constant 0 : index
    %7 = vector.load %arg4[%c0_5, %c0_6] : memref<1x32xf32, #tpu.memory_space<vmem>>, vector<1x32xf32>
    %8 = vector.broadcast %7 : vector<1x32xf32> to vector<128x32xf32>
    %9 = arith.addf %6, %8 : vector<128x32xf32>
    %cst_7 = arith.constant 0.000000e+00 : f32
    %10 = vector.broadcast %cst_7 : f32 to vector<128x32xf32>
    %11 = arith.maximumf %9, %10 : vector<128x32xf32>
    %12 = arith.truncf %11 : vector<128x32xf32> to vector<128x32xbf16>
    %c0_8 = arith.constant 0 : index
    %c0_9 = arith.constant 0 : index
    %13 = vector.load %arg5[%c0_8, %c0_9] : memref<128x32xbf16, #tpu.memory_space<vmem>>, vector<128x32xbf16>
    tpu.vector_store %arg5[%c0_8, %c0_9], %12 {strides = array<i32>} : memref<128x32xbf16, #tpu.memory_space<vmem>>, vector<128x32xbf16>,
    return
  }
  func.func @transform_0(%arg0: i32) -> (i32, i32) {
    %c0_i32 = arith.constant 0 : i32
    %c0_i32_0 = arith.constant 0 : i32
    return %arg0, %c0_i32 : i32, i32
  }
  func.func @transform_1(%arg0: i32) -> (i32, i32) {
    %c0_i32 = arith.constant 0 : i32
    %c0_i32_0 = arith.constant 0 : i32
    %c0_i32_1 = arith.constant 0 : i32
    return %c0_i32, %c0_i32_0 : i32, i32
  }
  func.func @transform_2(%arg0: i32) -> (i32, i32) {
    %c0_i32 = arith.constant 0 : i32
    %c0_i32_0 = arith.constant 0 : i32
    %c0_i32_1 = arith.constant 0 : i32
    return %c0_i32, %c0_i32_0 : i32, i32
  }
  func.func @transform_3(%arg0: i32) -> (i32, i32) {
    %c0_i32 = arith.constant 0 : i32
    %c0_i32_0 = arith.constant 0 : i32
    %c0_i32_1 = arith.constant 0 : i32
    return %c0_i32, %c0_i32_0 : i32, i32
  }
  func.func @transform_4(%arg0: i32) -> (i32, i32) {
    %c0_i32 = arith.constant 0 : i32
    %c0_i32_0 = arith.constant 0 : i32
    return %arg0, %c0_i32 : i32, i32
  }
}

module attributes {stable_mosaic.version = 11 : i64} {
  func.func @_attn_kernel(%arg0: i32, %arg1: i32, %arg2: memref<1x4x16x32xbf16, #tpu.memory_space<vmem>>, %arg3: memref<1x8x16x32xbf16, #tpu.memory_space<vmem>>, %arg4: memref<1x8x16x32xbf16, #tpu.memory_space<vmem>>, %arg5: memref<1x4x16x32xbf16, #tpu.memory_space<vmem>>) attributes {dimension_semantics = [#tpu.dimension_semantics<parallel>, #tpu.dimension_semantics<parallel>], iteration_bounds = array<i64: 2, 1>, scalar_prefetch = 0 : i64, scratch_operands = 0 : i64, tpu.core_type = #tpu.core_type<tc>, window_params = [{transform_indices = @transform_0, window_bounds = array<i64: 1, 4, 16, 32>}, {transform_indices = @transform_1, window_bounds = array<i64: 1, 8, 16, 32>}, {transform_indices = @transform_2, window_bounds = array<i64: 1, 8, 16, 32>}, {transform_indices = @transform_3, window_bounds = array<i64: 1, 4, 16, 32>}]} {
    %c0 = arith.constant 0 : index
    %c0_0 = arith.constant 0 : index
    %c0_1 = arith.constant 0 : index
    %c0_2 = arith.constant 0 : index
    %0 = vector.load %arg2[%c0, %c0_0, %c0_1, %c0_2] : memref<1x4x16x32xbf16, #tpu.memory_space<vmem>>, vector<1x4x16x32xbf16>
    %1 = vector.shape_cast %0 : vector<1x4x16x32xbf16> to vector<4x16x32xbf16>
    %2 = tpu.transpose %1, [1, 0, 2] : vector<4x16x32xbf16> -> vector<16x4x32xbf16>
    %c0_3 = arith.constant 0 : index
    %c0_4 = arith.constant 0 : index
    %c0_5 = arith.constant 0 : index
    %c0_6 = arith.constant 0 : index
    %3 = vector.load %arg3[%c0_3, %c0_4, %c0_5, %c0_6] : memref<1x8x16x32xbf16, #tpu.memory_space<vmem>>, vector<1x8x16x32xbf16>
    %4 = vector.shape_cast %3 : vector<1x8x16x32xbf16> to vector<8x16x32xbf16>
    %5 = tpu.transpose %4, [1, 0, 2] : vector<8x16x32xbf16> -> vector<16x8x32xbf16>
    %c0_7 = arith.constant 0 : index
    %c0_8 = arith.constant 0 : index
    %c0_9 = arith.constant 0 : index
    %c0_10 = arith.constant 0 : index
    %6 = vector.load %arg4[%c0_7, %c0_8, %c0_9, %c0_10] : memref<1x8x16x32xbf16, #tpu.memory_space<vmem>>, vector<1x8x16x32xbf16>
    %7 = vector.shape_cast %6 : vector<1x8x16x32xbf16> to vector<8x16x32xbf16>
    %8 = tpu.transpose %7, [1, 0, 2] : vector<8x16x32xbf16> -> vector<16x8x32xbf16>
    %9 = vector.extract_strided_slice %2 {offsets = [0, 0, 0], sizes = [16, 4, 8], strides = [1, 1, 1]} : vector<16x4x32xbf16> to vector<16x4x8xbf16>
    %10 = vector.extract_strided_slice %5 {offsets = [0, 0, 0], sizes = [16, 8, 8], strides = [1, 1, 1]} : vector<16x8x32xbf16> to vector<16x8x8xbf16>
    %11 = vector.extract_strided_slice %8 {offsets = [0, 0, 0], sizes = [16, 8, 8], strides = [1, 1, 1]} : vector<16x8x32xbf16> to vector<16x8x8xbf16>
    "tpu.trace_start"() <{level = 10 : i32, message = "npd,ntd->npt"}> : () -> ()
    %cst = arith.constant dense<0.000000e+00> : vector<16x4x8xf32>
    %12 = tpu.matmul %9, %10, %cst {dimension_numbers = #tpu.dot_dimension_numbers<[2], [2], [1], [1], [0, 0, 0, 1, 1, 1], [0], [0]>} : vector<16x4x8xbf16>, vector<16x8x8xbf16>, vector<16x4x8xf32> -> vector<16x4x8xf32>
    "tpu.trace_stop"() : () -> ()
    %cst_11 = arith.constant dense<0xFF800000> : vector<16x4xf32>
    %13 = vector.multi_reduction <maximumf>, %12, %cst_11 [2] : vector<16x4x8xf32> to vector<16x4xf32>
    %14 = vector.shape_cast %13 : vector<16x4xf32> to vector<16x4x1xf32>
    %15 = vector.broadcast %14 : vector<16x4x1xf32> to vector<16x4x8xf32>
    %16 = arith.subf %12, %15 : vector<16x4x8xf32>
    %17 = math.exp %16 : vector<16x4x8xf32>
    %cst_12 = arith.constant dense<0.000000e+00> : vector<16x4xf32>
    %18 = vector.multi_reduction <add>, %17, %cst_12 [2] : vector<16x4x8xf32> to vector<16x4xf32>
    %19 = vector.shape_cast %18 : vector<16x4xf32> to vector<16x4x1xf32>
    %20 = tpu.reciprocal %19 {approx = true} : vector<16x4x1xf32> -> vector<16x4x1xf32>
    %21 = vector.broadcast %20 : vector<16x4x1xf32> to vector<16x4x8xf32>
    %22 = arith.mulf %17, %21 : vector<16x4x8xf32>
    %23 = arith.truncf %22 : vector<16x4x8xf32> to vector<16x4x8xbf16>
    "tpu.trace_start"() <{level = 10 : i32, message = "npt,ntd->npd"}> : () -> ()
    %cst_13 = arith.constant dense<0.000000e+00> : vector<16x4x8xf32>
    %24 = tpu.matmul %23, %11, %cst_13 {dimension_numbers = #tpu.dot_dimension_numbers<[2], [1], [1], [2], [0, 0, 0, 1, 1, 2], [0], [0]>} : vector<16x4x8xbf16>, vector<16x8x8xbf16>, vector<16x4x8xf32> -> vector<16x4x8xf32>
    "tpu.trace_stop"() : () -> ()
    %25 = vector.extract_strided_slice %2 {offsets = [0, 0, 8], sizes = [16, 4, 8], strides = [1, 1, 1]} : vector<16x4x32xbf16> to vector<16x4x8xbf16>
    %26 = vector.extract_strided_slice %5 {offsets = [0, 0, 8], sizes = [16, 8, 8], strides = [1, 1, 1]} : vector<16x8x32xbf16> to vector<16x8x8xbf16>
    %27 = vector.extract_strided_slice %8 {offsets = [0, 0, 8], sizes = [16, 8, 8], strides = [1, 1, 1]} : vector<16x8x32xbf16> to vector<16x8x8xbf16>
    "tpu.trace_start"() <{level = 10 : i32, message = "npd,ntd->npt"}> : () -> ()
    %cst_14 = arith.constant dense<0.000000e+00> : vector<16x4x8xf32>
    %28 = tpu.matmul %25, %26, %cst_14 {dimension_numbers = #tpu.dot_dimension_numbers<[2], [2], [1], [1], [0, 0, 0, 1, 1, 1], [0], [0]>} : vector<16x4x8xbf16>, vector<16x8x8xbf16>, vector<16x4x8xf32> -> vector<16x4x8xf32>
    "tpu.trace_stop"() : () -> ()
    %cst_15 = arith.constant dense<0xFF800000> : vector<16x4xf32>
    %29 = vector.multi_reduction <maximumf>, %28, %cst_15 [2] : vector<16x4x8xf32> to vector<16x4xf32>
    %30 = vector.shape_cast %29 : vector<16x4xf32> to vector<16x4x1xf32>
    %31 = vector.broadcast %30 : vector<16x4x1xf32> to vector<16x4x8xf32>
    %32 = arith.subf %28, %31 : vector<16x4x8xf32>
    %33 = math.exp %32 : vector<16x4x8xf32>
    %cst_16 = arith.constant dense<0.000000e+00> : vector<16x4xf32>
    %34 = vector.multi_reduction <add>, %33, %cst_16 [2] : vector<16x4x8xf32> to vector<16x4xf32>
    %35 = vector.shape_cast %34 : vector<16x4xf32> to vector<16x4x1xf32>
    %36 = tpu.reciprocal %35 {approx = true} : vector<16x4x1xf32> -> vector<16x4x1xf32>
    %37 = vector.broadcast %36 : vector<16x4x1xf32> to vector<16x4x8xf32>
    %38 = arith.mulf %33, %37 : vector<16x4x8xf32>
    %39 = arith.truncf %38 : vector<16x4x8xf32> to vector<16x4x8xbf16>
    "tpu.trace_start"() <{level = 10 : i32, message = "npt,ntd->npd"}> : () -> ()
    %cst_17 = arith.constant dense<0.000000e+00> : vector<16x4x8xf32>
    %40 = tpu.matmul %39, %27, %cst_17 {dimension_numbers = #tpu.dot_dimension_numbers<[2], [1], [1], [2], [0, 0, 0, 1, 1, 2], [0], [0]>} : vector<16x4x8xbf16>, vector<16x8x8xbf16>, vector<16x4x8xf32> -> vector<16x4x8xf32>
    "tpu.trace_stop"() : () -> ()
    %41 = vector.extract_strided_slice %2 {offsets = [0, 0, 16], sizes = [16, 4, 8], strides = [1, 1, 1]} : vector<16x4x32xbf16> to vector<16x4x8xbf16>
    %42 = vector.extract_strided_slice %5 {offsets = [0, 0, 16], sizes = [16, 8, 8], strides = [1, 1, 1]} : vector<16x8x32xbf16> to vector<16x8x8xbf16>
    %43 = vector.extract_strided_slice %8 {offsets = [0, 0, 16], sizes = [16, 8, 8], strides = [1, 1, 1]} : vector<16x8x32xbf16> to vector<16x8x8xbf16>
    "tpu.trace_start"() <{level = 10 : i32, message = "npd,ntd->npt"}> : () -> ()
    %cst_18 = arith.constant dense<0.000000e+00> : vector<16x4x8xf32>
    %44 = tpu.matmul %41, %42, %cst_18 {dimension_numbers = #tpu.dot_dimension_numbers<[2], [2], [1], [1], [0, 0, 0, 1, 1, 1], [0], [0]>} : vector<16x4x8xbf16>, vector<16x8x8xbf16>, vector<16x4x8xf32> -> vector<16x4x8xf32>
    "tpu.trace_stop"() : () -> ()
    %cst_19 = arith.constant dense<0xFF800000> : vector<16x4xf32>
    %45 = vector.multi_reduction <maximumf>, %44, %cst_19 [2] : vector<16x4x8xf32> to vector<16x4xf32>
    %46 = vector.shape_cast %45 : vector<16x4xf32> to vector<16x4x1xf32>
    %47 = vector.broadcast %46 : vector<16x4x1xf32> to vector<16x4x8xf32>
    %48 = arith.subf %44, %47 : vector<16x4x8xf32>
    %49 = math.exp %48 : vector<16x4x8xf32>
    %cst_20 = arith.constant dense<0.000000e+00> : vector<16x4xf32>
    %50 = vector.multi_reduction <add>, %49, %cst_20 [2] : vector<16x4x8xf32> to vector<16x4xf32>
    %51 = vector.shape_cast %50 : vector<16x4xf32> to vector<16x4x1xf32>
    %52 = tpu.reciprocal %51 {approx = true} : vector<16x4x1xf32> -> vector<16x4x1xf32>
    %53 = vector.broadcast %52 : vector<16x4x1xf32> to vector<16x4x8xf32>
    %54 = arith.mulf %49, %53 : vector<16x4x8xf32>
    %55 = arith.truncf %54 : vector<16x4x8xf32> to vector<16x4x8xbf16>
    "tpu.trace_start"() <{level = 10 : i32, message = "npt,ntd->npd"}> : () -> ()
    %cst_21 = arith.constant dense<0.000000e+00> : vector<16x4x8xf32>
    %56 = tpu.matmul %55, %43, %cst_21 {dimension_numbers = #tpu.dot_dimension_numbers<[2], [1], [1], [2], [0, 0, 0, 1, 1, 2], [0], [0]>} : vector<16x4x8xbf16>, vector<16x8x8xbf16>, vector<16x4x8xf32> -> vector<16x4x8xf32>
    "tpu.trace_stop"() : () -> ()
    %57 = vector.extract_strided_slice %2 {offsets = [0, 0, 24], sizes = [16, 4, 8], strides = [1, 1, 1]} : vector<16x4x32xbf16> to vector<16x4x8xbf16>
    %58 = vector.extract_strided_slice %5 {offsets = [0, 0, 24], sizes = [16, 8, 8], strides = [1, 1, 1]} : vector<16x8x32xbf16> to vector<16x8x8xbf16>
    %59 = vector.extract_strided_slice %8 {offsets = [0, 0, 24], sizes = [16, 8, 8], strides = [1, 1, 1]} : vector<16x8x32xbf16> to vector<16x8x8xbf16>
    "tpu.trace_start"() <{level = 10 : i32, message = "npd,ntd->npt"}> : () -> ()
    %cst_22 = arith.constant dense<0.000000e+00> : vector<16x4x8xf32>
    %60 = tpu.matmul %57, %58, %cst_22 {dimension_numbers = #tpu.dot_dimension_numbers<[2], [2], [1], [1], [0, 0, 0, 1, 1, 1], [0], [0]>} : vector<16x4x8xbf16>, vector<16x8x8xbf16>, vector<16x4x8xf32> -> vector<16x4x8xf32>
    "tpu.trace_stop"() : () -> ()
    %cst_23 = arith.constant dense<0xFF800000> : vector<16x4xf32>
    %61 = vector.multi_reduction <maximumf>, %60, %cst_23 [2] : vector<16x4x8xf32> to vector<16x4xf32>
    %62 = vector.shape_cast %61 : vector<16x4xf32> to vector<16x4x1xf32>
    %63 = vector.broadcast %62 : vector<16x4x1xf32> to vector<16x4x8xf32>
    %64 = arith.subf %60, %63 : vector<16x4x8xf32>
    %65 = math.exp %64 : vector<16x4x8xf32>
    %cst_24 = arith.constant dense<0.000000e+00> : vector<16x4xf32>
    %66 = vector.multi_reduction <add>, %65, %cst_24 [2] : vector<16x4x8xf32> to vector<16x4xf32>
    %67 = vector.shape_cast %66 : vector<16x4xf32> to vector<16x4x1xf32>
    %68 = tpu.reciprocal %67 {approx = true} : vector<16x4x1xf32> -> vector<16x4x1xf32>
    %69 = vector.broadcast %68 : vector<16x4x1xf32> to vector<16x4x8xf32>
    %70 = arith.mulf %65, %69 : vector<16x4x8xf32>
    %71 = arith.truncf %70 : vector<16x4x8xf32> to vector<16x4x8xbf16>
    "tpu.trace_start"() <{level = 10 : i32, message = "npt,ntd->npd"}> : () -> ()
    %cst_25 = arith.constant dense<0.000000e+00> : vector<16x4x8xf32>
    %72 = tpu.matmul %71, %59, %cst_25 {dimension_numbers = #tpu.dot_dimension_numbers<[2], [1], [1], [2], [0, 0, 0, 1, 1, 2], [0], [0]>} : vector<16x4x8xbf16>, vector<16x8x8xbf16>, vector<16x4x8xf32> -> vector<16x4x8xf32>
    "tpu.trace_stop"() : () -> ()
    %73 = tpu.concatenate %24, %40, %56, %72 in 2 : vector<16x4x8xf32>, vector<16x4x8xf32>, vector<16x4x8xf32>, vector<16x4x8xf32> -> vector<16x4x32xf32>
    %74 = arith.truncf %73 : vector<16x4x32xf32> to vector<16x4x32xbf16>
    %75 = tpu.transpose %74, [1, 0, 2] : vector<16x4x32xbf16> -> vector<4x16x32xbf16>
    %c0_26 = arith.constant 0 : index
    %c0_27 = arith.constant 0 : index
    %c0_28 = arith.constant 0 : index
    %c0_29 = arith.constant 0 : index
    %76 = vector.load %arg5[%c0_26, %c0_27, %c0_28, %c0_29] : memref<1x4x16x32xbf16, #tpu.memory_space<vmem>>, vector<1x4x16x32xbf16>
    %77 = vector.shape_cast %76 : vector<1x4x16x32xbf16> to vector<4x16x32xbf16>
    %78 = vector.shape_cast %75 : vector<4x16x32xbf16> to vector<1x4x16x32xbf16>
    tpu.vector_store %arg5[%c0_26, %c0_27, %c0_28, %c0_29], %78 {strides = array<i32>} : memref<1x4x16x32xbf16, #tpu.memory_space<vmem>>, vector<1x4x16x32xbf16>,
    return
  }
  func.func @transform_0(%arg0: i32, %arg1: i32) -> (i32, i32, i32, i32) {
    %c0_i32 = arith.constant 0 : i32
    %c0_i32_0 = arith.constant 0 : i32
    %c0_i32_1 = arith.constant 0 : i32
    return %arg0, %c0_i32, %arg1, %c0_i32_0 : i32, i32, i32, i32
  }
  func.func @transform_1(%arg0: i32, %arg1: i32) -> (i32, i32, i32, i32) {
    %c0_i32 = arith.constant 0 : i32
    %c0_i32_0 = arith.constant 0 : i32
    %c0_i32_1 = arith.constant 0 : i32
    return %arg0, %c0_i32, %arg1, %c0_i32_0 : i32, i32, i32, i32
  }
  func.func @transform_2(%arg0: i32, %arg1: i32) -> (i32, i32, i32, i32) {
    %c0_i32 = arith.constant 0 : i32
    %c0_i32_0 = arith.constant 0 : i32
    %c0_i32_1 = arith.constant 0 : i32
    return %arg0, %c0_i32, %arg1, %c0_i32_0 : i32, i32, i32, i32
  }
  func.func @transform_3(%arg0: i32, %arg1: i32) -> (i32, i32, i32, i32) {
    %c0_i32 = arith.constant 0 : i32
    %c0_i32_0 = arith.constant 0 : i32
    %c0_i32_1 = arith.constant 0 : i32
    return %arg0, %c0_i32, %arg1, %c0_i32_0 : i32, i32, i32, i32
  }
}

module attributes {stable_mosaic.version = 11 : i64} {
  func.func @_fc_stats_kernel(%arg0: i32, %arg1: memref<128x32xbf16, #tpu.memory_space<vmem>>, %arg2: memref<32x32xbf16, #tpu.memory_space<vmem>>, %arg3: memref<1x2x32xf32, #tpu.memory_space<vmem>>) attributes {dimension_semantics = [#tpu.dimension_semantics<parallel>], iteration_bounds = array<i64: 1>, scalar_prefetch = 0 : i64, scratch_operands = 0 : i64, tpu.core_type = #tpu.core_type<tc>, window_params = [{transform_indices = @transform_0, window_bounds = array<i64: 128, 32>}, {pipeline_mode = #tpu.pipeline_mode<synchronous>, transform_indices = @transform_1, window_bounds = array<i64: 32, 32>}, {transform_indices = @transform_2, window_bounds = array<i64: 1, 2, 32>}]} {
    %c0 = arith.constant 0 : index
    %c0_0 = arith.constant 0 : index
    %0 = vector.load %arg1[%c0, %c0_0] : memref<128x32xbf16, #tpu.memory_space<vmem>>, vector<128x32xbf16>
    %c0_1 = arith.constant 0 : index
    %c0_2 = arith.constant 0 : index
    %1 = vector.load %arg2[%c0_1, %c0_2] : memref<32x32xbf16, #tpu.memory_space<vmem>>, vector<32x32xbf16>
    %cst = arith.constant dense<0.000000e+00> : vector<128x32xf32>
    %2 = tpu.matmul %0, %1, %cst {dimension_numbers = #tpu.dot_dimension_numbers<[1], [0], [0], [1], [0, 0, 1, 1], [], []>} : vector<128x32xbf16>, vector<32x32xbf16>, vector<128x32xf32> -> vector<128x32xf32>
    %cst_3 = arith.constant dense<0.000000e+00> : vector<32xf32>
    %3 = vector.multi_reduction <add>, %2, %cst_3 [0] : vector<128x32xf32> to vector<32xf32>
    %4 = vector.shape_cast %3 : vector<32xf32> to vector<1x32xf32>
    %5 = arith.mulf %2, %2 : vector<128x32xf32>
    %cst_4 = arith.constant dense<0.000000e+00> : vector<32xf32>
    %6 = vector.multi_reduction <add>, %5, %cst_4 [0] : vector<128x32xf32> to vector<32xf32>
    %7 = vector.shape_cast %6 : vector<32xf32> to vector<1x32xf32>
    %8 = tpu.concatenate %4, %7 in 0 : vector<1x32xf32>, vector<1x32xf32> -> vector<2x32xf32>
    %9 = vector.shape_cast %8 : vector<2x32xf32> to vector<1x2x32xf32>
    %c0_5 = arith.constant 0 : index
    %c0_6 = arith.constant 0 : index
    %c0_7 = arith.constant 0 : index
    %10 = vector.load %arg3[%c0_5, %c0_6, %c0_7] : memref<1x2x32xf32, #tpu.memory_space<vmem>>, vector<1x2x32xf32>
    tpu.vector_store %arg3[%c0_5, %c0_6, %c0_7], %9 {strides = array<i32>} : memref<1x2x32xf32, #tpu.memory_space<vmem>>, vector<1x2x32xf32>,
    return
  }
  func.func @transform_0(%arg0: i32) -> (i32, i32) {
    %c0_i32 = arith.constant 0 : i32
    %c0_i32_0 = arith.constant 0 : i32
    return %arg0, %c0_i32 : i32, i32
  }
  func.func @transform_1(%arg0: i32) -> (i32, i32) {
    %c0_i32 = arith.constant 0 : i32
    %c0_i32_0 = arith.constant 0 : i32
    %c0_i32_1 = arith.constant 0 : i32
    return %c0_i32, %c0_i32_0 : i32, i32
  }
  func.func @transform_2(%arg0: i32) -> (i32, i32, i32) {
    %c0_i32 = arith.constant 0 : i32
    %c0_i32_0 = arith.constant 0 : i32
    %c0_i32_1 = arith.constant 0 : i32
    return %arg0, %c0_i32, %c0_i32_0 : i32, i32, i32
  }
}

module attributes {stable_mosaic.version = 11 : i64} {
  func.func @_fc_apply_kernel(%arg0: i32, %arg1: memref<128x32xbf16, #tpu.memory_space<vmem>>, %arg2: memref<32x32xbf16, #tpu.memory_space<vmem>>, %arg3: memref<1x32xf32, #tpu.memory_space<vmem>>, %arg4: memref<1x32xf32, #tpu.memory_space<vmem>>, %arg5: memref<128x32xf32, #tpu.memory_space<vmem>>) attributes {dimension_semantics = [#tpu.dimension_semantics<parallel>], iteration_bounds = array<i64: 1>, scalar_prefetch = 0 : i64, scratch_operands = 0 : i64, tpu.core_type = #tpu.core_type<tc>, window_params = [{transform_indices = @transform_0, window_bounds = array<i64: 128, 32>}, {pipeline_mode = #tpu.pipeline_mode<synchronous>, transform_indices = @transform_1, window_bounds = array<i64: 32, 32>}, {pipeline_mode = #tpu.pipeline_mode<synchronous>, transform_indices = @transform_2, window_bounds = array<i64: 1, 32>}, {pipeline_mode = #tpu.pipeline_mode<synchronous>, transform_indices = @transform_3, window_bounds = array<i64: 1, 32>}, {transform_indices = @transform_4, window_bounds = array<i64: 128, 32>}]} {
    %c0 = arith.constant 0 : index
    %c0_0 = arith.constant 0 : index
    %0 = vector.load %arg1[%c0, %c0_0] : memref<128x32xbf16, #tpu.memory_space<vmem>>, vector<128x32xbf16>
    %c0_1 = arith.constant 0 : index
    %c0_2 = arith.constant 0 : index
    %1 = vector.load %arg2[%c0_1, %c0_2] : memref<32x32xbf16, #tpu.memory_space<vmem>>, vector<32x32xbf16>
    %cst = arith.constant dense<0.000000e+00> : vector<128x32xf32>
    %2 = tpu.matmul %0, %1, %cst {dimension_numbers = #tpu.dot_dimension_numbers<[1], [0], [0], [1], [0, 0, 1, 1], [], []>} : vector<128x32xbf16>, vector<32x32xbf16>, vector<128x32xf32> -> vector<128x32xf32>
    %c0_3 = arith.constant 0 : index
    %c0_4 = arith.constant 0 : index
    %3 = vector.load %arg3[%c0_3, %c0_4] : memref<1x32xf32, #tpu.memory_space<vmem>>, vector<1x32xf32>
    %4 = vector.broadcast %3 : vector<1x32xf32> to vector<128x32xf32>
    %5 = arith.mulf %2, %4 : vector<128x32xf32>
    %c0_5 = arith.constant 0 : index
    %c0_6 = arith.constant 0 : index
    %6 = vector.load %arg4[%c0_5, %c0_6] : memref<1x32xf32, #tpu.memory_space<vmem>>, vector<1x32xf32>
    %7 = vector.broadcast %6 : vector<1x32xf32> to vector<128x32xf32>
    %8 = arith.addf %5, %7 : vector<128x32xf32>
    %cst_7 = arith.constant 0.000000e+00 : f32
    %9 = vector.broadcast %cst_7 : f32 to vector<128x32xf32>
    %10 = arith.maximumf %8, %9 : vector<128x32xf32>
    %c0_8 = arith.constant 0 : index
    %c0_9 = arith.constant 0 : index
    %11 = vector.load %arg5[%c0_8, %c0_9] : memref<128x32xf32, #tpu.memory_space<vmem>>, vector<128x32xf32>
    tpu.vector_store %arg5[%c0_8, %c0_9], %10 {strides = array<i32>} : memref<128x32xf32, #tpu.memory_space<vmem>>, vector<128x32xf32>,
    return
  }
  func.func @transform_0(%arg0: i32) -> (i32, i32) {
    %c0_i32 = arith.constant 0 : i32
    %c0_i32_0 = arith.constant 0 : i32
    return %arg0, %c0_i32 : i32, i32
  }
  func.func @transform_1(%arg0: i32) -> (i32, i32) {
    %c0_i32 = arith.constant 0 : i32
    %c0_i32_0 = arith.constant 0 : i32
    %c0_i32_1 = arith.constant 0 : i32
    return %c0_i32, %c0_i32_0 : i32, i32
  }
  func.func @transform_2(%arg0: i32) -> (i32, i32) {
    %c0_i32 = arith.constant 0 : i32
    %c0_i32_0 = arith.constant 0 : i32
    %c0_i32_1 = arith.constant 0 : i32
    return %c0_i32, %c0_i32_0 : i32, i32
  }
  func.func @transform_3(%arg0: i32) -> (i32, i32) {
    %c0_i32 = arith.constant 0 : i32
    %c0_i32_0 = arith.constant 0 : i32
    %c0_i32_1 = arith.constant 0 : i32
    return %c0_i32, %c0_i32_0 : i32, i32
  }
  func.func @transform_4(%arg0: i32) -> (i32, i32) {
    %c0_i32 = arith.constant 0 : i32
    %c0_i32_0 = arith.constant 0 : i32
    return %arg0, %c0_i32 : i32, i32
  }
}

</mosaic_0001>

<llo_original>
// kernel: transform_attention.12
$region0: #{transform_attention.12}
  #allocation0 [shape = 'u32[]', space=smem, size = 0x4, offset = 0x4, fixed_abs, tag = 'smem constant byte address 0x4 - core index']
  #allocation1 [shape = 'u32[144,128]{1,0:T(1,128)}', space=vmem, size = 0x12000, scoped, tag = 'internal scratch']
  %s0 = inlined_call_operand.vmem [shape: f32[256,32], index: 0, kind: input, shape index: {}]
  %s1 = inlined_call_operand.vmem [shape: bf16[32,32], index: 1, kind: input, shape index: {}]
  %s2 = inlined_call_operand.vmem [shape: f32[1,32], index: 2, kind: input, shape index: {}]
  %s3 = inlined_call_operand.vmem [shape: f32[1,32], index: 3, kind: input, shape index: {}]
  %s4 = inlined_call_operand.vmem [shape: bf16[256,32], index: 4, kind: output, shape index: {}]
  %s5 = sld [smem:[#allocation0]]
  $region26: #{transform_attention.12} parent=0
    _
  %s7 = ssub.s32 1, %s5
  %s8 = scalar_select 0, %s7, %s5
  // Predicated region
  $region2: #{transform_attention.12} parent=0 // pred_check
    _
  $region3: #{transform_attention.12} parent=0 // pred_check_branch
    %10 = sbr.rel (0) target = $region5
  $region4: #{transform_attention.12} parent=0 // pred_region
    _
  $region5: #{transform_attention.12} parent=0 // pred_fallthru
    _
  // Predicated region
  $region6: #{transform_attention.12} parent=0 // pred_check
    _
  $region7: #{transform_attention.12} parent=0 // pred_check_branch
    %12 = sbr.rel (0) target = $region9
  $region8: #{transform_attention.12} parent=0 // pred_region
    _
  $region9: #{transform_attention.12} parent=0 // pred_fallthru
    _
  // Predicated region
  $region10: #{transform_attention.12} parent=0 // pred_check
    _
  $region11: #{transform_attention.12} parent=0 // pred_check_branch
    %14 = sbr.rel (0) target = $region13
  $region12: #{transform_attention.12} parent=0 // pred_region
    _
  $region13: #{transform_attention.12} parent=0 // pred_fallthru
    _
  // Predicated region
  $region14: #{transform_attention.12} parent=0 // pred_check
    _
  $region15: #{transform_attention.12} parent=0 // pred_check_branch
    %16 = sbr.rel (0) target = $region17
  $region16: #{transform_attention.12} parent=0 // pred_region
    _
  $region17: #{transform_attention.12} parent=0 // pred_fallthru
    _
  %v18 = vld [vmem:[%s0] sm:$0xff]
  %v19 = vld [vmem:[%s0 + $0x8] sm:$0xff]
  %v20 = vld [vmem:[%s0 + $0x10] sm:$0xff]
  %v21 = vld [vmem:[%s0 + $0x18] sm:$0xff]
  %v22 = vld [vmem:[%s0 + $0x20] sm:$0xff]
  %v23 = vld [vmem:[%s0 + $0x28] sm:$0xff]
  %v24 = vld [vmem:[%s0 + $0x30] sm:$0xff]
  %v25 = vld [vmem:[%s0 + $0x38] sm:$0xff]
  %v26 = vld [vmem:[%s0 + $0x40] sm:$0xff]
  %v27 = vld [vmem:[%s0 + $0x48] sm:$0xff]
  %v28 = vld [vmem:[%s0 + $0x50] sm:$0xff]
  %v29 = vld [vmem:[%s0 + $0x58] sm:$0xff]
  %v30 = vld [vmem:[%s0 + $0x60] sm:$0xff]
  %v31 = vld [vmem:[%s0 + $0x68] sm:$0xff]
  %v32 = vld [vmem:[%s0 + $0x70] sm:$0xff]
  %v33 = vld [vmem:[%s0 + $0x78] sm:$0xff]
  %v34 = vld [vmem:[%s0 + $0x80] sm:$0xff]
  %v35 = vld [vmem:[%s0 + $0x88] sm:$0xff]
  %v36 = vld [vmem:[%s0 + $0x90] sm:$0xff]
  %v37 = vld [vmem:[%s0 + $0x98] sm:$0xff]
  %v38 = vld [vmem:[%s0 + $0xa0] sm:$0xff]
  %v39 = vld [vmem:[%s0 + $0xa8] sm:$0xff]
  %v40 = vld [vmem:[%s0 + $0xb0] sm:$0xff]
  %v41 = vld [vmem:[%s0 + $0xb8] sm:$0xff]
  %v42 = vld [vmem:[%s0 + $0xc0] sm:$0xff]
  %v43 = vld [vmem:[%s0 + $0xc8] sm:$0xff]
  %v44 = vld [vmem:[%s0 + $0xd0] sm:$0xff]
  %v45 = vld [vmem:[%s0 + $0xd8] sm:$0xff]
  %v46 = vld [vmem:[%s0 + $0xe0] sm:$0xff]
  %v47 = vld [vmem:[%s0 + $0xe8] sm:$0xff]
  %v48 = vld [vmem:[%s0 + $0xf0] sm:$0xff]
  %v49 = vld [vmem:[%s0 + $0xf8] sm:$0xff]
  %v50 = vpack.c.bf16 %v19, %v18
  %v51 = vpack.c.bf16 %v21, %v20
  %v52 = vpack.c.bf16 %v23, %v22
  %v53 = vpack.c.bf16 %v25, %v24
  %v54 = vpack.c.bf16 %v27, %v26
  %v55 = vpack.c.bf16 %v29, %v28
  %v56 = vpack.c.bf16 %v31, %v30
  %v57 = vpack.c.bf16 %v33, %v32
  %v58 = vpack.c.bf16 %v35, %v34
  %v59 = vpack.c.bf16 %v37, %v36
  %v60 = vpack.c.bf16 %v39, %v38
  %v61 = vpack.c.bf16 %v41, %v40
  %v62 = vpack.c.bf16 %v43, %v42
  %v63 = vpack.c.bf16 %v45, %v44
  %v64 = vpack.c.bf16 %v47, %v46
  %v65 = vpack.c.bf16 %v49, %v48
  %v66 = vld [vmem:[%s1] sm:$0xf]
  %v67 = vld [vmem:[%s1 + $0x4] sm:$0xf]
  %v68 = vld [vmem:[%s1 + $0x8] sm:$0xf]
  %v69 = vld [vmem:[%s1 + $0xc] sm:$0xf]
  %v74 = vunpack.c.l.b16 %v66
  %v75 = vunpack.c.l.b16 %v67
  %v76 = vunpack.c.l.b16 %v68
  %v77 = vunpack.c.l.b16 %v69
  %v78 = vpack.c.b16 %v75, %v74
  %v79 = vpack.c.b16 %v77, %v76
  %vm82 = vcmask 261120
  %v84 = vsel %vm82, %v50, 0
  %v87 = vsel %vm82, %v51, 0
  %v90 = vsel %vm82, %v52, 0
  %v93 = vsel %vm82, %v53, 0
  %v96 = vsel %vm82, %v54, 0
  %v99 = vsel %vm82, %v55, 0
  %v102 = vsel %vm82, %v56, 0
  %v105 = vsel %vm82, %v57, 0
  %v108 = vsel %vm82, %v58, 0
  %v111 = vsel %vm82, %v59, 0
  %v114 = vsel %vm82, %v60, 0
  %v117 = vsel %vm82, %v61, 0
  %v120 = vsel %vm82, %v62, 0
  %v123 = vsel %vm82, %v63, 0
  %v126 = vsel %vm82, %v64, 0
  %v129 = vsel %vm82, %v65, 0
  %131 = vmatprep.subr.bf16.mxu0 0
  %132 = vmatpush1.bf16.msra.mxu0 %v78
  %133 = vmatprep.subr.bf16.mxu0 0
  %134 = vmatpush1.bf16.msra.mxu0 %v79
  %135 = vmatprep.subr.bf16.mxu0 0
  %136 = vmatpush1.bf16.msra.mxu0 0
  %137 = vmatprep.subr.bf16.mxu0 0
  %138 = vmatpush1.bf16.msra.mxu0 0
  %139 = vmatprep.subr.bf16.mxu0 0
  %140 = vmatpush1.bf16.msra.mxu0 0
  %141 = vmatprep.subr.bf16.mxu0 0
  %142 = vmatpush1.bf16.msra.mxu0 0
  %143 = vmatprep.subr.bf16.mxu0 0
  %144 = vmatpush1.bf16.msra.mxu0 0
  %145 = vmatprep.subr.bf16.mxu0 0
  %146 = vmatpush1.bf16.msra.mxu0 0
  %147 = vmatprep.subr.bf16.mxu0 0
  %148 = vmatpush1.bf16.msra.mxu0 0
  %149 = vmatprep.subr.bf16.mxu0 0
  %150 = vmatpush1.bf16.msra.mxu0 0
  %151 = vmatprep.subr.bf16.mxu0 0
  %152 = vmatpush1.bf16.msra.mxu0 0
  %153 = vmatprep.subr.bf16.mxu0 0
  %154 = vmatpush1.bf16.msra.mxu0 0
  %155 = vmatprep.subr.bf16.mxu0 0
  %156 = vmatpush1.bf16.msra.mxu0 0
  %157 = vmatprep.subr.bf16.mxu0 0
  %158 = vmatpush1.bf16.msra.mxu0 0
  %159 = vmatprep.subr.bf16.mxu0 0
  %160 = vmatpush1.bf16.msra.mxu0 0
  %161 = vmatprep.subr.bf16.mxu0 0
  %162 = vmatpush1.bf16.msra.mxu0 0
  %163 = vmatprep.mubr.bf16.mxu0 0
  %164 = vmatmul.mubr.bf16.gmra.mrb[0].mxu0 %v84
  %v165 = vpop.f32.mrb[0].mxu0
  %v166 = vadd.f32 0.0, %v165
  %v167 = vpop.f32.mrb[0].mxu0
  %v168 = vpop.f32.mrb[0].mxu0
  %v169 = vadd.f32 0.0, %v168
  %v170 = vpop.f32.mrb[0].mxu0
  %171 = vmatprep.mubr.bf16.mxu0 0
  %172 = vmatmul.mubr.bf16.gmra.mrb[0].mxu0 %v87
  %v173 = vpop.f32.mrb[0].mxu0
  %v174 = vadd.f32 0.0, %v173
  %v175 = vpop.f32.mrb[0].mxu0
  %v176 = vpop.f32.mrb[0].mxu0
  %v177 = vadd.f32 0.0, %v176
  %v178 = vpop.f32.mrb[0].mxu0
  %179 = vmatprep.mubr.bf16.mxu0 0
  %180 = vmatmul.mubr.bf16.gmra.mrb[0].mxu0 %v90
  %v181 = vpop.f32.mrb[0].mxu0
  %v182 = vadd.f32 0.0, %v181
  %v183 = vpop.f32.mrb[0].mxu0
  %v184 = vpop.f32.mrb[0].mxu0
  %v185 = vadd.f32 0.0, %v184
  %v186 = vpop.f32.mrb[0].mxu0
  %187 = vmatprep.mubr.bf16.mxu0 0
  %188 = vmatmul.mubr.bf16.gmra.mrb[0].mxu0 %v93
  %v189 = vpop.f32.mrb[0].mxu0
  %v190 = vadd.f32 0.0, %v189
  %v191 = vpop.f32.mrb[0].mxu0
  %v192 = vpop.f32.mrb[0].mxu0
  %v193 = vadd.f32 0.0, %v192
  %v194 = vpop.f32.mrb[0].mxu0
  %195 = vmatprep.mubr.bf16.mxu0 0
  %196 = vmatmul.mubr.bf16.gmra.mrb[0].mxu0 %v96
  %v197 = vpop.f32.mrb[0].mxu0
  %v198 = vadd.f32 0.0, %v197
  %v199 = vpop.f32.mrb[0].mxu0
  %v200 = vpop.f32.mrb[0].mxu0
  %v201 = vadd.f32 0.0, %v200
  %v202 = vpop.f32.mrb[0].mxu0
  %203 = vmatprep.mubr.bf16.mxu0 0
  %204 = vmatmul.mubr.bf16.gmra.mrb[0].mxu0 %v99
  %v205 = vpop.f32.mrb[0].mxu0
  %v206 = vadd.f32 0.0, %v205
  %v207 = vpop.f32.mrb[0].mxu0
  %v208 = vpop.f32.mrb[0].mxu0
  %v209 = vadd.f32 0.0, %v208
  %v210 = vpop.f32.mrb[0].mxu0
  %211 = vmatprep.mubr.bf16.mxu0 0
  %212 = vmatmul.mubr.bf16.gmra.mrb[0].mxu0 %v102
  %v213 = vpop.f32.mrb[0].mxu0
  %v214 = vadd.f32 0.0, %v213
  %v215 = vpop.f32.mrb[0].mxu0
  %v216 = vpop.f32.mrb[0].mxu0
  %v217 = vadd.f32 0.0, %v216
  %v218 = vpop.f32.mrb[0].mxu0
  %219 = vmatprep.mubr.bf16.mxu0 0
  %220 = vmatmul.mubr.bf16.gmra.mrb[0].mxu0 %v105
  %v221 = vpop.f32.mrb[0].mxu0
  %v222 = vadd.f32 0.0, %v221
  %v223 = vpop.f32.mrb[0].mxu0
  %v224 = vpop.f32.mrb[0].mxu0
  %v225 = vadd.f32 0.0, %v224
  %v226 = vpop.f32.mrb[0].mxu0
  %227 = vmatprep.mubr.bf16.mxu0 0
  %228 = vmatmul.mubr.bf16.gmra.mrb[0].mxu0 %v108
  %v229 = vpop.f32.mrb[0].mxu0
  %v230 = vadd.f32 0.0, %v229
  %v231 = vpop.f32.mrb[0].mxu0
  %v232 = vpop.f32.mrb[0].mxu0
  %v233 = vadd.f32 0.0, %v232
  %v234 = vpop.f32.mrb[0].mxu0
  %235 = vmatprep.mubr.bf16.mxu0 0
  %236 = vmatmul.mubr.bf16.gmra.mrb[0].mxu0 %v111
  %v237 = vpop.f32.mrb[0].mxu0
  %v238 = vadd.f32 0.0, %v237
  %v239 = vpop.f32.mrb[0].mxu0
  %v240 = vpop.f32.mrb[0].mxu0
  %v241 = vadd.f32 0.0, %v240
  %v242 = vpop.f32.mrb[0].mxu0
  %243 = vmatprep.mubr.bf16.mxu0 0
  %244 = vmatmul.mubr.bf16.gmra.mrb[0].mxu0 %v114
  %v245 = vpop.f32.mrb[0].mxu0
  %v246 = vadd.f32 0.0, %v245
  %v247 = vpop.f32.mrb[0].mxu0
  %v248 = vpop.f32.mrb[0].mxu0
  %v249 = vadd.f32 0.0, %v248
  %v250 = vpop.f32.mrb[0].mxu0
  %251 = vmatprep.mubr.bf16.mxu0 0
  %252 = vmatmul.mubr.bf16.gmra.mrb[0].mxu0 %v117
  %v253 = vpop.f32.mrb[0].mxu0
  %v254 = vadd.f32 0.0, %v253
  %v255 = vpop.f32.mrb[0].mxu0
  %v256 = vpop.f32.mrb[0].mxu0
  %v257 = vadd.f32 0.0, %v256
  %v258 = vpop.f32.mrb[0].mxu0
  %259 = vmatprep.mubr.bf16.mxu0 0
  %260 = vmatmul.mubr.bf16.gmra.mrb[0].mxu0 %v120
  %v261 = vpop.f32.mrb[0].mxu0
  %v262 = vadd.f32 0.0, %v261
  %v263 = vpop.f32.mrb[0].mxu0
  %v264 = vpop.f32.mrb[0].mxu0
  %v265 = vadd.f32 0.0, %v264
  %v266 = vpop.f32.mrb[0].mxu0
  %267 = vmatprep.mubr.bf16.mxu0 0
  %268 = vmatmul.mubr.bf16.gmra.mrb[0].mxu0 %v123
  %v269 = vpop.f32.mrb[0].mxu0
  %v270 = vadd.f32 0.0, %v269
  %v271 = vpop.f32.mrb[0].mxu0
  %v272 = vpop.f32.mrb[0].mxu0
  %v273 = vadd.f32 0.0, %v272
  %v274 = vpop.f32.mrb[0].mxu0
  %275 = vmatprep.mubr.bf16.mxu0 0
  %276 = vmatmul.mubr.bf16.gmra.mrb[0].mxu0 %v126
  %v277 = vpop.f32.mrb[0].mxu0
  %v278 = vadd.f32 0.0, %v277
  %v279 = vpop.f32.mrb[0].mxu0
  %v280 = vpop.f32.mrb[0].mxu0
  %v281 = vadd.f32 0.0, %v280
  %v282 = vpop.f32.mrb[0].mxu0
  %283 = vmatprep.mubr.bf16.mxu0 0
  %284 = vmatmul.mubr.bf16.gmra.mrb[0].mxu0 %v129
  %v285 = vpop.f32.mrb[0].mxu0
  %v286 = vadd.f32 0.0, %v285
  %v287 = vpop.f32.mrb[0].mxu0
  %v288 = vpop.f32.mrb[0].mxu0
  %v289 = vadd.f32 0.0, %v288
  %v290 = vpop.f32.mrb[0].mxu0
  %291 = vdwg.mxu0
  %v292 = vld [vmem:[%s2] sm:$0x1]
  %v294 = vlaneseq
  %v295 = vshrl.u32 %v294, 7
  %v296 = vsub.s32 0, %v295
  %v297 = vrot.slane %v292, %v296
  %v299 = vmul.f32 %v166, %v297
  %v300 = vmul.f32 %v169, %v297
  %v301 = vmul.f32 %v174, %v297
  %v302 = vmul.f32 %v177, %v297
  %v303 = vmul.f32 %v182, %v297
  %v304 = vmul.f32 %v185, %v297
  %v305 = vmul.f32 %v190, %v297
  %v306 = vmul.f32 %v193, %v297
  %v307 = vmul.f32 %v198, %v297
  %v308 = vmul.f32 %v201, %v297
  %v309 = vmul.f32 %v206, %v297
  %v310 = vmul.f32 %v209, %v297
  %v311 = vmul.f32 %v214, %v297
  %v312 = vmul.f32 %v217, %v297
  %v313 = vmul.f32 %v222, %v297
  %v314 = vmul.f32 %v225, %v297
  %v315 = vmul.f32 %v230, %v297
  %v316 = vmul.f32 %v233, %v297
  %v317 = vmul.f32 %v238, %v297
  %v318 = vmul.f32 %v241, %v297
  %v319 = vmul.f32 %v246, %v297
  %v320 = vmul.f32 %v249, %v297
  %v321 = vmul.f32 %v254, %v297
  %v322 = vmul.f32 %v257, %v297
  %v323 = vmul.f32 %v262, %v297
  %v324 = vmul.f32 %v265, %v297
  %v325 = vmul.f32 %v270, %v297
  %v326 = vmul.f32 %v273, %v297
  %v327 = vmul.f32 %v278, %v297
  %v328 = vmul.f32 %v281, %v297
  %v329 = vmul.f32 %v286, %v297
  %v330 = vmul.f32 %v289, %v297
  %v331 = vld [vmem:[%s3] sm:$0x1]
  %v333 = vlaneseq
  %v334 = vshrl.u32 %v333, 7
  %v335 = vsub.s32 0, %v334
  %v336 = vrot.slane %v331, %v335
  %v338 = vadd.f32 %v299, %v336
  %v339 = vadd.f32 %v300, %v336
  %v340 = vadd.f32 %v301, %v336
  %v341 = vadd.f32 %v302, %v336
  %v342 = vadd.f32 %v303, %v336
  %v343 = vadd.f32 %v304, %v336
  %v344 = vadd.f32 %v305, %v336
  %v345 = vadd.f32 %v306, %v336
  %v346 = vadd.f32 %v307, %v336
  %v347 = vadd.f32 %v308, %v336
  %v348 = vadd.f32 %v309, %v336
  %v349 = vadd.f32 %v310, %v336
  %v350 = vadd.f32 %v311, %v336
  %v351 = vadd.f32 %v312, %v336
  %v352 = vadd.f32 %v313, %v336
  %v353 = vadd.f32 %v314, %v336
  %v354 = vadd.f32 %v315, %v336
  %v355 = vadd.f32 %v316, %v336
  %v356 = vadd.f32 %v317, %v336
  %v357 = vadd.f32 %v318, %v336
  %v358 = vadd.f32 %v319, %v336
  %v359 = vadd.f32 %v320, %v336
  %v360 = vadd.f32 %v321, %v336
  %v361 = vadd.f32 %v322, %v336
  %v362 = vadd.f32 %v323, %v336
  %v363 = vadd.f32 %v324, %v336
  %v364 = vadd.f32 %v325, %v336
  %v365 = vadd.f32 %v326, %v336
  %v366 = vadd.f32 %v327, %v336
  %v367 = vadd.f32 %v328, %v336
  %v368 = vadd.f32 %v329, %v336
  %v369 = vadd.f32 %v330, %v336
  %v370 = vmax.f32 %v338, 0.0
  %v371 = vmax.f32 %v339, 0.0
  %v372 = vmax.f32 %v340, 0.0
  %v373 = vmax.f32 %v341, 0.0
  %v374 = vmax.f32 %v342, 0.0
  %v375 = vmax.f32 %v343, 0.0
  %v376 = vmax.f32 %v344, 0.0
  %v377 = vmax.f32 %v345, 0.0
  %v378 = vmax.f32 %v346, 0.0
  %v379 = vmax.f32 %v347, 0.0
  %v380 = vmax.f32 %v348, 0.0
  %v381 = vmax.f32 %v349, 0.0
  %v382 = vmax.f32 %v350, 0.0
  %v383 = vmax.f32 %v351, 0.0
  %v384 = vmax.f32 %v352, 0.0
  %v385 = vmax.f32 %v353, 0.0
  %v386 = vmax.f32 %v354, 0.0
  %v387 = vmax.f32 %v355, 0.0
  %v388 = vmax.f32 %v356, 0.0
  %v389 = vmax.f32 %v357, 0.0
  %v390 = vmax.f32 %v358, 0.0
  %v391 = vmax.f32 %v359, 0.0
  %v392 = vmax.f32 %v360, 0.0
  %v393 = vmax.f32 %v361, 0.0
  %v394 = vmax.f32 %v362, 0.0
  %v395 = vmax.f32 %v363, 0.0
  %v396 = vmax.f32 %v364, 0.0
  %v397 = vmax.f32 %v365, 0.0
  %v398 = vmax.f32 %v366, 0.0
  %v399 = vmax.f32 %v367, 0.0
  %v400 = vmax.f32 %v368, 0.0
  %v401 = vmax.f32 %v369, 0.0
  %v402 = vpack.c.bf16 %v371, %v370
  %v403 = vpack.c.bf16 %v373, %v372
  %v404 = vpack.c.bf16 %v375, %v374
  %v405 = vpack.c.bf16 %v377, %v376
  %v406 = vpack.c.bf16 %v379, %v378
  %v407 = vpack.c.bf16 %v381, %v380
  %v408 = vpack.c.bf16 %v383, %v382
  %v409 = vpack.c.bf16 %v385, %v384
  %v410 = vpack.c.bf16 %v387, %v386
  %v411 = vpack.c.bf16 %v389, %v388
  %v412 = vpack.c.bf16 %v391, %v390
  %v413 = vpack.c.bf16 %v393, %v392
  %v414 = vpack.c.bf16 %v395, %v394
  %v415 = vpack.c.bf16 %v397, %v396
  %v416 = vpack.c.bf16 %v399, %v398
  %v417 = vpack.c.bf16 %v401, %v400
  %v434 = vunpack.c.l.b16 %v402
  %v435 = vunpack.c.h.b16 %v402
  %v436 = vunpack.c.l.b16 %v403
  %v437 = vunpack.c.h.b16 %v403
  %v438 = vunpack.c.l.b16 %v404
  %v439 = vunpack.c.h.b16 %v404
  %v440 = vunpack.c.l.b16 %v405
  %v441 = vunpack.c.h.b16 %v405
  %v442 = vunpack.c.l.b16 %v406
  %v443 = vunpack.c.h.b16 %v406
  %v444 = vunpack.c.l.b16 %v407
  %v445 = vunpack.c.h.b16 %v407
  %v446 = vunpack.c.l.b16 %v408
  %v447 = vunpack.c.h.b16 %v408
  %v448 = vunpack.c.l.b16 %v409
  %v449 = vunpack.c.h.b16 %v409
  %v450 = vunpack.c.l.b16 %v410
  %v451 = vunpack.c.h.b16 %v410
  %v452 = vunpack.c.l.b16 %v411
  %v453 = vunpack.c.h.b16 %v411
  %v454 = vunpack.c.l.b16 %v412
  %v455 = vunpack.c.h.b16 %v412
  %v456 = vunpack.c.l.b16 %v413
  %v457 = vunpack.c.h.b16 %v413
  %v458 = vunpack.c.l.b16 %v414
  %v459 = vunpack.c.h.b16 %v414
  %v460 = vunpack.c.l.b16 %v415
  %v461 = vunpack.c.h.b16 %v415
  %v462 = vunpack.c.l.b16 %v416
  %v463 = vunpack.c.h.b16 %v416
  %v464 = vunpack.c.l.b16 %v417
  %v465 = vunpack.c.h.b16 %v417
  %v466 = vpack.c.b16 %v434, %v434
  %v467 = vpack.c.b16 %v435, %v435
  %v468 = vpack.c.b16 %v436, %v436
  %v469 = vpack.c.b16 %v437, %v437
  %v470 = vpack.c.b16 %v438, %v438
  %v471 = vpack.c.b16 %v439, %v439
  %v472 = vpack.c.b16 %v440, %v440
  %v473 = vpack.c.b16 %v441, %v441
  %v474 = vpack.c.b16 %v442, %v442
  %v475 = vpack.c.b16 %v443, %v443
  %v476 = vpack.c.b16 %v444, %v444
  %v477 = vpack.c.b16 %v445, %v445
  %v478 = vpack.c.b16 %v446, %v446
  %v479 = vpack.c.b16 %v447, %v447
  %v480 = vpack.c.b16 %v448, %v448
  %v481 = vpack.c.b16 %v449, %v449
  %v482 = vpack.c.b16 %v450, %v450
  %v483 = vpack.c.b16 %v451, %v451
  %v484 = vpack.c.b16 %v452, %v452
  %v485 = vpack.c.b16 %v453, %v453
  %v486 = vpack.c.b16 %v454, %v454
  %v487 = vpack.c.b16 %v455, %v455
  %v488 = vpack.c.b16 %v456, %v456
  %v489 = vpack.c.b16 %v457, %v457
  %v490 = vpack.c.b16 %v458, %v458
  %v491 = vpack.c.b16 %v459, %v459
  %v492 = vpack.c.b16 %v460, %v460
  %v493 = vpack.c.b16 %v461, %v461
  %v494 = vpack.c.b16 %v462, %v462
  %v495 = vpack.c.b16 %v463, %v463
  %v496 = vpack.c.b16 %v464, %v464
  %v497 = vpack.c.b16 %v465, %v465
  %vm530 = vcmask 257024
  %531 = vst.msk [vmem:[%s4] sm:$0xf] %vm530, %v466
  %532 = vst.msk [vmem:[%s4 + $0x4] sm:$0xf] %vm530, %v467
  %533 = vst.msk [vmem:[%s4 + $0x8] sm:$0xf] %vm530, %v468
  %534 = vst.msk [vmem:[%s4 + $0xc] sm:$0xf] %vm530, %v469
  %535 = vst.msk [vmem:[%s4 + $0x10] sm:$0xf] %vm530, %v470
  %536 = vst.msk [vmem:[%s4 + $0x14] sm:$0xf] %vm530, %v471
  %537 = vst.msk [vmem:[%s4 + $0x18] sm:$0xf] %vm530, %v472
  %538 = vst.msk [vmem:[%s4 + $0x1c] sm:$0xf] %vm530, %v473
  %539 = vst.msk [vmem:[%s4 + $0x20] sm:$0xf] %vm530, %v474
  %540 = vst.msk [vmem:[%s4 + $0x24] sm:$0xf] %vm530, %v475
  %541 = vst.msk [vmem:[%s4 + $0x28] sm:$0xf] %vm530, %v476
  %542 = vst.msk [vmem:[%s4 + $0x2c] sm:$0xf] %vm530, %v477
  %543 = vst.msk [vmem:[%s4 + $0x30] sm:$0xf] %vm530, %v478
  %544 = vst.msk [vmem:[%s4 + $0x34] sm:$0xf] %vm530, %v479
  %545 = vst.msk [vmem:[%s4 + $0x38] sm:$0xf] %vm530, %v480
  %546 = vst.msk [vmem:[%s4 + $0x3c] sm:$0xf] %vm530, %v481
  %547 = vst.msk [vmem:[%s4 + $0x40] sm:$0xf] %vm530, %v482
  %548 = vst.msk [vmem:[%s4 + $0x44] sm:$0xf] %vm530, %v483
  %549 = vst.msk [vmem:[%s4 + $0x48] sm:$0xf] %vm530, %v484
  %550 = vst.msk [vmem:[%s4 + $0x4c] sm:$0xf] %vm530, %v485
  %551 = vst.msk [vmem:[%s4 + $0x50] sm:$0xf] %vm530, %v486
  %552 = vst.msk [vmem:[%s4 + $0x54] sm:$0xf] %vm530, %v487
  %553 = vst.msk [vmem:[%s4 + $0x58] sm:$0xf] %vm530, %v488
  %554 = vst.msk [vmem:[%s4 + $0x5c] sm:$0xf] %vm530, %v489
  %555 = vst.msk [vmem:[%s4 + $0x60] sm:$0xf] %vm530, %v490
  %556 = vst.msk [vmem:[%s4 + $0x64] sm:$0xf] %vm530, %v491
  %557 = vst.msk [vmem:[%s4 + $0x68] sm:$0xf] %vm530, %v492
  %558 = vst.msk [vmem:[%s4 + $0x6c] sm:$0xf] %vm530, %v493
  %559 = vst.msk [vmem:[%s4 + $0x70] sm:$0xf] %vm530, %v494
  %560 = vst.msk [vmem:[%s4 + $0x74] sm:$0xf] %vm530, %v495
  %561 = vst.msk [vmem:[%s4 + $0x78] sm:$0xf] %vm530, %v496
  %562 = vst.msk [vmem:[%s4 + $0x7c] sm:$0xf] %vm530, %v497
  // Predicated region
  $region18: #{transform_attention.12} parent=0 // pred_check
    _
  $region19: #{transform_attention.12} parent=0 // pred_check_branch
    %564 = sbr.rel (0) target = $region21
  $region20: #{transform_attention.12} parent=0 // pred_region
    _
  $region21: #{transform_attention.12} parent=0 // pred_fallthru
    _
  // Predicated region
  $region22: #{transform_attention.12} parent=0 // pred_check
    _
  $region23: #{transform_attention.12} parent=0 // pred_check_branch
    %566 = sbr.rel (0) target = $region25
  $region24: #{transform_attention.12} parent=0 // pred_region
    _
  $region25: #{transform_attention.12} parent=0 // pred_fallthru
    _

// kernel: transform_attention.11
$region0: #{transform_attention.11}
  #allocation0 [shape = 'u32[]', space=smem, size = 0x4, offset = 0x4, fixed_abs, tag = 'smem constant byte address 0x4 - core index']
  #allocation1 [shape = 'u32[144,128]{1,0:T(1,128)}', space=vmem, size = 0x12000, scoped, tag = 'internal scratch']
  %s0 = inlined_call_operand.hbm [shape: f32[256,32], index: 0, kind: input, shape index: {}]
  %s1 = inlined_call_operand.vmem [shape: bf16[32,32], index: 1, kind: input, shape index: {}]
  %s2 = inlined_call_operand.vmem [shape: f32[1,2,32], index: 2, kind: output, shape index: {}]
  %s3 = sld [smem:[#allocation0]]
  $region22: #{transform_attention.11} parent=0
    _
  %s5 = ssub.s32 1, %s3
  %s6 = scalar_select 0, %s5, %s3
  $region1: #{transform_attention.11} parent=0
    #allocation2 [shape = 'u8[131072]{0}', space=vmem, size = 0x20000, scoped, tag = 'input window, operand 0, single buffered']
    #allocation3 [shape = 's32[1]{0}', space=sflag, size = 0x4, scoped, tag = 'scoped memory for transform_attention.11']
    %7 = vsyncpa [#allocation3], 0
    // Predicated region
    $region2: #{transform_attention.11} parent=1 // pred_check
      _
    $region3: #{transform_attention.11} parent=1 // pred_check_branch
      %9 = sbr.rel (0) target = $region5
    $region4: #{transform_attention.11} parent=1 // pred_region
      %s11 = ssub.s32 4096, 4096
      %12 = vsyncadd [#allocation3], %s11
      %s13 = sshll.u32 [#allocation2], 4
      %s14 = int_to_ptr.vmem [resolvable:$true] %s13
      %19 = dma.hbm_to_vmem [thread:$0]  %s0, 4096, %s14, [#allocation3], 128, 128, 8
    $region5: #{transform_attention.11} parent=1 // pred_fallthru
      _
    // Predicated region
    $region6: #{transform_attention.11} parent=1 // pred_check
      _
    $region7: #{transform_attention.11} parent=1 // pred_check_branch
      %21 = sbr.rel (0) target = $region9
    $region8: #{transform_attention.11} parent=1 // pred_region
      _
    $region9: #{transform_attention.11} parent=1 // pred_fallthru
      _
    // Predicated region
    $region10: #{transform_attention.11} parent=1 // pred_check
      _
    $region11: #{transform_attention.11} parent=1 // pred_check_branch
      %23 = sbr.rel (0) target = $region13
    $region12: #{transform_attention.11} parent=1 // pred_region
      %24 = dma.done [#allocation3], 4096
    $region13: #{transform_attention.11} parent=1 // pred_fallthru
      _
    %v26 = vld [vmem:[#allocation2] sm:$0xff]
    %v27 = vld [vmem:[#allocation2 + $0x8] sm:$0xff]
    %v28 = vld [vmem:[#allocation2 + $0x10] sm:$0xff]
    %v29 = vld [vmem:[#allocation2 + $0x18] sm:$0xff]
    %v30 = vld [vmem:[#allocation2 + $0x20] sm:$0xff]
    %v31 = vld [vmem:[#allocation2 + $0x28] sm:$0xff]
    %v32 = vld [vmem:[#allocation2 + $0x30] sm:$0xff]
    %v33 = vld [vmem:[#allocation2 + $0x38] sm:$0xff]
    %v34 = vld [vmem:[#allocation2 + $0x40] sm:$0xff]
    %v35 = vld [vmem:[#allocation2 + $0x48] sm:$0xff]
    %v36 = vld [vmem:[#allocation2 + $0x50] sm:$0xff]
    %v37 = vld [vmem:[#allocation2 + $0x58] sm:$0xff]
    %v38 = vld [vmem:[#allocation2 + $0x60] sm:$0xff]
    %v39 = vld [vmem:[#allocation2 + $0x68] sm:$0xff]
    %v40 = vld [vmem:[#allocation2 + $0x70] sm:$0xff]
    %v41 = vld [vmem:[#allocation2 + $0x78] sm:$0xff]
    %v42 = vld [vmem:[#allocation2 + $0x80] sm:$0xff]
    %v43 = vld [vmem:[#allocation2 + $0x88] sm:$0xff]
    %v44 = vld [vmem:[#allocation2 + $0x90] sm:$0xff]
    %v45 = vld [vmem:[#allocation2 + $0x98] sm:$0xff]
    %v46 = vld [vmem:[#allocation2 + $0xa0] sm:$0xff]
    %v47 = vld [vmem:[#allocation2 + $0xa8] sm:$0xff]
    %v48 = vld [vmem:[#allocation2 + $0xb0] sm:$0xff]
    %v49 = vld [vmem:[#allocation2 + $0xb8] sm:$0xff]
    %v50 = vld [vmem:[#allocation2 + $0xc0] sm:$0xff]
    %v51 = vld [vmem:[#allocation2 + $0xc8] sm:$0xff]
    %v52 = vld [vmem:[#allocation2 + $0xd0] sm:$0xff]
    %v53 = vld [vmem:[#allocation2 + $0xd8] sm:$0xff]
    %v54 = vld [vmem:[#allocation2 + $0xe0] sm:$0xff]
    %v55 = vld [vmem:[#allocation2 + $0xe8] sm:$0xff]
    %v56 = vld [vmem:[#allocation2 + $0xf0] sm:$0xff]
    %v57 = vld [vmem:[#allocation2 + $0xf8] sm:$0xff]
    %v58 = vpack.c.bf16 %v27, %v26
    %v59 = vpack.c.bf16 %v29, %v28
    %v60 = vpack.c.bf16 %v31, %v30
    %v61 = vpack.c.bf16 %v33, %v32
    %v62 = vpack.c.bf16 %v35, %v34
    %v63 = vpack.c.bf16 %v37, %v36
    %v64 = vpack.c.bf16 %v39, %v38
    %v65 = vpack.c.bf16 %v41, %v40
    %v66 = vpack.c.bf16 %v43, %v42
    %v67 = vpack.c.bf16 %v45, %v44
    %v68 = vpack.c.bf16 %v47, %v46
    %v69 = vpack.c.bf16 %v49, %v48
    %v70 = vpack.c.bf16 %v51, %v50
    %v71 = vpack.c.bf16 %v53, %v52
    %v72 = vpack.c.bf16 %v55, %v54
    %v73 = vpack.c.bf16 %v57, %v56
    %v74 = vld [vmem:[%s1] sm:$0xf]
    %v75 = vld [vmem:[%s1 + $0x4] sm:$0xf]
    %v76 = vld [vmem:[%s1 + $0x8] sm:$0xf]
    %v77 = vld [vmem:[%s1 + $0xc] sm:$0xf]
    %v82 = vunpack.c.l.b16 %v74
    %v83 = vunpack.c.l.b16 %v75
    %v84 = vunpack.c.l.b16 %v76
    %v85 = vunpack.c.l.b16 %v77
    %v86 = vpack.c.b16 %v83, %v82
    %v87 = vpack.c.b16 %v85, %v84
    %vm90 = vcmask 261120
    %v92 = vsel %vm90, %v58, 0
    %v95 = vsel %vm90, %v59, 0
    %v98 = vsel %vm90, %v60, 0
    %v101 = vsel %vm90, %v61, 0
    %v104 = vsel %vm90, %v62, 0
    %v107 = vsel %vm90, %v63, 0
    %v110 = vsel %vm90, %v64, 0
    %v113 = vsel %vm90, %v65, 0
    %v116 = vsel %vm90, %v66, 0
    %v119 = vsel %vm90, %v67, 0
    %v122 = vsel %vm90, %v68, 0
    %v125 = vsel %vm90, %v69, 0
    %v128 = vsel %vm90, %v70, 0
    %v131 = vsel %vm90, %v71, 0
    %v134 = vsel %vm90, %v72, 0
    %v137 = vsel %vm90, %v73, 0
    %139 = vmatprep.subr.bf16.mxu0 0
    %140 = vmatpush1.bf16.msra.mxu0 %v86
    %141 = vmatprep.subr.bf16.mxu0 0
    %142 = vmatpush1.bf16.msra.mxu0 %v87
    %143 = vmatprep.subr.bf16.mxu0 0
    %144 = vmatpush1.bf16.msra.mxu0 0
    %145 = vmatprep.subr.bf16.mxu0 0
    %146 = vmatpush1.bf16.msra.mxu0 0
    %147 = vmatprep.subr.bf16.mxu0 0
    %148 = vmatpush1.bf16.msra.mxu0 0
    %149 = vmatprep.subr.bf16.mxu0 0
    %150 = vmatpush1.bf16.msra.mxu0 0
    %151 = vmatprep.subr.bf16.mxu0 0
    %152 = vmatpush1.bf16.msra.mxu0 0
    %153 = vmatprep.subr.bf16.mxu0 0
    %154 = vmatpush1.bf16.msra.mxu0 0
    %155 = vmatprep.subr.bf16.mxu0 0
    %156 = vmatpush1.bf16.msra.mxu0 0
    %157 = vmatprep.subr.bf16.mxu0 0
    %158 = vmatpush1.bf16.msra.mxu0 0
    %159 = vmatprep.subr.bf16.mxu0 0
    %160 = vmatpush1.bf16.msra.mxu0 0
    %161 = vmatprep.subr.bf16.mxu0 0
    %162 = vmatpush1.bf16.msra.mxu0 0
    %163 = vmatprep.subr.bf16.mxu0 0
    %164 = vmatpush1.bf16.msra.mxu0 0
    %165 = vmatprep.subr.bf16.mxu0 0
    %166 = vmatpush1.bf16.msra.mxu0 0
    %167 = vmatprep.subr.bf16.mxu0 0
    %168 = vmatpush1.bf16.msra.mxu0 0
    %169 = vmatprep.subr.bf16.mxu0 0
    %170 = vmatpush1.bf16.msra.mxu0 0
    %171 = vmatprep.mubr.bf16.mxu0 0
    %172 = vmatmul.mubr.bf16.gmra.mrb[0].mxu0 %v92
    %v173 = vpop.f32.mrb[0].mxu0
    %v174 = vadd.f32 0.0, %v173
    %v175 = vpop.f32.mrb[0].mxu0
    %v176 = vpop.f32.mrb[0].mxu0
    %v177 = vadd.f32 0.0, %v176
    %v178 = vpop.f32.mrb[0].mxu0
    %179 = vmatprep.mubr.bf16.mxu0 0
    %180 = vmatmul.mubr.bf16.gmra.mrb[0].mxu0 %v95
    %v181 = vpop.f32.mrb[0].mxu0
    %v182 = vadd.f32 0.0, %v181
    %v183 = vpop.f32.mrb[0].mxu0
    %v184 = vpop.f32.mrb[0].mxu0
    %v185 = vadd.f32 0.0, %v184
    %v186 = vpop.f32.mrb[0].mxu0
    %187 = vmatprep.mubr.bf16.mxu0 0
    %188 = vmatmul.mubr.bf16.gmra.mrb[0].mxu0 %v98
    %v189 = vpop.f32.mrb[0].mxu0
    %v190 = vadd.f32 0.0, %v189
    %v191 = vpop.f32.mrb[0].mxu0
    %v192 = vpop.f32.mrb[0].mxu0
    %v193 = vadd.f32 0.0, %v192
    %v194 = vpop.f32.mrb[0].mxu0
    %195 = vmatprep.mubr.bf16.mxu0 0
    %196 = vmatmul.mubr.bf16.gmra.mrb[0].mxu0 %v101
    %v197 = vpop.f32.mrb[0].mxu0
    %v198 = vadd.f32 0.0, %v197
    %v199 = vpop.f32.mrb[0].mxu0
    %v200 = vpop.f32.mrb[0].mxu0
    %v201 = vadd.f32 0.0, %v200
    %v202 = vpop.f32.mrb[0].mxu0
    %203 = vmatprep.mubr.bf16.mxu0 0
    %204 = vmatmul.mubr.bf16.gmra.mrb[0].mxu0 %v104
    %v205 = vpop.f32.mrb[0].mxu0
    %v206 = vadd.f32 0.0, %v205
    %v207 = vpop.f32.mrb[0].mxu0
    %v208 = vpop.f32.mrb[0].mxu0
    %v209 = vadd.f32 0.0, %v208
    %v210 = vpop.f32.mrb[0].mxu0
    %211 = vmatprep.mubr.bf16.mxu0 0
    %212 = vmatmul.mubr.bf16.gmra.mrb[0].mxu0 %v107
    %v213 = vpop.f32.mrb[0].mxu0
    %v214 = vadd.f32 0.0, %v213
    %v215 = vpop.f32.mrb[0].mxu0
    %v216 = vpop.f32.mrb[0].mxu0
    %v217 = vadd.f32 0.0, %v216
    %v218 = vpop.f32.mrb[0].mxu0
    %219 = vmatprep.mubr.bf16.mxu0 0
    %220 = vmatmul.mubr.bf16.gmra.mrb[0].mxu0 %v110
    %v221 = vpop.f32.mrb[0].mxu0
    %v222 = vadd.f32 0.0, %v221
    %v223 = vpop.f32.mrb[0].mxu0
    %v224 = vpop.f32.mrb[0].mxu0
    %v225 = vadd.f32 0.0, %v224
    %v226 = vpop.f32.mrb[0].mxu0
    %227 = vmatprep.mubr.bf16.mxu0 0
    %228 = vmatmul.mubr.bf16.gmra.mrb[0].mxu0 %v113
    %v229 = vpop.f32.mrb[0].mxu0
    %v230 = vadd.f32 0.0, %v229
    %v231 = vpop.f32.mrb[0].mxu0
    %v232 = vpop.f32.mrb[0].mxu0
    %v233 = vadd.f32 0.0, %v232
    %v234 = vpop.f32.mrb[0].mxu0
    %235 = vmatprep.mubr.bf16.mxu0 0
    %236 = vmatmul.mubr.bf16.gmra.mrb[0].mxu0 %v116
    %v237 = vpop.f32.mrb[0].mxu0
    %v238 = vadd.f32 0.0, %v237
    %v239 = vpop.f32.mrb[0].mxu0
    %v240 = vpop.f32.mrb[0].mxu0
    %v241 = vadd.f32 0.0, %v240
    %v242 = vpop.f32.mrb[0].mxu0
    %243 = vmatprep.mubr.bf16.mxu0 0
    %244 = vmatmul.mubr.bf16.gmra.mrb[0].mxu0 %v119
    %v245 = vpop.f32.mrb[0].mxu0
    %v246 = vadd.f32 0.0, %v245
    %v247 = vpop.f32.mrb[0].mxu0
    %v248 = vpop.f32.mrb[0].mxu0
    %v249 = vadd.f32 0.0, %v248
    %v250 = vpop.f32.mrb[0].mxu0
    %251 = vmatprep.mubr.bf16.mxu0 0
    %252 = vmatmul.mubr.bf16.gmra.mrb[0].mxu0 %v122
    %v253 = vpop.f32.mrb[0].mxu0
    %v254 = vadd.f32 0.0, %v253
    %v255 = vpop.f32.mrb[0].mxu0
    %v256 = vpop.f32.mrb[0].mxu0
    %v257 = vadd.f32 0.0, %v256
    %v258 = vpop.f32.mrb[0].mxu0
    %259 = vmatprep.mubr.bf16.mxu0 0
    %260 = vmatmul.mubr.bf16.gmra.mrb[0].mxu0 %v125
    %v261 = vpop.f32.mrb[0].mxu0
    %v262 = vadd.f32 0.0, %v261
    %v263 = vpop.f32.mrb[0].mxu0
    %v264 = vpop.f32.mrb[0].mxu0
    %v265 = vadd.f32 0.0, %v264
    %v266 = vpop.f32.mrb[0].mxu0
    %267 = vmatprep.mubr.bf16.mxu0 0
    %268 = vmatmul.mubr.bf16.gmra.mrb[0].mxu0 %v128
    %v269 = vpop.f32.mrb[0].mxu0
    %v270 = vadd.f32 0.0, %v269
    %v271 = vpop.f32.mrb[0].mxu0
    %v272 = vpop.f32.mrb[0].mxu0
    %v273 = vadd.f32 0.0, %v272
    %v274 = vpop.f32.mrb[0].mxu0
    %275 = vmatprep.mubr.bf16.mxu0 0
    %276 = vmatmul.mubr.bf16.gmra.mrb[0].mxu0 %v131
    %v277 = vpop.f32.mrb[0].mxu0
    %v278 = vadd.f32 0.0, %v277
    %v279 = vpop.f32.mrb[0].mxu0
    %v280 = vpop.f32.mrb[0].mxu0
    %v281 = vadd.f32 0.0, %v280
    %v282 = vpop.f32.mrb[0].mxu0
    %283 = vmatprep.mubr.bf16.mxu0 0
    %284 = vmatmul.mubr.bf16.gmra.mrb[0].mxu0 %v134
    %v285 = vpop.f32.mrb[0].mxu0
    %v286 = vadd.f32 0.0, %v285
    %v287 = vpop.f32.mrb[0].mxu0
    %v288 = vpop.f32.mrb[0].mxu0
    %v289 = vadd.f32 0.0, %v288
    %v290 = vpop.f32.mrb[0].mxu0
    %291 = vmatprep.mubr.bf16.mxu0 0
    %292 = vmatmul.mubr.bf16.gmra.mrb[0].mxu0 %v137
    %v293 = vpop.f32.mrb[0].mxu0
    %v294 = vadd.f32 0.0, %v293
    %v295 = vpop.f32.mrb[0].mxu0
    %v296 = vpop.f32.mrb[0].mxu0
    %v297 = vadd.f32 0.0, %v296
    %v298 = vpop.f32.mrb[0].mxu0
    %299 = vdwg.mxu0
    %v300 = vsel %vm90, %v174, 0.0
    %v301 = vsel %vm90, %v177, 0.0
    %v302 = vadd.f32 %v300, %v301
    %v303 = vsel %vm90, %v182, 0.0
    %v304 = vadd.f32 %v302, %v303
    %v305 = vsel %vm90, %v185, 0.0
    %v306 = vadd.f32 %v304, %v305
    %v307 = vsel %vm90, %v190, 0.0
    %v308 = vadd.f32 %v306, %v307
    %v309 = vsel %vm90, %v193, 0.0
    %v310 = vadd.f32 %v308, %v309
    %v311 = vsel %vm90, %v198, 0.0
    %v312 = vadd.f32 %v310, %v311
    %v313 = vsel %vm90, %v201, 0.0
    %v314 = vadd.f32 %v312, %v313
    %v315 = vsel %vm90, %v206, 0.0
    %v316 = vadd.f32 %v314, %v315
    %v317 = vsel %vm90, %v209, 0.0
    %v318 = vadd.f32 %v316, %v317
    %v319 = vsel %vm90, %v214, 0.0
    %v320 = vadd.f32 %v318, %v319
    %v321 = vsel %vm90, %v217, 0.0
    %v322 = vadd.f32 %v320, %v321
    %v323 = vsel %vm90, %v222, 0.0
    %v324 = vadd.f32 %v322, %v323
    %v325 = vsel %vm90, %v225, 0.0
    %v326 = vadd.f32 %v324, %v325
    %v327 = vsel %vm90, %v230, 0.0
    %v328 = vadd.f32 %v326, %v327
    %v329 = vsel %vm90, %v233, 0.0
    %v330 = vadd.f32 %v328, %v329
    %v331 = vsel %vm90, %v238, 0.0
    %v332 = vadd.f32 %v330, %v331
    %v333 = vsel %vm90, %v241, 0.0
    %v334 = vadd.f32 %v332, %v333
    %v335 = vsel %vm90, %v246, 0.0
    %v336 = vadd.f32 %v334, %v335
    %v337 = vsel %vm90, %v249, 0.0
    %v338 = vadd.f32 %v336, %v337
    %v339 = vsel %vm90, %v254, 0.0
    %v340 = vadd.f32 %v338, %v339
    %v341 = vsel %vm90, %v257, 0.0
    %v342 = vadd.f32 %v340, %v341
    %v343 = vsel %vm90, %v262, 0.0
    %v344 = vadd.f32 %v342, %v343
    %v345 = vsel %vm90, %v265, 0.0
    %v346 = vadd.f32 %v344, %v345
    %v347 = vsel %vm90, %v270, 0.0
    %v348 = vadd.f32 %v346, %v347
    %v349 = vsel %vm90, %v273, 0.0
    %v350 = vadd.f32 %v348, %v349
    %v351 = vsel %vm90, %v278, 0.0
    %v352 = vadd.f32 %v350, %v351
    %v353 = vsel %vm90, %v281, 0.0
    %v354 = vadd.f32 %v352, %v353
    %v355 = vsel %vm90, %v286, 0.0
    %v356 = vadd.f32 %v354, %v355
    %v357 = vsel %vm90, %v289, 0.0
    %v358 = vadd.f32 %v356, %v357
    %v359 = vsel %vm90, %v294, 0.0
    %v360 = vadd.f32 %v358, %v359
    %v361 = vsel %vm90, %v297, 0.0
    %v362 = vadd.f32 %v360, %v361
    %v363 = vrot.slane %v362, 4
    %v364 = vadd.f32 %v362, %v363
    %v365 = vrot.slane %v364, 2
    %v366 = vadd.f32 %v364, %v365
    %v367 = vrot.slane %v366, 1
    %v368 = vadd.f32 %v366, %v367
    %v369 = vmul.f32 %v174, %v174
    %v370 = vmul.f32 %v177, %v177
    %v371 = vmul.f32 %v182, %v182
    %v372 = vmul.f32 %v185, %v185
    %v373 = vmul.f32 %v190, %v190
    %v374 = vmul.f32 %v193, %v193
    %v375 = vmul.f32 %v198, %v198
    %v376 = vmul.f32 %v201, %v201
    %v377 = vmul.f32 %v206, %v206
    %v378 = vmul.f32 %v209, %v209
    %v379 = vmul.f32 %v214, %v214
    %v380 = vmul.f32 %v217, %v217
    %v381 = vmul.f32 %v222, %v222
    %v382 = vmul.f32 %v225, %v225
    %v383 = vmul.f32 %v230, %v230
    %v384 = vmul.f32 %v233, %v233
    %v385 = vmul.f32 %v238, %v238
    %v386 = vmul.f32 %v241, %v241
    %v387 = vmul.f32 %v246, %v246
    %v388 = vmul.f32 %v249, %v249
    %v389 = vmul.f32 %v254, %v254
    %v390 = vmul.f32 %v257, %v257
    %v391 = vmul.f32 %v262, %v262
    %v392 = vmul.f32 %v265, %v265
    %v393 = vmul.f32 %v270, %v270
    %v394 = vmul.f32 %v273, %v273
    %v395 = vmul.f32 %v278, %v278
    %v396 = vmul.f32 %v281, %v281
    %v397 = vmul.f32 %v286, %v286
    %v398 = vmul.f32 %v289, %v289
    %v399 = vmul.f32 %v294, %v294
    %v400 = vmul.f32 %v297, %v297
    %v401 = vsel %vm90, %v369, 0.0
    %v402 = vsel %vm90, %v370, 0.0
    %v403 = vadd.f32 %v401, %v402
    %v404 = vsel %vm90, %v371, 0.0
    %v405 = vadd.f32 %v403, %v404
    %v406 = vsel %vm90, %v372, 0.0
    %v407 = vadd.f32 %v405, %v406
    %v408 = vsel %vm90, %v373, 0.0
    %v409 = vadd.f32 %v407, %v408
    %v410 = vsel %vm90, %v374, 0.0
    %v411 = vadd.f32 %v409, %v410
    %v412 = vsel %vm90, %v375, 0.0
    %v413 = vadd.f32 %v411, %v412
    %v414 = vsel %vm90, %v376, 0.0
    %v415 = vadd.f32 %v413, %v414
    %v416 = vsel %vm90, %v377, 0.0
    %v417 = vadd.f32 %v415, %v416
    %v418 = vsel %vm90, %v378, 0.0
    %v419 = vadd.f32 %v417, %v418
    %v420 = vsel %vm90, %v379, 0.0
    %v421 = vadd.f32 %v419, %v420
    %v422 = vsel %vm90, %v380, 0.0
    %v423 = vadd.f32 %v421, %v422
    %v424 = vsel %vm90, %v381, 0.0
    %v425 = vadd.f32 %v423, %v424
    %v426 = vsel %vm90, %v382, 0.0
    %v427 = vadd.f32 %v425, %v426
    %v428 = vsel %vm90, %v383, 0.0
    %v429 = vadd.f32 %v427, %v428
    %v430 = vsel %vm90, %v384, 0.0
    %v431 = vadd.f32 %v429, %v430
    %v432 = vsel %vm90, %v385, 0.0
    %v433 = vadd.f32 %v431, %v432
    %v434 = vsel %vm90, %v386, 0.0
    %v435 = vadd.f32 %v433, %v434
    %v436 = vsel %vm90, %v387, 0.0
    %v437 = vadd.f32 %v435, %v436
    %v438 = vsel %vm90, %v388, 0.0
    %v439 = vadd.f32 %v437, %v438
    %v440 = vsel %vm90, %v389, 0.0
    %v441 = vadd.f32 %v439, %v440
    %v442 = vsel %vm90, %v390, 0.0
    %v443 = vadd.f32 %v441, %v442
    %v444 = vsel %vm90, %v391, 0.0
    %v445 = vadd.f32 %v443, %v444
    %v446 = vsel %vm90, %v392, 0.0
    %v447 = vadd.f32 %v445, %v446
    %v448 = vsel %vm90, %v393, 0.0
    %v449 = vadd.f32 %v447, %v448
    %v450 = vsel %vm90, %v394, 0.0
    %v451 = vadd.f32 %v449, %v450
    %v452 = vsel %vm90, %v395, 0.0
    %v453 = vadd.f32 %v451, %v452
    %v454 = vsel %vm90, %v396, 0.0
    %v455 = vadd.f32 %v453, %v454
    %v456 = vsel %vm90, %v397, 0.0
    %v457 = vadd.f32 %v455, %v456
    %v458 = vsel %vm90, %v398, 0.0
    %v459 = vadd.f32 %v457, %v458
    %v460 = vsel %vm90, %v399, 0.0
    %v461 = vadd.f32 %v459, %v460
    %v462 = vsel %vm90, %v400, 0.0
    %v463 = vadd.f32 %v461, %v462
    %v464 = vrot.slane %v463, 4
    %v465 = vadd.f32 %v463, %v464
    %v466 = vrot.slane %v465, 2
    %v467 = vadd.f32 %v465, %v466
    %v468 = vrot.slane %v467, 1
    %v469 = vadd.f32 %v467, %v468
    %vm470 = vcmask 1040384
    %v471 = vsel %vm470, %v368, %v469
    %vm472 = vcmask 254976
    %473 = vst.msk [vmem:[%s2] sm:$0x3] %vm472, %v471
    // Predicated region
    $region14: #{transform_attention.11} parent=1 // pred_check
      _
    $region15: #{transform_attention.11} parent=1 // pred_check_branch
      %475 = sbr.rel (0) target = $region17
    $region16: #{transform_attention.11} parent=1 // pred_region
      _
    $region17: #{transform_attention.11} parent=1 // pred_fallthru
      _
    // Predicated region
    $region18: #{transform_attention.11} parent=1 // pred_check
      _
    $region19: #{transform_attention.11} parent=1 // pred_check_branch
      %477 = sbr.rel (0) target = $region21
    $region20: #{transform_attention.11} parent=1 // pred_region
      _
    $region21: #{transform_attention.11} parent=1 // pred_fallthru
      _
    %478 = vsyncpa [#allocation3], 1

// kernel: transform_attention.9
$region0: #{transform_attention.9}
  #allocation0 [shape = 'u32[]', space=smem, size = 0x4, offset = 0x4, fixed_abs, tag = 'smem constant byte address 0x4 - core index']
  #allocation1 [shape = 'u32[144,128]{1,0:T(1,128)}', space=vmem, size = 0x12000, scoped, tag = 'internal scratch']
  %s0 = inlined_call_operand.vmem [shape: f32[128,32], index: 0, kind: input, shape index: {}]
  %s1 = inlined_call_operand.vmem [shape: bf16[32,32], index: 1, kind: input, shape index: {}]
  %s2 = inlined_call_operand.vmem [shape: f32[1,2,32], index: 2, kind: output, shape index: {}]
  %s3 = sld [smem:[#allocation0]]
  $region18: #{transform_attention.9} parent=0
    _
  %s5 = ssub.s32 1, %s3
  %s6 = scalar_select 0, %s5, %s3
  // Predicated region
  $region2: #{transform_attention.9} parent=0 // pred_check
    _
  $region3: #{transform_attention.9} parent=0 // pred_check_branch
    %8 = sbr.rel (0) target = $region5
  $region4: #{transform_attention.9} parent=0 // pred_region
    _
  $region5: #{transform_attention.9} parent=0 // pred_fallthru
    _
  // Predicated region
  $region6: #{transform_attention.9} parent=0 // pred_check
    _
  $region7: #{transform_attention.9} parent=0 // pred_check_branch
    %10 = sbr.rel (0) target = $region9
  $region8: #{transform_attention.9} parent=0 // pred_region
    _
  $region9: #{transform_attention.9} parent=0 // pred_fallthru
    _
  %v12 = vld [vmem:[%s0] sm:$0xff]
  %v13 = vld [vmem:[%s0 + $0x8] sm:$0xff]
  %v14 = vld [vmem:[%s0 + $0x10] sm:$0xff]
  %v15 = vld [vmem:[%s0 + $0x18] sm:$0xff]
  %v16 = vld [vmem:[%s0 + $0x20] sm:$0xff]
  %v17 = vld [vmem:[%s0 + $0x28] sm:$0xff]
  %v18 = vld [vmem:[%s0 + $0x30] sm:$0xff]
  %v19 = vld [vmem:[%s0 + $0x38] sm:$0xff]
  %v20 = vld [vmem:[%s0 + $0x40] sm:$0xff]
  %v21 = vld [vmem:[%s0 + $0x48] sm:$0xff]
  %v22 = vld [vmem:[%s0 + $0x50] sm:$0xff]
  %v23 = vld [vmem:[%s0 + $0x58] sm:$0xff]
  %v24 = vld [vmem:[%s0 + $0x60] sm:$0xff]
  %v25 = vld [vmem:[%s0 + $0x68] sm:$0xff]
  %v26 = vld [vmem:[%s0 + $0x70] sm:$0xff]
  %v27 = vld [vmem:[%s0 + $0x78] sm:$0xff]
  %v28 = vpack.c.bf16 %v13, %v12
  %v29 = vpack.c.bf16 %v15, %v14
  %v30 = vpack.c.bf16 %v17, %v16
  %v31 = vpack.c.bf16 %v19, %v18
  %v32 = vpack.c.bf16 %v21, %v20
  %v33 = vpack.c.bf16 %v23, %v22
  %v34 = vpack.c.bf16 %v25, %v24
  %v35 = vpack.c.bf16 %v27, %v26
  %v36 = vld [vmem:[%s1] sm:$0xf]
  %v37 = vld [vmem:[%s1 + $0x4] sm:$0xf]
  %v38 = vld [vmem:[%s1 + $0x8] sm:$0xf]
  %v39 = vld [vmem:[%s1 + $0xc] sm:$0xf]
  %v44 = vunpack.c.l.b16 %v36
  %v45 = vunpack.c.l.b16 %v37
  %v46 = vunpack.c.l.b16 %v38
  %v47 = vunpack.c.l.b16 %v39
  %v48 = vpack.c.b16 %v45, %v44
  %v49 = vpack.c.b16 %v47, %v46
  %vm52 = vcmask 261120
  %v54 = vsel %vm52, %v28, 0
  %v57 = vsel %vm52, %v29, 0
  %v60 = vsel %vm52, %v30, 0
  %v63 = vsel %vm52, %v31, 0
  %v66 = vsel %vm52, %v32, 0
  %v69 = vsel %vm52, %v33, 0
  %v72 = vsel %vm52, %v34, 0
  %v75 = vsel %vm52, %v35, 0
  %77 = vmatprep.subr.bf16.mxu0 0
  %78 = vmatpush1.bf16.msra.mxu0 %v48
  %79 = vmatprep.subr.bf16.mxu0 0
  %80 = vmatpush1.bf16.msra.mxu0 %v49
  %81 = vmatprep.subr.bf16.mxu0 0
  %82 = vmatpush1.bf16.msra.mxu0 0
  %83 = vmatprep.subr.bf16.mxu0 0
  %84 = vmatpush1.bf16.msra.mxu0 0
  %85 = vmatprep.subr.bf16.mxu0 0
  %86 = vmatpush1.bf16.msra.mxu0 0
  %87 = vmatprep.subr.bf16.mxu0 0
  %88 = vmatpush1.bf16.msra.mxu0 0
  %89 = vmatprep.subr.bf16.mxu0 0
  %90 = vmatpush1.bf16.msra.mxu0 0
  %91 = vmatprep.subr.bf16.mxu0 0
  %92 = vmatpush1.bf16.msra.mxu0 0
  %93 = vmatprep.subr.bf16.mxu0 0
  %94 = vmatpush1.bf16.msra.mxu0 0
  %95 = vmatprep.subr.bf16.mxu0 0
  %96 = vmatpush1.bf16.msra.mxu0 0
  %97 = vmatprep.subr.bf16.mxu0 0
  %98 = vmatpush1.bf16.msra.mxu0 0
  %99 = vmatprep.subr.bf16.mxu0 0
  %100 = vmatpush1.bf16.msra.mxu0 0
  %101 = vmatprep.subr.bf16.mxu0 0
  %102 = vmatpush1.bf16.msra.mxu0 0
  %103 = vmatprep.subr.bf16.mxu0 0
  %104 = vmatpush1.bf16.msra.mxu0 0
  %105 = vmatprep.subr.bf16.mxu0 0
  %106 = vmatpush1.bf16.msra.mxu0 0
  %107 = vmatprep.subr.bf16.mxu0 0
  %108 = vmatpush1.bf16.msra.mxu0 0
  %109 = vmatprep.mubr.bf16.mxu0 0
  %110 = vmatmul.mubr.bf16.gmra.mrb[0].mxu0 %v54
  %v111 = vpop.f32.mrb[0].mxu0
  %v112 = vadd.f32 0.0, %v111
  %v113 = vpop.f32.mrb[0].mxu0
  %v114 = vpop.f32.mrb[0].mxu0
  %v115 = vadd.f32 0.0, %v114
  %v116 = vpop.f32.mrb[0].mxu0
  %117 = vmatprep.mubr.bf16.mxu0 0
  %118 = vmatmul.mubr.bf16.gmra.mrb[0].mxu0 %v57
  %v119 = vpop.f32.mrb[0].mxu0
  %v120 = vadd.f32 0.0, %v119
  %v121 = vpop.f32.mrb[0].mxu0
  %v122 = vpop.f32.mrb[0].mxu0
  %v123 = vadd.f32 0.0, %v122
  %v124 = vpop.f32.mrb[0].mxu0
  %125 = vmatprep.mubr.bf16.mxu0 0
  %126 = vmatmul.mubr.bf16.gmra.mrb[0].mxu0 %v60
  %v127 = vpop.f32.mrb[0].mxu0
  %v128 = vadd.f32 0.0, %v127
  %v129 = vpop.f32.mrb[0].mxu0
  %v130 = vpop.f32.mrb[0].mxu0
  %v131 = vadd.f32 0.0, %v130
  %v132 = vpop.f32.mrb[0].mxu0
  %133 = vmatprep.mubr.bf16.mxu0 0
  %134 = vmatmul.mubr.bf16.gmra.mrb[0].mxu0 %v63
  %v135 = vpop.f32.mrb[0].mxu0
  %v136 = vadd.f32 0.0, %v135
  %v137 = vpop.f32.mrb[0].mxu0
  %v138 = vpop.f32.mrb[0].mxu0
  %v139 = vadd.f32 0.0, %v138
  %v140 = vpop.f32.mrb[0].mxu0
  %141 = vmatprep.mubr.bf16.mxu0 0
  %142 = vmatmul.mubr.bf16.gmra.mrb[0].mxu0 %v66
  %v143 = vpop.f32.mrb[0].mxu0
  %v144 = vadd.f32 0.0, %v143
  %v145 = vpop.f32.mrb[0].mxu0
  %v146 = vpop.f32.mrb[0].mxu0
  %v147 = vadd.f32 0.0, %v146
  %v148 = vpop.f32.mrb[0].mxu0
  %149 = vmatprep.mubr.bf16.mxu0 0
  %150 = vmatmul.mubr.bf16.gmra.mrb[0].mxu0 %v69
  %v151 = vpop.f32.mrb[0].mxu0
  %v152 = vadd.f32 0.0, %v151
  %v153 = vpop.f32.mrb[0].mxu0
  %v154 = vpop.f32.mrb[0].mxu0
  %v155 = vadd.f32 0.0, %v154
  %v156 = vpop.f32.mrb[0].mxu0
  %157 = vmatprep.mubr.bf16.mxu0 0
  %158 = vmatmul.mubr.bf16.gmra.mrb[0].mxu0 %v72
  %v159 = vpop.f32.mrb[0].mxu0
  %v160 = vadd.f32 0.0, %v159
  %v161 = vpop.f32.mrb[0].mxu0
  %v162 = vpop.f32.mrb[0].mxu0
  %v163 = vadd.f32 0.0, %v162
  %v164 = vpop.f32.mrb[0].mxu0
  %165 = vmatprep.mubr.bf16.mxu0 0
  %166 = vmatmul.mubr.bf16.gmra.mrb[0].mxu0 %v75
  %v167 = vpop.f32.mrb[0].mxu0
  %v168 = vadd.f32 0.0, %v167
  %v169 = vpop.f32.mrb[0].mxu0
  %v170 = vpop.f32.mrb[0].mxu0
  %v171 = vadd.f32 0.0, %v170
  %v172 = vpop.f32.mrb[0].mxu0
  %173 = vdwg.mxu0
  %v174 = vsel %vm52, %v112, 0.0
  %v175 = vsel %vm52, %v115, 0.0
  %v176 = vadd.f32 %v174, %v175
  %v177 = vsel %vm52, %v120, 0.0
  %v178 = vadd.f32 %v176, %v177
  %v179 = vsel %vm52, %v123, 0.0
  %v180 = vadd.f32 %v178, %v179
  %v181 = vsel %vm52, %v128, 0.0
  %v182 = vadd.f32 %v180, %v181
  %v183 = vsel %vm52, %v131, 0.0
  %v184 = vadd.f32 %v182, %v183
  %v185 = vsel %vm52, %v136, 0.0
  %v186 = vadd.f32 %v184, %v185
  %v187 = vsel %vm52, %v139, 0.0
  %v188 = vadd.f32 %v186, %v187
  %v189 = vsel %vm52, %v144, 0.0
  %v190 = vadd.f32 %v188, %v189
  %v191 = vsel %vm52, %v147, 0.0
  %v192 = vadd.f32 %v190, %v191
  %v193 = vsel %vm52, %v152, 0.0
  %v194 = vadd.f32 %v192, %v193
  %v195 = vsel %vm52, %v155, 0.0
  %v196 = vadd.f32 %v194, %v195
  %v197 = vsel %vm52, %v160, 0.0
  %v198 = vadd.f32 %v196, %v197
  %v199 = vsel %vm52, %v163, 0.0
  %v200 = vadd.f32 %v198, %v199
  %v201 = vsel %vm52, %v168, 0.0
  %v202 = vadd.f32 %v200, %v201
  %v203 = vsel %vm52, %v171, 0.0
  %v204 = vadd.f32 %v202, %v203
  %v205 = vrot.slane %v204, 4
  %v206 = vadd.f32 %v204, %v205
  %v207 = vrot.slane %v206, 2
  %v208 = vadd.f32 %v206, %v207
  %v209 = vrot.slane %v208, 1
  %v210 = vadd.f32 %v208, %v209
  %v211 = vmul.f32 %v112, %v112
  %v212 = vmul.f32 %v115, %v115
  %v213 = vmul.f32 %v120, %v120
  %v214 = vmul.f32 %v123, %v123
  %v215 = vmul.f32 %v128, %v128
  %v216 = vmul.f32 %v131, %v131
  %v217 = vmul.f32 %v136, %v136
  %v218 = vmul.f32 %v139, %v139
  %v219 = vmul.f32 %v144, %v144
  %v220 = vmul.f32 %v147, %v147
  %v221 = vmul.f32 %v152, %v152
  %v222 = vmul.f32 %v155, %v155
  %v223 = vmul.f32 %v160, %v160
  %v224 = vmul.f32 %v163, %v163
  %v225 = vmul.f32 %v168, %v168
  %v226 = vmul.f32 %v171, %v171
  %v227 = vsel %vm52, %v211, 0.0
  %v228 = vsel %vm52, %v212, 0.0
  %v229 = vadd.f32 %v227, %v228
  %v230 = vsel %vm52, %v213, 0.0
  %v231 = vadd.f32 %v229, %v230
  %v232 = vsel %vm52, %v214, 0.0
  %v233 = vadd.f32 %v231, %v232
  %v234 = vsel %vm52, %v215, 0.0
  %v235 = vadd.f32 %v233, %v234
  %v236 = vsel %vm52, %v216, 0.0
  %v237 = vadd.f32 %v235, %v236
  %v238 = vsel %vm52, %v217, 0.0
  %v239 = vadd.f32 %v237, %v238
  %v240 = vsel %vm52, %v218, 0.0
  %v241 = vadd.f32 %v239, %v240
  %v242 = vsel %vm52, %v219, 0.0
  %v243 = vadd.f32 %v241, %v242
  %v244 = vsel %vm52, %v220, 0.0
  %v245 = vadd.f32 %v243, %v244
  %v246 = vsel %vm52, %v221, 0.0
  %v247 = vadd.f32 %v245, %v246
  %v248 = vsel %vm52, %v222, 0.0
  %v249 = vadd.f32 %v247, %v248
  %v250 = vsel %vm52, %v223, 0.0
  %v251 = vadd.f32 %v249, %v250
  %v252 = vsel %vm52, %v224, 0.0
  %v253 = vadd.f32 %v251, %v252
  %v254 = vsel %vm52, %v225, 0.0
  %v255 = vadd.f32 %v253, %v254
  %v256 = vsel %vm52, %v226, 0.0
  %v257 = vadd.f32 %v255, %v256
  %v258 = vrot.slane %v257, 4
  %v259 = vadd.f32 %v257, %v258
  %v260 = vrot.slane %v259, 2
  %v261 = vadd.f32 %v259, %v260
  %v262 = vrot.slane %v261, 1
  %v263 = vadd.f32 %v261, %v262
  %vm264 = vcmask 1040384
  %v265 = vsel %vm264, %v210, %v263
  %vm266 = vcmask 254976
  %267 = vst.msk [vmem:[%s2] sm:$0x3] %vm266, %v265
  // Predicated region
  $region10: #{transform_attention.9} parent=0 // pred_check
    _
  $region11: #{transform_attention.9} parent=0 // pred_check_branch
    %269 = sbr.rel (0) target = $region13
  $region12: #{transform_attention.9} parent=0 // pred_region
    _
  $region13: #{transform_attention.9} parent=0 // pred_fallthru
    _
  // Predicated region
  $region14: #{transform_attention.9} parent=0 // pred_check
    _
  $region15: #{transform_attention.9} parent=0 // pred_check_branch
    %271 = sbr.rel (0) target = $region17
  $region16: #{transform_attention.9} parent=0 // pred_region
    _
  $region17: #{transform_attention.9} parent=0 // pred_fallthru
    _

// kernel: transform_attention.13
$region0: #{transform_attention.13}
  #allocation0 [shape = 'u32[]', space=smem, size = 0x4, offset = 0x4, fixed_abs, tag = 'smem constant byte address 0x4 - core index']
  #allocation1 [shape = 'u32[144,128]{1,0:T(1,128)}', space=vmem, size = 0x12000, scoped, tag = 'internal scratch']
  %s0 = inlined_call_operand.vmem [shape: f32[256,32], index: 0, kind: input, shape index: {}]
  %s1 = inlined_call_operand.vmem [shape: bf16[32,32], index: 1, kind: input, shape index: {}]
  %s2 = inlined_call_operand.vmem [shape: f32[1,2,32], index: 2, kind: output, shape index: {}]
  %s3 = sld [smem:[#allocation0]]
  $region18: #{transform_attention.13} parent=0
    _
  %s5 = ssub.s32 1, %s3
  %s6 = scalar_select 0, %s5, %s3
  // Predicated region
  $region2: #{transform_attention.13} parent=0 // pred_check
    _
  $region3: #{transform_attention.13} parent=0 // pred_check_branch
    %8 = sbr.rel (0) target = $region5
  $region4: #{transform_attention.13} parent=0 // pred_region
    _
  $region5: #{transform_attention.13} parent=0 // pred_fallthru
    _
  // Predicated region
  $region6: #{transform_attention.13} parent=0 // pred_check
    _
  $region7: #{transform_attention.13} parent=0 // pred_check_branch
    %10 = sbr.rel (0) target = $region9
  $region8: #{transform_attention.13} parent=0 // pred_region
    _
  $region9: #{transform_attention.13} parent=0 // pred_fallthru
    _
  %v12 = vld [vmem:[%s0] sm:$0xff]
  %v13 = vld [vmem:[%s0 + $0x8] sm:$0xff]
  %v14 = vld [vmem:[%s0 + $0x10] sm:$0xff]
  %v15 = vld [vmem:[%s0 + $0x18] sm:$0xff]
  %v16 = vld [vmem:[%s0 + $0x20] sm:$0xff]
  %v17 = vld [vmem:[%s0 + $0x28] sm:$0xff]
  %v18 = vld [vmem:[%s0 + $0x30] sm:$0xff]
  %v19 = vld [vmem:[%s0 + $0x38] sm:$0xff]
  %v20 = vld [vmem:[%s0 + $0x40] sm:$0xff]
  %v21 = vld [vmem:[%s0 + $0x48] sm:$0xff]
  %v22 = vld [vmem:[%s0 + $0x50] sm:$0xff]
  %v23 = vld [vmem:[%s0 + $0x58] sm:$0xff]
  %v24 = vld [vmem:[%s0 + $0x60] sm:$0xff]
  %v25 = vld [vmem:[%s0 + $0x68] sm:$0xff]
  %v26 = vld [vmem:[%s0 + $0x70] sm:$0xff]
  %v27 = vld [vmem:[%s0 + $0x78] sm:$0xff]
  %v28 = vld [vmem:[%s0 + $0x80] sm:$0xff]
  %v29 = vld [vmem:[%s0 + $0x88] sm:$0xff]
  %v30 = vld [vmem:[%s0 + $0x90] sm:$0xff]
  %v31 = vld [vmem:[%s0 + $0x98] sm:$0xff]
  %v32 = vld [vmem:[%s0 + $0xa0] sm:$0xff]
  %v33 = vld [vmem:[%s0 + $0xa8] sm:$0xff]
  %v34 = vld [vmem:[%s0 + $0xb0] sm:$0xff]
  %v35 = vld [vmem:[%s0 + $0xb8] sm:$0xff]
  %v36 = vld [vmem:[%s0 + $0xc0] sm:$0xff]
  %v37 = vld [vmem:[%s0 + $0xc8] sm:$0xff]
  %v38 = vld [vmem:[%s0 + $0xd0] sm:$0xff]
  %v39 = vld [vmem:[%s0 + $0xd8] sm:$0xff]
  %v40 = vld [vmem:[%s0 + $0xe0] sm:$0xff]
  %v41 = vld [vmem:[%s0 + $0xe8] sm:$0xff]
  %v42 = vld [vmem:[%s0 + $0xf0] sm:$0xff]
  %v43 = vld [vmem:[%s0 + $0xf8] sm:$0xff]
  %v44 = vpack.c.bf16 %v13, %v12
  %v45 = vpack.c.bf16 %v15, %v14
  %v46 = vpack.c.bf16 %v17, %v16
  %v47 = vpack.c.bf16 %v19, %v18
  %v48 = vpack.c.bf16 %v21, %v20
  %v49 = vpack.c.bf16 %v23, %v22
  %v50 = vpack.c.bf16 %v25, %v24
  %v51 = vpack.c.bf16 %v27, %v26
  %v52 = vpack.c.bf16 %v29, %v28
  %v53 = vpack.c.bf16 %v31, %v30
  %v54 = vpack.c.bf16 %v33, %v32
  %v55 = vpack.c.bf16 %v35, %v34
  %v56 = vpack.c.bf16 %v37, %v36
  %v57 = vpack.c.bf16 %v39, %v38
  %v58 = vpack.c.bf16 %v41, %v40
  %v59 = vpack.c.bf16 %v43, %v42
  %v60 = vld [vmem:[%s1] sm:$0xf]
  %v61 = vld [vmem:[%s1 + $0x4] sm:$0xf]
  %v62 = vld [vmem:[%s1 + $0x8] sm:$0xf]
  %v63 = vld [vmem:[%s1 + $0xc] sm:$0xf]
  %v68 = vunpack.c.l.b16 %v60
  %v69 = vunpack.c.l.b16 %v61
  %v70 = vunpack.c.l.b16 %v62
  %v71 = vunpack.c.l.b16 %v63
  %v72 = vpack.c.b16 %v69, %v68
  %v73 = vpack.c.b16 %v71, %v70
  %vm76 = vcmask 261120
  %v78 = vsel %vm76, %v44, 0
  %v81 = vsel %vm76, %v45, 0
  %v84 = vsel %vm76, %v46, 0
  %v87 = vsel %vm76, %v47, 0
  %v90 = vsel %vm76, %v48, 0
  %v93 = vsel %vm76, %v49, 0
  %v96 = vsel %vm76, %v50, 0
  %v99 = vsel %vm76, %v51, 0
  %v102 = vsel %vm76, %v52, 0
  %v105 = vsel %vm76, %v53, 0
  %v108 = vsel %vm76, %v54, 0
  %v111 = vsel %vm76, %v55, 0
  %v114 = vsel %vm76, %v56, 0
  %v117 = vsel %vm76, %v57, 0
  %v120 = vsel %vm76, %v58, 0
  %v123 = vsel %vm76, %v59, 0
  %125 = vmatprep.subr.bf16.mxu0 0
  %126 = vmatpush1.bf16.msra.mxu0 %v72
  %127 = vmatprep.subr.bf16.mxu0 0
  %128 = vmatpush1.bf16.msra.mxu0 %v73
  %129 = vmatprep.subr.bf16.mxu0 0
  %130 = vmatpush1.bf16.msra.mxu0 0
  %131 = vmatprep.subr.bf16.mxu0 0
  %132 = vmatpush1.bf16.msra.mxu0 0
  %133 = vmatprep.subr.bf16.mxu0 0
  %134 = vmatpush1.bf16.msra.mxu0 0
  %135 = vmatprep.subr.bf16.mxu0 0
  %136 = vmatpush1.bf16.msra.mxu0 0
  %137 = vmatprep.subr.bf16.mxu0 0
  %138 = vmatpush1.bf16.msra.mxu0 0
  %139 = vmatprep.subr.bf16.mxu0 0
  %140 = vmatpush1.bf16.msra.mxu0 0
  %141 = vmatprep.subr.bf16.mxu0 0
  %142 = vmatpush1.bf16.msra.mxu0 0
  %143 = vmatprep.subr.bf16.mxu0 0
  %144 = vmatpush1.bf16.msra.mxu0 0
  %145 = vmatprep.subr.bf16.mxu0 0
  %146 = vmatpush1.bf16.msra.mxu0 0
  %147 = vmatprep.subr.bf16.mxu0 0
  %148 = vmatpush1.bf16.msra.mxu0 0
  %149 = vmatprep.subr.bf16.mxu0 0
  %150 = vmatpush1.bf16.msra.mxu0 0
  %151 = vmatprep.subr.bf16.mxu0 0
  %152 = vmatpush1.bf16.msra.mxu0 0
  %153 = vmatprep.subr.bf16.mxu0 0
  %154 = vmatpush1.bf16.msra.mxu0 0
  %155 = vmatprep.subr.bf16.mxu0 0
  %156 = vmatpush1.bf16.msra.mxu0 0
  %157 = vmatprep.mubr.bf16.mxu0 0
  %158 = vmatmul.mubr.bf16.gmra.mrb[0].mxu0 %v78
  %v159 = vpop.f32.mrb[0].mxu0
  %v160 = vadd.f32 0.0, %v159
  %v161 = vpop.f32.mrb[0].mxu0
  %v162 = vpop.f32.mrb[0].mxu0
  %v163 = vadd.f32 0.0, %v162
  %v164 = vpop.f32.mrb[0].mxu0
  %165 = vmatprep.mubr.bf16.mxu0 0
  %166 = vmatmul.mubr.bf16.gmra.mrb[0].mxu0 %v81
  %v167 = vpop.f32.mrb[0].mxu0
  %v168 = vadd.f32 0.0, %v167
  %v169 = vpop.f32.mrb[0].mxu0
  %v170 = vpop.f32.mrb[0].mxu0
  %v171 = vadd.f32 0.0, %v170
  %v172 = vpop.f32.mrb[0].mxu0
  %173 = vmatprep.mubr.bf16.mxu0 0
  %174 = vmatmul.mubr.bf16.gmra.mrb[0].mxu0 %v84
  %v175 = vpop.f32.mrb[0].mxu0
  %v176 = vadd.f32 0.0, %v175
  %v177 = vpop.f32.mrb[0].mxu0
  %v178 = vpop.f32.mrb[0].mxu0
  %v179 = vadd.f32 0.0, %v178
  %v180 = vpop.f32.mrb[0].mxu0
  %181 = vmatprep.mubr.bf16.mxu0 0
  %182 = vmatmul.mubr.bf16.gmra.mrb[0].mxu0 %v87
  %v183 = vpop.f32.mrb[0].mxu0
  %v184 = vadd.f32 0.0, %v183
  %v185 = vpop.f32.mrb[0].mxu0
  %v186 = vpop.f32.mrb[0].mxu0
  %v187 = vadd.f32 0.0, %v186
  %v188 = vpop.f32.mrb[0].mxu0
  %189 = vmatprep.mubr.bf16.mxu0 0
  %190 = vmatmul.mubr.bf16.gmra.mrb[0].mxu0 %v90
  %v191 = vpop.f32.mrb[0].mxu0
  %v192 = vadd.f32 0.0, %v191
  %v193 = vpop.f32.mrb[0].mxu0
  %v194 = vpop.f32.mrb[0].mxu0
  %v195 = vadd.f32 0.0, %v194
  %v196 = vpop.f32.mrb[0].mxu0
  %197 = vmatprep.mubr.bf16.mxu0 0
  %198 = vmatmul.mubr.bf16.gmra.mrb[0].mxu0 %v93
  %v199 = vpop.f32.mrb[0].mxu0
  %v200 = vadd.f32 0.0, %v199
  %v201 = vpop.f32.mrb[0].mxu0
  %v202 = vpop.f32.mrb[0].mxu0
  %v203 = vadd.f32 0.0, %v202
  %v204 = vpop.f32.mrb[0].mxu0
  %205 = vmatprep.mubr.bf16.mxu0 0
  %206 = vmatmul.mubr.bf16.gmra.mrb[0].mxu0 %v96
  %v207 = vpop.f32.mrb[0].mxu0
  %v208 = vadd.f32 0.0, %v207
  %v209 = vpop.f32.mrb[0].mxu0
  %v210 = vpop.f32.mrb[0].mxu0
  %v211 = vadd.f32 0.0, %v210
  %v212 = vpop.f32.mrb[0].mxu0
  %213 = vmatprep.mubr.bf16.mxu0 0
  %214 = vmatmul.mubr.bf16.gmra.mrb[0].mxu0 %v99
  %v215 = vpop.f32.mrb[0].mxu0
  %v216 = vadd.f32 0.0, %v215
  %v217 = vpop.f32.mrb[0].mxu0
  %v218 = vpop.f32.mrb[0].mxu0
  %v219 = vadd.f32 0.0, %v218
  %v220 = vpop.f32.mrb[0].mxu0
  %221 = vmatprep.mubr.bf16.mxu0 0
  %222 = vmatmul.mubr.bf16.gmra.mrb[0].mxu0 %v102
  %v223 = vpop.f32.mrb[0].mxu0
  %v224 = vadd.f32 0.0, %v223
  %v225 = vpop.f32.mrb[0].mxu0
  %v226 = vpop.f32.mrb[0].mxu0
  %v227 = vadd.f32 0.0, %v226
  %v228 = vpop.f32.mrb[0].mxu0
  %229 = vmatprep.mubr.bf16.mxu0 0
  %230 = vmatmul.mubr.bf16.gmra.mrb[0].mxu0 %v105
  %v231 = vpop.f32.mrb[0].mxu0
  %v232 = vadd.f32 0.0, %v231
  %v233 = vpop.f32.mrb[0].mxu0
  %v234 = vpop.f32.mrb[0].mxu0
  %v235 = vadd.f32 0.0, %v234
  %v236 = vpop.f32.mrb[0].mxu0
  %237 = vmatprep.mubr.bf16.mxu0 0
  %238 = vmatmul.mubr.bf16.gmra.mrb[0].mxu0 %v108
  %v239 = vpop.f32.mrb[0].mxu0
  %v240 = vadd.f32 0.0, %v239
  %v241 = vpop.f32.mrb[0].mxu0
  %v242 = vpop.f32.mrb[0].mxu0
  %v243 = vadd.f32 0.0, %v242
  %v244 = vpop.f32.mrb[0].mxu0
  %245 = vmatprep.mubr.bf16.mxu0 0
  %246 = vmatmul.mubr.bf16.gmra.mrb[0].mxu0 %v111
  %v247 = vpop.f32.mrb[0].mxu0
  %v248 = vadd.f32 0.0, %v247
  %v249 = vpop.f32.mrb[0].mxu0
  %v250 = vpop.f32.mrb[0].mxu0
  %v251 = vadd.f32 0.0, %v250
  %v252 = vpop.f32.mrb[0].mxu0
  %253 = vmatprep.mubr.bf16.mxu0 0
  %254 = vmatmul.mubr.bf16.gmra.mrb[0].mxu0 %v114
  %v255 = vpop.f32.mrb[0].mxu0
  %v256 = vadd.f32 0.0, %v255
  %v257 = vpop.f32.mrb[0].mxu0
  %v258 = vpop.f32.mrb[0].mxu0
  %v259 = vadd.f32 0.0, %v258
  %v260 = vpop.f32.mrb[0].mxu0
  %261 = vmatprep.mubr.bf16.mxu0 0
  %262 = vmatmul.mubr.bf16.gmra.mrb[0].mxu0 %v117
  %v263 = vpop.f32.mrb[0].mxu0
  %v264 = vadd.f32 0.0, %v263
  %v265 = vpop.f32.mrb[0].mxu0
  %v266 = vpop.f32.mrb[0].mxu0
  %v267 = vadd.f32 0.0, %v266
  %v268 = vpop.f32.mrb[0].mxu0
  %269 = vmatprep.mubr.bf16.mxu0 0
  %270 = vmatmul.mubr.bf16.gmra.mrb[0].mxu0 %v120
  %v271 = vpop.f32.mrb[0].mxu0
  %v272 = vadd.f32 0.0, %v271
  %v273 = vpop.f32.mrb[0].mxu0
  %v274 = vpop.f32.mrb[0].mxu0
  %v275 = vadd.f32 0.0, %v274
  %v276 = vpop.f32.mrb[0].mxu0
  %277 = vmatprep.mubr.bf16.mxu0 0
  %278 = vmatmul.mubr.bf16.gmra.mrb[0].mxu0 %v123
  %v279 = vpop.f32.mrb[0].mxu0
  %v280 = vadd.f32 0.0, %v279
  %v281 = vpop.f32.mrb[0].mxu0
  %v282 = vpop.f32.mrb[0].mxu0
  %v283 = vadd.f32 0.0, %v282
  %v284 = vpop.f32.mrb[0].mxu0
  %285 = vdwg.mxu0
  %v286 = vsel %vm76, %v160, 0.0
  %v287 = vsel %vm76, %v163, 0.0
  %v288 = vadd.f32 %v286, %v287
  %v289 = vsel %vm76, %v168, 0.0
  %v290 = vadd.f32 %v288, %v289
  %v291 = vsel %vm76, %v171, 0.0
  %v292 = vadd.f32 %v290, %v291
  %v293 = vsel %vm76, %v176, 0.0
  %v294 = vadd.f32 %v292, %v293
  %v295 = vsel %vm76, %v179, 0.0
  %v296 = vadd.f32 %v294, %v295
  %v297 = vsel %vm76, %v184, 0.0
  %v298 = vadd.f32 %v296, %v297
  %v299 = vsel %vm76, %v187, 0.0
  %v300 = vadd.f32 %v298, %v299
  %v301 = vsel %vm76, %v192, 0.0
  %v302 = vadd.f32 %v300, %v301
  %v303 = vsel %vm76, %v195, 0.0
  %v304 = vadd.f32 %v302, %v303
  %v305 = vsel %vm76, %v200, 0.0
  %v306 = vadd.f32 %v304, %v305
  %v307 = vsel %vm76, %v203, 0.0
  %v308 = vadd.f32 %v306, %v307
  %v309 = vsel %vm76, %v208, 0.0
  %v310 = vadd.f32 %v308, %v309
  %v311 = vsel %vm76, %v211, 0.0
  %v312 = vadd.f32 %v310, %v311
  %v313 = vsel %vm76, %v216, 0.0
  %v314 = vadd.f32 %v312, %v313
  %v315 = vsel %vm76, %v219, 0.0
  %v316 = vadd.f32 %v314, %v315
  %v317 = vsel %vm76, %v224, 0.0
  %v318 = vadd.f32 %v316, %v317
  %v319 = vsel %vm76, %v227, 0.0
  %v320 = vadd.f32 %v318, %v319
  %v321 = vsel %vm76, %v232, 0.0
  %v322 = vadd.f32 %v320, %v321
  %v323 = vsel %vm76, %v235, 0.0
  %v324 = vadd.f32 %v322, %v323
  %v325 = vsel %vm76, %v240, 0.0
  %v326 = vadd.f32 %v324, %v325
  %v327 = vsel %vm76, %v243, 0.0
  %v328 = vadd.f32 %v326, %v327
  %v329 = vsel %vm76, %v248, 0.0
  %v330 = vadd.f32 %v328, %v329
  %v331 = vsel %vm76, %v251, 0.0
  %v332 = vadd.f32 %v330, %v331
  %v333 = vsel %vm76, %v256, 0.0
  %v334 = vadd.f32 %v332, %v333
  %v335 = vsel %vm76, %v259, 0.0
  %v336 = vadd.f32 %v334, %v335
  %v337 = vsel %vm76, %v264, 0.0
  %v338 = vadd.f32 %v336, %v337
  %v339 = vsel %vm76, %v267, 0.0
  %v340 = vadd.f32 %v338, %v339
  %v341 = vsel %vm76, %v272, 0.0
  %v342 = vadd.f32 %v340, %v341
  %v343 = vsel %vm76, %v275, 0.0
  %v344 = vadd.f32 %v342, %v343
  %v345 = vsel %vm76, %v280, 0.0
  %v346 = vadd.f32 %v344, %v345
  %v347 = vsel %vm76, %v283, 0.0
  %v348 = vadd.f32 %v346, %v347
  %v349 = vrot.slane %v348, 4
  %v350 = vadd.f32 %v348, %v349
  %v351 = vrot.slane %v350, 2
  %v352 = vadd.f32 %v350, %v351
  %v353 = vrot.slane %v352, 1
  %v354 = vadd.f32 %v352, %v353
  %v355 = vmul.f32 %v160, %v160
  %v356 = vmul.f32 %v163, %v163
  %v357 = vmul.f32 %v168, %v168
  %v358 = vmul.f32 %v171, %v171
  %v359 = vmul.f32 %v176, %v176
  %v360 = vmul.f32 %v179, %v179
  %v361 = vmul.f32 %v184, %v184
  %v362 = vmul.f32 %v187, %v187
  %v363 = vmul.f32 %v192, %v192
  %v364 = vmul.f32 %v195, %v195
  %v365 = vmul.f32 %v200, %v200
  %v366 = vmul.f32 %v203, %v203
  %v367 = vmul.f32 %v208, %v208
  %v368 = vmul.f32 %v211, %v211
  %v369 = vmul.f32 %v216, %v216
  %v370 = vmul.f32 %v219, %v219
  %v371 = vmul.f32 %v224, %v224
  %v372 = vmul.f32 %v227, %v227
  %v373 = vmul.f32 %v232, %v232
  %v374 = vmul.f32 %v235, %v235
  %v375 = vmul.f32 %v240, %v240
  %v376 = vmul.f32 %v243, %v243
  %v377 = vmul.f32 %v248, %v248
  %v378 = vmul.f32 %v251, %v251
  %v379 = vmul.f32 %v256, %v256
  %v380 = vmul.f32 %v259, %v259
  %v381 = vmul.f32 %v264, %v264
  %v382 = vmul.f32 %v267, %v267
  %v383 = vmul.f32 %v272, %v272
  %v384 = vmul.f32 %v275, %v275
  %v385 = vmul.f32 %v280, %v280
  %v386 = vmul.f32 %v283, %v283
  %v387 = vsel %vm76, %v355, 0.0
  %v388 = vsel %vm76, %v356, 0.0
  %v389 = vadd.f32 %v387, %v388
  %v390 = vsel %vm76, %v357, 0.0
  %v391 = vadd.f32 %v389, %v390
  %v392 = vsel %vm76, %v358, 0.0
  %v393 = vadd.f32 %v391, %v392
  %v394 = vsel %vm76, %v359, 0.0
  %v395 = vadd.f32 %v393, %v394
  %v396 = vsel %vm76, %v360, 0.0
  %v397 = vadd.f32 %v395, %v396
  %v398 = vsel %vm76, %v361, 0.0
  %v399 = vadd.f32 %v397, %v398
  %v400 = vsel %vm76, %v362, 0.0
  %v401 = vadd.f32 %v399, %v400
  %v402 = vsel %vm76, %v363, 0.0
  %v403 = vadd.f32 %v401, %v402
  %v404 = vsel %vm76, %v364, 0.0
  %v405 = vadd.f32 %v403, %v404
  %v406 = vsel %vm76, %v365, 0.0
  %v407 = vadd.f32 %v405, %v406
  %v408 = vsel %vm76, %v366, 0.0
  %v409 = vadd.f32 %v407, %v408
  %v410 = vsel %vm76, %v367, 0.0
  %v411 = vadd.f32 %v409, %v410
  %v412 = vsel %vm76, %v368, 0.0
  %v413 = vadd.f32 %v411, %v412
  %v414 = vsel %vm76, %v369, 0.0
  %v415 = vadd.f32 %v413, %v414
  %v416 = vsel %vm76, %v370, 0.0
  %v417 = vadd.f32 %v415, %v416
  %v418 = vsel %vm76, %v371, 0.0
  %v419 = vadd.f32 %v417, %v418
  %v420 = vsel %vm76, %v372, 0.0
  %v421 = vadd.f32 %v419, %v420
  %v422 = vsel %vm76, %v373, 0.0
  %v423 = vadd.f32 %v421, %v422
  %v424 = vsel %vm76, %v374, 0.0
  %v425 = vadd.f32 %v423, %v424
  %v426 = vsel %vm76, %v375, 0.0
  %v427 = vadd.f32 %v425, %v426
  %v428 = vsel %vm76, %v376, 0.0
  %v429 = vadd.f32 %v427, %v428
  %v430 = vsel %vm76, %v377, 0.0
  %v431 = vadd.f32 %v429, %v430
  %v432 = vsel %vm76, %v378, 0.0
  %v433 = vadd.f32 %v431, %v432
  %v434 = vsel %vm76, %v379, 0.0
  %v435 = vadd.f32 %v433, %v434
  %v436 = vsel %vm76, %v380, 0.0
  %v437 = vadd.f32 %v435, %v436
  %v438 = vsel %vm76, %v381, 0.0
  %v439 = vadd.f32 %v437, %v438
  %v440 = vsel %vm76, %v382, 0.0
  %v441 = vadd.f32 %v439, %v440
  %v442 = vsel %vm76, %v383, 0.0
  %v443 = vadd.f32 %v441, %v442
  %v444 = vsel %vm76, %v384, 0.0
  %v445 = vadd.f32 %v443, %v444
  %v446 = vsel %vm76, %v385, 0.0
  %v447 = vadd.f32 %v445, %v446
  %v448 = vsel %vm76, %v386, 0.0
  %v449 = vadd.f32 %v447, %v448
  %v450 = vrot.slane %v449, 4
  %v451 = vadd.f32 %v449, %v450
  %v452 = vrot.slane %v451, 2
  %v453 = vadd.f32 %v451, %v452
  %v454 = vrot.slane %v453, 1
  %v455 = vadd.f32 %v453, %v454
  %vm456 = vcmask 1040384
  %v457 = vsel %vm456, %v354, %v455
  %vm458 = vcmask 254976
  %459 = vst.msk [vmem:[%s2] sm:$0x3] %vm458, %v457
  // Predicated region
  $region10: #{transform_attention.13} parent=0 // pred_check
    _
  $region11: #{transform_attention.13} parent=0 // pred_check_branch
    %461 = sbr.rel (0) target = $region13
  $region12: #{transform_attention.13} parent=0 // pred_region
    _
  $region13: #{transform_attention.13} parent=0 // pred_fallthru
    _
  // Predicated region
  $region14: #{transform_attention.13} parent=0 // pred_check
    _
  $region15: #{transform_attention.13} parent=0 // pred_check_branch
    %463 = sbr.rel (0) target = $region17
  $region16: #{transform_attention.13} parent=0 // pred_region
    _
  $region17: #{transform_attention.13} parent=0 // pred_fallthru
    _

// kernel: transform_attention.10
$region0: #{transform_attention.10}
  #allocation0 [shape = 'u32[]', space=smem, size = 0x4, offset = 0x4, fixed_abs, tag = 'smem constant byte address 0x4 - core index']
  #allocation1 [shape = 'u32[144,128]{1,0:T(1,128)}', space=vmem, size = 0x12000, scoped, tag = 'internal scratch']
  %s0 = inlined_call_operand.vmem [shape: f32[128,32], index: 0, kind: input, shape index: {}]
  %s1 = inlined_call_operand.vmem [shape: bf16[32,32], index: 1, kind: input, shape index: {}]
  %s2 = inlined_call_operand.vmem [shape: f32[1,32], index: 2, kind: input, shape index: {}]
  %s3 = inlined_call_operand.vmem [shape: f32[1,32], index: 3, kind: input, shape index: {}]
  %s4 = inlined_call_operand.vmem [shape: bf16[128,32], index: 4, kind: output, shape index: {}]
  %s5 = sld [smem:[#allocation0]]
  $region26: #{transform_attention.10} parent=0
    _
  %s7 = ssub.s32 1, %s5
  %s8 = scalar_select 0, %s7, %s5
  // Predicated region
  $region2: #{transform_attention.10} parent=0 // pred_check
    _
  $region3: #{transform_attention.10} parent=0 // pred_check_branch
    %10 = sbr.rel (0) target = $region5
  $region4: #{transform_attention.10} parent=0 // pred_region
    _
  $region5: #{transform_attention.10} parent=0 // pred_fallthru
    _
  // Predicated region
  $region6: #{transform_attention.10} parent=0 // pred_check
    _
  $region7: #{transform_attention.10} parent=0 // pred_check_branch
    %12 = sbr.rel (0) target = $region9
  $region8: #{transform_attention.10} parent=0 // pred_region
    _
  $region9: #{transform_attention.10} parent=0 // pred_fallthru
    _
  // Predicated region
  $region10: #{transform_attention.10} parent=0 // pred_check
    _
  $region11: #{transform_attention.10} parent=0 // pred_check_branch
    %14 = sbr.rel (0) target = $region13
  $region12: #{transform_attention.10} parent=0 // pred_region
    _
  $region13: #{transform_attention.10} parent=0 // pred_fallthru
    _
  // Predicated region
  $region14: #{transform_attention.10} parent=0 // pred_check
    _
  $region15: #{transform_attention.10} parent=0 // pred_check_branch
    %16 = sbr.rel (0) target = $region17
  $region16: #{transform_attention.10} parent=0 // pred_region
    _
  $region17: #{transform_attention.10} parent=0 // pred_fallthru
    _
  %v18 = vld [vmem:[%s0] sm:$0xff]
  %v19 = vld [vmem:[%s0 + $0x8] sm:$0xff]
  %v20 = vld [vmem:[%s0 + $0x10] sm:$0xff]
  %v21 = vld [vmem:[%s0 + $0x18] sm:$0xff]
  %v22 = vld [vmem:[%s0 + $0x20] sm:$0xff]
  %v23 = vld [vmem:[%s0 + $0x28] sm:$0xff]
  %v24 = vld [vmem:[%s0 + $0x30] sm:$0xff]
  %v25 = vld [vmem:[%s0 + $0x38] sm:$0xff]
  %v26 = vld [vmem:[%s0 + $0x40] sm:$0xff]
  %v27 = vld [vmem:[%s0 + $0x48] sm:$0xff]
  %v28 = vld [vmem:[%s0 + $0x50] sm:$0xff]
  %v29 = vld [vmem:[%s0 + $0x58] sm:$0xff]
  %v30 = vld [vmem:[%s0 + $0x60] sm:$0xff]
  %v31 = vld [vmem:[%s0 + $0x68] sm:$0xff]
  %v32 = vld [vmem:[%s0 + $0x70] sm:$0xff]
  %v33 = vld [vmem:[%s0 + $0x78] sm:$0xff]
  %v34 = vpack.c.bf16 %v19, %v18
  %v35 = vpack.c.bf16 %v21, %v20
  %v36 = vpack.c.bf16 %v23, %v22
  %v37 = vpack.c.bf16 %v25, %v24
  %v38 = vpack.c.bf16 %v27, %v26
  %v39 = vpack.c.bf16 %v29, %v28
  %v40 = vpack.c.bf16 %v31, %v30
  %v41 = vpack.c.bf16 %v33, %v32
  %v42 = vld [vmem:[%s1] sm:$0xf]
  %v43 = vld [vmem:[%s1 + $0x4] sm:$0xf]
  %v44 = vld [vmem:[%s1 + $0x8] sm:$0xf]
  %v45 = vld [vmem:[%s1 + $0xc] sm:$0xf]
  %v50 = vunpack.c.l.b16 %v42
  %v51 = vunpack.c.l.b16 %v43
  %v52 = vunpack.c.l.b16 %v44
  %v53 = vunpack.c.l.b16 %v45
  %v54 = vpack.c.b16 %v51, %v50
  %v55 = vpack.c.b16 %v53, %v52
  %vm58 = vcmask 261120
  %v60 = vsel %vm58, %v34, 0
  %v63 = vsel %vm58, %v35, 0
  %v66 = vsel %vm58, %v36, 0
  %v69 = vsel %vm58, %v37, 0
  %v72 = vsel %vm58, %v38, 0
  %v75 = vsel %vm58, %v39, 0
  %v78 = vsel %vm58, %v40, 0
  %v81 = vsel %vm58, %v41, 0
  %83 = vmatprep.subr.bf16.mxu0 0
  %84 = vmatpush1.bf16.msra.mxu0 %v54
  %85 = vmatprep.subr.bf16.mxu0 0
  %86 = vmatpush1.bf16.msra.mxu0 %v55
  %87 = vmatprep.subr.bf16.mxu0 0
  %88 = vmatpush1.bf16.msra.mxu0 0
  %89 = vmatprep.subr.bf16.mxu0 0
  %90 = vmatpush1.bf16.msra.mxu0 0
  %91 = vmatprep.subr.bf16.mxu0 0
  %92 = vmatpush1.bf16.msra.mxu0 0
  %93 = vmatprep.subr.bf16.mxu0 0
  %94 = vmatpush1.bf16.msra.mxu0 0
  %95 = vmatprep.subr.bf16.mxu0 0
  %96 = vmatpush1.bf16.msra.mxu0 0
  %97 = vmatprep.subr.bf16.mxu0 0
  %98 = vmatpush1.bf16.msra.mxu0 0
  %99 = vmatprep.subr.bf16.mxu0 0
  %100 = vmatpush1.bf16.msra.mxu0 0
  %101 = vmatprep.subr.bf16.mxu0 0
  %102 = vmatpush1.bf16.msra.mxu0 0
  %103 = vmatprep.subr.bf16.mxu0 0
  %104 = vmatpush1.bf16.msra.mxu0 0
  %105 = vmatprep.subr.bf16.mxu0 0
  %106 = vmatpush1.bf16.msra.mxu0 0
  %107 = vmatprep.subr.bf16.mxu0 0
  %108 = vmatpush1.bf16.msra.mxu0 0
  %109 = vmatprep.subr.bf16.mxu0 0
  %110 = vmatpush1.bf16.msra.mxu0 0
  %111 = vmatprep.subr.bf16.mxu0 0
  %112 = vmatpush1.bf16.msra.mxu0 0
  %113 = vmatprep.subr.bf16.mxu0 0
  %114 = vmatpush1.bf16.msra.mxu0 0
  %115 = vmatprep.mubr.bf16.mxu0 0
  %116 = vmatmul.mubr.bf16.gmra.mrb[0].mxu0 %v60
  %v117 = vpop.f32.mrb[0].mxu0
  %v118 = vadd.f32 0.0, %v117
  %v119 = vpop.f32.mrb[0].mxu0
  %v120 = vpop.f32.mrb[0].mxu0
  %v121 = vadd.f32 0.0, %v120
  %v122 = vpop.f32.mrb[0].mxu0
  %123 = vmatprep.mubr.bf16.mxu0 0
  %124 = vmatmul.mubr.bf16.gmra.mrb[0].mxu0 %v63
  %v125 = vpop.f32.mrb[0].mxu0
  %v126 = vadd.f32 0.0, %v125
  %v127 = vpop.f32.mrb[0].mxu0
  %v128 = vpop.f32.mrb[0].mxu0
  %v129 = vadd.f32 0.0, %v128
  %v130 = vpop.f32.mrb[0].mxu0
  %131 = vmatprep.mubr.bf16.mxu0 0
  %132 = vmatmul.mubr.bf16.gmra.mrb[0].mxu0 %v66
  %v133 = vpop.f32.mrb[0].mxu0
  %v134 = vadd.f32 0.0, %v133
  %v135 = vpop.f32.mrb[0].mxu0
  %v136 = vpop.f32.mrb[0].mxu0
  %v137 = vadd.f32 0.0, %v136
  %v138 = vpop.f32.mrb[0].mxu0
  %139 = vmatprep.mubr.bf16.mxu0 0
  %140 = vmatmul.mubr.bf16.gmra.mrb[0].mxu0 %v69
  %v141 = vpop.f32.mrb[0].mxu0
  %v142 = vadd.f32 0.0, %v141
  %v143 = vpop.f32.mrb[0].mxu0
  %v144 = vpop.f32.mrb[0].mxu0
  %v145 = vadd.f32 0.0, %v144
  %v146 = vpop.f32.mrb[0].mxu0
  %147 = vmatprep.mubr.bf16.mxu0 0
  %148 = vmatmul.mubr.bf16.gmra.mrb[0].mxu0 %v72
  %v149 = vpop.f32.mrb[0].mxu0
  %v150 = vadd.f32 0.0, %v149
  %v151 = vpop.f32.mrb[0].mxu0
  %v152 = vpop.f32.mrb[0].mxu0
  %v153 = vadd.f32 0.0, %v152
  %v154 = vpop.f32.mrb[0].mxu0
  %155 = vmatprep.mubr.bf16.mxu0 0
  %156 = vmatmul.mubr.bf16.gmra.mrb[0].mxu0 %v75
  %v157 = vpop.f32.mrb[0].mxu0
  %v158 = vadd.f32 0.0, %v157
  %v159 = vpop.f32.mrb[0].mxu0
  %v160 = vpop.f32.mrb[0].mxu0
  %v161 = vadd.f32 0.0, %v160
  %v162 = vpop.f32.mrb[0].mxu0
  %163 = vmatprep.mubr.bf16.mxu0 0
  %164 = vmatmul.mubr.bf16.gmra.mrb[0].mxu0 %v78
  %v165 = vpop.f32.mrb[0].mxu0
  %v166 = vadd.f32 0.0, %v165
  %v167 = vpop.f32.mrb[0].mxu0
  %v168 = vpop.f32.mrb[0].mxu0
  %v169 = vadd.f32 0.0, %v168
  %v170 = vpop.f32.mrb[0].mxu0
  %171 = vmatprep.mubr.bf16.mxu0 0
  %172 = vmatmul.mubr.bf16.gmra.mrb[0].mxu0 %v81
  %v173 = vpop.f32.mrb[0].mxu0
  %v174 = vadd.f32 0.0, %v173
  %v175 = vpop.f32.mrb[0].mxu0
  %v176 = vpop.f32.mrb[0].mxu0
  %v177 = vadd.f32 0.0, %v176
  %v178 = vpop.f32.mrb[0].mxu0
  %179 = vdwg.mxu0
  %v180 = vld [vmem:[%s2] sm:$0x1]
  %v182 = vlaneseq
  %v183 = vshrl.u32 %v182, 7
  %v184 = vsub.s32 0, %v183
  %v185 = vrot.slane %v180, %v184
  %v187 = vmul.f32 %v118, %v185
  %v188 = vmul.f32 %v121, %v185
  %v189 = vmul.f32 %v126, %v185
  %v190 = vmul.f32 %v129, %v185
  %v191 = vmul.f32 %v134, %v185
  %v192 = vmul.f32 %v137, %v185
  %v193 = vmul.f32 %v142, %v185
  %v194 = vmul.f32 %v145, %v185
  %v195 = vmul.f32 %v150, %v185
  %v196 = vmul.f32 %v153, %v185
  %v197 = vmul.f32 %v158, %v185
  %v198 = vmul.f32 %v161, %v185
  %v199 = vmul.f32 %v166, %v185
  %v200 = vmul.f32 %v169, %v185
  %v201 = vmul.f32 %v174, %v185
  %v202 = vmul.f32 %v177, %v185
  %v203 = vld [vmem:[%s3] sm:$0x1]
  %v205 = vlaneseq
  %v206 = vshrl.u32 %v205, 7
  %v207 = vsub.s32 0, %v206
  %v208 = vrot.slane %v203, %v207
  %v210 = vadd.f32 %v187, %v208
  %v211 = vadd.f32 %v188, %v208
  %v212 = vadd.f32 %v189, %v208
  %v213 = vadd.f32 %v190, %v208
  %v214 = vadd.f32 %v191, %v208
  %v215 = vadd.f32 %v192, %v208
  %v216 = vadd.f32 %v193, %v208
  %v217 = vadd.f32 %v194, %v208
  %v218 = vadd.f32 %v195, %v208
  %v219 = vadd.f32 %v196, %v208
  %v220 = vadd.f32 %v197, %v208
  %v221 = vadd.f32 %v198, %v208
  %v222 = vadd.f32 %v199, %v208
  %v223 = vadd.f32 %v200, %v208
  %v224 = vadd.f32 %v201, %v208
  %v225 = vadd.f32 %v202, %v208
  %v226 = vmax.f32 %v210, 0.0
  %v227 = vmax.f32 %v211, 0.0
  %v228 = vmax.f32 %v212, 0.0
  %v229 = vmax.f32 %v213, 0.0
  %v230 = vmax.f32 %v214, 0.0
  %v231 = vmax.f32 %v215, 0.0
  %v232 = vmax.f32 %v216, 0.0
  %v233 = vmax.f32 %v217, 0.0
  %v234 = vmax.f32 %v218, 0.0
  %v235 = vmax.f32 %v219, 0.0
  %v236 = vmax.f32 %v220, 0.0
  %v237 = vmax.f32 %v221, 0.0
  %v238 = vmax.f32 %v222, 0.0
  %v239 = vmax.f32 %v223, 0.0
  %v240 = vmax.f32 %v224, 0.0
  %v241 = vmax.f32 %v225, 0.0
  %v242 = vpack.c.bf16 %v227, %v226
  %v243 = vpack.c.bf16 %v229, %v228
  %v244 = vpack.c.bf16 %v231, %v230
  %v245 = vpack.c.bf16 %v233, %v232
  %v246 = vpack.c.bf16 %v235, %v234
  %v247 = vpack.c.bf16 %v237, %v236
  %v248 = vpack.c.bf16 %v239, %v238
  %v249 = vpack.c.bf16 %v241, %v240
  %v258 = vunpack.c.l.b16 %v242
  %v259 = vunpack.c.h.b16 %v242
  %v260 = vunpack.c.l.b16 %v243
  %v261 = vunpack.c.h.b16 %v243
  %v262 = vunpack.c.l.b16 %v244
  %v263 = vunpack.c.h.b16 %v244
  %v264 = vunpack.c.l.b16 %v245
  %v265 = vunpack.c.h.b16 %v245
  %v266 = vunpack.c.l.b16 %v246
  %v267 = vunpack.c.h.b16 %v246
  %v268 = vunpack.c.l.b16 %v247
  %v269 = vunpack.c.h.b16 %v247
  %v270 = vunpack.c.l.b16 %v248
  %v271 = vunpack.c.h.b16 %v248
  %v272 = vunpack.c.l.b16 %v249
  %v273 = vunpack.c.h.b16 %v249
  %v274 = vpack.c.b16 %v258, %v258
  %v275 = vpack.c.b16 %v259, %v259
  %v276 = vpack.c.b16 %v260, %v260
  %v277 = vpack.c.b16 %v261, %v261
  %v278 = vpack.c.b16 %v262, %v262
  %v279 = vpack.c.b16 %v263, %v263
  %v280 = vpack.c.b16 %v264, %v264
  %v281 = vpack.c.b16 %v265, %v265
  %v282 = vpack.c.b16 %v266, %v266
  %v283 = vpack.c.b16 %v267, %v267
  %v284 = vpack.c.b16 %v268, %v268
  %v285 = vpack.c.b16 %v269, %v269
  %v286 = vpack.c.b16 %v270, %v270
  %v287 = vpack.c.b16 %v271, %v271
  %v288 = vpack.c.b16 %v272, %v272
  %v289 = vpack.c.b16 %v273, %v273
  %vm306 = vcmask 257024
  %307 = vst.msk [vmem:[%s4] sm:$0xf] %vm306, %v274
  %308 = vst.msk [vmem:[%s4 + $0x4] sm:$0xf] %vm306, %v275
  %309 = vst.msk [vmem:[%s4 + $0x8] sm:$0xf] %vm306, %v276
  %310 = vst.msk [vmem:[%s4 + $0xc] sm:$0xf] %vm306, %v277
  %311 = vst.msk [vmem:[%s4 + $0x10] sm:$0xf] %vm306, %v278
  %312 = vst.msk [vmem:[%s4 + $0x14] sm:$0xf] %vm306, %v279
  %313 = vst.msk [vmem:[%s4 + $0x18] sm:$0xf] %vm306, %v280
  %314 = vst.msk [vmem:[%s4 + $0x1c] sm:$0xf] %vm306, %v281
  %315 = vst.msk [vmem:[%s4 + $0x20] sm:$0xf] %vm306, %v282
  %316 = vst.msk [vmem:[%s4 + $0x24] sm:$0xf] %vm306, %v283
  %317 = vst.msk [vmem:[%s4 + $0x28] sm:$0xf] %vm306, %v284
  %318 = vst.msk [vmem:[%s4 + $0x2c] sm:$0xf] %vm306, %v285
  %319 = vst.msk [vmem:[%s4 + $0x30] sm:$0xf] %vm306, %v286
  %320 = vst.msk [vmem:[%s4 + $0x34] sm:$0xf] %vm306, %v287
  %321 = vst.msk [vmem:[%s4 + $0x38] sm:$0xf] %vm306, %v288
  %322 = vst.msk [vmem:[%s4 + $0x3c] sm:$0xf] %vm306, %v289
  // Predicated region
  $region18: #{transform_attention.10} parent=0 // pred_check
    _
  $region19: #{transform_attention.10} parent=0 // pred_check_branch
    %324 = sbr.rel (0) target = $region21
  $region20: #{transform_attention.10} parent=0 // pred_region
    _
  $region21: #{transform_attention.10} parent=0 // pred_fallthru
    _
  // Predicated region
  $region22: #{transform_attention.10} parent=0 // pred_check
    _
  $region23: #{transform_attention.10} parent=0 // pred_check_branch
    %326 = sbr.rel (0) target = $region25
  $region24: #{transform_attention.10} parent=0 // pred_region
    _
  $region25: #{transform_attention.10} parent=0 // pred_fallthru
    _

// kernel: transform_attention.16
$region0: #{transform_attention.16}
  #allocation0 [shape = 'u32[]', space=smem, size = 0x4, offset = 0x4, fixed_abs, tag = 'smem constant byte address 0x4 - core index']
  #allocation1 [shape = 'u32[144,128]{1,0:T(1,128)}', space=vmem, size = 0x12000, scoped, tag = 'internal scratch']
  %s0 = inlined_call_operand.vmem [shape: bf16[128,32], index: 0, kind: input, shape index: {}]
  %s1 = inlined_call_operand.vmem [shape: bf16[32,32], index: 1, kind: input, shape index: {}]
  %s2 = inlined_call_operand.vmem [shape: f32[1,2,32], index: 2, kind: output, shape index: {}]
  %s3 = sld [smem:[#allocation0]]
  $region18: #{transform_attention.16} parent=0
    _
  %s5 = ssub.s32 1, %s3
  %s6 = scalar_select 0, %s5, %s3
  // Predicated region
  $region2: #{transform_attention.16} parent=0 // pred_check
    _
  $region3: #{transform_attention.16} parent=0 // pred_check_branch
    %8 = sbr.rel (0) target = $region5
  $region4: #{transform_attention.16} parent=0 // pred_region
    _
  $region5: #{transform_attention.16} parent=0 // pred_fallthru
    _
  // Predicated region
  $region6: #{transform_attention.16} parent=0 // pred_check
    _
  $region7: #{transform_attention.16} parent=0 // pred_check_branch
    %10 = sbr.rel (0) target = $region9
  $region8: #{transform_attention.16} parent=0 // pred_region
    _
  $region9: #{transform_attention.16} parent=0 // pred_fallthru
    _
  %v12 = vld [vmem:[%s0] sm:$0xf]
  %v13 = vld [vmem:[%s0 + $0x4] sm:$0xf]
  %v14 = vld [vmem:[%s0 + $0x8] sm:$0xf]
  %v15 = vld [vmem:[%s0 + $0xc] sm:$0xf]
  %v16 = vld [vmem:[%s0 + $0x10] sm:$0xf]
  %v17 = vld [vmem:[%s0 + $0x14] sm:$0xf]
  %v18 = vld [vmem:[%s0 + $0x18] sm:$0xf]
  %v19 = vld [vmem:[%s0 + $0x1c] sm:$0xf]
  %v20 = vld [vmem:[%s0 + $0x20] sm:$0xf]
  %v21 = vld [vmem:[%s0 + $0x24] sm:$0xf]
  %v22 = vld [vmem:[%s0 + $0x28] sm:$0xf]
  %v23 = vld [vmem:[%s0 + $0x2c] sm:$0xf]
  %v24 = vld [vmem:[%s0 + $0x30] sm:$0xf]
  %v25 = vld [vmem:[%s0 + $0x34] sm:$0xf]
  %v26 = vld [vmem:[%s0 + $0x38] sm:$0xf]
  %v27 = vld [vmem:[%s0 + $0x3c] sm:$0xf]
  %v28 = vld [vmem:[%s1] sm:$0xf]
  %v29 = vld [vmem:[%s1 + $0x4] sm:$0xf]
  %v30 = vld [vmem:[%s1 + $0x8] sm:$0xf]
  %v31 = vld [vmem:[%s1 + $0xc] sm:$0xf]
  %v48 = vunpack.c.l.b16 %v12
  %v49 = vunpack.c.l.b16 %v13
  %v50 = vunpack.c.l.b16 %v14
  %v51 = vunpack.c.l.b16 %v15
  %v52 = vunpack.c.l.b16 %v16
  %v53 = vunpack.c.l.b16 %v17
  %v54 = vunpack.c.l.b16 %v18
  %v55 = vunpack.c.l.b16 %v19
  %v56 = vunpack.c.l.b16 %v20
  %v57 = vunpack.c.l.b16 %v21
  %v58 = vunpack.c.l.b16 %v22
  %v59 = vunpack.c.l.b16 %v23
  %v60 = vunpack.c.l.b16 %v24
  %v61 = vunpack.c.l.b16 %v25
  %v62 = vunpack.c.l.b16 %v26
  %v63 = vunpack.c.l.b16 %v27
  %v64 = vpack.c.b16 %v49, %v48
  %v65 = vpack.c.b16 %v51, %v50
  %v66 = vpack.c.b16 %v53, %v52
  %v67 = vpack.c.b16 %v55, %v54
  %v68 = vpack.c.b16 %v57, %v56
  %v69 = vpack.c.b16 %v59, %v58
  %v70 = vpack.c.b16 %v61, %v60
  %v71 = vpack.c.b16 %v63, %v62
  %v76 = vunpack.c.l.b16 %v28
  %v77 = vunpack.c.l.b16 %v29
  %v78 = vunpack.c.l.b16 %v30
  %v79 = vunpack.c.l.b16 %v31
  %v80 = vpack.c.b16 %v77, %v76
  %v81 = vpack.c.b16 %v79, %v78
  %vm84 = vcmask 261120
  %v86 = vsel %vm84, %v64, 0
  %v89 = vsel %vm84, %v65, 0
  %v92 = vsel %vm84, %v66, 0
  %v95 = vsel %vm84, %v67, 0
  %v98 = vsel %vm84, %v68, 0
  %v101 = vsel %vm84, %v69, 0
  %v104 = vsel %vm84, %v70, 0
  %v107 = vsel %vm84, %v71, 0
  %109 = vmatprep.subr.bf16.mxu0 0
  %110 = vmatpush1.bf16.msra.mxu0 %v80
  %111 = vmatprep.subr.bf16.mxu0 0
  %112 = vmatpush1.bf16.msra.mxu0 %v81
  %113 = vmatprep.subr.bf16.mxu0 0
  %114 = vmatpush1.bf16.msra.mxu0 0
  %115 = vmatprep.subr.bf16.mxu0 0
  %116 = vmatpush1.bf16.msra.mxu0 0
  %117 = vmatprep.subr.bf16.mxu0 0
  %118 = vmatpush1.bf16.msra.mxu0 0
  %119 = vmatprep.subr.bf16.mxu0 0
  %120 = vmatpush1.bf16.msra.mxu0 0
  %121 = vmatprep.subr.bf16.mxu0 0
  %122 = vmatpush1.bf16.msra.mxu0 0
  %123 = vmatprep.subr.bf16.mxu0 0
  %124 = vmatpush1.bf16.msra.mxu0 0
  %125 = vmatprep.subr.bf16.mxu0 0
  %126 = vmatpush1.bf16.msra.mxu0 0
  %127 = vmatprep.subr.bf16.mxu0 0
  %128 = vmatpush1.bf16.msra.mxu0 0
  %129 = vmatprep.subr.bf16.mxu0 0
  %130 = vmatpush1.bf16.msra.mxu0 0
  %131 = vmatprep.subr.bf16.mxu0 0
  %132 = vmatpush1.bf16.msra.mxu0 0
  %133 = vmatprep.subr.bf16.mxu0 0
  %134 = vmatpush1.bf16.msra.mxu0 0
  %135 = vmatprep.subr.bf16.mxu0 0
  %136 = vmatpush1.bf16.msra.mxu0 0
  %137 = vmatprep.subr.bf16.mxu0 0
  %138 = vmatpush1.bf16.msra.mxu0 0
  %139 = vmatprep.subr.bf16.mxu0 0
  %140 = vmatpush1.bf16.msra.mxu0 0
  %141 = vmatprep.mubr.bf16.mxu0 0
  %142 = vmatmul.mubr.bf16.gmra.mrb[0].mxu0 %v86
  %v143 = vpop.f32.mrb[0].mxu0
  %v144 = vadd.f32 0.0, %v143
  %v145 = vpop.f32.mrb[0].mxu0
  %v146 = vpop.f32.mrb[0].mxu0
  %v147 = vadd.f32 0.0, %v146
  %v148 = vpop.f32.mrb[0].mxu0
  %149 = vmatprep.mubr.bf16.mxu0 0
  %150 = vmatmul.mubr.bf16.gmra.mrb[0].mxu0 %v89
  %v151 = vpop.f32.mrb[0].mxu0
  %v152 = vadd.f32 0.0, %v151
  %v153 = vpop.f32.mrb[0].mxu0
  %v154 = vpop.f32.mrb[0].mxu0
  %v155 = vadd.f32 0.0, %v154
  %v156 = vpop.f32.mrb[0].mxu0
  %157 = vmatprep.mubr.bf16.mxu0 0
  %158 = vmatmul.mubr.bf16.gmra.mrb[0].mxu0 %v92
  %v159 = vpop.f32.mrb[0].mxu0
  %v160 = vadd.f32 0.0, %v159
  %v161 = vpop.f32.mrb[0].mxu0
  %v162 = vpop.f32.mrb[0].mxu0
  %v163 = vadd.f32 0.0, %v162
  %v164 = vpop.f32.mrb[0].mxu0
  %165 = vmatprep.mubr.bf16.mxu0 0
  %166 = vmatmul.mubr.bf16.gmra.mrb[0].mxu0 %v95
  %v167 = vpop.f32.mrb[0].mxu0
  %v168 = vadd.f32 0.0, %v167
  %v169 = vpop.f32.mrb[0].mxu0
  %v170 = vpop.f32.mrb[0].mxu0
  %v171 = vadd.f32 0.0, %v170
  %v172 = vpop.f32.mrb[0].mxu0
  %173 = vmatprep.mubr.bf16.mxu0 0
  %174 = vmatmul.mubr.bf16.gmra.mrb[0].mxu0 %v98
  %v175 = vpop.f32.mrb[0].mxu0
  %v176 = vadd.f32 0.0, %v175
  %v177 = vpop.f32.mrb[0].mxu0
  %v178 = vpop.f32.mrb[0].mxu0
  %v179 = vadd.f32 0.0, %v178
  %v180 = vpop.f32.mrb[0].mxu0
  %181 = vmatprep.mubr.bf16.mxu0 0
  %182 = vmatmul.mubr.bf16.gmra.mrb[0].mxu0 %v101
  %v183 = vpop.f32.mrb[0].mxu0
  %v184 = vadd.f32 0.0, %v183
  %v185 = vpop.f32.mrb[0].mxu0
  %v186 = vpop.f32.mrb[0].mxu0
  %v187 = vadd.f32 0.0, %v186
  %v188 = vpop.f32.mrb[0].mxu0
  %189 = vmatprep.mubr.bf16.mxu0 0
  %190 = vmatmul.mubr.bf16.gmra.mrb[0].mxu0 %v104
  %v191 = vpop.f32.mrb[0].mxu0
  %v192 = vadd.f32 0.0, %v191
  %v193 = vpop.f32.mrb[0].mxu0
  %v194 = vpop.f32.mrb[0].mxu0
  %v195 = vadd.f32 0.0, %v194
  %v196 = vpop.f32.mrb[0].mxu0
  %197 = vmatprep.mubr.bf16.mxu0 0
  %198 = vmatmul.mubr.bf16.gmra.mrb[0].mxu0 %v107
  %v199 = vpop.f32.mrb[0].mxu0
  %v200 = vadd.f32 0.0, %v199
  %v201 = vpop.f32.mrb[0].mxu0
  %v202 = vpop.f32.mrb[0].mxu0
  %v203 = vadd.f32 0.0, %v202
  %v204 = vpop.f32.mrb[0].mxu0
  %205 = vdwg.mxu0
  %v206 = vsel %vm84, %v144, 0.0
  %v207 = vsel %vm84, %v147, 0.0
  %v208 = vadd.f32 %v206, %v207
  %v209 = vsel %vm84, %v152, 0.0
  %v210 = vadd.f32 %v208, %v209
  %v211 = vsel %vm84, %v155, 0.0
  %v212 = vadd.f32 %v210, %v211
  %v213 = vsel %vm84, %v160, 0.0
  %v214 = vadd.f32 %v212, %v213
  %v215 = vsel %vm84, %v163, 0.0
  %v216 = vadd.f32 %v214, %v215
  %v217 = vsel %vm84, %v168, 0.0
  %v218 = vadd.f32 %v216, %v217
  %v219 = vsel %vm84, %v171, 0.0
  %v220 = vadd.f32 %v218, %v219
  %v221 = vsel %vm84, %v176, 0.0
  %v222 = vadd.f32 %v220, %v221
  %v223 = vsel %vm84, %v179, 0.0
  %v224 = vadd.f32 %v222, %v223
  %v225 = vsel %vm84, %v184, 0.0
  %v226 = vadd.f32 %v224, %v225
  %v227 = vsel %vm84, %v187, 0.0
  %v228 = vadd.f32 %v226, %v227
  %v229 = vsel %vm84, %v192, 0.0
  %v230 = vadd.f32 %v228, %v229
  %v231 = vsel %vm84, %v195, 0.0
  %v232 = vadd.f32 %v230, %v231
  %v233 = vsel %vm84, %v200, 0.0
  %v234 = vadd.f32 %v232, %v233
  %v235 = vsel %vm84, %v203, 0.0
  %v236 = vadd.f32 %v234, %v235
  %v237 = vrot.slane %v236, 4
  %v238 = vadd.f32 %v236, %v237
  %v239 = vrot.slane %v238, 2
  %v240 = vadd.f32 %v238, %v239
  %v241 = vrot.slane %v240, 1
  %v242 = vadd.f32 %v240, %v241
  %v243 = vmul.f32 %v144, %v144
  %v244 = vmul.f32 %v147, %v147
  %v245 = vmul.f32 %v152, %v152
  %v246 = vmul.f32 %v155, %v155
  %v247 = vmul.f32 %v160, %v160
  %v248 = vmul.f32 %v163, %v163
  %v249 = vmul.f32 %v168, %v168
  %v250 = vmul.f32 %v171, %v171
  %v251 = vmul.f32 %v176, %v176
  %v252 = vmul.f32 %v179, %v179
  %v253 = vmul.f32 %v184, %v184
  %v254 = vmul.f32 %v187, %v187
  %v255 = vmul.f32 %v192, %v192
  %v256 = vmul.f32 %v195, %v195
  %v257 = vmul.f32 %v200, %v200
  %v258 = vmul.f32 %v203, %v203
  %v259 = vsel %vm84, %v243, 0.0
  %v260 = vsel %vm84, %v244, 0.0
  %v261 = vadd.f32 %v259, %v260
  %v262 = vsel %vm84, %v245, 0.0
  %v263 = vadd.f32 %v261, %v262
  %v264 = vsel %vm84, %v246, 0.0
  %v265 = vadd.f32 %v263, %v264
  %v266 = vsel %vm84, %v247, 0.0
  %v267 = vadd.f32 %v265, %v266
  %v268 = vsel %vm84, %v248, 0.0
  %v269 = vadd.f32 %v267, %v268
  %v270 = vsel %vm84, %v249, 0.0
  %v271 = vadd.f32 %v269, %v270
  %v272 = vsel %vm84, %v250, 0.0
  %v273 = vadd.f32 %v271, %v272
  %v274 = vsel %vm84, %v251, 0.0
  %v275 = vadd.f32 %v273, %v274
  %v276 = vsel %vm84, %v252, 0.0
  %v277 = vadd.f32 %v275, %v276
  %v278 = vsel %vm84, %v253, 0.0
  %v279 = vadd.f32 %v277, %v278
  %v280 = vsel %vm84, %v254, 0.0
  %v281 = vadd.f32 %v279, %v280
  %v282 = vsel %vm84, %v255, 0.0
  %v283 = vadd.f32 %v281, %v282
  %v284 = vsel %vm84, %v256, 0.0
  %v285 = vadd.f32 %v283, %v284
  %v286 = vsel %vm84, %v257, 0.0
  %v287 = vadd.f32 %v285, %v286
  %v288 = vsel %vm84, %v258, 0.0
  %v289 = vadd.f32 %v287, %v288
  %v290 = vrot.slane %v289, 4
  %v291 = vadd.f32 %v289, %v290
  %v292 = vrot.slane %v291, 2
  %v293 = vadd.f32 %v291, %v292
  %v294 = vrot.slane %v293, 1
  %v295 = vadd.f32 %v293, %v294
  %vm296 = vcmask 1040384
  %v297 = vsel %vm296, %v242, %v295
  %vm298 = vcmask 254976
  %299 = vst.msk [vmem:[%s2] sm:$0x3] %vm298, %v297
  // Predicated region
  $region10: #{transform_attention.16} parent=0 // pred_check
    _
  $region11: #{transform_attention.16} parent=0 // pred_check_branch
    %301 = sbr.rel (0) target = $region13
  $region12: #{transform_attention.16} parent=0 // pred_region
    _
  $region13: #{transform_attention.16} parent=0 // pred_fallthru
    _
  // Predicated region
  $region14: #{transform_attention.16} parent=0 // pred_check
    _
  $region15: #{transform_attention.16} parent=0 // pred_check_branch
    %303 = sbr.rel (0) target = $region17
  $region16: #{transform_attention.16} parent=0 // pred_region
    _
  $region17: #{transform_attention.16} parent=0 // pred_fallthru
    _

// kernel: transform_attention.17
$region0: #{transform_attention.17}
  #allocation0 [shape = 'u32[]', space=smem, size = 0x4, offset = 0x4, fixed_abs, tag = 'smem constant byte address 0x4 - core index']
  #allocation1 [shape = 'u32[144,128]{1,0:T(1,128)}', space=vmem, size = 0x12000, scoped, tag = 'internal scratch']
  %s0 = inlined_call_operand.vmem [shape: bf16[128,32], index: 0, kind: input, shape index: {}]
  %s1 = inlined_call_operand.vmem [shape: bf16[32,32], index: 1, kind: input, shape index: {}]
  %s2 = inlined_call_operand.vmem [shape: f32[1,32], index: 2, kind: input, shape index: {}]
  %s3 = inlined_call_operand.vmem [shape: f32[1,32], index: 3, kind: input, shape index: {}]
  %s4 = inlined_call_operand.hbm [shape: f32[128,32], index: 4, kind: output, shape index: {}]
  %s5 = sld [smem:[#allocation0]]
  $region26: #{transform_attention.17} parent=0
    _
  %s7 = ssub.s32 1, %s5
  %s8 = scalar_select 0, %s7, %s5
  $region1: #{transform_attention.17} parent=0
    #allocation2 [shape = 'u8[65536]{0}', space=vmem, size = 0x10000, scoped, tag = 'output window, operand 0, single buffered']
    #allocation3 [shape = 's32[1]{0}', space=sflag, size = 0x4, scoped, tag = 'scoped memory for transform_attention.17']
    %9 = vsyncpa [#allocation3], 0
    // Predicated region
    $region2: #{transform_attention.17} parent=1 // pred_check
      _
    $region3: #{transform_attention.17} parent=1 // pred_check_branch
      %11 = sbr.rel (0) target = $region5
    $region4: #{transform_attention.17} parent=1 // pred_region
      _
    $region5: #{transform_attention.17} parent=1 // pred_fallthru
      _
    // Predicated region
    $region6: #{transform_attention.17} parent=1 // pred_check
      _
    $region7: #{transform_attention.17} parent=1 // pred_check_branch
      %13 = sbr.rel (0) target = $region9
    $region8: #{transform_attention.17} parent=1 // pred_region
      _
    $region9: #{transform_attention.17} parent=1 // pred_fallthru
      _
    // Predicated region
    $region10: #{transform_attention.17} parent=1 // pred_check
      _
    $region11: #{transform_attention.17} parent=1 // pred_check_branch
      %15 = sbr.rel (0) target = $region13
    $region12: #{transform_attention.17} parent=1 // pred_region
      _
    $region13: #{transform_attention.17} parent=1 // pred_fallthru
      _
    // Predicated region
    $region14: #{transform_attention.17} parent=1 // pred_check
      _
    $region15: #{transform_attention.17} parent=1 // pred_check_branch
      %17 = sbr.rel (0) target = $region17
    $region16: #{transform_attention.17} parent=1 // pred_region
      _
    $region17: #{transform_attention.17} parent=1 // pred_fallthru
      _
    %v19 = vld [vmem:[%s0] sm:$0xf]
    %v20 = vld [vmem:[%s0 + $0x4] sm:$0xf]
    %v21 = vld [vmem:[%s0 + $0x8] sm:$0xf]
    %v22 = vld [vmem:[%s0 + $0xc] sm:$0xf]
    %v23 = vld [vmem:[%s0 + $0x10] sm:$0xf]
    %v24 = vld [vmem:[%s0 + $0x14] sm:$0xf]
    %v25 = vld [vmem:[%s0 + $0x18] sm:$0xf]
    %v26 = vld [vmem:[%s0 + $0x1c] sm:$0xf]
    %v27 = vld [vmem:[%s0 + $0x20] sm:$0xf]
    %v28 = vld [vmem:[%s0 + $0x24] sm:$0xf]
    %v29 = vld [vmem:[%s0 + $0x28] sm:$0xf]
    %v30 = vld [vmem:[%s0 + $0x2c] sm:$0xf]
    %v31 = vld [vmem:[%s0 + $0x30] sm:$0xf]
    %v32 = vld [vmem:[%s0 + $0x34] sm:$0xf]
    %v33 = vld [vmem:[%s0 + $0x38] sm:$0xf]
    %v34 = vld [vmem:[%s0 + $0x3c] sm:$0xf]
    %v35 = vld [vmem:[%s1] sm:$0xf]
    %v36 = vld [vmem:[%s1 + $0x4] sm:$0xf]
    %v37 = vld [vmem:[%s1 + $0x8] sm:$0xf]
    %v38 = vld [vmem:[%s1 + $0xc] sm:$0xf]
    %v55 = vunpack.c.l.b16 %v19
    %v56 = vunpack.c.l.b16 %v20
    %v57 = vunpack.c.l.b16 %v21
    %v58 = vunpack.c.l.b16 %v22
    %v59 = vunpack.c.l.b16 %v23
    %v60 = vunpack.c.l.b16 %v24
    %v61 = vunpack.c.l.b16 %v25
    %v62 = vunpack.c.l.b16 %v26
    %v63 = vunpack.c.l.b16 %v27
    %v64 = vunpack.c.l.b16 %v28
    %v65 = vunpack.c.l.b16 %v29
    %v66 = vunpack.c.l.b16 %v30
    %v67 = vunpack.c.l.b16 %v31
    %v68 = vunpack.c.l.b16 %v32
    %v69 = vunpack.c.l.b16 %v33
    %v70 = vunpack.c.l.b16 %v34
    %v71 = vpack.c.b16 %v56, %v55
    %v72 = vpack.c.b16 %v58, %v57
    %v73 = vpack.c.b16 %v60, %v59
    %v74 = vpack.c.b16 %v62, %v61
    %v75 = vpack.c.b16 %v64, %v63
    %v76 = vpack.c.b16 %v66, %v65
    %v77 = vpack.c.b16 %v68, %v67
    %v78 = vpack.c.b16 %v70, %v69
    %v83 = vunpack.c.l.b16 %v35
    %v84 = vunpack.c.l.b16 %v36
    %v85 = vunpack.c.l.b16 %v37
    %v86 = vunpack.c.l.b16 %v38
    %v87 = vpack.c.b16 %v84, %v83
    %v88 = vpack.c.b16 %v86, %v85
    %vm91 = vcmask 261120
    %v93 = vsel %vm91, %v71, 0
    %v96 = vsel %vm91, %v72, 0
    %v99 = vsel %vm91, %v73, 0
    %v102 = vsel %vm91, %v74, 0
    %v105 = vsel %vm91, %v75, 0
    %v108 = vsel %vm91, %v76, 0
    %v111 = vsel %vm91, %v77, 0
    %v114 = vsel %vm91, %v78, 0
    %116 = vmatprep.subr.bf16.mxu0 0
    %117 = vmatpush1.bf16.msra.mxu0 %v87
    %118 = vmatprep.subr.bf16.mxu0 0
    %119 = vmatpush1.bf16.msra.mxu0 %v88
    %120 = vmatprep.subr.bf16.mxu0 0
    %121 = vmatpush1.bf16.msra.mxu0 0
    %122 = vmatprep.subr.bf16.mxu0 0
    %123 = vmatpush1.bf16.msra.mxu0 0
    %124 = vmatprep.subr.bf16.mxu0 0
    %125 = vmatpush1.bf16.msra.mxu0 0
    %126 = vmatprep.subr.bf16.mxu0 0
    %127 = vmatpush1.bf16.msra.mxu0 0
    %128 = vmatprep.subr.bf16.mxu0 0
    %129 = vmatpush1.bf16.msra.mxu0 0
    %130 = vmatprep.subr.bf16.mxu0 0
    %131 = vmatpush1.bf16.msra.mxu0 0
    %132 = vmatprep.subr.bf16.mxu0 0
    %133 = vmatpush1.bf16.msra.mxu0 0
    %134 = vmatprep.subr.bf16.mxu0 0
    %135 = vmatpush1.bf16.msra.mxu0 0
    %136 = vmatprep.subr.bf16.mxu0 0
    %137 = vmatpush1.bf16.msra.mxu0 0
    %138 = vmatprep.subr.bf16.mxu0 0
    %139 = vmatpush1.bf16.msra.mxu0 0
    %140 = vmatprep.subr.bf16.mxu0 0
    %141 = vmatpush1.bf16.msra.mxu0 0
    %142 = vmatprep.subr.bf16.mxu0 0
    %143 = vmatpush1.bf16.msra.mxu0 0
    %144 = vmatprep.subr.bf16.mxu0 0
    %145 = vmatpush1.bf16.msra.mxu0 0
    %146 = vmatprep.subr.bf16.mxu0 0
    %147 = vmatpush1.bf16.msra.mxu0 0
    %148 = vmatprep.mubr.bf16.mxu0 0
    %149 = vmatmul.mubr.bf16.gmra.mrb[0].mxu0 %v93
    %v150 = vpop.f32.mrb[0].mxu0
    %v151 = vadd.f32 0.0, %v150
    %v152 = vpop.f32.mrb[0].mxu0
    %v153 = vpop.f32.mrb[0].mxu0
    %v154 = vadd.f32 0.0, %v153
    %v155 = vpop.f32.mrb[0].mxu0
    %156 = vmatprep.mubr.bf16.mxu0 0
    %157 = vmatmul.mubr.bf16.gmra.mrb[0].mxu0 %v96
    %v158 = vpop.f32.mrb[0].mxu0
    %v159 = vadd.f32 0.0, %v158
    %v160 = vpop.f32.mrb[0].mxu0
    %v161 = vpop.f32.mrb[0].mxu0
    %v162 = vadd.f32 0.0, %v161
    %v163 = vpop.f32.mrb[0].mxu0
    %164 = vmatprep.mubr.bf16.mxu0 0
    %165 = vmatmul.mubr.bf16.gmra.mrb[0].mxu0 %v99
    %v166 = vpop.f32.mrb[0].mxu0
    %v167 = vadd.f32 0.0, %v166
    %v168 = vpop.f32.mrb[0].mxu0
    %v169 = vpop.f32.mrb[0].mxu0
    %v170 = vadd.f32 0.0, %v169
    %v171 = vpop.f32.mrb[0].mxu0
    %172 = vmatprep.mubr.bf16.mxu0 0
    %173 = vmatmul.mubr.bf16.gmra.mrb[0].mxu0 %v102
    %v174 = vpop.f32.mrb[0].mxu0
    %v175 = vadd.f32 0.0, %v174
    %v176 = vpop.f32.mrb[0].mxu0
    %v177 = vpop.f32.mrb[0].mxu0
    %v178 = vadd.f32 0.0, %v177
    %v179 = vpop.f32.mrb[0].mxu0
    %180 = vmatprep.mubr.bf16.mxu0 0
    %181 = vmatmul.mubr.bf16.gmra.mrb[0].mxu0 %v105
    %v182 = vpop.f32.mrb[0].mxu0
    %v183 = vadd.f32 0.0, %v182
    %v184 = vpop.f32.mrb[0].mxu0
    %v185 = vpop.f32.mrb[0].mxu0
    %v186 = vadd.f32 0.0, %v185
    %v187 = vpop.f32.mrb[0].mxu0
    %188 = vmatprep.mubr.bf16.mxu0 0
    %189 = vmatmul.mubr.bf16.gmra.mrb[0].mxu0 %v108
    %v190 = vpop.f32.mrb[0].mxu0
    %v191 = vadd.f32 0.0, %v190
    %v192 = vpop.f32.mrb[0].mxu0
    %v193 = vpop.f32.mrb[0].mxu0
    %v194 = vadd.f32 0.0, %v193
    %v195 = vpop.f32.mrb[0].mxu0
    %196 = vmatprep.mubr.bf16.mxu0 0
    %197 = vmatmul.mubr.bf16.gmra.mrb[0].mxu0 %v111
    %v198 = vpop.f32.mrb[0].mxu0
    %v199 = vadd.f32 0.0, %v198
    %v200 = vpop.f32.mrb[0].mxu0
    %v201 = vpop.f32.mrb[0].mxu0
    %v202 = vadd.f32 0.0, %v201
    %v203 = vpop.f32.mrb[0].mxu0
    %204 = vmatprep.mubr.bf16.mxu0 0
    %205 = vmatmul.mubr.bf16.gmra.mrb[0].mxu0 %v114
    %v206 = vpop.f32.mrb[0].mxu0
    %v207 = vadd.f32 0.0, %v206
    %v208 = vpop.f32.mrb[0].mxu0
    %v209 = vpop.f32.mrb[0].mxu0
    %v210 = vadd.f32 0.0, %v209
    %v211 = vpop.f32.mrb[0].mxu0
    %212 = vdwg.mxu0
    %v213 = vld [vmem:[%s2] sm:$0x1]
    %v215 = vlaneseq
    %v216 = vshrl.u32 %v215, 7
    %v217 = vsub.s32 0, %v216
    %v218 = vrot.slane %v213, %v217
    %v220 = vmul.f32 %v151, %v218
    %v221 = vmul.f32 %v154, %v218
    %v222 = vmul.f32 %v159, %v218
    %v223 = vmul.f32 %v162, %v218
    %v224 = vmul.f32 %v167, %v218
    %v225 = vmul.f32 %v170, %v218
    %v226 = vmul.f32 %v175, %v218
    %v227 = vmul.f32 %v178, %v218
    %v228 = vmul.f32 %v183, %v218
    %v229 = vmul.f32 %v186, %v218
    %v230 = vmul.f32 %v191, %v218
    %v231 = vmul.f32 %v194, %v218
    %v232 = vmul.f32 %v199, %v218
    %v233 = vmul.f32 %v202, %v218
    %v234 = vmul.f32 %v207, %v218
    %v235 = vmul.f32 %v210, %v218
    %v236 = vld [vmem:[%s3] sm:$0x1]
    %v238 = vlaneseq
    %v239 = vshrl.u32 %v238, 7
    %v240 = vsub.s32 0, %v239
    %v241 = vrot.slane %v236, %v240
    %v243 = vadd.f32 %v220, %v241
    %v244 = vadd.f32 %v221, %v241
    %v245 = vadd.f32 %v222, %v241
    %v246 = vadd.f32 %v223, %v241
    %v247 = vadd.f32 %v224, %v241
    %v248 = vadd.f32 %v225, %v241
    %v249 = vadd.f32 %v226, %v241
    %v250 = vadd.f32 %v227, %v241
    %v251 = vadd.f32 %v228, %v241
    %v252 = vadd.f32 %v229, %v241
    %v253 = vadd.f32 %v230, %v241
    %v254 = vadd.f32 %v231, %v241
    %v255 = vadd.f32 %v232, %v241
    %v256 = vadd.f32 %v233, %v241
    %v257 = vadd.f32 %v234, %v241
    %v258 = vadd.f32 %v235, %v241
    %v259 = vmax.f32 %v243, 0.0
    %v260 = vmax.f32 %v244, 0.0
    %v261 = vmax.f32 %v245, 0.0
    %v262 = vmax.f32 %v246, 0.0
    %v263 = vmax.f32 %v247, 0.0
    %v264 = vmax.f32 %v248, 0.0
    %v265 = vmax.f32 %v249, 0.0
    %v266 = vmax.f32 %v250, 0.0
    %v267 = vmax.f32 %v251, 0.0
    %v268 = vmax.f32 %v252, 0.0
    %v269 = vmax.f32 %v253, 0.0
    %v270 = vmax.f32 %v254, 0.0
    %v271 = vmax.f32 %v255, 0.0
    %v272 = vmax.f32 %v256, 0.0
    %v273 = vmax.f32 %v257, 0.0
    %v274 = vmax.f32 %v258, 0.0
    %275 = vst.msk [vmem:[#allocation2] sm:$0xff] %vm91, %v259
    %276 = vst.msk [vmem:[#allocation2 + $0x8] sm:$0xff] %vm91, %v260
    %277 = vst.msk [vmem:[#allocation2 + $0x10] sm:$0xff] %vm91, %v261
    %278 = vst.msk [vmem:[#allocation2 + $0x18] sm:$0xff] %vm91, %v262
    %279 = vst.msk [vmem:[#allocation2 + $0x20] sm:$0xff] %vm91, %v263
    %280 = vst.msk [vmem:[#allocation2 + $0x28] sm:$0xff] %vm91, %v264
    %281 = vst.msk [vmem:[#allocation2 + $0x30] sm:$0xff] %vm91, %v265
    %282 = vst.msk [vmem:[#allocation2 + $0x38] sm:$0xff] %vm91, %v266
    %283 = vst.msk [vmem:[#allocation2 + $0x40] sm:$0xff] %vm91, %v267
    %284 = vst.msk [vmem:[#allocation2 + $0x48] sm:$0xff] %vm91, %v268
    %285 = vst.msk [vmem:[#allocation2 + $0x50] sm:$0xff] %vm91, %v269
    %286 = vst.msk [vmem:[#allocation2 + $0x58] sm:$0xff] %vm91, %v270
    %287 = vst.msk [vmem:[#allocation2 + $0x60] sm:$0xff] %vm91, %v271
    %288 = vst.msk [vmem:[#allocation2 + $0x68] sm:$0xff] %vm91, %v272
    %289 = vst.msk [vmem:[#allocation2 + $0x70] sm:$0xff] %vm91, %v273
    %290 = vst.msk [vmem:[#allocation2 + $0x78] sm:$0xff] %vm91, %v274
    // Predicated region
    $region18: #{transform_attention.17} parent=1 // pred_check
      _
    $region19: #{transform_attention.17} parent=1 // pred_check_branch
      %292 = sbr.rel (0) target = $region21
    $region20: #{transform_attention.17} parent=1 // pred_region
      %s294 = ssub.s32 2048, 2048
      %295 = vsyncadd [#allocation3], %s294
      %s296 = sshll.u32 [#allocation2], 4
      %s297 = int_to_ptr.vmem [resolvable:$true] %s296
      %302 = dma.vmem_to_hbm [thread:$0]  %s297, 2048, %s4, [#allocation3], 128, 128, 8
    $region21: #{transform_attention.17} parent=1 // pred_fallthru
      _
    // Predicated region
    $region22: #{transform_attention.17} parent=1 // pred_check
      _
    $region23: #{transform_attention.17} parent=1 // pred_check_branch
      %304 = sbr.rel (0) target = $region25
    $region24: #{transform_attention.17} parent=1 // pred_region
      %305 = dma.done [#allocation3], 2048
    $region25: #{transform_attention.17} parent=1 // pred_fallthru
      _
    %306 = vsyncpa [#allocation3], 1

// kernel: transform_attention.15
$region0: #{transform_attention.15}
  #allocation0 [shape = 'u32[]', space=smem, size = 0x4, offset = 0x4, fixed_abs, tag = 'smem constant byte address 0x4 - core index']
  #allocation1 [shape = 'u32[144,128]{1,0:T(1,128)}', space=vmem, size = 0x12000, scoped, tag = 'internal scratch']
  %s0 = inlined_call_operand.vmem [shape: bf16[2,4,16,32], index: 0, kind: input, shape index: {}]
  %s1 = inlined_call_operand.vmem [shape: bf16[2,8,16,32], index: 1, kind: input, shape index: {}]
  %s2 = inlined_call_operand.vmem [shape: bf16[2,8,16,32], index: 2, kind: input, shape index: {}]
  %s3 = inlined_call_operand.vmem [shape: bf16[2,4,16,32], index: 3, kind: output, shape index: {}]
  %s4 = sld [smem:[#allocation0]]
  $region45: #{transform_attention.15} parent=0
    _
  %s6 = ssub.s32 1, %s4
  %s7 = scalar_select 0, %s6, %s4
  loop: start=0, step=1, limit=4
  $region2: #{transform_attention.15} parent=0 // loop_pre_header
    _
  $region3: #{transform_attention.15} parent=0 // loop_header
    %s9 = sphi 0, %s13
    %p10 = scmp.ge.s32.totalorder %s9, 4
    %s16 = sphi 0, %s28
    %s17 = sphi 0, %s24
    %s18 = sphi 0, %s16
    %s19 = sphi 0, %s17
    %s20 = sphi 0, %s18
    %s21 = sphi 0, %s19
    %s33 = sphi 0, %s35
    %s36 = sphi 0, %s33
    %s37 = sphi 0, %s36
    %s53 = sphi 0, %s37
    %s61 = sphi 0, %s63
    %s64 = sphi 0, %s61
    %s65 = sphi 0, %s64
    %s81 = sphi 0, %s65
    %s89 = sphi 0, %s91
    %s92 = sphi 0, %s89
    %s93 = sphi 0, %s92
    %s109 = sphi 0, %s93
    %s117 = sphi 0, %s119
    %s120 = sphi 0, %s117
    %s121 = sphi 0, %s120
    %s137 = sphi 0, %s121
  $region4: #{transform_attention.15} parent=0 // loop_header_branch
    %12 = sbr.rel (%p10) target = $region8
  $region5: #{transform_attention.15} parent=0 // loop_body
    %s14 = ssub.s32 %s9, 1
    %s15 = ssub.s32 %s9, 2
    %s22 = sadd.s32 1, %s17
    %p23 = scmp.ge.s32.totalorder %s22, 1
    %s24 = scalar_select %p23, 0, %s22
    %s25 = sadd.s32 1, %s16
    %s26 = scalar_select %p23, %s25, %s16
    %p27 = scmp.ge.s32.totalorder %s26, 2
    %s28 = scalar_select %p27, 0, %s26
    %s29 = ssub.s32 %s16, %s28
    %s30 = ssub.s32 %s17, %s24
    %s31 = sor.u32 %s29, %s30
    %p32 = scmp.eq.s32.totalorder %s31, 0
    %s34 = sadd.s32 %s33, 1
    %s35 = scalar_select %p32, %s33, %s34
    %p38 = pneg %p32
    %p39 = scmp.eq.s32.totalorder %s9, 1
    %p40 = por %p38, %p39
    %p41 = scmp.ne.s32.totalorder %s33, %s36
    %p42 = scmp.eq.s32.totalorder %s9, 0
    %p43 = por %p41, %p42
    %p44 = scmp.ne.s32.totalorder %s33, %s36
    %p45 = scmp.eq.s32.totalorder %s14, 1
    %p46 = por %p44, %p45
    %p47 = scmp.ne.s32.totalorder %s36, %s37
    %p48 = scmp.eq.s32.totalorder %s14, 0
    %p49 = por %p47, %p48
    %p50 = scmp.ne.s32.totalorder %s36, %s37
    %p51 = scmp.eq.s32.totalorder %s15, 1
    %p52 = por %p50, %p51
    %p54 = scmp.ne.s32.totalorder %s37, %s53
    %p55 = scmp.eq.s32.totalorder %s15, 0
    %p56 = por %p54, %p55
    %s57 = ssub.s32 %s16, %s28
    %s58 = ssub.s32 %s17, %s24
    %s59 = sor.u32 %s57, %s58
    %p60 = scmp.eq.s32.totalorder %s59, 0
    %s62 = sadd.s32 %s61, 1
    %s63 = scalar_select %p60, %s61, %s62
    %p66 = pneg %p60
    %p67 = scmp.eq.s32.totalorder %s9, 1
    %p68 = por %p66, %p67
    %p69 = scmp.ne.s32.totalorder %s61, %s64
    %p70 = scmp.eq.s32.totalorder %s9, 0
    %p71 = por %p69, %p70
    %p72 = scmp.ne.s32.totalorder %s61, %s64
    %p73 = scmp.eq.s32.totalorder %s14, 1
    %p74 = por %p72, %p73
    %p75 = scmp.ne.s32.totalorder %s64, %s65
    %p76 = scmp.eq.s32.totalorder %s14, 0
    %p77 = por %p75, %p76
    %p78 = scmp.ne.s32.totalorder %s64, %s65
    %p79 = scmp.eq.s32.totalorder %s15, 1
    %p80 = por %p78, %p79
    %p82 = scmp.ne.s32.totalorder %s65, %s81
    %p83 = scmp.eq.s32.totalorder %s15, 0
    %p84 = por %p82, %p83
    %s85 = ssub.s32 %s16, %s28
    %s86 = ssub.s32 %s17, %s24
    %s87 = sor.u32 %s85, %s86
    %p88 = scmp.eq.s32.totalorder %s87, 0
    %s90 = sadd.s32 %s89, 1
    %s91 = scalar_select %p88, %s89, %s90
    %p94 = pneg %p88
    %p95 = scmp.eq.s32.totalorder %s9, 1
    %p96 = por %p94, %p95
    %p97 = scmp.ne.s32.totalorder %s89, %s92
    %p98 = scmp.eq.s32.totalorder %s9, 0
    %p99 = por %p97, %p98
    %p100 = scmp.ne.s32.totalorder %s89, %s92
    %p101 = scmp.eq.s32.totalorder %s14, 1
    %p102 = por %p100, %p101
    %p103 = scmp.ne.s32.totalorder %s92, %s93
    %p104 = scmp.eq.s32.totalorder %s14, 0
    %p105 = por %p103, %p104
    %p106 = scmp.ne.s32.totalorder %s92, %s93
    %p107 = scmp.eq.s32.totalorder %s15, 1
    %p108 = por %p106, %p107
    %p110 = scmp.ne.s32.totalorder %s93, %s109
    %p111 = scmp.eq.s32.totalorder %s15, 0
    %p112 = por %p110, %p111
    %s113 = ssub.s32 %s16, %s28
    %s114 = ssub.s32 %s17, %s24
    %s115 = sor.u32 %s113, %s114
    %p116 = scmp.eq.s32.totalorder %s115, 0
    %s118 = sadd.s32 %s117, 1
    %s119 = scalar_select %p116, %s117, %s118
    %p122 = pneg %p116
    %p123 = scmp.eq.s32.totalorder %s9, 1
    %p124 = por %p122, %p123
    %p125 = scmp.ne.s32.totalorder %s117, %s120
    %p126 = scmp.eq.s32.totalorder %s9, 0
    %p127 = por %p125, %p126
    %p128 = scmp.ne.s32.totalorder %s117, %s120
    %p129 = scmp.eq.s32.totalorder %s14, 1
    %p130 = por %p128, %p129
    %p131 = scmp.ne.s32.totalorder %s120, %s121
    %p132 = scmp.eq.s32.totalorder %s14, 0
    %p133 = por %p131, %p132
    %p134 = scmp.ne.s32.totalorder %s120, %s121
    %p135 = scmp.eq.s32.totalorder %s15, 1
    %p136 = por %p134, %p135
    %p138 = scmp.ne.s32.totalorder %s121, %s137
    %p139 = scmp.eq.s32.totalorder %s15, 0
    %p140 = por %p138, %p139
    %p141 = scmp.le.s32.totalorder 1, %s9
    %p142 = scmp.lt.s32.totalorder %s9, 3
    %p143 = pnand %p141, %p142
    %p144 = pneg %p143
    // Predicated region
    $region9: #{transform_attention.15} parent=5 // pred_check
      _
    $region10: #{transform_attention.15} parent=5 // pred_check_branch
      %146 = sbr.rel (%p143) target = $region12
    $region11: #{transform_attention.15} parent=5 // pred_region
      %s147 = ssub.s32 %s9, 1
    $region12: #{transform_attention.15} parent=5 // pred_fallthru
      _
    %p148 = scmp.lt.s32.totalorder %s9, 2
    // Predicated region
    $region13: #{transform_attention.15} parent=5 // pred_check
      %p149 = pneg %p148
    $region14: #{transform_attention.15} parent=5 // pred_check_branch
      %151 = sbr.rel (%p149) target = $region16
    $region15: #{transform_attention.15} parent=5 // pred_region
      // Predicated region
      $region17: #{transform_attention.15} parent=15 // pred_check
        %p152 = pneg %p43
      $region18: #{transform_attention.15} parent=15 // pred_check_branch
        %154 = sbr.rel (%p152) target = $region20
      $region19: #{transform_attention.15} parent=15 // pred_region
        %s155 = smul.u32 2, %s17
        %p156 = scmp.lt.s32.totalorder %s16, 1
        %s157 = scalar_select %p156, %s16, 1
        %p158 = scmp.lt.s32.totalorder %s155, 1
        %s159 = scalar_select %p158, %s155, 1
        %s160 = smul.addr %s157, 8
        %s161 = sadd.s32 %s159, %s160
        %s162 = smul.addr %s161, 4
        %s163 = scalar_lea.vmem %s0, %s162
        %s164 = smul.u32 2, %s17
      $region20: #{transform_attention.15} parent=15 // pred_fallthru
        _
      // Predicated region
      $region21: #{transform_attention.15} parent=15 // pred_check
        %p165 = pneg %p71
      $region22: #{transform_attention.15} parent=15 // pred_check_branch
        %167 = sbr.rel (%p165) target = $region24
      $region23: #{transform_attention.15} parent=15 // pred_region
        %s168 = smul.u32 2, %s17
        %p169 = scmp.lt.s32.totalorder %s16, 1
        %s170 = scalar_select %p169, %s16, 1
        %p171 = scmp.lt.s32.totalorder %s168, 1
        %s172 = scalar_select %p171, %s168, 1
        %s173 = smul.addr %s170, 16
        %s174 = sadd.s32 %s172, %s173
        %s175 = smul.addr %s174, 4
        %s176 = scalar_lea.vmem %s1, %s175
        %s177 = smul.u32 2, %s17
      $region24: #{transform_attention.15} parent=15 // pred_fallthru
        _
      // Predicated region
      $region25: #{transform_attention.15} parent=15 // pred_check
        %p178 = pneg %p99
      $region26: #{transform_attention.15} parent=15 // pred_check_branch
        %180 = sbr.rel (%p178) target = $region28
      $region27: #{transform_attention.15} parent=15 // pred_region
        %s181 = smul.u32 2, %s17
        %p182 = scmp.lt.s32.totalorder %s16, 1
        %s183 = scalar_select %p182, %s16, 1
        %p184 = scmp.lt.s32.totalorder %s181, 1
        %s185 = scalar_select %p184, %s181, 1
        %s186 = smul.addr %s183, 16
        %s187 = sadd.s32 %s185, %s186
        %s188 = smul.addr %s187, 4
        %s189 = scalar_lea.vmem %s2, %s188
        %s190 = smul.u32 2, %s17
      $region28: #{transform_attention.15} parent=15 // pred_fallthru
        _
    $region16: #{transform_attention.15} parent=5 // pred_fallthru
      _
    %p191 = scmp.le.s32.totalorder 1, %s9
    %p192 = scmp.lt.s32.totalorder %s9, 3
    %p193 = pnand %p191, %p192
    %p194 = pneg %p193
    // Predicated region
    $region29: #{transform_attention.15} parent=5 // pred_check
      _
    $region30: #{transform_attention.15} parent=5 // pred_check_branch
      %196 = sbr.rel (%p193) target = $region32
    $region31: #{transform_attention.15} parent=5 // pred_region
      %s197 = ssub.s32 %s9, 1
      %s198 = smul.u32 2, %s19
      %p199 = scmp.lt.s32.totalorder %s18, 1
      %s200 = scalar_select %p199, %s18, 1
      %p201 = scmp.lt.s32.totalorder %s198, 1
      %s202 = scalar_select %p201, %s198, 1
      %s203 = smul.addr %s200, 8
      %s204 = sadd.s32 %s202, %s203
      %s205 = smul.addr %s204, 4
      %s206 = scalar_lea.vmem %s0, %s205
      %p207 = pneg %p49
      %p208 = pneg %p46
      %s209 = smul.u32 2, %s19
      %p210 = scmp.lt.s32.totalorder %s18, 1
      %s211 = scalar_select %p210, %s18, 1
      %p212 = scmp.lt.s32.totalorder %s209, 1
      %s213 = scalar_select %p212, %s209, 1
      %s214 = smul.addr %s211, 16
      %s215 = sadd.s32 %s213, %s214
      %s216 = smul.addr %s215, 4
      %s217 = scalar_lea.vmem %s1, %s216
      %p218 = pneg %p77
      %p219 = pneg %p74
      %s220 = smul.u32 2, %s19
      %p221 = scmp.lt.s32.totalorder %s18, 1
      %s222 = scalar_select %p221, %s18, 1
      %p223 = scmp.lt.s32.totalorder %s220, 1
      %s224 = scalar_select %p223, %s220, 1
      %s225 = smul.addr %s222, 16
      %s226 = sadd.s32 %s224, %s225
      %s227 = smul.addr %s226, 4
      %s228 = scalar_lea.vmem %s2, %s227
      %p229 = pneg %p105
      %p230 = pneg %p102
      %p231 = pneg %p133
      %p232 = pneg %p130
      %s233 = smul.u32 2, %s19
      %p234 = scmp.lt.s32.totalorder %s18, 1
      %s235 = scalar_select %p234, %s18, 1
      %p236 = scmp.lt.s32.totalorder %s233, 1
      %s237 = scalar_select %p236, %s233, 1
      %s238 = smul.addr %s235, 8
      %s239 = sadd.s32 %s237, %s238
      %s240 = smul.addr %s239, 4
      %s241 = scalar_lea.vmem %s3, %s240
      %s242 = smul.u32 2, %s19
      %p243 = scmp.lt.s32.totalorder %s18, 1
      %s244 = scalar_select %p243, %s18, 1
      %p245 = scmp.lt.s32.totalorder %s242, 1
      %s246 = scalar_select %p245, %s242, 1
      %s247 = smul.addr %s244, 8
      %s248 = sadd.s32 %s246, %s247
      %s249 = smul.addr %s248, 4
      %s250 = scalar_lea.vmem %s0, %s249
      %s251 = smul.u32 2, %s19
      %s252 = smul.u32 2, %s19
      %p253 = scmp.lt.s32.totalorder %s18, 1
      %s254 = scalar_select %p253, %s18, 1
      %p255 = scmp.lt.s32.totalorder %s252, 1
      %s256 = scalar_select %p255, %s252, 1
      %s257 = smul.addr %s254, 16
      %s258 = sadd.s32 %s256, %s257
      %s259 = smul.addr %s258, 4
      %s260 = scalar_lea.vmem %s1, %s259
      %s261 = smul.u32 2, %s19
      %s262 = smul.u32 2, %s19
      %p263 = scmp.lt.s32.totalorder %s18, 1
      %s264 = scalar_select %p263, %s18, 1
      %p265 = scmp.lt.s32.totalorder %s262, 1
      %s266 = scalar_select %p265, %s262, 1
      %s267 = smul.addr %s264, 16
      %s268 = sadd.s32 %s266, %s267
      %s269 = smul.addr %s268, 4
      %s270 = scalar_lea.vmem %s2, %s269
      %s271 = smul.u32 2, %s19
      %s272 = smul.u32 2, %s19
      %p273 = scmp.lt.s32.totalorder %s18, 1
      %s274 = scalar_select %p273, %s18, 1
      %p275 = scmp.lt.s32.totalorder %s272, 1
      %s276 = scalar_select %p275, %s272, 1
      %s277 = smul.addr %s274, 8
      %s278 = sadd.s32 %s276, %s277
      %s279 = smul.addr %s278, 4
      %s280 = scalar_lea.vmem %s3, %s279
      %s281 = smul.u32 2, %s19
      %v283 = vld [vmem:[%s250] sm:$0xf]
      %v284 = vld [vmem:[%s250 + $0x4] sm:$0xf]
      %v285 = vld [vmem:[%s250 + $0x8] sm:$0xf]
      %v286 = vld [vmem:[%s250 + $0xc] sm:$0xf]
      %v287 = vld [vmem:[%s250 + $0x10] sm:$0xf]
      %v288 = vld [vmem:[%s250 + $0x14] sm:$0xf]
      %v289 = vld [vmem:[%s250 + $0x18] sm:$0xf]
      %v290 = vld [vmem:[%s250 + $0x1c] sm:$0xf]
      %v293 = vpack.i.b16 %v285, %v283
      %v294 = vshrl.u32 %v283, 16
      %v295 = vshrl.u32 %v285, 16
      %v296 = vpack.i.b16 %v295, %v294
      %v299 = vpack.i.b16 %v289, %v287
      %v300 = vshrl.u32 %v287, 16
      %v301 = vshrl.u32 %v289, 16
      %v302 = vpack.i.b16 %v301, %v300
      %v305 = vpack.i.b16 %v286, %v284
      %v306 = vshrl.u32 %v284, 16
      %v307 = vshrl.u32 %v286, 16
      %v308 = vpack.i.b16 %v307, %v306
      %v311 = vpack.i.b16 %v290, %v288
      %v312 = vshrl.u32 %v288, 16
      %v313 = vshrl.u32 %v290, 16
      %v314 = vpack.i.b16 %v313, %v312
      %v317 = vunpack.c.l.s4 1983009808
      %v318 = vunpack.c.0.s8 %v317
      %v319 = vlaneseq
      %v320 = vshrl.u32 %v319, 7
      %v321 = vsub.s32 %v318, %v320
      %v322 = vrot.slane %v293, %v321
      %v325 = vunpack.c.l.s4 1983009808
      %v326 = vunpack.c.0.s8 %v325
      %v327 = vlaneseq
      %v328 = vshrl.u32 %v327, 7
      %v329 = vsub.s32 %v326, %v328
      %v330 = vrot.slane %v299, %v329
      %v331 = vcombine.low %v322, %v330
      %v332 = vcombine.high %v322, %v330
      %v334 = vunpack.c.l.s4 1934713408
      %v335 = vunpack.c.0.s8 %v334
      %v336 = vlaneseq
      %v337 = vshrl.u32 %v336, 7
      %v338 = vsub.s32 %v335, %v337
      %v339 = vrot.slane %v331, %v338
      %v341 = vunpack.c.l.s4 1934713408
      %v342 = vunpack.c.0.s8 %v341
      %v343 = vlaneseq
      %v344 = vshrl.u32 %v343, 7
      %v345 = vsub.s32 %v342, %v344
      %v346 = vrot.slane %v332, %v345
      %v347 = vcombine.high %v339, 0
      %v348 = vcombine.high %v346, 0
      %v351 = vunpack.c.l.s4 1983009808
      %v352 = vunpack.c.0.s8 %v351
      %v353 = vlaneseq
      %v354 = vshrl.u32 %v353, 7
      %v355 = vsub.s32 %v352, %v354
      %v356 = vrot.slane %v296, %v355
      %v359 = vunpack.c.l.s4 1983009808
      %v360 = vunpack.c.0.s8 %v359
      %v361 = vlaneseq
      %v362 = vshrl.u32 %v361, 7
      %v363 = vsub.s32 %v360, %v362
      %v364 = vrot.slane %v302, %v363
      %v365 = vcombine.low %v356, %v364
      %v366 = vcombine.high %v356, %v364
      %v368 = vunpack.c.l.s4 1934713408
      %v369 = vunpack.c.0.s8 %v368
      %v370 = vlaneseq
      %v371 = vshrl.u32 %v370, 7
      %v372 = vsub.s32 %v369, %v371
      %v373 = vrot.slane %v365, %v372
      %v375 = vunpack.c.l.s4 1934713408
      %v376 = vunpack.c.0.s8 %v375
      %v377 = vlaneseq
      %v378 = vshrl.u32 %v377, 7
      %v379 = vsub.s32 %v376, %v378
      %v380 = vrot.slane %v366, %v379
      %v381 = vcombine.high %v373, 0
      %v382 = vcombine.high %v380, 0
      %v385 = vunpack.c.l.s4 1983009808
      %v386 = vunpack.c.0.s8 %v385
      %v387 = vlaneseq
      %v388 = vshrl.u32 %v387, 7
      %v389 = vsub.s32 %v386, %v388
      %v390 = vrot.slane %v305, %v389
      %v393 = vunpack.c.l.s4 1983009808
      %v394 = vunpack.c.0.s8 %v393
      %v395 = vlaneseq
      %v396 = vshrl.u32 %v395, 7
      %v397 = vsub.s32 %v394, %v396
      %v398 = vrot.slane %v311, %v397
      %v399 = vcombine.low %v390, %v398
      %v400 = vcombine.high %v390, %v398
      %v402 = vunpack.c.l.s4 1934713408
      %v403 = vunpack.c.0.s8 %v402
      %v404 = vlaneseq
      %v405 = vshrl.u32 %v404, 7
      %v406 = vsub.s32 %v403, %v405
      %v407 = vrot.slane %v399, %v406
      %v409 = vunpack.c.l.s4 1934713408
      %v410 = vunpack.c.0.s8 %v409
      %v411 = vlaneseq
      %v412 = vshrl.u32 %v411, 7
      %v413 = vsub.s32 %v410, %v412
      %v414 = vrot.slane %v400, %v413
      %v415 = vcombine.high %v407, 0
      %v416 = vcombine.high %v414, 0
      %v419 = vunpack.c.l.s4 1983009808
      %v420 = vunpack.c.0.s8 %v419
      %v421 = vlaneseq
      %v422 = vshrl.u32 %v421, 7
      %v423 = vsub.s32 %v420, %v422
      %v424 = vrot.slane %v308, %v423
      %v427 = vunpack.c.l.s4 1983009808
      %v428 = vunpack.c.0.s8 %v427
      %v429 = vlaneseq
      %v430 = vshrl.u32 %v429, 7
      %v431 = vsub.s32 %v428, %v430
      %v432 = vrot.slane %v314, %v431
      %v433 = vcombine.low %v424, %v432
      %v434 = vcombine.high %v424, %v432
      %v436 = vunpack.c.l.s4 1934713408
      %v437 = vunpack.c.0.s8 %v436
      %v438 = vlaneseq
      %v439 = vshrl.u32 %v438, 7
      %v440 = vsub.s32 %v437, %v439
      %v441 = vrot.slane %v433, %v440
      %v443 = vunpack.c.l.s4 1934713408
      %v444 = vunpack.c.0.s8 %v443
      %v445 = vlaneseq
      %v446 = vshrl.u32 %v445, 7
      %v447 = vsub.s32 %v444, %v446
      %v448 = vrot.slane %v434, %v447
      %v449 = vcombine.high %v441, 0
      %v450 = vcombine.high %v448, 0
      %v451 = vld [vmem:[%s260] sm:$0xf]
      %v452 = vld [vmem:[%s260 + $0x4] sm:$0xf]
      %v453 = vld [vmem:[%s260 + $0x8] sm:$0xf]
      %v454 = vld [vmem:[%s260 + $0xc] sm:$0xf]
      %v455 = vld [vmem:[%s260 + $0x10] sm:$0xf]
      %v456 = vld [vmem:[%s260 + $0x14] sm:$0xf]
      %v457 = vld [vmem:[%s260 + $0x18] sm:$0xf]
      %v458 = vld [vmem:[%s260 + $0x1c] sm:$0xf]
      %v459 = vld [vmem:[%s260 + $0x20] sm:$0xf]
      %v460 = vld [vmem:[%s260 + $0x24] sm:$0xf]
      %v461 = vld [vmem:[%s260 + $0x28] sm:$0xf]
      %v462 = vld [vmem:[%s260 + $0x2c] sm:$0xf]
      %v463 = vld [vmem:[%s260 + $0x30] sm:$0xf]
      %v464 = vld [vmem:[%s260 + $0x34] sm:$0xf]
      %v465 = vld [vmem:[%s260 + $0x38] sm:$0xf]
      %v466 = vld [vmem:[%s260 + $0x3c] sm:$0xf]
      %v467 = vcombine.low %v451, %v459
      %v469 = vunpack.c.l.s4 1983009808
      %v470 = vunpack.c.0.s8 %v469
      %v471 = vlaneseq
      %v472 = vshrl.u32 %v471, 7
      %v473 = vsub.s32 %v470, %v472
      %v474 = vrot.slane %v467, %v473
      %v475 = vcombine.low %v455, %v463
      %v477 = vunpack.c.l.s4 1983009808
      %v478 = vunpack.c.0.s8 %v477
      %v479 = vlaneseq
      %v480 = vshrl.u32 %v479, 7
      %v481 = vsub.s32 %v478, %v480
      %v482 = vrot.slane %v475, %v481
      %v483 = vcombine.low %v474, %v482
      %v484 = vcombine.high %v474, %v482
      %v486 = vunpack.c.l.s4 1934713408
      %v487 = vunpack.c.0.s8 %v486
      %v488 = vlaneseq
      %v489 = vshrl.u32 %v488, 7
      %v490 = vsub.s32 %v487, %v489
      %v491 = vrot.slane %v483, %v490
      %v493 = vunpack.c.l.s4 1934713408
      %v494 = vunpack.c.0.s8 %v493
      %v495 = vlaneseq
      %v496 = vshrl.u32 %v495, 7
      %v497 = vsub.s32 %v494, %v496
      %v498 = vrot.slane %v484, %v497
      %v499 = vcombine.high %v491, 0
      %v500 = vcombine.high %v498, 0
      %v501 = vcombine.low %v453, %v461
      %v503 = vunpack.c.l.s4 1983009808
      %v504 = vunpack.c.0.s8 %v503
      %v505 = vlaneseq
      %v506 = vshrl.u32 %v505, 7
      %v507 = vsub.s32 %v504, %v506
      %v508 = vrot.slane %v501, %v507
      %v509 = vcombine.low %v457, %v465
      %v511 = vunpack.c.l.s4 1983009808
      %v512 = vunpack.c.0.s8 %v511
      %v513 = vlaneseq
      %v514 = vshrl.u32 %v513, 7
      %v515 = vsub.s32 %v512, %v514
      %v516 = vrot.slane %v509, %v515
      %v517 = vcombine.low %v508, %v516
      %v518 = vcombine.high %v508, %v516
      %v520 = vunpack.c.l.s4 1934713408
      %v521 = vunpack.c.0.s8 %v520
      %v522 = vlaneseq
      %v523 = vshrl.u32 %v522, 7
      %v524 = vsub.s32 %v521, %v523
      %v525 = vrot.slane %v517, %v524
      %v527 = vunpack.c.l.s4 1934713408
      %v528 = vunpack.c.0.s8 %v527
      %v529 = vlaneseq
      %v530 = vshrl.u32 %v529, 7
      %v531 = vsub.s32 %v528, %v530
      %v532 = vrot.slane %v518, %v531
      %v533 = vcombine.high %v525, 0
      %v534 = vcombine.high %v532, 0
      %v535 = vcombine.low %v452, %v460
      %v537 = vunpack.c.l.s4 1983009808
      %v538 = vunpack.c.0.s8 %v537
      %v539 = vlaneseq
      %v540 = vshrl.u32 %v539, 7
      %v541 = vsub.s32 %v538, %v540
      %v542 = vrot.slane %v535, %v541
      %v543 = vcombine.low %v456, %v464
      %v545 = vunpack.c.l.s4 1983009808
      %v546 = vunpack.c.0.s8 %v545
      %v547 = vlaneseq
      %v548 = vshrl.u32 %v547, 7
      %v549 = vsub.s32 %v546, %v548
      %v550 = vrot.slane %v543, %v549
      %v551 = vcombine.low %v542, %v550
      %v552 = vcombine.high %v542, %v550
      %v554 = vunpack.c.l.s4 1934713408
      %v555 = vunpack.c.0.s8 %v554
      %v556 = vlaneseq
      %v557 = vshrl.u32 %v556, 7
      %v558 = vsub.s32 %v555, %v557
      %v559 = vrot.slane %v551, %v558
      %v561 = vunpack.c.l.s4 1934713408
      %v562 = vunpack.c.0.s8 %v561
      %v563 = vlaneseq
      %v564 = vshrl.u32 %v563, 7
      %v565 = vsub.s32 %v562, %v564
      %v566 = vrot.slane %v552, %v565
      %v567 = vcombine.high %v559, 0
      %v568 = vcombine.high %v566, 0
      %v569 = vcombine.low %v454, %v462
      %v571 = vunpack.c.l.s4 1983009808
      %v572 = vunpack.c.0.s8 %v571
      %v573 = vlaneseq
      %v574 = vshrl.u32 %v573, 7
      %v575 = vsub.s32 %v572, %v574
      %v576 = vrot.slane %v569, %v575
      %v577 = vcombine.low %v458, %v466
      %v579 = vunpack.c.l.s4 1983009808
      %v580 = vunpack.c.0.s8 %v579
      %v581 = vlaneseq
      %v582 = vshrl.u32 %v581, 7
      %v583 = vsub.s32 %v580, %v582
      %v584 = vrot.slane %v577, %v583
      %v585 = vcombine.low %v576, %v584
      %v586 = vcombine.high %v576, %v584
      %v588 = vunpack.c.l.s4 1934713408
      %v589 = vunpack.c.0.s8 %v588
      %v590 = vlaneseq
      %v591 = vshrl.u32 %v590, 7
      %v592 = vsub.s32 %v589, %v591
      %v593 = vrot.slane %v585, %v592
      %v595 = vunpack.c.l.s4 1934713408
      %v596 = vunpack.c.0.s8 %v595
      %v597 = vlaneseq
      %v598 = vshrl.u32 %v597, 7
      %v599 = vsub.s32 %v596, %v598
      %v600 = vrot.slane %v586, %v599
      %v601 = vcombine.high %v593, 0
      %v602 = vcombine.high %v600, 0
      %v605 = vpack.i.b16 %v525, %v491
      %v606 = vshrl.u32 %v491, 16
      %v607 = vshrl.u32 %v525, 16
      %v608 = vpack.i.b16 %v607, %v606
      %v611 = vpack.i.b16 %v533, %v499
      %v612 = vshrl.u32 %v499, 16
      %v613 = vshrl.u32 %v533, 16
      %v614 = vpack.i.b16 %v613, %v612
      %v617 = vpack.i.b16 %v532, %v498
      %v618 = vshrl.u32 %v498, 16
      %v619 = vshrl.u32 %v532, 16
      %v620 = vpack.i.b16 %v619, %v618
      %v623 = vpack.i.b16 %v534, %v500
      %v624 = vshrl.u32 %v500, 16
      %v625 = vshrl.u32 %v534, 16
      %v626 = vpack.i.b16 %v625, %v624
      %v629 = vpack.i.b16 %v593, %v559
      %v630 = vshrl.u32 %v559, 16
      %v631 = vshrl.u32 %v593, 16
      %v632 = vpack.i.b16 %v631, %v630
      %v635 = vpack.i.b16 %v601, %v567
      %v636 = vshrl.u32 %v567, 16
      %v637 = vshrl.u32 %v601, 16
      %v638 = vpack.i.b16 %v637, %v636
      %v641 = vpack.i.b16 %v600, %v566
      %v642 = vshrl.u32 %v566, 16
      %v643 = vshrl.u32 %v600, 16
      %v644 = vpack.i.b16 %v643, %v642
      %v647 = vpack.i.b16 %v602, %v568
      %v648 = vshrl.u32 %v568, 16
      %v649 = vshrl.u32 %v602, 16
      %v650 = vpack.i.b16 %v649, %v648
      %v651 = vld [vmem:[%s270] sm:$0xf]
      %v652 = vld [vmem:[%s270 + $0x4] sm:$0xf]
      %v653 = vld [vmem:[%s270 + $0x8] sm:$0xf]
      %v654 = vld [vmem:[%s270 + $0xc] sm:$0xf]
      %v655 = vld [vmem:[%s270 + $0x10] sm:$0xf]
      %v656 = vld [vmem:[%s270 + $0x14] sm:$0xf]
      %v657 = vld [vmem:[%s270 + $0x18] sm:$0xf]
      %v658 = vld [vmem:[%s270 + $0x1c] sm:$0xf]
      %v659 = vld [vmem:[%s270 + $0x20] sm:$0xf]
      %v660 = vld [vmem:[%s270 + $0x24] sm:$0xf]
      %v661 = vld [vmem:[%s270 + $0x28] sm:$0xf]
      %v662 = vld [vmem:[%s270 + $0x2c] sm:$0xf]
      %v663 = vld [vmem:[%s270 + $0x30] sm:$0xf]
      %v664 = vld [vmem:[%s270 + $0x34] sm:$0xf]
      %v665 = vld [vmem:[%s270 + $0x38] sm:$0xf]
      %v666 = vld [vmem:[%s270 + $0x3c] sm:$0xf]
      %v667 = vcombine.low %v651, %v659
      %v669 = vunpack.c.l.s4 1983009808
      %v670 = vunpack.c.0.s8 %v669
      %v671 = vlaneseq
      %v672 = vshrl.u32 %v671, 7
      %v673 = vsub.s32 %v670, %v672
      %v674 = vrot.slane %v667, %v673
      %v675 = vcombine.low %v655, %v663
      %v677 = vunpack.c.l.s4 1983009808
      %v678 = vunpack.c.0.s8 %v677
      %v679 = vlaneseq
      %v680 = vshrl.u32 %v679, 7
      %v681 = vsub.s32 %v678, %v680
      %v682 = vrot.slane %v675, %v681
      %v683 = vcombine.low %v674, %v682
      %v684 = vcombine.high %v674, %v682
      %v686 = vunpack.c.l.s4 1934713408
      %v687 = vunpack.c.0.s8 %v686
      %v688 = vlaneseq
      %v689 = vshrl.u32 %v688, 7
      %v690 = vsub.s32 %v687, %v689
      %v691 = vrot.slane %v683, %v690
      %v693 = vunpack.c.l.s4 1934713408
      %v694 = vunpack.c.0.s8 %v693
      %v695 = vlaneseq
      %v696 = vshrl.u32 %v695, 7
      %v697 = vsub.s32 %v694, %v696
      %v698 = vrot.slane %v684, %v697
      %v699 = vcombine.high %v691, 0
      %v700 = vcombine.high %v698, 0
      %v701 = vcombine.low %v653, %v661
      %v703 = vunpack.c.l.s4 1983009808
      %v704 = vunpack.c.0.s8 %v703
      %v705 = vlaneseq
      %v706 = vshrl.u32 %v705, 7
      %v707 = vsub.s32 %v704, %v706
      %v708 = vrot.slane %v701, %v707
      %v709 = vcombine.low %v657, %v665
      %v711 = vunpack.c.l.s4 1983009808
      %v712 = vunpack.c.0.s8 %v711
      %v713 = vlaneseq
      %v714 = vshrl.u32 %v713, 7
      %v715 = vsub.s32 %v712, %v714
      %v716 = vrot.slane %v709, %v715
      %v717 = vcombine.low %v708, %v716
      %v718 = vcombine.high %v708, %v716
      %v720 = vunpack.c.l.s4 1934713408
      %v721 = vunpack.c.0.s8 %v720
      %v722 = vlaneseq
      %v723 = vshrl.u32 %v722, 7
      %v724 = vsub.s32 %v721, %v723
      %v725 = vrot.slane %v717, %v724
      %v727 = vunpack.c.l.s4 1934713408
      %v728 = vunpack.c.0.s8 %v727
      %v729 = vlaneseq
      %v730 = vshrl.u32 %v729, 7
      %v731 = vsub.s32 %v728, %v730
      %v732 = vrot.slane %v718, %v731
      %v733 = vcombine.high %v725, 0
      %v734 = vcombine.high %v732, 0
      %v735 = vcombine.low %v652, %v660
      %v737 = vunpack.c.l.s4 1983009808
      %v738 = vunpack.c.0.s8 %v737
      %v739 = vlaneseq
      %v740 = vshrl.u32 %v739, 7
      %v741 = vsub.s32 %v738, %v740
      %v742 = vrot.slane %v735, %v741
      %v743 = vcombine.low %v656, %v664
      %v745 = vunpack.c.l.s4 1983009808
      %v746 = vunpack.c.0.s8 %v745
      %v747 = vlaneseq
      %v748 = vshrl.u32 %v747, 7
      %v749 = vsub.s32 %v746, %v748
      %v750 = vrot.slane %v743, %v749
      %v751 = vcombine.low %v742, %v750
      %v752 = vcombine.high %v742, %v750
      %v754 = vunpack.c.l.s4 1934713408
      %v755 = vunpack.c.0.s8 %v754
      %v756 = vlaneseq
      %v757 = vshrl.u32 %v756, 7
      %v758 = vsub.s32 %v755, %v757
      %v759 = vrot.slane %v751, %v758
      %v761 = vunpack.c.l.s4 1934713408
      %v762 = vunpack.c.0.s8 %v761
      %v763 = vlaneseq
      %v764 = vshrl.u32 %v763, 7
      %v765 = vsub.s32 %v762, %v764
      %v766 = vrot.slane %v752, %v765
      %v767 = vcombine.high %v759, 0
      %v768 = vcombine.high %v766, 0
      %v769 = vcombine.low %v654, %v662
      %v771 = vunpack.c.l.s4 1983009808
      %v772 = vunpack.c.0.s8 %v771
      %v773 = vlaneseq
      %v774 = vshrl.u32 %v773, 7
      %v775 = vsub.s32 %v772, %v774
      %v776 = vrot.slane %v769, %v775
      %v777 = vcombine.low %v658, %v666
      %v779 = vunpack.c.l.s4 1983009808
      %v780 = vunpack.c.0.s8 %v779
      %v781 = vlaneseq
      %v782 = vshrl.u32 %v781, 7
      %v783 = vsub.s32 %v780, %v782
      %v784 = vrot.slane %v777, %v783
      %v785 = vcombine.low %v776, %v784
      %v786 = vcombine.high %v776, %v784
      %v788 = vunpack.c.l.s4 1934713408
      %v789 = vunpack.c.0.s8 %v788
      %v790 = vlaneseq
      %v791 = vshrl.u32 %v790, 7
      %v792 = vsub.s32 %v789, %v791
      %v793 = vrot.slane %v785, %v792
      %v795 = vunpack.c.l.s4 1934713408
      %v796 = vunpack.c.0.s8 %v795
      %v797 = vlaneseq
      %v798 = vshrl.u32 %v797, 7
      %v799 = vsub.s32 %v796, %v798
      %v800 = vrot.slane %v786, %v799
      %v801 = vcombine.high %v793, 0
      %v802 = vcombine.high %v800, 0
      %v805 = vpack.i.b16 %v725, %v691
      %v806 = vshrl.u32 %v691, 16
      %v807 = vshrl.u32 %v725, 16
      %v808 = vpack.i.b16 %v807, %v806
      %v811 = vpack.i.b16 %v733, %v699
      %v812 = vshrl.u32 %v699, 16
      %v813 = vshrl.u32 %v733, 16
      %v814 = vpack.i.b16 %v813, %v812
      %v817 = vpack.i.b16 %v732, %v698
      %v818 = vshrl.u32 %v698, 16
      %v819 = vshrl.u32 %v732, 16
      %v820 = vpack.i.b16 %v819, %v818
      %v823 = vpack.i.b16 %v734, %v700
      %v824 = vshrl.u32 %v700, 16
      %v825 = vshrl.u32 %v734, 16
      %v826 = vpack.i.b16 %v825, %v824
      %v829 = vpack.i.b16 %v793, %v759
      %v830 = vshrl.u32 %v759, 16
      %v831 = vshrl.u32 %v793, 16
      %v832 = vpack.i.b16 %v831, %v830
      %v835 = vpack.i.b16 %v801, %v767
      %v836 = vshrl.u32 %v767, 16
      %v837 = vshrl.u32 %v801, 16
      %v838 = vpack.i.b16 %v837, %v836
      %v841 = vpack.i.b16 %v800, %v766
      %v842 = vshrl.u32 %v766, 16
      %v843 = vshrl.u32 %v800, 16
      %v844 = vpack.i.b16 %v843, %v842
      %v847 = vpack.i.b16 %v802, %v768
      %v848 = vshrl.u32 %v768, 16
      %v849 = vshrl.u32 %v802, 16
      %v850 = vpack.i.b16 %v849, %v848
      %vm851 = vcmask 64512
      %v853 = vsel %vm851, %v339, 0
      %v856 = vsel %vm851, %v605, 0
      %858 = vmatprep.subr.bf16.mxu0 0
      %859 = vmatpush1.bf16.xpose.msra.mxu0 %v856
      %860 = vmatprep.subr.bf16.mxu0 0
      %861 = vmatpush1.bf16.xpose.msra.mxu0 0
      %862 = vmatprep.subr.bf16.mxu0 0
      %863 = vmatpush1.bf16.xpose.msra.mxu0 0
      %864 = vmatprep.subr.bf16.mxu0 0
      %865 = vmatpush1.bf16.xpose.msra.mxu0 0
      %866 = vmatprep.subr.bf16.mxu0 0
      %867 = vmatpush1.bf16.xpose.msra.mxu0 0
      %868 = vmatprep.subr.bf16.mxu0 0
      %869 = vmatpush1.bf16.xpose.msra.mxu0 0
      %870 = vmatprep.subr.bf16.mxu0 0
      %871 = vmatpush1.bf16.xpose.msra.mxu0 0
      %872 = vmatprep.subr.bf16.mxu0 0
      %873 = vmatpush1.bf16.xpose.msra.mxu0 0
      %874 = vmatprep.subr.bf16.mxu0 0
      %875 = vmatpush1.bf16.xpose.msra.mxu0 0
      %876 = vmatprep.subr.bf16.mxu0 0
      %877 = vmatpush1.bf16.xpose.msra.mxu0 0
      %878 = vmatprep.subr.bf16.mxu0 0
      %879 = vmatpush1.bf16.xpose.msra.mxu0 0
      %880 = vmatprep.subr.bf16.mxu0 0
      %881 = vmatpush1.bf16.xpose.msra.mxu0 0
      %882 = vmatprep.subr.bf16.mxu0 0
      %883 = vmatpush1.bf16.xpose.msra.mxu0 0
      %884 = vmatprep.subr.bf16.mxu0 0
      %885 = vmatpush1.bf16.xpose.msra.mxu0 0
      %886 = vmatprep.subr.bf16.mxu0 0
      %887 = vmatpush1.bf16.xpose.msra.mxu0 0
      %888 = vmatprep.subr.bf16.mxu0 0
      %889 = vmatpush1.bf16.xpose.msra.mxu0 0
      %890 = vmatprep.mubr.bf16.mxu0 0
      %891 = vmatmul.mubr.bf16.gmra.mrb[0].mxu0 %v853
      %v892 = vpop.f32.mrb[0].mxu0
      %v893 = vadd.f32 0.0, %v892
      %v894 = vpop.f32.mrb[0].mxu0
      %v895 = vpop.f32.mrb[0].mxu0
      %v896 = vpop.f32.mrb[0].mxu0
      %897 = vdwg.mxu0
      %v899 = vsel %vm851, %v373, 0
      %v902 = vsel %vm851, %v608, 0
      %904 = vmatprep.subr.bf16.mxu0 0
      %905 = vmatpush1.bf16.xpose.msra.mxu0 %v902
      %906 = vmatprep.subr.bf16.mxu0 0
      %907 = vmatpush1.bf16.xpose.msra.mxu0 0
      %908 = vmatprep.subr.bf16.mxu0 0
      %909 = vmatpush1.bf16.xpose.msra.mxu0 0
      %910 = vmatprep.subr.bf16.mxu0 0
      %911 = vmatpush1.bf16.xpose.msra.mxu0 0
      %912 = vmatprep.subr.bf16.mxu0 0
      %913 = vmatpush1.bf16.xpose.msra.mxu0 0
      %914 = vmatprep.subr.bf16.mxu0 0
      %915 = vmatpush1.bf16.xpose.msra.mxu0 0
      %916 = vmatprep.subr.bf16.mxu0 0
      %917 = vmatpush1.bf16.xpose.msra.mxu0 0
      %918 = vmatprep.subr.bf16.mxu0 0
      %919 = vmatpush1.bf16.xpose.msra.mxu0 0
      %920 = vmatprep.subr.bf16.mxu0 0
      %921 = vmatpush1.bf16.xpose.msra.mxu0 0
      %922 = vmatprep.subr.bf16.mxu0 0
      %923 = vmatpush1.bf16.xpose.msra.mxu0 0
      %924 = vmatprep.subr.bf16.mxu0 0
      %925 = vmatpush1.bf16.xpose.msra.mxu0 0
      %926 = vmatprep.subr.bf16.mxu0 0
      %927 = vmatpush1.bf16.xpose.msra.mxu0 0
      %928 = vmatprep.subr.bf16.mxu0 0
      %929 = vmatpush1.bf16.xpose.msra.mxu0 0
      %930 = vmatprep.subr.bf16.mxu0 0
      %931 = vmatpush1.bf16.xpose.msra.mxu0 0
      %932 = vmatprep.subr.bf16.mxu0 0
      %933 = vmatpush1.bf16.xpose.msra.mxu0 0
      %934 = vmatprep.subr.bf16.mxu0 0
      %935 = vmatpush1.bf16.xpose.msra.mxu0 0
      %936 = vmatprep.mubr.bf16.mxu0 0
      %937 = vmatmul.mubr.bf16.gmra.mrb[0].mxu0 %v899
      %v938 = vpop.f32.mrb[0].mxu0
      %v939 = vadd.f32 0.0, %v938
      %v940 = vpop.f32.mrb[0].mxu0
      %v941 = vpop.f32.mrb[0].mxu0
      %v942 = vpop.f32.mrb[0].mxu0
      %943 = vdwg.mxu0
      %v945 = vsel %vm851, %v347, 0
      %v948 = vsel %vm851, %v611, 0
      %950 = vmatprep.subr.bf16.mxu0 0
      %951 = vmatpush1.bf16.xpose.msra.mxu0 %v948
      %952 = vmatprep.subr.bf16.mxu0 0
      %953 = vmatpush1.bf16.xpose.msra.mxu0 0
      %954 = vmatprep.subr.bf16.mxu0 0
      %955 = vmatpush1.bf16.xpose.msra.mxu0 0
      %956 = vmatprep.subr.bf16.mxu0 0
      %957 = vmatpush1.bf16.xpose.msra.mxu0 0
      %958 = vmatprep.subr.bf16.mxu0 0
      %959 = vmatpush1.bf16.xpose.msra.mxu0 0
      %960 = vmatprep.subr.bf16.mxu0 0
      %961 = vmatpush1.bf16.xpose.msra.mxu0 0
      %962 = vmatprep.subr.bf16.mxu0 0
      %963 = vmatpush1.bf16.xpose.msra.mxu0 0
      %964 = vmatprep.subr.bf16.mxu0 0
      %965 = vmatpush1.bf16.xpose.msra.mxu0 0
      %966 = vmatprep.subr.bf16.mxu0 0
      %967 = vmatpush1.bf16.xpose.msra.mxu0 0
      %968 = vmatprep.subr.bf16.mxu0 0
      %969 = vmatpush1.bf16.xpose.msra.mxu0 0
      %970 = vmatprep.subr.bf16.mxu0 0
      %971 = vmatpush1.bf16.xpose.msra.mxu0 0
      %972 = vmatprep.subr.bf16.mxu0 0
      %973 = vmatpush1.bf16.xpose.msra.mxu0 0
      %974 = vmatprep.subr.bf16.mxu0 0
      %975 = vmatpush1.bf16.xpose.msra.mxu0 0
      %976 = vmatprep.subr.bf16.mxu0 0
      %977 = vmatpush1.bf16.xpose.msra.mxu0 0
      %978 = vmatprep.subr.bf16.mxu0 0
      %979 = vmatpush1.bf16.xpose.msra.mxu0 0
      %980 = vmatprep.subr.bf16.mxu0 0
      %981 = vmatpush1.bf16.xpose.msra.mxu0 0
      %982 = vmatprep.mubr.bf16.mxu0 0
      %983 = vmatmul.mubr.bf16.gmra.mrb[0].mxu0 %v945
      %v984 = vpop.f32.mrb[0].mxu0
      %v985 = vadd.f32 0.0, %v984
      %v986 = vpop.f32.mrb[0].mxu0
      %v987 = vpop.f32.mrb[0].mxu0
      %v988 = vpop.f32.mrb[0].mxu0
      %989 = vdwg.mxu0
      %v991 = vsel %vm851, %v381, 0
      %v994 = vsel %vm851, %v614, 0
      %996 = vmatprep.subr.bf16.mxu0 0
      %997 = vmatpush1.bf16.xpose.msra.mxu0 %v994
      %998 = vmatprep.subr.bf16.mxu0 0
      %999 = vmatpush1.bf16.xpose.msra.mxu0 0
      %1000 = vmatprep.subr.bf16.mxu0 0
      %1001 = vmatpush1.bf16.xpose.msra.mxu0 0
      %1002 = vmatprep.subr.bf16.mxu0 0
      %1003 = vmatpush1.bf16.xpose.msra.mxu0 0
      %1004 = vmatprep.subr.bf16.mxu0 0
      %1005 = vmatpush1.bf16.xpose.msra.mxu0 0
      %1006 = vmatprep.subr.bf16.mxu0 0
      %1007 = vmatpush1.bf16.xpose.msra.mxu0 0
      %1008 = vmatprep.subr.bf16.mxu0 0
      %1009 = vmatpush1.bf16.xpose.msra.mxu0 0
      %1010 = vmatprep.subr.bf16.mxu0 0
      %1011 = vmatpush1.bf16.xpose.msra.mxu0 0
      %1012 = vmatprep.subr.bf16.mxu0 0
      %1013 = vmatpush1.bf16.xpose.msra.mxu0 0
      %1014 = vmatprep.subr.bf16.mxu0 0
      %1015 = vmatpush1.bf16.xpose.msra.mxu0 0
      %1016 = vmatprep.subr.bf16.mxu0 0
      %1017 = vmatpush1.bf16.xpose.msra.mxu0 0
      %1018 = vmatprep.subr.bf16.mxu0 0
      %1019 = vmatpush1.bf16.xpose.msra.mxu0 0
      %1020 = vmatprep.subr.bf16.mxu0 0
      %1021 = vmatpush1.bf16.xpose.msra.mxu0 0
      %1022 = vmatprep.subr.bf16.mxu0 0
      %1023 = vmatpush1.bf16.xpose.msra.mxu0 0
      %1024 = vmatprep.subr.bf16.mxu0 0
      %1025 = vmatpush1.bf16.xpose.msra.mxu0 0
      %1026 = vmatprep.subr.bf16.mxu0 0
      %1027 = vmatpush1.bf16.xpose.msra.mxu0 0
      %1028 = vmatprep.mubr.bf16.mxu0 0
      %1029 = vmatmul.mubr.bf16.gmra.mrb[0].mxu0 %v991
      %v1030 = vpop.f32.mrb[0].mxu0
      %v1031 = vadd.f32 0.0, %v1030
      %v1032 = vpop.f32.mrb[0].mxu0
      %v1033 = vpop.f32.mrb[0].mxu0
      %v1034 = vpop.f32.mrb[0].mxu0
      %1035 = vdwg.mxu0
      %v1037 = vsel %vm851, %v346, 0
      %v1040 = vsel %vm851, %v617, 0
      %1042 = vmatprep.subr.bf16.mxu0 0
      %1043 = vmatpush1.bf16.xpose.msra.mxu0 %v1040
      %1044 = vmatprep.subr.bf16.mxu0 0
      %1045 = vmatpush1.bf16.xpose.msra.mxu0 0
      %1046 = vmatprep.subr.bf16.mxu0 0
      %1047 = vmatpush1.bf16.xpose.msra.mxu0 0
      %1048 = vmatprep.subr.bf16.mxu0 0
      %1049 = vmatpush1.bf16.xpose.msra.mxu0 0
      %1050 = vmatprep.subr.bf16.mxu0 0
      %1051 = vmatpush1.bf16.xpose.msra.mxu0 0
      %1052 = vmatprep.subr.bf16.mxu0 0
      %1053 = vmatpush1.bf16.xpose.msra.mxu0 0
      %1054 = vmatprep.subr.bf16.mxu0 0
      %1055 = vmatpush1.bf16.xpose.msra.mxu0 0
      %1056 = vmatprep.subr.bf16.mxu0 0
      %1057 = vmatpush1.bf16.xpose.msra.mxu0 0
      %1058 = vmatprep.subr.bf16.mxu0 0
      %1059 = vmatpush1.bf16.xpose.msra.mxu0 0
      %1060 = vmatprep.subr.bf16.mxu0 0
      %1061 = vmatpush1.bf16.xpose.msra.mxu0 0
      %1062 = vmatprep.subr.bf16.mxu0 0
      %1063 = vmatpush1.bf16.xpose.msra.mxu0 0
      %1064 = vmatprep.subr.bf16.mxu0 0
      %1065 = vmatpush1.bf16.xpose.msra.mxu0 0
      %1066 = vmatprep.subr.bf16.mxu0 0
      %1067 = vmatpush1.bf16.xpose.msra.mxu0 0
      %1068 = vmatprep.subr.bf16.mxu0 0
      %1069 = vmatpush1.bf16.xpose.msra.mxu0 0
      %1070 = vmatprep.subr.bf16.mxu0 0
      %1071 = vmatpush1.bf16.xpose.msra.mxu0 0
      %1072 = vmatprep.subr.bf16.mxu0 0
      %1073 = vmatpush1.bf16.xpose.msra.mxu0 0
      %1074 = vmatprep.mubr.bf16.mxu0 0
      %1075 = vmatmul.mubr.bf16.gmra.mrb[0].mxu0 %v1037
      %v1076 = vpop.f32.mrb[0].mxu0
      %v1077 = vadd.f32 0.0, %v1076
      %v1078 = vpop.f32.mrb[0].mxu0
      %v1079 = vpop.f32.mrb[0].mxu0
      %v1080 = vpop.f32.mrb[0].mxu0
      %1081 = vdwg.mxu0
      %v1083 = vsel %vm851, %v380, 0
      %v1086 = vsel %vm851, %v620, 0
      %1088 = vmatprep.subr.bf16.mxu0 0
      %1089 = vmatpush1.bf16.xpose.msra.mxu0 %v1086
      %1090 = vmatprep.subr.bf16.mxu0 0
      %1091 = vmatpush1.bf16.xpose.msra.mxu0 0
      %1092 = vmatprep.subr.bf16.mxu0 0
      %1093 = vmatpush1.bf16.xpose.msra.mxu0 0
      %1094 = vmatprep.subr.bf16.mxu0 0
      %1095 = vmatpush1.bf16.xpose.msra.mxu0 0
      %1096 = vmatprep.subr.bf16.mxu0 0
      %1097 = vmatpush1.bf16.xpose.msra.mxu0 0
      %1098 = vmatprep.subr.bf16.mxu0 0
      %1099 = vmatpush1.bf16.xpose.msra.mxu0 0
      %1100 = vmatprep.subr.bf16.mxu0 0
      %1101 = vmatpush1.bf16.xpose.msra.mxu0 0
      %1102 = vmatprep.subr.bf16.mxu0 0
      %1103 = vmatpush1.bf16.xpose.msra.mxu0 0
      %1104 = vmatprep.subr.bf16.mxu0 0
      %1105 = vmatpush1.bf16.xpose.msra.mxu0 0
      %1106 = vmatprep.subr.bf16.mxu0 0
      %1107 = vmatpush1.bf16.xpose.msra.mxu0 0
      %1108 = vmatprep.subr.bf16.mxu0 0
      %1109 = vmatpush1.bf16.xpose.msra.mxu0 0
      %1110 = vmatprep.subr.bf16.mxu0 0
      %1111 = vmatpush1.bf16.xpose.msra.mxu0 0
      %1112 = vmatprep.subr.bf16.mxu0 0
      %1113 = vmatpush1.bf16.xpose.msra.mxu0 0
      %1114 = vmatprep.subr.bf16.mxu0 0
      %1115 = vmatpush1.bf16.xpose.msra.mxu0 0
      %1116 = vmatprep.subr.bf16.mxu0 0
      %1117 = vmatpush1.bf16.xpose.msra.mxu0 0
      %1118 = vmatprep.subr.bf16.mxu0 0
      %1119 = vmatpush1.bf16.xpose.msra.mxu0 0
      %1120 = vmatprep.mubr.bf16.mxu0 0
      %1121 = vmatmul.mubr.bf16.gmra.mrb[0].mxu0 %v1083
      %v1122 = vpop.f32.mrb[0].mxu0
      %v1123 = vadd.f32 0.0, %v1122
      %v1124 = vpop.f32.mrb[0].mxu0
      %v1125 = vpop.f32.mrb[0].mxu0
      %v1126 = vpop.f32.mrb[0].mxu0
      %1127 = vdwg.mxu0
      %v1129 = vsel %vm851, %v348, 0
      %v1132 = vsel %vm851, %v623, 0
      %1134 = vmatprep.subr.bf16.mxu0 0
      %1135 = vmatpush1.bf16.xpose.msra.mxu0 %v1132
      %1136 = vmatprep.subr.bf16.mxu0 0
      %1137 = vmatpush1.bf16.xpose.msra.mxu0 0
      %1138 = vmatprep.subr.bf16.mxu0 0
      %1139 = vmatpush1.bf16.xpose.msra.mxu0 0
      %1140 = vmatprep.subr.bf16.mxu0 0
      %1141 = vmatpush1.bf16.xpose.msra.mxu0 0
      %1142 = vmatprep.subr.bf16.mxu0 0
      %1143 = vmatpush1.bf16.xpose.msra.mxu0 0
      %1144 = vmatprep.subr.bf16.mxu0 0
      %1145 = vmatpush1.bf16.xpose.msra.mxu0 0
      %1146 = vmatprep.subr.bf16.mxu0 0
      %1147 = vmatpush1.bf16.xpose.msra.mxu0 0
      %1148 = vmatprep.subr.bf16.mxu0 0
      %1149 = vmatpush1.bf16.xpose.msra.mxu0 0
      %1150 = vmatprep.subr.bf16.mxu0 0
      %1151 = vmatpush1.bf16.xpose.msra.mxu0 0
      %1152 = vmatprep.subr.bf16.mxu0 0
      %1153 = vmatpush1.bf16.xpose.msra.mxu0 0
      %1154 = vmatprep.subr.bf16.mxu0 0
      %1155 = vmatpush1.bf16.xpose.msra.mxu0 0
      %1156 = vmatprep.subr.bf16.mxu0 0
      %1157 = vmatpush1.bf16.xpose.msra.mxu0 0
      %1158 = vmatprep.subr.bf16.mxu0 0
      %1159 = vmatpush1.bf16.xpose.msra.mxu0 0
      %1160 = vmatprep.subr.bf16.mxu0 0
      %1161 = vmatpush1.bf16.xpose.msra.mxu0 0
      %1162 = vmatprep.subr.bf16.mxu0 0
      %1163 = vmatpush1.bf16.xpose.msra.mxu0 0
      %1164 = vmatprep.subr.bf16.mxu0 0
      %1165 = vmatpush1.bf16.xpose.msra.mxu0 0
      %1166 = vmatprep.mubr.bf16.mxu0 0
      %1167 = vmatmul.mubr.bf16.gmra.mrb[0].mxu0 %v1129
      %v1168 = vpop.f32.mrb[0].mxu0
      %v1169 = vadd.f32 0.0, %v1168
      %v1170 = vpop.f32.mrb[0].mxu0
      %v1171 = vpop.f32.mrb[0].mxu0
      %v1172 = vpop.f32.mrb[0].mxu0
      %1173 = vdwg.mxu0
      %v1175 = vsel %vm851, %v382, 0
      %v1178 = vsel %vm851, %v626, 0
      %1180 = vmatprep.subr.bf16.mxu0 0
      %1181 = vmatpush1.bf16.xpose.msra.mxu0 %v1178
      %1182 = vmatprep.subr.bf16.mxu0 0
      %1183 = vmatpush1.bf16.xpose.msra.mxu0 0
      %1184 = vmatprep.subr.bf16.mxu0 0
      %1185 = vmatpush1.bf16.xpose.msra.mxu0 0
      %1186 = vmatprep.subr.bf16.mxu0 0
      %1187 = vmatpush1.bf16.xpose.msra.mxu0 0
      %1188 = vmatprep.subr.bf16.mxu0 0
      %1189 = vmatpush1.bf16.xpose.msra.mxu0 0
      %1190 = vmatprep.subr.bf16.mxu0 0
      %1191 = vmatpush1.bf16.xpose.msra.mxu0 0
      %1192 = vmatprep.subr.bf16.mxu0 0
      %1193 = vmatpush1.bf16.xpose.msra.mxu0 0
      %1194 = vmatprep.subr.bf16.mxu0 0
      %1195 = vmatpush1.bf16.xpose.msra.mxu0 0
      %1196 = vmatprep.subr.bf16.mxu0 0
      %1197 = vmatpush1.bf16.xpose.msra.mxu0 0
      %1198 = vmatprep.subr.bf16.mxu0 0
      %1199 = vmatpush1.bf16.xpose.msra.mxu0 0
      %1200 = vmatprep.subr.bf16.mxu0 0
      %1201 = vmatpush1.bf16.xpose.msra.mxu0 0
      %1202 = vmatprep.subr.bf16.mxu0 0
      %1203 = vmatpush1.bf16.xpose.msra.mxu0 0
      %1204 = vmatprep.subr.bf16.mxu0 0
      %1205 = vmatpush1.bf16.xpose.msra.mxu0 0
      %1206 = vmatprep.subr.bf16.mxu0 0
      %1207 = vmatpush1.bf16.xpose.msra.mxu0 0
      %1208 = vmatprep.subr.bf16.mxu0 0
      %1209 = vmatpush1.bf16.xpose.msra.mxu0 0
      %1210 = vmatprep.subr.bf16.mxu0 0
      %1211 = vmatpush1.bf16.xpose.msra.mxu0 0
      %1212 = vmatprep.mubr.bf16.mxu0 0
      %1213 = vmatmul.mubr.bf16.gmra.mrb[0].mxu0 %v1175
      %v1214 = vpop.f32.mrb[0].mxu0
      %v1215 = vadd.f32 0.0, %v1214
      %v1216 = vpop.f32.mrb[0].mxu0
      %v1217 = vpop.f32.mrb[0].mxu0
      %v1218 = vpop.f32.mrb[0].mxu0
      %1219 = vdwg.mxu0
      %v1221 = vsel %vm851, %v407, 0
      %v1224 = vsel %vm851, %v629, 0
      %1226 = vmatprep.subr.bf16.mxu0 0
      %1227 = vmatpush1.bf16.xpose.msra.mxu0 %v1224
      %1228 = vmatprep.subr.bf16.mxu0 0
      %1229 = vmatpush1.bf16.xpose.msra.mxu0 0
      %1230 = vmatprep.subr.bf16.mxu0 0
      %1231 = vmatpush1.bf16.xpose.msra.mxu0 0
      %1232 = vmatprep.subr.bf16.mxu0 0
      %1233 = vmatpush1.bf16.xpose.msra.mxu0 0
      %1234 = vmatprep.subr.bf16.mxu0 0
      %1235 = vmatpush1.bf16.xpose.msra.mxu0 0
      %1236 = vmatprep.subr.bf16.mxu0 0
      %1237 = vmatpush1.bf16.xpose.msra.mxu0 0
      %1238 = vmatprep.subr.bf16.mxu0 0
      %1239 = vmatpush1.bf16.xpose.msra.mxu0 0
      %1240 = vmatprep.subr.bf16.mxu0 0
      %1241 = vmatpush1.bf16.xpose.msra.mxu0 0
      %1242 = vmatprep.subr.bf16.mxu0 0
      %1243 = vmatpush1.bf16.xpose.msra.mxu0 0
      %1244 = vmatprep.subr.bf16.mxu0 0
      %1245 = vmatpush1.bf16.xpose.msra.mxu0 0
      %1246 = vmatprep.subr.bf16.mxu0 0
      %1247 = vmatpush1.bf16.xpose.msra.mxu0 0
      %1248 = vmatprep.subr.bf16.mxu0 0
      %1249 = vmatpush1.bf16.xpose.msra.mxu0 0
      %1250 = vmatprep.subr.bf16.mxu0 0
      %1251 = vmatpush1.bf16.xpose.msra.mxu0 0
      %1252 = vmatprep.subr.bf16.mxu0 0
      %1253 = vmatpush1.bf16.xpose.msra.mxu0 0
      %1254 = vmatprep.subr.bf16.mxu0 0
      %1255 = vmatpush1.bf16.xpose.msra.mxu0 0
      %1256 = vmatprep.subr.bf16.mxu0 0
      %1257 = vmatpush1.bf16.xpose.msra.mxu0 0
      %1258 = vmatprep.mubr.bf16.mxu0 0
      %1259 = vmatmul.mubr.bf16.gmra.mrb[0].mxu0 %v1221
      %v1260 = vpop.f32.mrb[0].mxu0
      %v1261 = vadd.f32 0.0, %v1260
      %v1262 = vpop.f32.mrb[0].mxu0
      %v1263 = vpop.f32.mrb[0].mxu0
      %v1264 = vpop.f32.mrb[0].mxu0
      %1265 = vdwg.mxu0
      %v1267 = vsel %vm851, %v441, 0
      %v1270 = vsel %vm851, %v632, 0
      %1272 = vmatprep.subr.bf16.mxu0 0
      %1273 = vmatpush1.bf16.xpose.msra.mxu0 %v1270
      %1274 = vmatprep.subr.bf16.mxu0 0
      %1275 = vmatpush1.bf16.xpose.msra.mxu0 0
      %1276 = vmatprep.subr.bf16.mxu0 0
      %1277 = vmatpush1.bf16.xpose.msra.mxu0 0
      %1278 = vmatprep.subr.bf16.mxu0 0
      %1279 = vmatpush1.bf16.xpose.msra.mxu0 0
      %1280 = vmatprep.subr.bf16.mxu0 0
      %1281 = vmatpush1.bf16.xpose.msra.mxu0 0
      %1282 = vmatprep.subr.bf16.mxu0 0
      %1283 = vmatpush1.bf16.xpose.msra.mxu0 0
      %1284 = vmatprep.subr.bf16.mxu0 0
      %1285 = vmatpush1.bf16.xpose.msra.mxu0 0
      %1286 = vmatprep.subr.bf16.mxu0 0
      %1287 = vmatpush1.bf16.xpose.msra.mxu0 0
      %1288 = vmatprep.subr.bf16.mxu0 0
      %1289 = vmatpush1.bf16.xpose.msra.mxu0 0
      %1290 = vmatprep.subr.bf16.mxu0 0
      %1291 = vmatpush1.bf16.xpose.msra.mxu0 0
      %1292 = vmatprep.subr.bf16.mxu0 0
      %1293 = vmatpush1.bf16.xpose.msra.mxu0 0
      %1294 = vmatprep.subr.bf16.mxu0 0
      %1295 = vmatpush1.bf16.xpose.msra.mxu0 0
      %1296 = vmatprep.subr.bf16.mxu0 0
      %1297 = vmatpush1.bf16.xpose.msra.mxu0 0
      %1298 = vmatprep.subr.bf16.mxu0 0
      %1299 = vmatpush1.bf16.xpose.msra.mxu0 0
      %1300 = vmatprep.subr.bf16.mxu0 0
      %1301 = vmatpush1.bf16.xpose.msra.mxu0 0
      %1302 = vmatprep.subr.bf16.mxu0 0
      %1303 = vmatpush1.bf16.xpose.msra.mxu0 0
      %1304 = vmatprep.mubr.bf16.mxu0 0
      %1305 = vmatmul.mubr.bf16.gmra.mrb[0].mxu0 %v1267
      %v1306 = vpop.f32.mrb[0].mxu0
      %v1307 = vadd.f32 0.0, %v1306
      %v1308 = vpop.f32.mrb[0].mxu0
      %v1309 = vpop.f32.mrb[0].mxu0
      %v1310 = vpop.f32.mrb[0].mxu0
      %1311 = vdwg.mxu0
      %v1313 = vsel %vm851, %v415, 0
      %v1316 = vsel %vm851, %v635, 0
      %1318 = vmatprep.subr.bf16.mxu0 0
      %1319 = vmatpush1.bf16.xpose.msra.mxu0 %v1316
      %1320 = vmatprep.subr.bf16.mxu0 0
      %1321 = vmatpush1.bf16.xpose.msra.mxu0 0
      %1322 = vmatprep.subr.bf16.mxu0 0
      %1323 = vmatpush1.bf16.xpose.msra.mxu0 0
      %1324 = vmatprep.subr.bf16.mxu0 0
      %1325 = vmatpush1.bf16.xpose.msra.mxu0 0
      %1326 = vmatprep.subr.bf16.mxu0 0
      %1327 = vmatpush1.bf16.xpose.msra.mxu0 0
      %1328 = vmatprep.subr.bf16.mxu0 0
      %1329 = vmatpush1.bf16.xpose.msra.mxu0 0
      %1330 = vmatprep.subr.bf16.mxu0 0
      %1331 = vmatpush1.bf16.xpose.msra.mxu0 0
      %1332 = vmatprep.subr.bf16.mxu0 0
      %1333 = vmatpush1.bf16.xpose.msra.mxu0 0
      %1334 = vmatprep.subr.bf16.mxu0 0
      %1335 = vmatpush1.bf16.xpose.msra.mxu0 0
      %1336 = vmatprep.subr.bf16.mxu0 0
      %1337 = vmatpush1.bf16.xpose.msra.mxu0 0
      %1338 = vmatprep.subr.bf16.mxu0 0
      %1339 = vmatpush1.bf16.xpose.msra.mxu0 0
      %1340 = vmatprep.subr.bf16.mxu0 0
      %1341 = vmatpush1.bf16.xpose.msra.mxu0 0
      %1342 = vmatprep.subr.bf16.mxu0 0
      %1343 = vmatpush1.bf16.xpose.msra.mxu0 0
      %1344 = vmatprep.subr.bf16.mxu0 0
      %1345 = vmatpush1.bf16.xpose.msra.mxu0 0
      %1346 = vmatprep.subr.bf16.mxu0 0
      %1347 = vmatpush1.bf16.xpose.msra.mxu0 0
      %1348 = vmatprep.subr.bf16.mxu0 0
      %1349 = vmatpush1.bf16.xpose.msra.mxu0 0
      %1350 = vmatprep.mubr.bf16.mxu0 0
      %1351 = vmatmul.mubr.bf16.gmra.mrb[0].mxu0 %v1313
      %v1352 = vpop.f32.mrb[0].mxu0
      %v1353 = vadd.f32 0.0, %v1352
      %v1354 = vpop.f32.mrb[0].mxu0
      %v1355 = vpop.f32.mrb[0].mxu0
      %v1356 = vpop.f32.mrb[0].mxu0
      %1357 = vdwg.mxu0
      %v1359 = vsel %vm851, %v449, 0
      %v1362 = vsel %vm851, %v638, 0
      %1364 = vmatprep.subr.bf16.mxu0 0
      %1365 = vmatpush1.bf16.xpose.msra.mxu0 %v1362
      %1366 = vmatprep.subr.bf16.mxu0 0
      %1367 = vmatpush1.bf16.xpose.msra.mxu0 0
      %1368 = vmatprep.subr.bf16.mxu0 0
      %1369 = vmatpush1.bf16.xpose.msra.mxu0 0
      %1370 = vmatprep.subr.bf16.mxu0 0
      %1371 = vmatpush1.bf16.xpose.msra.mxu0 0
      %1372 = vmatprep.subr.bf16.mxu0 0
      %1373 = vmatpush1.bf16.xpose.msra.mxu0 0
      %1374 = vmatprep.subr.bf16.mxu0 0
      %1375 = vmatpush1.bf16.xpose.msra.mxu0 0
      %1376 = vmatprep.subr.bf16.mxu0 0
      %1377 = vmatpush1.bf16.xpose.msra.mxu0 0
      %1378 = vmatprep.subr.bf16.mxu0 0
      %1379 = vmatpush1.bf16.xpose.msra.mxu0 0
      %1380 = vmatprep.subr.bf16.mxu0 0
      %1381 = vmatpush1.bf16.xpose.msra.mxu0 0
      %1382 = vmatprep.subr.bf16.mxu0 0
      %1383 = vmatpush1.bf16.xpose.msra.mxu0 0
      %1384 = vmatprep.subr.bf16.mxu0 0
      %1385 = vmatpush1.bf16.xpose.msra.mxu0 0
      %1386 = vmatprep.subr.bf16.mxu0 0
      %1387 = vmatpush1.bf16.xpose.msra.mxu0 0
      %1388 = vmatprep.subr.bf16.mxu0 0
      %1389 = vmatpush1.bf16.xpose.msra.mxu0 0
      %1390 = vmatprep.subr.bf16.mxu0 0
      %1391 = vmatpush1.bf16.xpose.msra.mxu0 0
      %1392 = vmatprep.subr.bf16.mxu0 0
      %1393 = vmatpush1.bf16.xpose.msra.mxu0 0
      %1394 = vmatprep.subr.bf16.mxu0 0
      %1395 = vmatpush1.bf16.xpose.msra.mxu0 0
      %1396 = vmatprep.mubr.bf16.mxu0 0
      %1397 = vmatmul.mubr.bf16.gmra.mrb[0].mxu0 %v1359
      %v1398 = vpop.f32.mrb[0].mxu0
      %v1399 = vadd.f32 0.0, %v1398
      %v1400 = vpop.f32.mrb[0].mxu0
      %v1401 = vpop.f32.mrb[0].mxu0
      %v1402 = vpop.f32.mrb[0].mxu0
      %1403 = vdwg.mxu0
      %v1405 = vsel %vm851, %v414, 0
      %v1408 = vsel %vm851, %v641, 0
      %1410 = vmatprep.subr.bf16.mxu0 0
      %1411 = vmatpush1.bf16.xpose.msra.mxu0 %v1408
      %1412 = vmatprep.subr.bf16.mxu0 0
      %1413 = vmatpush1.bf16.xpose.msra.mxu0 0
      %1414 = vmatprep.subr.bf16.mxu0 0
      %1415 = vmatpush1.bf16.xpose.msra.mxu0 0
      %1416 = vmatprep.subr.bf16.mxu0 0
      %1417 = vmatpush1.bf16.xpose.msra.mxu0 0
      %1418 = vmatprep.subr.bf16.mxu0 0
      %1419 = vmatpush1.bf16.xpose.msra.mxu0 0
      %1420 = vmatprep.subr.bf16.mxu0 0
      %1421 = vmatpush1.bf16.xpose.msra.mxu0 0
      %1422 = vmatprep.subr.bf16.mxu0 0
      %1423 = vmatpush1.bf16.xpose.msra.mxu0 0
      %1424 = vmatprep.subr.bf16.mxu0 0
      %1425 = vmatpush1.bf16.xpose.msra.mxu0 0
      %1426 = vmatprep.subr.bf16.mxu0 0
      %1427 = vmatpush1.bf16.xpose.msra.mxu0 0
      %1428 = vmatprep.subr.bf16.mxu0 0
      %1429 = vmatpush1.bf16.xpose.msra.mxu0 0
      %1430 = vmatprep.subr.bf16.mxu0 0
      %1431 = vmatpush1.bf16.xpose.msra.mxu0 0
      %1432 = vmatprep.subr.bf16.mxu0 0
      %1433 = vmatpush1.bf16.xpose.msra.mxu0 0
      %1434 = vmatprep.subr.bf16.mxu0 0
      %1435 = vmatpush1.bf16.xpose.msra.mxu0 0
      %1436 = vmatprep.subr.bf16.mxu0 0
      %1437 = vmatpush1.bf16.xpose.msra.mxu0 0
      %1438 = vmatprep.subr.bf16.mxu0 0
      %1439 = vmatpush1.bf16.xpose.msra.mxu0 0
      %1440 = vmatprep.subr.bf16.mxu0 0
      %1441 = vmatpush1.bf16.xpose.msra.mxu0 0
      %1442 = vmatprep.mubr.bf16.mxu0 0
      %1443 = vmatmul.mubr.bf16.gmra.mrb[0].mxu0 %v1405
      %v1444 = vpop.f32.mrb[0].mxu0
      %v1445 = vadd.f32 0.0, %v1444
      %v1446 = vpop.f32.mrb[0].mxu0
      %v1447 = vpop.f32.mrb[0].mxu0
      %v1448 = vpop.f32.mrb[0].mxu0
      %1449 = vdwg.mxu0
      %v1451 = vsel %vm851, %v448, 0
      %v1454 = vsel %vm851, %v644, 0
      %1456 = vmatprep.subr.bf16.mxu0 0
      %1457 = vmatpush1.bf16.xpose.msra.mxu0 %v1454
      %1458 = vmatprep.subr.bf16.mxu0 0
      %1459 = vmatpush1.bf16.xpose.msra.mxu0 0
      %1460 = vmatprep.subr.bf16.mxu0 0
      %1461 = vmatpush1.bf16.xpose.msra.mxu0 0
      %1462 = vmatprep.subr.bf16.mxu0 0
      %1463 = vmatpush1.bf16.xpose.msra.mxu0 0
      %1464 = vmatprep.subr.bf16.mxu0 0
      %1465 = vmatpush1.bf16.xpose.msra.mxu0 0
      %1466 = vmatprep.subr.bf16.mxu0 0
      %1467 = vmatpush1.bf16.xpose.msra.mxu0 0
      %1468 = vmatprep.subr.bf16.mxu0 0
      %1469 = vmatpush1.bf16.xpose.msra.mxu0 0
      %1470 = vmatprep.subr.bf16.mxu0 0
      %1471 = vmatpush1.bf16.xpose.msra.mxu0 0
      %1472 = vmatprep.subr.bf16.mxu0 0
      %1473 = vmatpush1.bf16.xpose.msra.mxu0 0
      %1474 = vmatprep.subr.bf16.mxu0 0
      %1475 = vmatpush1.bf16.xpose.msra.mxu0 0
      %1476 = vmatprep.subr.bf16.mxu0 0
      %1477 = vmatpush1.bf16.xpose.msra.mxu0 0
      %1478 = vmatprep.subr.bf16.mxu0 0
      %1479 = vmatpush1.bf16.xpose.msra.mxu0 0
      %1480 = vmatprep.subr.bf16.mxu0 0
      %1481 = vmatpush1.bf16.xpose.msra.mxu0 0
      %1482 = vmatprep.subr.bf16.mxu0 0
      %1483 = vmatpush1.bf16.xpose.msra.mxu0 0
      %1484 = vmatprep.subr.bf16.mxu0 0
      %1485 = vmatpush1.bf16.xpose.msra.mxu0 0
      %1486 = vmatprep.subr.bf16.mxu0 0
      %1487 = vmatpush1.bf16.xpose.msra.mxu0 0
      %1488 = vmatprep.mubr.bf16.mxu0 0
      %1489 = vmatmul.mubr.bf16.gmra.mrb[0].mxu0 %v1451
      %v1490 = vpop.f32.mrb[0].mxu0
      %v1491 = vadd.f32 0.0, %v1490
      %v1492 = vpop.f32.mrb[0].mxu0
      %v1493 = vpop.f32.mrb[0].mxu0
      %v1494 = vpop.f32.mrb[0].mxu0
      %1495 = vdwg.mxu0
      %v1497 = vsel %vm851, %v416, 0
      %v1500 = vsel %vm851, %v647, 0
      %1502 = vmatprep.subr.bf16.mxu0 0
      %1503 = vmatpush1.bf16.xpose.msra.mxu0 %v1500
      %1504 = vmatprep.subr.bf16.mxu0 0
      %1505 = vmatpush1.bf16.xpose.msra.mxu0 0
      %1506 = vmatprep.subr.bf16.mxu0 0
      %1507 = vmatpush1.bf16.xpose.msra.mxu0 0
      %1508 = vmatprep.subr.bf16.mxu0 0
      %1509 = vmatpush1.bf16.xpose.msra.mxu0 0
      %1510 = vmatprep.subr.bf16.mxu0 0
      %1511 = vmatpush1.bf16.xpose.msra.mxu0 0
      %1512 = vmatprep.subr.bf16.mxu0 0
      %1513 = vmatpush1.bf16.xpose.msra.mxu0 0
      %1514 = vmatprep.subr.bf16.mxu0 0
      %1515 = vmatpush1.bf16.xpose.msra.mxu0 0
      %1516 = vmatprep.subr.bf16.mxu0 0
      %1517 = vmatpush1.bf16.xpose.msra.mxu0 0
      %1518 = vmatprep.subr.bf16.mxu0 0
      %1519 = vmatpush1.bf16.xpose.msra.mxu0 0
      %1520 = vmatprep.subr.bf16.mxu0 0
      %1521 = vmatpush1.bf16.xpose.msra.mxu0 0
      %1522 = vmatprep.subr.bf16.mxu0 0
      %1523 = vmatpush1.bf16.xpose.msra.mxu0 0
      %1524 = vmatprep.subr.bf16.mxu0 0
      %1525 = vmatpush1.bf16.xpose.msra.mxu0 0
      %1526 = vmatprep.subr.bf16.mxu0 0
      %1527 = vmatpush1.bf16.xpose.msra.mxu0 0
      %1528 = vmatprep.subr.bf16.mxu0 0
      %1529 = vmatpush1.bf16.xpose.msra.mxu0 0
      %1530 = vmatprep.subr.bf16.mxu0 0
      %1531 = vmatpush1.bf16.xpose.msra.mxu0 0
      %1532 = vmatprep.subr.bf16.mxu0 0
      %1533 = vmatpush1.bf16.xpose.msra.mxu0 0
      %1534 = vmatprep.mubr.bf16.mxu0 0
      %1535 = vmatmul.mubr.bf16.gmra.mrb[0].mxu0 %v1497
      %v1536 = vpop.f32.mrb[0].mxu0
      %v1537 = vadd.f32 0.0, %v1536
      %v1538 = vpop.f32.mrb[0].mxu0
      %v1539 = vpop.f32.mrb[0].mxu0
      %v1540 = vpop.f32.mrb[0].mxu0
      %1541 = vdwg.mxu0
      %v1543 = vsel %vm851, %v450, 0
      %v1546 = vsel %vm851, %v650, 0
      %1548 = vmatprep.subr.bf16.mxu0 0
      %1549 = vmatpush1.bf16.xpose.msra.mxu0 %v1546
      %1550 = vmatprep.subr.bf16.mxu0 0
      %1551 = vmatpush1.bf16.xpose.msra.mxu0 0
      %1552 = vmatprep.subr.bf16.mxu0 0
      %1553 = vmatpush1.bf16.xpose.msra.mxu0 0
      %1554 = vmatprep.subr.bf16.mxu0 0
      %1555 = vmatpush1.bf16.xpose.msra.mxu0 0
      %1556 = vmatprep.subr.bf16.mxu0 0
      %1557 = vmatpush1.bf16.xpose.msra.mxu0 0
      %1558 = vmatprep.subr.bf16.mxu0 0
      %1559 = vmatpush1.bf16.xpose.msra.mxu0 0
      %1560 = vmatprep.subr.bf16.mxu0 0
      %1561 = vmatpush1.bf16.xpose.msra.mxu0 0
      %1562 = vmatprep.subr.bf16.mxu0 0
      %1563 = vmatpush1.bf16.xpose.msra.mxu0 0
      %1564 = vmatprep.subr.bf16.mxu0 0
      %1565 = vmatpush1.bf16.xpose.msra.mxu0 0
      %1566 = vmatprep.subr.bf16.mxu0 0
      %1567 = vmatpush1.bf16.xpose.msra.mxu0 0
      %1568 = vmatprep.subr.bf16.mxu0 0
      %1569 = vmatpush1.bf16.xpose.msra.mxu0 0
      %1570 = vmatprep.subr.bf16.mxu0 0
      %1571 = vmatpush1.bf16.xpose.msra.mxu0 0
      %1572 = vmatprep.subr.bf16.mxu0 0
      %1573 = vmatpush1.bf16.xpose.msra.mxu0 0
      %1574 = vmatprep.subr.bf16.mxu0 0
      %1575 = vmatpush1.bf16.xpose.msra.mxu0 0
      %1576 = vmatprep.subr.bf16.mxu0 0
      %1577 = vmatpush1.bf16.xpose.msra.mxu0 0
      %1578 = vmatprep.subr.bf16.mxu0 0
      %1579 = vmatpush1.bf16.xpose.msra.mxu0 0
      %1580 = vmatprep.mubr.bf16.mxu0 0
      %1581 = vmatmul.mubr.bf16.gmra.mrb[0].mxu0 %v1543
      %v1582 = vpop.f32.mrb[0].mxu0
      %v1583 = vadd.f32 0.0, %v1582
      %v1584 = vpop.f32.mrb[0].mxu0
      %v1585 = vpop.f32.mrb[0].mxu0
      %v1586 = vpop.f32.mrb[0].mxu0
      %1587 = vdwg.mxu0
      %vm1588 = vcmask 60416
      %v1589 = vsel %vm1588, %v893, -inf
      %1590 = vmax.xlane.f32.xlu0 %v1589
      %v1591 = vpop.xlane.xlu0 %1590
      %v1592 = vsel %vm1588, %v939, -inf
      %1593 = vmax.xlane.f32.xlu0 %v1592
      %v1594 = vpop.xlane.xlu0 %1593
      %v1595 = vsel %vm1588, %v985, -inf
      %1596 = vmax.xlane.f32.xlu0 %v1595
      %v1597 = vpop.xlane.xlu0 %1596
      %v1598 = vsel %vm1588, %v1031, -inf
      %1599 = vmax.xlane.f32.xlu0 %v1598
      %v1600 = vpop.xlane.xlu0 %1599
      %v1601 = vsel %vm1588, %v1077, -inf
      %1602 = vmax.xlane.f32.xlu0 %v1601
      %v1603 = vpop.xlane.xlu0 %1602
      %v1604 = vsel %vm1588, %v1123, -inf
      %1605 = vmax.xlane.f32.xlu0 %v1604
      %v1606 = vpop.xlane.xlu0 %1605
      %v1607 = vsel %vm1588, %v1169, -inf
      %1608 = vmax.xlane.f32.xlu0 %v1607
      %v1609 = vpop.xlane.xlu0 %1608
      %v1610 = vsel %vm1588, %v1215, -inf
      %1611 = vmax.xlane.f32.xlu0 %v1610
      %v1612 = vpop.xlane.xlu0 %1611
      %v1613 = vsel %vm1588, %v1261, -inf
      %1614 = vmax.xlane.f32.xlu0 %v1613
      %v1615 = vpop.xlane.xlu0 %1614
      %v1616 = vsel %vm1588, %v1307, -inf
      %1617 = vmax.xlane.f32.xlu0 %v1616
      %v1618 = vpop.xlane.xlu0 %1617
      %v1619 = vsel %vm1588, %v1353, -inf
      %1620 = vmax.xlane.f32.xlu0 %v1619
      %v1621 = vpop.xlane.xlu0 %1620
      %v1622 = vsel %vm1588, %v1399, -inf
      %1623 = vmax.xlane.f32.xlu0 %v1622
      %v1624 = vpop.xlane.xlu0 %1623
      %v1625 = vsel %vm1588, %v1445, -inf
      %1626 = vmax.xlane.f32.xlu0 %v1625
      %v1627 = vpop.xlane.xlu0 %1626
      %v1628 = vsel %vm1588, %v1491, -inf
      %1629 = vmax.xlane.f32.xlu0 %v1628
      %v1630 = vpop.xlane.xlu0 %1629
      %v1631 = vsel %vm1588, %v1537, -inf
      %1632 = vmax.xlane.f32.xlu0 %v1631
      %v1633 = vpop.xlane.xlu0 %1632
      %v1634 = vsel %vm1588, %v1583, -inf
      %1635 = vmax.xlane.f32.xlu0 %v1634
      %v1636 = vpop.xlane.xlu0 %1635
      %v1637 = vsub.f32 %v893, %v1591
      %v1638 = vsub.f32 %v939, %v1594
      %v1639 = vsub.f32 %v985, %v1597
      %v1640 = vsub.f32 %v1031, %v1600
      %v1641 = vsub.f32 %v1077, %v1603
      %v1642 = vsub.f32 %v1123, %v1606
      %v1643 = vsub.f32 %v1169, %v1609
      %v1644 = vsub.f32 %v1215, %v1612
      %v1645 = vsub.f32 %v1261, %v1615
      %v1646 = vsub.f32 %v1307, %v1618
      %v1647 = vsub.f32 %v1353, %v1621
      %v1648 = vsub.f32 %v1399, %v1624
      %v1649 = vsub.f32 %v1445, %v1627
      %v1650 = vsub.f32 %v1491, %v1630
      %v1651 = vsub.f32 %v1537, %v1633
      %v1652 = vsub.f32 %v1583, %v1636
      %v1653 = vmul.f32 %v1637, 1.442695
      %v1654 = vpow.pop %v1653
      %v1655 = vmul.f32 %v1638, 1.442695
      %v1656 = vpow.pop %v1655
      %v1657 = vmul.f32 %v1639, 1.442695
      %v1658 = vpow.pop %v1657
      %v1659 = vmul.f32 %v1640, 1.442695
      %v1660 = vpow.pop %v1659
      %v1661 = vmul.f32 %v1641, 1.442695
      %v1662 = vpow.pop %v1661
      %v1663 = vmul.f32 %v1642, 1.442695
      %v1664 = vpow.pop %v1663
      %v1665 = vmul.f32 %v1643, 1.442695
      %v1666 = vpow.pop %v1665
      %v1667 = vmul.f32 %v1644, 1.442695
      %v1668 = vpow.pop %v1667
      %v1669 = vmul.f32 %v1645, 1.442695
      %v1670 = vpow.pop %v1669
      %v1671 = vmul.f32 %v1646, 1.442695
      %v1672 = vpow.pop %v1671
      %v1673 = vmul.f32 %v1647, 1.442695
      %v1674 = vpow.pop %v1673
      %v1675 = vmul.f32 %v1648, 1.442695
      %v1676 = vpow.pop %v1675
      %v1677 = vmul.f32 %v1649, 1.442695
      %v1678 = vpow.pop %v1677
      %v1679 = vmul.f32 %v1650, 1.442695
      %v1680 = vpow.pop %v1679
      %v1681 = vmul.f32 %v1651, 1.442695
      %v1682 = vpow.pop %v1681
      %v1683 = vmul.f32 %v1652, 1.442695
      %v1684 = vpow.pop %v1683
      %v1685 = vsel %vm1588, %v1654, 0.0
      %1686 = vadd.xlane.f32.xlu0 %v1685
      %v1687 = vpop.xlane.xlu0 %1686
      %v1688 = vsel %vm1588, %v1656, 0.0
      %1689 = vadd.xlane.f32.xlu0 %v1688
      %v1690 = vpop.xlane.xlu0 %1689
      %v1691 = vsel %vm1588, %v1658, 0.0
      %1692 = vadd.xlane.f32.xlu0 %v1691
      %v1693 = vpop.xlane.xlu0 %1692
      %v1694 = vsel %vm1588, %v1660, 0.0
      %1695 = vadd.xlane.f32.xlu0 %v1694
      %v1696 = vpop.xlane.xlu0 %1695
      %v1697 = vsel %vm1588, %v1662, 0.0
      %1698 = vadd.xlane.f32.xlu0 %v1697
      %v1699 = vpop.xlane.xlu0 %1698
      %v1700 = vsel %vm1588, %v1664, 0.0
      %1701 = vadd.xlane.f32.xlu0 %v1700
      %v1702 = vpop.xlane.xlu0 %1701
      %v1703 = vsel %vm1588, %v1666, 0.0
      %1704 = vadd.xlane.f32.xlu0 %v1703
      %v1705 = vpop.xlane.xlu0 %1704
      %v1706 = vsel %vm1588, %v1668, 0.0
      %1707 = vadd.xlane.f32.xlu0 %v1706
      %v1708 = vpop.xlane.xlu0 %1707
      %v1709 = vsel %vm1588, %v1670, 0.0
      %1710 = vadd.xlane.f32.xlu0 %v1709
      %v1711 = vpop.xlane.xlu0 %1710
      %v1712 = vsel %vm1588, %v1672, 0.0
      %1713 = vadd.xlane.f32.xlu0 %v1712
      %v1714 = vpop.xlane.xlu0 %1713
      %v1715 = vsel %vm1588, %v1674, 0.0
      %1716 = vadd.xlane.f32.xlu0 %v1715
      %v1717 = vpop.xlane.xlu0 %1716
      %v1718 = vsel %vm1588, %v1676, 0.0
      %1719 = vadd.xlane.f32.xlu0 %v1718
      %v1720 = vpop.xlane.xlu0 %1719
      %v1721 = vsel %vm1588, %v1678, 0.0
      %1722 = vadd.xlane.f32.xlu0 %v1721
      %v1723 = vpop.xlane.xlu0 %1722
      %v1724 = vsel %vm1588, %v1680, 0.0
      %1725 = vadd.xlane.f32.xlu0 %v1724
      %v1726 = vpop.xlane.xlu0 %1725
      %v1727 = vsel %vm1588, %v1682, 0.0
      %1728 = vadd.xlane.f32.xlu0 %v1727
      %v1729 = vpop.xlane.xlu0 %1728
      %v1730 = vsel %vm1588, %v1684, 0.0
      %1731 = vadd.xlane.f32.xlu0 %v1730
      %v1732 = vpop.xlane.xlu0 %1731
      %v1733 = vrcp.pop %v1687
      %v1734 = vrcp.pop %v1690
      %v1735 = vrcp.pop %v1693
      %v1736 = vrcp.pop %v1696
      %v1737 = vrcp.pop %v1699
      %v1738 = vrcp.pop %v1702
      %v1739 = vrcp.pop %v1705
      %v1740 = vrcp.pop %v1708
      %v1741 = vrcp.pop %v1711
      %v1742 = vrcp.pop %v1714
      %v1743 = vrcp.pop %v1717
      %v1744 = vrcp.pop %v1720
      %v1745 = vrcp.pop %v1723
      %v1746 = vrcp.pop %v1726
      %v1747 = vrcp.pop %v1729
      %v1748 = vrcp.pop %v1732
      %v1749 = vmul.f32 %v1654, %v1733
      %v1750 = vmul.f32 %v1656, %v1734
      %v1751 = vmul.f32 %v1658, %v1735
      %v1752 = vmul.f32 %v1660, %v1736
      %v1753 = vmul.f32 %v1662, %v1737
      %v1754 = vmul.f32 %v1664, %v1738
      %v1755 = vmul.f32 %v1666, %v1739
      %v1756 = vmul.f32 %v1668, %v1740
      %v1757 = vmul.f32 %v1670, %v1741
      %v1758 = vmul.f32 %v1672, %v1742
      %v1759 = vmul.f32 %v1674, %v1743
      %v1760 = vmul.f32 %v1676, %v1744
      %v1761 = vmul.f32 %v1678, %v1745
      %v1762 = vmul.f32 %v1680, %v1746
      %v1763 = vmul.f32 %v1682, %v1747
      %v1764 = vmul.f32 %v1684, %v1748
      %v1765 = vpack.c.bf16 %v1749, %v1749
      %v1766 = vpack.c.bf16 %v1750, %v1750
      %v1767 = vpack.c.bf16 %v1751, %v1751
      %v1768 = vpack.c.bf16 %v1752, %v1752
      %v1769 = vpack.c.bf16 %v1753, %v1753
      %v1770 = vpack.c.bf16 %v1754, %v1754
      %v1771 = vpack.c.bf16 %v1755, %v1755
      %v1772 = vpack.c.bf16 %v1756, %v1756
      %v1773 = vpack.c.bf16 %v1757, %v1757
      %v1774 = vpack.c.bf16 %v1758, %v1758
      %v1775 = vpack.c.bf16 %v1759, %v1759
      %v1776 = vpack.c.bf16 %v1760, %v1760
      %v1777 = vpack.c.bf16 %v1761, %v1761
      %v1778 = vpack.c.bf16 %v1762, %v1762
      %v1779 = vpack.c.bf16 %v1763, %v1763
      %v1780 = vpack.c.bf16 %v1764, %v1764
      %v1782 = vsel %vm851, %v1765, 0
      %vm1784 = vcmask 1043456
      %v1786 = vsel %vm1784, %v805, 0
      %1788 = vmatprep.subr.bf16.mxu0 0
      %1789 = vmatpush1.bf16.msra.mxu0 %v1786
      %1790 = vmatprep.subr.bf16.mxu0 0
      %1791 = vmatpush1.bf16.msra.mxu0 0
      %1792 = vmatprep.subr.bf16.mxu0 0
      %1793 = vmatpush1.bf16.msra.mxu0 0
      %1794 = vmatprep.subr.bf16.mxu0 0
      %1795 = vmatpush1.bf16.msra.mxu0 0
      %1796 = vmatprep.subr.bf16.mxu0 0
      %1797 = vmatpush1.bf16.msra.mxu0 0
      %1798 = vmatprep.subr.bf16.mxu0 0
      %1799 = vmatpush1.bf16.msra.mxu0 0
      %1800 = vmatprep.subr.bf16.mxu0 0
      %1801 = vmatpush1.bf16.msra.mxu0 0
      %1802 = vmatprep.subr.bf16.mxu0 0
      %1803 = vmatpush1.bf16.msra.mxu0 0
      %1804 = vmatprep.subr.bf16.mxu0 0
      %1805 = vmatpush1.bf16.msra.mxu0 0
      %1806 = vmatprep.subr.bf16.mxu0 0
      %1807 = vmatpush1.bf16.msra.mxu0 0
      %1808 = vmatprep.subr.bf16.mxu0 0
      %1809 = vmatpush1.bf16.msra.mxu0 0
      %1810 = vmatprep.subr.bf16.mxu0 0
      %1811 = vmatpush1.bf16.msra.mxu0 0
      %1812 = vmatprep.subr.bf16.mxu0 0
      %1813 = vmatpush1.bf16.msra.mxu0 0
      %1814 = vmatprep.subr.bf16.mxu0 0
      %1815 = vmatpush1.bf16.msra.mxu0 0
      %1816 = vmatprep.subr.bf16.mxu0 0
      %1817 = vmatpush1.bf16.msra.mxu0 0
      %1818 = vmatprep.subr.bf16.mxu0 0
      %1819 = vmatpush1.bf16.msra.mxu0 0
      %1820 = vmatprep.mubr.bf16.mxu0 0
      %1821 = vmatmul.mubr.bf16.gmra.mrb[0].mxu0 %v1782
      %v1822 = vpop.f32.mrb[0].mxu0
      %v1823 = vadd.f32 0.0, %v1822
      %v1824 = vpop.f32.mrb[0].mxu0
      %v1825 = vpop.f32.mrb[0].mxu0
      %v1826 = vpop.f32.mrb[0].mxu0
      %1827 = vdwg.mxu0
      %v1829 = vsel %vm851, %v1766, 0
      %v1832 = vsel %vm1784, %v808, 0
      %1834 = vmatprep.subr.bf16.mxu0 0
      %1835 = vmatpush1.bf16.msra.mxu0 %v1832
      %1836 = vmatprep.subr.bf16.mxu0 0
      %1837 = vmatpush1.bf16.msra.mxu0 0
      %1838 = vmatprep.subr.bf16.mxu0 0
      %1839 = vmatpush1.bf16.msra.mxu0 0
      %1840 = vmatprep.subr.bf16.mxu0 0
      %1841 = vmatpush1.bf16.msra.mxu0 0
      %1842 = vmatprep.subr.bf16.mxu0 0
      %1843 = vmatpush1.bf16.msra.mxu0 0
      %1844 = vmatprep.subr.bf16.mxu0 0
      %1845 = vmatpush1.bf16.msra.mxu0 0
      %1846 = vmatprep.subr.bf16.mxu0 0
      %1847 = vmatpush1.bf16.msra.mxu0 0
      %1848 = vmatprep.subr.bf16.mxu0 0
      %1849 = vmatpush1.bf16.msra.mxu0 0
      %1850 = vmatprep.subr.bf16.mxu0 0
      %1851 = vmatpush1.bf16.msra.mxu0 0
      %1852 = vmatprep.subr.bf16.mxu0 0
      %1853 = vmatpush1.bf16.msra.mxu0 0
      %1854 = vmatprep.subr.bf16.mxu0 0
      %1855 = vmatpush1.bf16.msra.mxu0 0
      %1856 = vmatprep.subr.bf16.mxu0 0
      %1857 = vmatpush1.bf16.msra.mxu0 0
      %1858 = vmatprep.subr.bf16.mxu0 0
      %1859 = vmatpush1.bf16.msra.mxu0 0
      %1860 = vmatprep.subr.bf16.mxu0 0
      %1861 = vmatpush1.bf16.msra.mxu0 0
      %1862 = vmatprep.subr.bf16.mxu0 0
      %1863 = vmatpush1.bf16.msra.mxu0 0
      %1864 = vmatprep.subr.bf16.mxu0 0
      %1865 = vmatpush1.bf16.msra.mxu0 0
      %1866 = vmatprep.mubr.bf16.mxu0 0
      %1867 = vmatmul.mubr.bf16.gmra.mrb[0].mxu0 %v1829
      %v1868 = vpop.f32.mrb[0].mxu0
      %v1869 = vadd.f32 0.0, %v1868
      %v1870 = vpop.f32.mrb[0].mxu0
      %v1871 = vpop.f32.mrb[0].mxu0
      %v1872 = vpop.f32.mrb[0].mxu0
      %1873 = vdwg.mxu0
      %v1875 = vsel %vm851, %v1767, 0
      %v1878 = vsel %vm1784, %v811, 0
      %1880 = vmatprep.subr.bf16.mxu0 0
      %1881 = vmatpush1.bf16.msra.mxu0 %v1878
      %1882 = vmatprep.subr.bf16.mxu0 0
      %1883 = vmatpush1.bf16.msra.mxu0 0
      %1884 = vmatprep.subr.bf16.mxu0 0
      %1885 = vmatpush1.bf16.msra.mxu0 0
      %1886 = vmatprep.subr.bf16.mxu0 0
      %1887 = vmatpush1.bf16.msra.mxu0 0
      %1888 = vmatprep.subr.bf16.mxu0 0
      %1889 = vmatpush1.bf16.msra.mxu0 0
      %1890 = vmatprep.subr.bf16.mxu0 0
      %1891 = vmatpush1.bf16.msra.mxu0 0
      %1892 = vmatprep.subr.bf16.mxu0 0
      %1893 = vmatpush1.bf16.msra.mxu0 0
      %1894 = vmatprep.subr.bf16.mxu0 0
      %1895 = vmatpush1.bf16.msra.mxu0 0
      %1896 = vmatprep.subr.bf16.mxu0 0
      %1897 = vmatpush1.bf16.msra.mxu0 0
      %1898 = vmatprep.subr.bf16.mxu0 0
      %1899 = vmatpush1.bf16.msra.mxu0 0
      %1900 = vmatprep.subr.bf16.mxu0 0
      %1901 = vmatpush1.bf16.msra.mxu0 0
      %1902 = vmatprep.subr.bf16.mxu0 0
      %1903 = vmatpush1.bf16.msra.mxu0 0
      %1904 = vmatprep.subr.bf16.mxu0 0
      %1905 = vmatpush1.bf16.msra.mxu0 0
      %1906 = vmatprep.subr.bf16.mxu0 0
      %1907 = vmatpush1.bf16.msra.mxu0 0
      %1908 = vmatprep.subr.bf16.mxu0 0
      %1909 = vmatpush1.bf16.msra.mxu0 0
      %1910 = vmatprep.subr.bf16.mxu0 0
      %1911 = vmatpush1.bf16.msra.mxu0 0
      %1912 = vmatprep.mubr.bf16.mxu0 0
      %1913 = vmatmul.mubr.bf16.gmra.mrb[0].mxu0 %v1875
      %v1914 = vpop.f32.mrb[0].mxu0
      %v1915 = vadd.f32 0.0, %v1914
      %v1916 = vpop.f32.mrb[0].mxu0
      %v1917 = vpop.f32.mrb[0].mxu0
      %v1918 = vpop.f32.mrb[0].mxu0
      %1919 = vdwg.mxu0
      %v1921 = vsel %vm851, %v1768, 0
      %v1924 = vsel %vm1784, %v814, 0
      %1926 = vmatprep.subr.bf16.mxu0 0
      %1927 = vmatpush1.bf16.msra.mxu0 %v1924
      %1928 = vmatprep.subr.bf16.mxu0 0
      %1929 = vmatpush1.bf16.msra.mxu0 0
      %1930 = vmatprep.subr.bf16.mxu0 0
      %1931 = vmatpush1.bf16.msra.mxu0 0
      %1932 = vmatprep.subr.bf16.mxu0 0
      %1933 = vmatpush1.bf16.msra.mxu0 0
      %1934 = vmatprep.subr.bf16.mxu0 0
      %1935 = vmatpush1.bf16.msra.mxu0 0
      %1936 = vmatprep.subr.bf16.mxu0 0
      %1937 = vmatpush1.bf16.msra.mxu0 0
      %1938 = vmatprep.subr.bf16.mxu0 0
      %1939 = vmatpush1.bf16.msra.mxu0 0
      %1940 = vmatprep.subr.bf16.mxu0 0
      %1941 = vmatpush1.bf16.msra.mxu0 0
      %1942 = vmatprep.subr.bf16.mxu0 0
      %1943 = vmatpush1.bf16.msra.mxu0 0
      %1944 = vmatprep.subr.bf16.mxu0 0
      %1945 = vmatpush1.bf16.msra.mxu0 0
      %1946 = vmatprep.subr.bf16.mxu0 0
      %1947 = vmatpush1.bf16.msra.mxu0 0
      %1948 = vmatprep.subr.bf16.mxu0 0
      %1949 = vmatpush1.bf16.msra.mxu0 0
      %1950 = vmatprep.subr.bf16.mxu0 0
      %1951 = vmatpush1.bf16.msra.mxu0 0
      %1952 = vmatprep.subr.bf16.mxu0 0
      %1953 = vmatpush1.bf16.msra.mxu0 0
      %1954 = vmatprep.subr.bf16.mxu0 0
      %1955 = vmatpush1.bf16.msra.mxu0 0
      %1956 = vmatprep.subr.bf16.mxu0 0
      %1957 = vmatpush1.bf16.msra.mxu0 0
      %1958 = vmatprep.mubr.bf16.mxu0 0
      %1959 = vmatmul.mubr.bf16.gmra.mrb[0].mxu0 %v1921
      %v1960 = vpop.f32.mrb[0].mxu0
      %v1961 = vadd.f32 0.0, %v1960
      %v1962 = vpop.f32.mrb[0].mxu0
      %v1963 = vpop.f32.mrb[0].mxu0
      %v1964 = vpop.f32.mrb[0].mxu0
      %1965 = vdwg.mxu0
      %v1967 = vsel %vm851, %v1769, 0
      %v1970 = vsel %vm1784, %v817, 0
      %1972 = vmatprep.subr.bf16.mxu0 0
      %1973 = vmatpush1.bf16.msra.mxu0 %v1970
      %1974 = vmatprep.subr.bf16.mxu0 0
      %1975 = vmatpush1.bf16.msra.mxu0 0
      %1976 = vmatprep.subr.bf16.mxu0 0
      %1977 = vmatpush1.bf16.msra.mxu0 0
      %1978 = vmatprep.subr.bf16.mxu0 0
      %1979 = vmatpush1.bf16.msra.mxu0 0
      %1980 = vmatprep.subr.bf16.mxu0 0
      %1981 = vmatpush1.bf16.msra.mxu0 0
      %1982 = vmatprep.subr.bf16.mxu0 0
      %1983 = vmatpush1.bf16.msra.mxu0 0
      %1984 = vmatprep.subr.bf16.mxu0 0
      %1985 = vmatpush1.bf16.msra.mxu0 0
      %1986 = vmatprep.subr.bf16.mxu0 0
      %1987 = vmatpush1.bf16.msra.mxu0 0
      %1988 = vmatprep.subr.bf16.mxu0 0
      %1989 = vmatpush1.bf16.msra.mxu0 0
      %1990 = vmatprep.subr.bf16.mxu0 0
      %1991 = vmatpush1.bf16.msra.mxu0 0
      %1992 = vmatprep.subr.bf16.mxu0 0
      %1993 = vmatpush1.bf16.msra.mxu0 0
      %1994 = vmatprep.subr.bf16.mxu0 0
      %1995 = vmatpush1.bf16.msra.mxu0 0
      %1996 = vmatprep.subr.bf16.mxu0 0
      %1997 = vmatpush1.bf16.msra.mxu0 0
      %1998 = vmatprep.subr.bf16.mxu0 0
      %1999 = vmatpush1.bf16.msra.mxu0 0
      %2000 = vmatprep.subr.bf16.mxu0 0
      %2001 = vmatpush1.bf16.msra.mxu0 0
      %2002 = vmatprep.subr.bf16.mxu0 0
      %2003 = vmatpush1.bf16.msra.mxu0 0
      %2004 = vmatprep.mubr.bf16.mxu0 0
      %2005 = vmatmul.mubr.bf16.gmra.mrb[0].mxu0 %v1967
      %v2006 = vpop.f32.mrb[0].mxu0
      %v2007 = vadd.f32 0.0, %v2006
      %v2008 = vpop.f32.mrb[0].mxu0
      %v2009 = vpop.f32.mrb[0].mxu0
      %v2010 = vpop.f32.mrb[0].mxu0
      %2011 = vdwg.mxu0
      %v2013 = vsel %vm851, %v1770, 0
      %v2016 = vsel %vm1784, %v820, 0
      %2018 = vmatprep.subr.bf16.mxu0 0
      %2019 = vmatpush1.bf16.msra.mxu0 %v2016
      %2020 = vmatprep.subr.bf16.mxu0 0
      %2021 = vmatpush1.bf16.msra.mxu0 0
      %2022 = vmatprep.subr.bf16.mxu0 0
      %2023 = vmatpush1.bf16.msra.mxu0 0
      %2024 = vmatprep.subr.bf16.mxu0 0
      %2025 = vmatpush1.bf16.msra.mxu0 0
      %2026 = vmatprep.subr.bf16.mxu0 0
      %2027 = vmatpush1.bf16.msra.mxu0 0
      %2028 = vmatprep.subr.bf16.mxu0 0
      %2029 = vmatpush1.bf16.msra.mxu0 0
      %2030 = vmatprep.subr.bf16.mxu0 0
      %2031 = vmatpush1.bf16.msra.mxu0 0
      %2032 = vmatprep.subr.bf16.mxu0 0
      %2033 = vmatpush1.bf16.msra.mxu0 0
      %2034 = vmatprep.subr.bf16.mxu0 0
      %2035 = vmatpush1.bf16.msra.mxu0 0
      %2036 = vmatprep.subr.bf16.mxu0 0
      %2037 = vmatpush1.bf16.msra.mxu0 0
      %2038 = vmatprep.subr.bf16.mxu0 0
      %2039 = vmatpush1.bf16.msra.mxu0 0
      %2040 = vmatprep.subr.bf16.mxu0 0
      %2041 = vmatpush1.bf16.msra.mxu0 0
      %2042 = vmatprep.subr.bf16.mxu0 0
      %2043 = vmatpush1.bf16.msra.mxu0 0
      %2044 = vmatprep.subr.bf16.mxu0 0
      %2045 = vmatpush1.bf16.msra.mxu0 0
      %2046 = vmatprep.subr.bf16.mxu0 0
      %2047 = vmatpush1.bf16.msra.mxu0 0
      %2048 = vmatprep.subr.bf16.mxu0 0
      %2049 = vmatpush1.bf16.msra.mxu0 0
      %2050 = vmatprep.mubr.bf16.mxu0 0
      %2051 = vmatmul.mubr.bf16.gmra.mrb[0].mxu0 %v2013
      %v2052 = vpop.f32.mrb[0].mxu0
      %v2053 = vadd.f32 0.0, %v2052
      %v2054 = vpop.f32.mrb[0].mxu0
      %v2055 = vpop.f32.mrb[0].mxu0
      %v2056 = vpop.f32.mrb[0].mxu0
      %2057 = vdwg.mxu0
      %v2059 = vsel %vm851, %v1771, 0
      %v2062 = vsel %vm1784, %v823, 0
      %2064 = vmatprep.subr.bf16.mxu0 0
      %2065 = vmatpush1.bf16.msra.mxu0 %v2062
      %2066 = vmatprep.subr.bf16.mxu0 0
      %2067 = vmatpush1.bf16.msra.mxu0 0
      %2068 = vmatprep.subr.bf16.mxu0 0
      %2069 = vmatpush1.bf16.msra.mxu0 0
      %2070 = vmatprep.subr.bf16.mxu0 0
      %2071 = vmatpush1.bf16.msra.mxu0 0
      %2072 = vmatprep.subr.bf16.mxu0 0
      %2073 = vmatpush1.bf16.msra.mxu0 0
      %2074 = vmatprep.subr.bf16.mxu0 0
      %2075 = vmatpush1.bf16.msra.mxu0 0
      %2076 = vmatprep.subr.bf16.mxu0 0
      %2077 = vmatpush1.bf16.msra.mxu0 0
      %2078 = vmatprep.subr.bf16.mxu0 0
      %2079 = vmatpush1.bf16.msra.mxu0 0
      %2080 = vmatprep.subr.bf16.mxu0 0
      %2081 = vmatpush1.bf16.msra.mxu0 0
      %2082 = vmatprep.subr.bf16.mxu0 0
      %2083 = vmatpush1.bf16.msra.mxu0 0
      %2084 = vmatprep.subr.bf16.mxu0 0
      %2085 = vmatpush1.bf16.msra.mxu0 0
      %2086 = vmatprep.subr.bf16.mxu0 0
      %2087 = vmatpush1.bf16.msra.mxu0 0
      %2088 = vmatprep.subr.bf16.mxu0 0
      %2089 = vmatpush1.bf16.msra.mxu0 0
      %2090 = vmatprep.subr.bf16.mxu0 0
      %2091 = vmatpush1.bf16.msra.mxu0 0
      %2092 = vmatprep.subr.bf16.mxu0 0
      %2093 = vmatpush1.bf16.msra.mxu0 0
      %2094 = vmatprep.subr.bf16.mxu0 0
      %2095 = vmatpush1.bf16.msra.mxu0 0
      %2096 = vmatprep.mubr.bf16.mxu0 0
      %2097 = vmatmul.mubr.bf16.gmra.mrb[0].mxu0 %v2059
      %v2098 = vpop.f32.mrb[0].mxu0
      %v2099 = vadd.f32 0.0, %v2098
      %v2100 = vpop.f32.mrb[0].mxu0
      %v2101 = vpop.f32.mrb[0].mxu0
      %v2102 = vpop.f32.mrb[0].mxu0
      %2103 = vdwg.mxu0
      %v2105 = vsel %vm851, %v1772, 0
      %v2108 = vsel %vm1784, %v826, 0
      %2110 = vmatprep.subr.bf16.mxu0 0
      %2111 = vmatpush1.bf16.msra.mxu0 %v2108
      %2112 = vmatprep.subr.bf16.mxu0 0
      %2113 = vmatpush1.bf16.msra.mxu0 0
      %2114 = vmatprep.subr.bf16.mxu0 0
      %2115 = vmatpush1.bf16.msra.mxu0 0
      %2116 = vmatprep.subr.bf16.mxu0 0
      %2117 = vmatpush1.bf16.msra.mxu0 0
      %2118 = vmatprep.subr.bf16.mxu0 0
      %2119 = vmatpush1.bf16.msra.mxu0 0
      %2120 = vmatprep.subr.bf16.mxu0 0
      %2121 = vmatpush1.bf16.msra.mxu0 0
      %2122 = vmatprep.subr.bf16.mxu0 0
      %2123 = vmatpush1.bf16.msra.mxu0 0
      %2124 = vmatprep.subr.bf16.mxu0 0
      %2125 = vmatpush1.bf16.msra.mxu0 0
      %2126 = vmatprep.subr.bf16.mxu0 0
      %2127 = vmatpush1.bf16.msra.mxu0 0
      %2128 = vmatprep.subr.bf16.mxu0 0
      %2129 = vmatpush1.bf16.msra.mxu0 0
      %2130 = vmatprep.subr.bf16.mxu0 0
      %2131 = vmatpush1.bf16.msra.mxu0 0
      %2132 = vmatprep.subr.bf16.mxu0 0
      %2133 = vmatpush1.bf16.msra.mxu0 0
      %2134 = vmatprep.subr.bf16.mxu0 0
      %2135 = vmatpush1.bf16.msra.mxu0 0
      %2136 = vmatprep.subr.bf16.mxu0 0
      %2137 = vmatpush1.bf16.msra.mxu0 0
      %2138 = vmatprep.subr.bf16.mxu0 0
      %2139 = vmatpush1.bf16.msra.mxu0 0
      %2140 = vmatprep.subr.bf16.mxu0 0
      %2141 = vmatpush1.bf16.msra.mxu0 0
      %2142 = vmatprep.mubr.bf16.mxu0 0
      %2143 = vmatmul.mubr.bf16.gmra.mrb[0].mxu0 %v2105
      %v2144 = vpop.f32.mrb[0].mxu0
      %v2145 = vadd.f32 0.0, %v2144
      %v2146 = vpop.f32.mrb[0].mxu0
      %v2147 = vpop.f32.mrb[0].mxu0
      %v2148 = vpop.f32.mrb[0].mxu0
      %2149 = vdwg.mxu0
      %v2151 = vsel %vm851, %v1773, 0
      %v2154 = vsel %vm1784, %v829, 0
      %2156 = vmatprep.subr.bf16.mxu0 0
      %2157 = vmatpush1.bf16.msra.mxu0 %v2154
      %2158 = vmatprep.subr.bf16.mxu0 0
      %2159 = vmatpush1.bf16.msra.mxu0 0
      %2160 = vmatprep.subr.bf16.mxu0 0
      %2161 = vmatpush1.bf16.msra.mxu0 0
      %2162 = vmatprep.subr.bf16.mxu0 0
      %2163 = vmatpush1.bf16.msra.mxu0 0
      %2164 = vmatprep.subr.bf16.mxu0 0
      %2165 = vmatpush1.bf16.msra.mxu0 0
      %2166 = vmatprep.subr.bf16.mxu0 0
      %2167 = vmatpush1.bf16.msra.mxu0 0
      %2168 = vmatprep.subr.bf16.mxu0 0
      %2169 = vmatpush1.bf16.msra.mxu0 0
      %2170 = vmatprep.subr.bf16.mxu0 0
      %2171 = vmatpush1.bf16.msra.mxu0 0
      %2172 = vmatprep.subr.bf16.mxu0 0
      %2173 = vmatpush1.bf16.msra.mxu0 0
      %2174 = vmatprep.subr.bf16.mxu0 0
      %2175 = vmatpush1.bf16.msra.mxu0 0
      %2176 = vmatprep.subr.bf16.mxu0 0
      %2177 = vmatpush1.bf16.msra.mxu0 0
      %2178 = vmatprep.subr.bf16.mxu0 0
      %2179 = vmatpush1.bf16.msra.mxu0 0
      %2180 = vmatprep.subr.bf16.mxu0 0
      %2181 = vmatpush1.bf16.msra.mxu0 0
      %2182 = vmatprep.subr.bf16.mxu0 0
      %2183 = vmatpush1.bf16.msra.mxu0 0
      %2184 = vmatprep.subr.bf16.mxu0 0
      %2185 = vmatpush1.bf16.msra.mxu0 0
      %2186 = vmatprep.subr.bf16.mxu0 0
      %2187 = vmatpush1.bf16.msra.mxu0 0
      %2188 = vmatprep.mubr.bf16.mxu0 0
      %2189 = vmatmul.mubr.bf16.gmra.mrb[0].mxu0 %v2151
      %v2190 = vpop.f32.mrb[0].mxu0
      %v2191 = vadd.f32 0.0, %v2190
      %v2192 = vpop.f32.mrb[0].mxu0
      %v2193 = vpop.f32.mrb[0].mxu0
      %v2194 = vpop.f32.mrb[0].mxu0
      %2195 = vdwg.mxu0
      %v2197 = vsel %vm851, %v1774, 0
      %v2200 = vsel %vm1784, %v832, 0
      %2202 = vmatprep.subr.bf16.mxu0 0
      %2203 = vmatpush1.bf16.msra.mxu0 %v2200
      %2204 = vmatprep.subr.bf16.mxu0 0
      %2205 = vmatpush1.bf16.msra.mxu0 0
      %2206 = vmatprep.subr.bf16.mxu0 0
      %2207 = vmatpush1.bf16.msra.mxu0 0
      %2208 = vmatprep.subr.bf16.mxu0 0
      %2209 = vmatpush1.bf16.msra.mxu0 0
      %2210 = vmatprep.subr.bf16.mxu0 0
      %2211 = vmatpush1.bf16.msra.mxu0 0
      %2212 = vmatprep.subr.bf16.mxu0 0
      %2213 = vmatpush1.bf16.msra.mxu0 0
      %2214 = vmatprep.subr.bf16.mxu0 0
      %2215 = vmatpush1.bf16.msra.mxu0 0
      %2216 = vmatprep.subr.bf16.mxu0 0
      %2217 = vmatpush1.bf16.msra.mxu0 0
      %2218 = vmatprep.subr.bf16.mxu0 0
      %2219 = vmatpush1.bf16.msra.mxu0 0
      %2220 = vmatprep.subr.bf16.mxu0 0
      %2221 = vmatpush1.bf16.msra.mxu0 0
      %2222 = vmatprep.subr.bf16.mxu0 0
      %2223 = vmatpush1.bf16.msra.mxu0 0
      %2224 = vmatprep.subr.bf16.mxu0 0
      %2225 = vmatpush1.bf16.msra.mxu0 0
      %2226 = vmatprep.subr.bf16.mxu0 0
      %2227 = vmatpush1.bf16.msra.mxu0 0
      %2228 = vmatprep.subr.bf16.mxu0 0
      %2229 = vmatpush1.bf16.msra.mxu0 0
      %2230 = vmatprep.subr.bf16.mxu0 0
      %2231 = vmatpush1.bf16.msra.mxu0 0
      %2232 = vmatprep.subr.bf16.mxu0 0
      %2233 = vmatpush1.bf16.msra.mxu0 0
      %2234 = vmatprep.mubr.bf16.mxu0 0
      %2235 = vmatmul.mubr.bf16.gmra.mrb[0].mxu0 %v2197
      %v2236 = vpop.f32.mrb[0].mxu0
      %v2237 = vadd.f32 0.0, %v2236
      %v2238 = vpop.f32.mrb[0].mxu0
      %v2239 = vpop.f32.mrb[0].mxu0
      %v2240 = vpop.f32.mrb[0].mxu0
      %2241 = vdwg.mxu0
      %v2243 = vsel %vm851, %v1775, 0
      %v2246 = vsel %vm1784, %v835, 0
      %2248 = vmatprep.subr.bf16.mxu0 0
      %2249 = vmatpush1.bf16.msra.mxu0 %v2246
      %2250 = vmatprep.subr.bf16.mxu0 0
      %2251 = vmatpush1.bf16.msra.mxu0 0
      %2252 = vmatprep.subr.bf16.mxu0 0
      %2253 = vmatpush1.bf16.msra.mxu0 0
      %2254 = vmatprep.subr.bf16.mxu0 0
      %2255 = vmatpush1.bf16.msra.mxu0 0
      %2256 = vmatprep.subr.bf16.mxu0 0
      %2257 = vmatpush1.bf16.msra.mxu0 0
      %2258 = vmatprep.subr.bf16.mxu0 0
      %2259 = vmatpush1.bf16.msra.mxu0 0
      %2260 = vmatprep.subr.bf16.mxu0 0
      %2261 = vmatpush1.bf16.msra.mxu0 0
      %2262 = vmatprep.subr.bf16.mxu0 0
      %2263 = vmatpush1.bf16.msra.mxu0 0
      %2264 = vmatprep.subr.bf16.mxu0 0
      %2265 = vmatpush1.bf16.msra.mxu0 0
      %2266 = vmatprep.subr.bf16.mxu0 0
      %2267 = vmatpush1.bf16.msra.mxu0 0
      %2268 = vmatprep.subr.bf16.mxu0 0
      %2269 = vmatpush1.bf16.msra.mxu0 0
      %2270 = vmatprep.subr.bf16.mxu0 0
      %2271 = vmatpush1.bf16.msra.mxu0 0
      %2272 = vmatprep.subr.bf16.mxu0 0
      %2273 = vmatpush1.bf16.msra.mxu0 0
      %2274 = vmatprep.subr.bf16.mxu0 0
      %2275 = vmatpush1.bf16.msra.mxu0 0
      %2276 = vmatprep.subr.bf16.mxu0 0
      %2277 = vmatpush1.bf16.msra.mxu0 0
      %2278 = vmatprep.subr.bf16.mxu0 0
      %2279 = vmatpush1.bf16.msra.mxu0 0
      %2280 = vmatprep.mubr.bf16.mxu0 0
      %2281 = vmatmul.mubr.bf16.gmra.mrb[0].mxu0 %v2243
      %v2282 = vpop.f32.mrb[0].mxu0
      %v2283 = vadd.f32 0.0, %v2282
      %v2284 = vpop.f32.mrb[0].mxu0
      %v2285 = vpop.f32.mrb[0].mxu0
      %v2286 = vpop.f32.mrb[0].mxu0
      %2287 = vdwg.mxu0
      %v2289 = vsel %vm851, %v1776, 0
      %v2292 = vsel %vm1784, %v838, 0
      %2294 = vmatprep.subr.bf16.mxu0 0
      %2295 = vmatpush1.bf16.msra.mxu0 %v2292
      %2296 = vmatprep.subr.bf16.mxu0 0
      %2297 = vmatpush1.bf16.msra.mxu0 0
      %2298 = vmatprep.subr.bf16.mxu0 0
      %2299 = vmatpush1.bf16.msra.mxu0 0
      %2300 = vmatprep.subr.bf16.mxu0 0
      %2301 = vmatpush1.bf16.msra.mxu0 0
      %2302 = vmatprep.subr.bf16.mxu0 0
      %2303 = vmatpush1.bf16.msra.mxu0 0
      %2304 = vmatprep.subr.bf16.mxu0 0
      %2305 = vmatpush1.bf16.msra.mxu0 0
      %2306 = vmatprep.subr.bf16.mxu0 0
      %2307 = vmatpush1.bf16.msra.mxu0 0
      %2308 = vmatprep.subr.bf16.mxu0 0
      %2309 = vmatpush1.bf16.msra.mxu0 0
      %2310 = vmatprep.subr.bf16.mxu0 0
      %2311 = vmatpush1.bf16.msra.mxu0 0
      %2312 = vmatprep.subr.bf16.mxu0 0
      %2313 = vmatpush1.bf16.msra.mxu0 0
      %2314 = vmatprep.subr.bf16.mxu0 0
      %2315 = vmatpush1.bf16.msra.mxu0 0
      %2316 = vmatprep.subr.bf16.mxu0 0
      %2317 = vmatpush1.bf16.msra.mxu0 0
      %2318 = vmatprep.subr.bf16.mxu0 0
      %2319 = vmatpush1.bf16.msra.mxu0 0
      %2320 = vmatprep.subr.bf16.mxu0 0
      %2321 = vmatpush1.bf16.msra.mxu0 0
      %2322 = vmatprep.subr.bf16.mxu0 0
      %2323 = vmatpush1.bf16.msra.mxu0 0
      %2324 = vmatprep.subr.bf16.mxu0 0
      %2325 = vmatpush1.bf16.msra.mxu0 0
      %2326 = vmatprep.mubr.bf16.mxu0 0
      %2327 = vmatmul.mubr.bf16.gmra.mrb[0].mxu0 %v2289
      %v2328 = vpop.f32.mrb[0].mxu0
      %v2329 = vadd.f32 0.0, %v2328
      %v2330 = vpop.f32.mrb[0].mxu0
      %v2331 = vpop.f32.mrb[0].mxu0
      %v2332 = vpop.f32.mrb[0].mxu0
      %2333 = vdwg.mxu0
      %v2335 = vsel %vm851, %v1777, 0
      %v2338 = vsel %vm1784, %v841, 0
      %2340 = vmatprep.subr.bf16.mxu0 0
      %2341 = vmatpush1.bf16.msra.mxu0 %v2338
      %2342 = vmatprep.subr.bf16.mxu0 0
      %2343 = vmatpush1.bf16.msra.mxu0 0
      %2344 = vmatprep.subr.bf16.mxu0 0
      %2345 = vmatpush1.bf16.msra.mxu0 0
      %2346 = vmatprep.subr.bf16.mxu0 0
      %2347 = vmatpush1.bf16.msra.mxu0 0
      %2348 = vmatprep.subr.bf16.mxu0 0
      %2349 = vmatpush1.bf16.msra.mxu0 0
      %2350 = vmatprep.subr.bf16.mxu0 0
      %2351 = vmatpush1.bf16.msra.mxu0 0
      %2352 = vmatprep.subr.bf16.mxu0 0
      %2353 = vmatpush1.bf16.msra.mxu0 0
      %2354 = vmatprep.subr.bf16.mxu0 0
      %2355 = vmatpush1.bf16.msra.mxu0 0
      %2356 = vmatprep.subr.bf16.mxu0 0
      %2357 = vmatpush1.bf16.msra.mxu0 0
      %2358 = vmatprep.subr.bf16.mxu0 0
      %2359 = vmatpush1.bf16.msra.mxu0 0
      %2360 = vmatprep.subr.bf16.mxu0 0
      %2361 = vmatpush1.bf16.msra.mxu0 0
      %2362 = vmatprep.subr.bf16.mxu0 0
      %2363 = vmatpush1.bf16.msra.mxu0 0
      %2364 = vmatprep.subr.bf16.mxu0 0
      %2365 = vmatpush1.bf16.msra.mxu0 0
      %2366 = vmatprep.subr.bf16.mxu0 0
      %2367 = vmatpush1.bf16.msra.mxu0 0
      %2368 = vmatprep.subr.bf16.mxu0 0
      %2369 = vmatpush1.bf16.msra.mxu0 0
      %2370 = vmatprep.subr.bf16.mxu0 0
      %2371 = vmatpush1.bf16.msra.mxu0 0
      %2372 = vmatprep.mubr.bf16.mxu0 0
      %2373 = vmatmul.mubr.bf16.gmra.mrb[0].mxu0 %v2335
      %v2374 = vpop.f32.mrb[0].mxu0
      %v2375 = vadd.f32 0.0, %v2374
      %v2376 = vpop.f32.mrb[0].mxu0
      %v2377 = vpop.f32.mrb[0].mxu0
      %v2378 = vpop.f32.mrb[0].mxu0
      %2379 = vdwg.mxu0
      %v2381 = vsel %vm851, %v1778, 0
      %v2384 = vsel %vm1784, %v844, 0
      %2386 = vmatprep.subr.bf16.mxu0 0
      %2387 = vmatpush1.bf16.msra.mxu0 %v2384
      %2388 = vmatprep.subr.bf16.mxu0 0
      %2389 = vmatpush1.bf16.msra.mxu0 0
      %2390 = vmatprep.subr.bf16.mxu0 0
      %2391 = vmatpush1.bf16.msra.mxu0 0
      %2392 = vmatprep.subr.bf16.mxu0 0
      %2393 = vmatpush1.bf16.msra.mxu0 0
      %2394 = vmatprep.subr.bf16.mxu0 0
      %2395 = vmatpush1.bf16.msra.mxu0 0
      %2396 = vmatprep.subr.bf16.mxu0 0
      %2397 = vmatpush1.bf16.msra.mxu0 0
      %2398 = vmatprep.subr.bf16.mxu0 0
      %2399 = vmatpush1.bf16.msra.mxu0 0
      %2400 = vmatprep.subr.bf16.mxu0 0
      %2401 = vmatpush1.bf16.msra.mxu0 0
      %2402 = vmatprep.subr.bf16.mxu0 0
      %2403 = vmatpush1.bf16.msra.mxu0 0
      %2404 = vmatprep.subr.bf16.mxu0 0
      %2405 = vmatpush1.bf16.msra.mxu0 0
      %2406 = vmatprep.subr.bf16.mxu0 0
      %2407 = vmatpush1.bf16.msra.mxu0 0
      %2408 = vmatprep.subr.bf16.mxu0 0
      %2409 = vmatpush1.bf16.msra.mxu0 0
      %2410 = vmatprep.subr.bf16.mxu0 0
      %2411 = vmatpush1.bf16.msra.mxu0 0
      %2412 = vmatprep.subr.bf16.mxu0 0
      %2413 = vmatpush1.bf16.msra.mxu0 0
      %2414 = vmatprep.subr.bf16.mxu0 0
      %2415 = vmatpush1.bf16.msra.mxu0 0
      %2416 = vmatprep.subr.bf16.mxu0 0
      %2417 = vmatpush1.bf16.msra.mxu0 0
      %2418 = vmatprep.mubr.bf16.mxu0 0
      %2419 = vmatmul.mubr.bf16.gmra.mrb[0].mxu0 %v2381
      %v2420 = vpop.f32.mrb[0].mxu0
      %v2421 = vadd.f32 0.0, %v2420
      %v2422 = vpop.f32.mrb[0].mxu0
      %v2423 = vpop.f32.mrb[0].mxu0
      %v2424 = vpop.f32.mrb[0].mxu0
      %2425 = vdwg.mxu0
      %v2427 = vsel %vm851, %v1779, 0
      %v2430 = vsel %vm1784, %v847, 0
      %2432 = vmatprep.subr.bf16.mxu0 0
      %2433 = vmatpush1.bf16.msra.mxu0 %v2430
      %2434 = vmatprep.subr.bf16.mxu0 0
      %2435 = vmatpush1.bf16.msra.mxu0 0
      %2436 = vmatprep.subr.bf16.mxu0 0
      %2437 = vmatpush1.bf16.msra.mxu0 0
      %2438 = vmatprep.subr.bf16.mxu0 0
      %2439 = vmatpush1.bf16.msra.mxu0 0
      %2440 = vmatprep.subr.bf16.mxu0 0
      %2441 = vmatpush1.bf16.msra.mxu0 0
      %2442 = vmatprep.subr.bf16.mxu0 0
      %2443 = vmatpush1.bf16.msra.mxu0 0
      %2444 = vmatprep.subr.bf16.mxu0 0
      %2445 = vmatpush1.bf16.msra.mxu0 0
      %2446 = vmatprep.subr.bf16.mxu0 0
      %2447 = vmatpush1.bf16.msra.mxu0 0
      %2448 = vmatprep.subr.bf16.mxu0 0
      %2449 = vmatpush1.bf16.msra.mxu0 0
      %2450 = vmatprep.subr.bf16.mxu0 0
      %2451 = vmatpush1.bf16.msra.mxu0 0
      %2452 = vmatprep.subr.bf16.mxu0 0
      %2453 = vmatpush1.bf16.msra.mxu0 0
      %2454 = vmatprep.subr.bf16.mxu0 0
      %2455 = vmatpush1.bf16.msra.mxu0 0
      %2456 = vmatprep.subr.bf16.mxu0 0
      %2457 = vmatpush1.bf16.msra.mxu0 0
      %2458 = vmatprep.subr.bf16.mxu0 0
      %2459 = vmatpush1.bf16.msra.mxu0 0
      %2460 = vmatprep.subr.bf16.mxu0 0
      %2461 = vmatpush1.bf16.msra.mxu0 0
      %2462 = vmatprep.subr.bf16.mxu0 0
      %2463 = vmatpush1.bf16.msra.mxu0 0
      %2464 = vmatprep.mubr.bf16.mxu0 0
      %2465 = vmatmul.mubr.bf16.gmra.mrb[0].mxu0 %v2427
      %v2466 = vpop.f32.mrb[0].mxu0
      %v2467 = vadd.f32 0.0, %v2466
      %v2468 = vpop.f32.mrb[0].mxu0
      %v2469 = vpop.f32.mrb[0].mxu0
      %v2470 = vpop.f32.mrb[0].mxu0
      %2471 = vdwg.mxu0
      %v2473 = vsel %vm851, %v1780, 0
      %v2476 = vsel %vm1784, %v850, 0
      %2478 = vmatprep.subr.bf16.mxu0 0
      %2479 = vmatpush1.bf16.msra.mxu0 %v2476
      %2480 = vmatprep.subr.bf16.mxu0 0
      %2481 = vmatpush1.bf16.msra.mxu0 0
      %2482 = vmatprep.subr.bf16.mxu0 0
      %2483 = vmatpush1.bf16.msra.mxu0 0
      %2484 = vmatprep.subr.bf16.mxu0 0
      %2485 = vmatpush1.bf16.msra.mxu0 0
      %2486 = vmatprep.subr.bf16.mxu0 0
      %2487 = vmatpush1.bf16.msra.mxu0 0
      %2488 = vmatprep.subr.bf16.mxu0 0
      %2489 = vmatpush1.bf16.msra.mxu0 0
      %2490 = vmatprep.subr.bf16.mxu0 0
      %2491 = vmatpush1.bf16.msra.mxu0 0
      %2492 = vmatprep.subr.bf16.mxu0 0
      %2493 = vmatpush1.bf16.msra.mxu0 0
      %2494 = vmatprep.subr.bf16.mxu0 0
      %2495 = vmatpush1.bf16.msra.mxu0 0
      %2496 = vmatprep.subr.bf16.mxu0 0
      %2497 = vmatpush1.bf16.msra.mxu0 0
      %2498 = vmatprep.subr.bf16.mxu0 0
      %2499 = vmatpush1.bf16.msra.mxu0 0
      %2500 = vmatprep.subr.bf16.mxu0 0
      %2501 = vmatpush1.bf16.msra.mxu0 0
      %2502 = vmatprep.subr.bf16.mxu0 0
      %2503 = vmatpush1.bf16.msra.mxu0 0
      %2504 = vmatprep.subr.bf16.mxu0 0
      %2505 = vmatpush1.bf16.msra.mxu0 0
      %2506 = vmatprep.subr.bf16.mxu0 0
      %2507 = vmatpush1.bf16.msra.mxu0 0
      %2508 = vmatprep.subr.bf16.mxu0 0
      %2509 = vmatpush1.bf16.msra.mxu0 0
      %2510 = vmatprep.mubr.bf16.mxu0 0
      %2511 = vmatmul.mubr.bf16.gmra.mrb[0].mxu0 %v2473
      %v2512 = vpop.f32.mrb[0].mxu0
      %v2513 = vadd.f32 0.0, %v2512
      %v2514 = vpop.f32.mrb[0].mxu0
      %v2515 = vpop.f32.mrb[0].mxu0
      %v2516 = vpop.f32.mrb[0].mxu0
      %2517 = vdwg.mxu0
      %v2519 = vunpack.c.l.b16 %v339
      %v2520 = vpack.c.b16 %v2519, %v2519
      %2521 = vrot.lane.b32.xlu0 %v2520, 120
      %v2522 = vpop.permute.xlu0 %2521
      %v2523 = vunpack.c.l.b16 %v605
      %v2524 = vpack.c.b16 %v2523, %v2523
      %2525 = vrot.lane.b32.xlu0 %v2524, 120
      %v2526 = vpop.permute.xlu0 %2525
      %v2528 = vsel %vm851, %v2522, 0
      %v2531 = vsel %vm851, %v2526, 0
      %2533 = vmatprep.subr.bf16.mxu0 0
      %2534 = vmatpush1.bf16.xpose.msra.mxu0 %v2531
      %2535 = vmatprep.subr.bf16.mxu0 0
      %2536 = vmatpush1.bf16.xpose.msra.mxu0 0
      %2537 = vmatprep.subr.bf16.mxu0 0
      %2538 = vmatpush1.bf16.xpose.msra.mxu0 0
      %2539 = vmatprep.subr.bf16.mxu0 0
      %2540 = vmatpush1.bf16.xpose.msra.mxu0 0
      %2541 = vmatprep.subr.bf16.mxu0 0
      %2542 = vmatpush1.bf16.xpose.msra.mxu0 0
      %2543 = vmatprep.subr.bf16.mxu0 0
      %2544 = vmatpush1.bf16.xpose.msra.mxu0 0
      %2545 = vmatprep.subr.bf16.mxu0 0
      %2546 = vmatpush1.bf16.xpose.msra.mxu0 0
      %2547 = vmatprep.subr.bf16.mxu0 0
      %2548 = vmatpush1.bf16.xpose.msra.mxu0 0
      %2549 = vmatprep.subr.bf16.mxu0 0
      %2550 = vmatpush1.bf16.xpose.msra.mxu0 0
      %2551 = vmatprep.subr.bf16.mxu0 0
      %2552 = vmatpush1.bf16.xpose.msra.mxu0 0
      %2553 = vmatprep.subr.bf16.mxu0 0
      %2554 = vmatpush1.bf16.xpose.msra.mxu0 0
      %2555 = vmatprep.subr.bf16.mxu0 0
      %2556 = vmatpush1.bf16.xpose.msra.mxu0 0
      %2557 = vmatprep.subr.bf16.mxu0 0
      %2558 = vmatpush1.bf16.xpose.msra.mxu0 0
      %2559 = vmatprep.subr.bf16.mxu0 0
      %2560 = vmatpush1.bf16.xpose.msra.mxu0 0
      %2561 = vmatprep.subr.bf16.mxu0 0
      %2562 = vmatpush1.bf16.xpose.msra.mxu0 0
      %2563 = vmatprep.subr.bf16.mxu0 0
      %2564 = vmatpush1.bf16.xpose.msra.mxu0 0
      %2565 = vmatprep.mubr.bf16.mxu0 0
      %2566 = vmatmul.mubr.bf16.gmra.mrb[0].mxu0 %v2528
      %v2567 = vpop.f32.mrb[0].mxu0
      %v2568 = vadd.f32 0.0, %v2567
      %v2569 = vpop.f32.mrb[0].mxu0
      %v2570 = vpop.f32.mrb[0].mxu0
      %v2571 = vpop.f32.mrb[0].mxu0
      %2572 = vdwg.mxu0
      %v2574 = vunpack.c.l.b16 %v373
      %v2575 = vpack.c.b16 %v2574, %v2574
      %2576 = vrot.lane.b32.xlu0 %v2575, 120
      %v2577 = vpop.permute.xlu0 %2576
      %v2578 = vunpack.c.l.b16 %v608
      %v2579 = vpack.c.b16 %v2578, %v2578
      %2580 = vrot.lane.b32.xlu0 %v2579, 120
      %v2581 = vpop.permute.xlu0 %2580
      %v2583 = vsel %vm851, %v2577, 0
      %v2586 = vsel %vm851, %v2581, 0
      %2588 = vmatprep.subr.bf16.mxu0 0
      %2589 = vmatpush1.bf16.xpose.msra.mxu0 %v2586
      %2590 = vmatprep.subr.bf16.mxu0 0
      %2591 = vmatpush1.bf16.xpose.msra.mxu0 0
      %2592 = vmatprep.subr.bf16.mxu0 0
      %2593 = vmatpush1.bf16.xpose.msra.mxu0 0
      %2594 = vmatprep.subr.bf16.mxu0 0
      %2595 = vmatpush1.bf16.xpose.msra.mxu0 0
      %2596 = vmatprep.subr.bf16.mxu0 0
      %2597 = vmatpush1.bf16.xpose.msra.mxu0 0
      %2598 = vmatprep.subr.bf16.mxu0 0
      %2599 = vmatpush1.bf16.xpose.msra.mxu0 0
      %2600 = vmatprep.subr.bf16.mxu0 0
      %2601 = vmatpush1.bf16.xpose.msra.mxu0 0
      %2602 = vmatprep.subr.bf16.mxu0 0
      %2603 = vmatpush1.bf16.xpose.msra.mxu0 0
      %2604 = vmatprep.subr.bf16.mxu0 0
      %2605 = vmatpush1.bf16.xpose.msra.mxu0 0
      %2606 = vmatprep.subr.bf16.mxu0 0
      %2607 = vmatpush1.bf16.xpose.msra.mxu0 0
      %2608 = vmatprep.subr.bf16.mxu0 0
      %2609 = vmatpush1.bf16.xpose.msra.mxu0 0
      %2610 = vmatprep.subr.bf16.mxu0 0
      %2611 = vmatpush1.bf16.xpose.msra.mxu0 0
      %2612 = vmatprep.subr.bf16.mxu0 0
      %2613 = vmatpush1.bf16.xpose.msra.mxu0 0
      %2614 = vmatprep.subr.bf16.mxu0 0
      %2615 = vmatpush1.bf16.xpose.msra.mxu0 0
      %2616 = vmatprep.subr.bf16.mxu0 0
      %2617 = vmatpush1.bf16.xpose.msra.mxu0 0
      %2618 = vmatprep.subr.bf16.mxu0 0
      %2619 = vmatpush1.bf16.xpose.msra.mxu0 0
      %2620 = vmatprep.mubr.bf16.mxu0 0
      %2621 = vmatmul.mubr.bf16.gmra.mrb[0].mxu0 %v2583
      %v2622 = vpop.f32.mrb[0].mxu0
      %v2623 = vadd.f32 0.0, %v2622
      %v2624 = vpop.f32.mrb[0].mxu0
      %v2625 = vpop.f32.mrb[0].mxu0
      %v2626 = vpop.f32.mrb[0].mxu0
      %2627 = vdwg.mxu0
      %v2629 = vunpack.c.l.b16 %v347
      %v2630 = vpack.c.b16 %v2629, %v2629
      %2631 = vrot.lane.b32.xlu0 %v2630, 120
      %v2632 = vpop.permute.xlu0 %2631
      %v2633 = vunpack.c.l.b16 %v611
      %v2634 = vpack.c.b16 %v2633, %v2633
      %2635 = vrot.lane.b32.xlu0 %v2634, 120
      %v2636 = vpop.permute.xlu0 %2635
      %v2638 = vsel %vm851, %v2632, 0
      %v2641 = vsel %vm851, %v2636, 0
      %2643 = vmatprep.subr.bf16.mxu0 0
      %2644 = vmatpush1.bf16.xpose.msra.mxu0 %v2641
      %2645 = vmatprep.subr.bf16.mxu0 0
      %2646 = vmatpush1.bf16.xpose.msra.mxu0 0
      %2647 = vmatprep.subr.bf16.mxu0 0
      %2648 = vmatpush1.bf16.xpose.msra.mxu0 0
      %2649 = vmatprep.subr.bf16.mxu0 0
      %2650 = vmatpush1.bf16.xpose.msra.mxu0 0
      %2651 = vmatprep.subr.bf16.mxu0 0
      %2652 = vmatpush1.bf16.xpose.msra.mxu0 0
      %2653 = vmatprep.subr.bf16.mxu0 0
      %2654 = vmatpush1.bf16.xpose.msra.mxu0 0
      %2655 = vmatprep.subr.bf16.mxu0 0
      %2656 = vmatpush1.bf16.xpose.msra.mxu0 0
      %2657 = vmatprep.subr.bf16.mxu0 0
      %2658 = vmatpush1.bf16.xpose.msra.mxu0 0
      %2659 = vmatprep.subr.bf16.mxu0 0
      %2660 = vmatpush1.bf16.xpose.msra.mxu0 0
      %2661 = vmatprep.subr.bf16.mxu0 0
      %2662 = vmatpush1.bf16.xpose.msra.mxu0 0
      %2663 = vmatprep.subr.bf16.mxu0 0
      %2664 = vmatpush1.bf16.xpose.msra.mxu0 0
      %2665 = vmatprep.subr.bf16.mxu0 0
      %2666 = vmatpush1.bf16.xpose.msra.mxu0 0
      %2667 = vmatprep.subr.bf16.mxu0 0
      %2668 = vmatpush1.bf16.xpose.msra.mxu0 0
      %2669 = vmatprep.subr.bf16.mxu0 0
      %2670 = vmatpush1.bf16.xpose.msra.mxu0 0
      %2671 = vmatprep.subr.bf16.mxu0 0
      %2672 = vmatpush1.bf16.xpose.msra.mxu0 0
      %2673 = vmatprep.subr.bf16.mxu0 0
      %2674 = vmatpush1.bf16.xpose.msra.mxu0 0
      %2675 = vmatprep.mubr.bf16.mxu0 0
      %2676 = vmatmul.mubr.bf16.gmra.mrb[0].mxu0 %v2638
      %v2677 = vpop.f32.mrb[0].mxu0
      %v2678 = vadd.f32 0.0, %v2677
      %v2679 = vpop.f32.mrb[0].mxu0
      %v2680 = vpop.f32.mrb[0].mxu0
      %v2681 = vpop.f32.mrb[0].mxu0
      %2682 = vdwg.mxu0
      %v2684 = vunpack.c.l.b16 %v381
      %v2685 = vpack.c.b16 %v2684, %v2684
      %2686 = vrot.lane.b32.xlu0 %v2685, 120
      %v2687 = vpop.permute.xlu0 %2686
      %v2688 = vunpack.c.l.b16 %v614
      %v2689 = vpack.c.b16 %v2688, %v2688
      %2690 = vrot.lane.b32.xlu0 %v2689, 120
      %v2691 = vpop.permute.xlu0 %2690
      %v2693 = vsel %vm851, %v2687, 0
      %v2696 = vsel %vm851, %v2691, 0
      %2698 = vmatprep.subr.bf16.mxu0 0
      %2699 = vmatpush1.bf16.xpose.msra.mxu0 %v2696
      %2700 = vmatprep.subr.bf16.mxu0 0
      %2701 = vmatpush1.bf16.xpose.msra.mxu0 0
      %2702 = vmatprep.subr.bf16.mxu0 0
      %2703 = vmatpush1.bf16.xpose.msra.mxu0 0
      %2704 = vmatprep.subr.bf16.mxu0 0
      %2705 = vmatpush1.bf16.xpose.msra.mxu0 0
      %2706 = vmatprep.subr.bf16.mxu0 0
      %2707 = vmatpush1.bf16.xpose.msra.mxu0 0
      %2708 = vmatprep.subr.bf16.mxu0 0
      %2709 = vmatpush1.bf16.xpose.msra.mxu0 0
      %2710 = vmatprep.subr.bf16.mxu0 0
      %2711 = vmatpush1.bf16.xpose.msra.mxu0 0
      %2712 = vmatprep.subr.bf16.mxu0 0
      %2713 = vmatpush1.bf16.xpose.msra.mxu0 0
      %2714 = vmatprep.subr.bf16.mxu0 0
      %2715 = vmatpush1.bf16.xpose.msra.mxu0 0
      %2716 = vmatprep.subr.bf16.mxu0 0
      %2717 = vmatpush1.bf16.xpose.msra.mxu0 0
      %2718 = vmatprep.subr.bf16.mxu0 0
      %2719 = vmatpush1.bf16.xpose.msra.mxu0 0
      %2720 = vmatprep.subr.bf16.mxu0 0
      %2721 = vmatpush1.bf16.xpose.msra.mxu0 0
      %2722 = vmatprep.subr.bf16.mxu0 0
      %2723 = vmatpush1.bf16.xpose.msra.mxu0 0
      %2724 = vmatprep.subr.bf16.mxu0 0
      %2725 = vmatpush1.bf16.xpose.msra.mxu0 0
      %2726 = vmatprep.subr.bf16.mxu0 0
      %2727 = vmatpush1.bf16.xpose.msra.mxu0 0
      %2728 = vmatprep.subr.bf16.mxu0 0
      %2729 = vmatpush1.bf16.xpose.msra.mxu0 0
      %2730 = vmatprep.mubr.bf16.mxu0 0
      %2731 = vmatmul.mubr.bf16.gmra.mrb[0].mxu0 %v2693
      %v2732 = vpop.f32.mrb[0].mxu0
      %v2733 = vadd.f32 0.0, %v2732
      %v2734 = vpop.f32.mrb[0].mxu0
      %v2735 = vpop.f32.mrb[0].mxu0
      %v2736 = vpop.f32.mrb[0].mxu0
      %2737 = vdwg.mxu0
      %v2739 = vunpack.c.l.b16 %v346
      %v2740 = vpack.c.b16 %v2739, %v2739
      %2741 = vrot.lane.b32.xlu0 %v2740, 120
      %v2742 = vpop.permute.xlu0 %2741
      %v2743 = vunpack.c.l.b16 %v617
      %v2744 = vpack.c.b16 %v2743, %v2743
      %2745 = vrot.lane.b32.xlu0 %v2744, 120
      %v2746 = vpop.permute.xlu0 %2745
      %v2748 = vsel %vm851, %v2742, 0
      %v2751 = vsel %vm851, %v2746, 0
      %2753 = vmatprep.subr.bf16.mxu0 0
      %2754 = vmatpush1.bf16.xpose.msra.mxu0 %v2751
      %2755 = vmatprep.subr.bf16.mxu0 0
      %2756 = vmatpush1.bf16.xpose.msra.mxu0 0
      %2757 = vmatprep.subr.bf16.mxu0 0
      %2758 = vmatpush1.bf16.xpose.msra.mxu0 0
      %2759 = vmatprep.subr.bf16.mxu0 0
      %2760 = vmatpush1.bf16.xpose.msra.mxu0 0
      %2761 = vmatprep.subr.bf16.mxu0 0
      %2762 = vmatpush1.bf16.xpose.msra.mxu0 0
      %2763 = vmatprep.subr.bf16.mxu0 0
      %2764 = vmatpush1.bf16.xpose.msra.mxu0 0
      %2765 = vmatprep.subr.bf16.mxu0 0
      %2766 = vmatpush1.bf16.xpose.msra.mxu0 0
      %2767 = vmatprep.subr.bf16.mxu0 0
      %2768 = vmatpush1.bf16.xpose.msra.mxu0 0
      %2769 = vmatprep.subr.bf16.mxu0 0
      %2770 = vmatpush1.bf16.xpose.msra.mxu0 0
      %2771 = vmatprep.subr.bf16.mxu0 0
      %2772 = vmatpush1.bf16.xpose.msra.mxu0 0
      %2773 = vmatprep.subr.bf16.mxu0 0
      %2774 = vmatpush1.bf16.xpose.msra.mxu0 0
      %2775 = vmatprep.subr.bf16.mxu0 0
      %2776 = vmatpush1.bf16.xpose.msra.mxu0 0
      %2777 = vmatprep.subr.bf16.mxu0 0
      %2778 = vmatpush1.bf16.xpose.msra.mxu0 0
      %2779 = vmatprep.subr.bf16.mxu0 0
      %2780 = vmatpush1.bf16.xpose.msra.mxu0 0
      %2781 = vmatprep.subr.bf16.mxu0 0
      %2782 = vmatpush1.bf16.xpose.msra.mxu0 0
      %2783 = vmatprep.subr.bf16.mxu0 0
      %2784 = vmatpush1.bf16.xpose.msra.mxu0 0
      %2785 = vmatprep.mubr.bf16.mxu0 0
      %2786 = vmatmul.mubr.bf16.gmra.mrb[0].mxu0 %v2748
      %v2787 = vpop.f32.mrb[0].mxu0
      %v2788 = vadd.f32 0.0, %v2787
      %v2789 = vpop.f32.mrb[0].mxu0
      %v2790 = vpop.f32.mrb[0].mxu0
      %v2791 = vpop.f32.mrb[0].mxu0
      %2792 = vdwg.mxu0
      %v2794 = vunpack.c.l.b16 %v380
      %v2795 = vpack.c.b16 %v2794, %v2794
      %2796 = vrot.lane.b32.xlu0 %v2795, 120
      %v2797 = vpop.permute.xlu0 %2796
      %v2798 = vunpack.c.l.b16 %v620
      %v2799 = vpack.c.b16 %v2798, %v2798
      %2800 = vrot.lane.b32.xlu0 %v2799, 120
      %v2801 = vpop.permute.xlu0 %2800
      %v2803 = vsel %vm851, %v2797, 0
      %v2806 = vsel %vm851, %v2801, 0
      %2808 = vmatprep.subr.bf16.mxu0 0
      %2809 = vmatpush1.bf16.xpose.msra.mxu0 %v2806
      %2810 = vmatprep.subr.bf16.mxu0 0
      %2811 = vmatpush1.bf16.xpose.msra.mxu0 0
      %2812 = vmatprep.subr.bf16.mxu0 0
      %2813 = vmatpush1.bf16.xpose.msra.mxu0 0
      %2814 = vmatprep.subr.bf16.mxu0 0
      %2815 = vmatpush1.bf16.xpose.msra.mxu0 0
      %2816 = vmatprep.subr.bf16.mxu0 0
      %2817 = vmatpush1.bf16.xpose.msra.mxu0 0
      %2818 = vmatprep.subr.bf16.mxu0 0
      %2819 = vmatpush1.bf16.xpose.msra.mxu0 0
      %2820 = vmatprep.subr.bf16.mxu0 0
      %2821 = vmatpush1.bf16.xpose.msra.mxu0 0
      %2822 = vmatprep.subr.bf16.mxu0 0
      %2823 = vmatpush1.bf16.xpose.msra.mxu0 0
      %2824 = vmatprep.subr.bf16.mxu0 0
      %2825 = vmatpush1.bf16.xpose.msra.mxu0 0
      %2826 = vmatprep.subr.bf16.mxu0 0
      %2827 = vmatpush1.bf16.xpose.msra.mxu0 0
      %2828 = vmatprep.subr.bf16.mxu0 0
      %2829 = vmatpush1.bf16.xpose.msra.mxu0 0
      %2830 = vmatprep.subr.bf16.mxu0 0
      %2831 = vmatpush1.bf16.xpose.msra.mxu0 0
      %2832 = vmatprep.subr.bf16.mxu0 0
      %2833 = vmatpush1.bf16.xpose.msra.mxu0 0
      %2834 = vmatprep.subr.bf16.mxu0 0
      %2835 = vmatpush1.bf16.xpose.msra.mxu0 0
      %2836 = vmatprep.subr.bf16.mxu0 0
      %2837 = vmatpush1.bf16.xpose.msra.mxu0 0
      %2838 = vmatprep.subr.bf16.mxu0 0
      %2839 = vmatpush1.bf16.xpose.msra.mxu0 0
      %2840 = vmatprep.mubr.bf16.mxu0 0
      %2841 = vmatmul.mubr.bf16.gmra.mrb[0].mxu0 %v2803
      %v2842 = vpop.f32.mrb[0].mxu0
      %v2843 = vadd.f32 0.0, %v2842
      %v2844 = vpop.f32.mrb[0].mxu0
      %v2845 = vpop.f32.mrb[0].mxu0
      %v2846 = vpop.f32.mrb[0].mxu0
      %2847 = vdwg.mxu0
      %v2849 = vunpack.c.l.b16 %v348
      %v2850 = vpack.c.b16 %v2849, %v2849
      %2851 = vrot.lane.b32.xlu0 %v2850, 120
      %v2852 = vpop.permute.xlu0 %2851
      %v2853 = vunpack.c.l.b16 %v623
      %v2854 = vpack.c.b16 %v2853, %v2853
      %2855 = vrot.lane.b32.xlu0 %v2854, 120
      %v2856 = vpop.permute.xlu0 %2855
      %v2858 = vsel %vm851, %v2852, 0
      %v2861 = vsel %vm851, %v2856, 0
      %2863 = vmatprep.subr.bf16.mxu0 0
      %2864 = vmatpush1.bf16.xpose.msra.mxu0 %v2861
      %2865 = vmatprep.subr.bf16.mxu0 0
      %2866 = vmatpush1.bf16.xpose.msra.mxu0 0
      %2867 = vmatprep.subr.bf16.mxu0 0
      %2868 = vmatpush1.bf16.xpose.msra.mxu0 0
      %2869 = vmatprep.subr.bf16.mxu0 0
      %2870 = vmatpush1.bf16.xpose.msra.mxu0 0
      %2871 = vmatprep.subr.bf16.mxu0 0
      %2872 = vmatpush1.bf16.xpose.msra.mxu0 0
      %2873 = vmatprep.subr.bf16.mxu0 0
      %2874 = vmatpush1.bf16.xpose.msra.mxu0 0
      %2875 = vmatprep.subr.bf16.mxu0 0
      %2876 = vmatpush1.bf16.xpose.msra.mxu0 0
      %2877 = vmatprep.subr.bf16.mxu0 0
      %2878 = vmatpush1.bf16.xpose.msra.mxu0 0
      %2879 = vmatprep.subr.bf16.mxu0 0
      %2880 = vmatpush1.bf16.xpose.msra.mxu0 0
      %2881 = vmatprep.subr.bf16.mxu0 0
      %2882 = vmatpush1.bf16.xpose.msra.mxu0 0
      %2883 = vmatprep.subr.bf16.mxu0 0
      %2884 = vmatpush1.bf16.xpose.msra.mxu0 0
      %2885 = vmatprep.subr.bf16.mxu0 0
      %2886 = vmatpush1.bf16.xpose.msra.mxu0 0
      %2887 = vmatprep.subr.bf16.mxu0 0
      %2888 = vmatpush1.bf16.xpose.msra.mxu0 0
      %2889 = vmatprep.subr.bf16.mxu0 0
      %2890 = vmatpush1.bf16.xpose.msra.mxu0 0
      %2891 = vmatprep.subr.bf16.mxu0 0
      %2892 = vmatpush1.bf16.xpose.msra.mxu0 0
      %2893 = vmatprep.subr.bf16.mxu0 0
      %2894 = vmatpush1.bf16.xpose.msra.mxu0 0
      %2895 = vmatprep.mubr.bf16.mxu0 0
      %2896 = vmatmul.mubr.bf16.gmra.mrb[0].mxu0 %v2858
      %v2897 = vpop.f32.mrb[0].mxu0
      %v2898 = vadd.f32 0.0, %v2897
      %v2899 = vpop.f32.mrb[0].mxu0
      %v2900 = vpop.f32.mrb[0].mxu0
      %v2901 = vpop.f32.mrb[0].mxu0
      %2902 = vdwg.mxu0
      %v2904 = vunpack.c.l.b16 %v382
      %v2905 = vpack.c.b16 %v2904, %v2904
      %2906 = vrot.lane.b32.xlu0 %v2905, 120
      %v2907 = vpop.permute.xlu0 %2906
      %v2908 = vunpack.c.l.b16 %v626
      %v2909 = vpack.c.b16 %v2908, %v2908
      %2910 = vrot.lane.b32.xlu0 %v2909, 120
      %v2911 = vpop.permute.xlu0 %2910
      %v2913 = vsel %vm851, %v2907, 0
      %v2916 = vsel %vm851, %v2911, 0
      %2918 = vmatprep.subr.bf16.mxu0 0
      %2919 = vmatpush1.bf16.xpose.msra.mxu0 %v2916
      %2920 = vmatprep.subr.bf16.mxu0 0
      %2921 = vmatpush1.bf16.xpose.msra.mxu0 0
      %2922 = vmatprep.subr.bf16.mxu0 0
      %2923 = vmatpush1.bf16.xpose.msra.mxu0 0
      %2924 = vmatprep.subr.bf16.mxu0 0
      %2925 = vmatpush1.bf16.xpose.msra.mxu0 0
      %2926 = vmatprep.subr.bf16.mxu0 0
      %2927 = vmatpush1.bf16.xpose.msra.mxu0 0
      %2928 = vmatprep.subr.bf16.mxu0 0
      %2929 = vmatpush1.bf16.xpose.msra.mxu0 0
      %2930 = vmatprep.subr.bf16.mxu0 0
      %2931 = vmatpush1.bf16.xpose.msra.mxu0 0
      %2932 = vmatprep.subr.bf16.mxu0 0
      %2933 = vmatpush1.bf16.xpose.msra.mxu0 0
      %2934 = vmatprep.subr.bf16.mxu0 0
      %2935 = vmatpush1.bf16.xpose.msra.mxu0 0
      %2936 = vmatprep.subr.bf16.mxu0 0
      %2937 = vmatpush1.bf16.xpose.msra.mxu0 0
      %2938 = vmatprep.subr.bf16.mxu0 0
      %2939 = vmatpush1.bf16.xpose.msra.mxu0 0
      %2940 = vmatprep.subr.bf16.mxu0 0
      %2941 = vmatpush1.bf16.xpose.msra.mxu0 0
      %2942 = vmatprep.subr.bf16.mxu0 0
      %2943 = vmatpush1.bf16.xpose.msra.mxu0 0
      %2944 = vmatprep.subr.bf16.mxu0 0
      %2945 = vmatpush1.bf16.xpose.msra.mxu0 0
      %2946 = vmatprep.subr.bf16.mxu0 0
      %2947 = vmatpush1.bf16.xpose.msra.mxu0 0
      %2948 = vmatprep.subr.bf16.mxu0 0
      %2949 = vmatpush1.bf16.xpose.msra.mxu0 0
      %2950 = vmatprep.mubr.bf16.mxu0 0
      %2951 = vmatmul.mubr.bf16.gmra.mrb[0].mxu0 %v2913
      %v2952 = vpop.f32.mrb[0].mxu0
      %v2953 = vadd.f32 0.0, %v2952
      %v2954 = vpop.f32.mrb[0].mxu0
      %v2955 = vpop.f32.mrb[0].mxu0
      %v2956 = vpop.f32.mrb[0].mxu0
      %2957 = vdwg.mxu0
      %v2959 = vunpack.c.l.b16 %v407
      %v2960 = vpack.c.b16 %v2959, %v2959
      %2961 = vrot.lane.b32.xlu0 %v2960, 120
      %v2962 = vpop.permute.xlu0 %2961
      %v2963 = vunpack.c.l.b16 %v629
      %v2964 = vpack.c.b16 %v2963, %v2963
      %2965 = vrot.lane.b32.xlu0 %v2964, 120
      %v2966 = vpop.permute.xlu0 %2965
      %v2968 = vsel %vm851, %v2962, 0
      %v2971 = vsel %vm851, %v2966, 0
      %2973 = vmatprep.subr.bf16.mxu0 0
      %2974 = vmatpush1.bf16.xpose.msra.mxu0 %v2971
      %2975 = vmatprep.subr.bf16.mxu0 0
      %2976 = vmatpush1.bf16.xpose.msra.mxu0 0
      %2977 = vmatprep.subr.bf16.mxu0 0
      %2978 = vmatpush1.bf16.xpose.msra.mxu0 0
      %2979 = vmatprep.subr.bf16.mxu0 0
      %2980 = vmatpush1.bf16.xpose.msra.mxu0 0
      %2981 = vmatprep.subr.bf16.mxu0 0
      %2982 = vmatpush1.bf16.xpose.msra.mxu0 0
      %2983 = vmatprep.subr.bf16.mxu0 0
      %2984 = vmatpush1.bf16.xpose.msra.mxu0 0
      %2985 = vmatprep.subr.bf16.mxu0 0
      %2986 = vmatpush1.bf16.xpose.msra.mxu0 0
      %2987 = vmatprep.subr.bf16.mxu0 0
      %2988 = vmatpush1.bf16.xpose.msra.mxu0 0
      %2989 = vmatprep.subr.bf16.mxu0 0
      %2990 = vmatpush1.bf16.xpose.msra.mxu0 0
      %2991 = vmatprep.subr.bf16.mxu0 0
      %2992 = vmatpush1.bf16.xpose.msra.mxu0 0
      %2993 = vmatprep.subr.bf16.mxu0 0
      %2994 = vmatpush1.bf16.xpose.msra.mxu0 0
      %2995 = vmatprep.subr.bf16.mxu0 0
      %2996 = vmatpush1.bf16.xpose.msra.mxu0 0
      %2997 = vmatprep.subr.bf16.mxu0 0
      %2998 = vmatpush1.bf16.xpose.msra.mxu0 0
      %2999 = vmatprep.subr.bf16.mxu0 0
      %3000 = vmatpush1.bf16.xpose.msra.mxu0 0
      %3001 = vmatprep.subr.bf16.mxu0 0
      %3002 = vmatpush1.bf16.xpose.msra.mxu0 0
      %3003 = vmatprep.subr.bf16.mxu0 0
      %3004 = vmatpush1.bf16.xpose.msra.mxu0 0
      %3005 = vmatprep.mubr.bf16.mxu0 0
      %3006 = vmatmul.mubr.bf16.gmra.mrb[0].mxu0 %v2968
      %v3007 = vpop.f32.mrb[0].mxu0
      %v3008 = vadd.f32 0.0, %v3007
      %v3009 = vpop.f32.mrb[0].mxu0
      %v3010 = vpop.f32.mrb[0].mxu0
      %v3011 = vpop.f32.mrb[0].mxu0
      %3012 = vdwg.mxu0
      %v3014 = vunpack.c.l.b16 %v441
      %v3015 = vpack.c.b16 %v3014, %v3014
      %3016 = vrot.lane.b32.xlu0 %v3015, 120
      %v3017 = vpop.permute.xlu0 %3016
      %v3018 = vunpack.c.l.b16 %v632
      %v3019 = vpack.c.b16 %v3018, %v3018
      %3020 = vrot.lane.b32.xlu0 %v3019, 120
      %v3021 = vpop.permute.xlu0 %3020
      %v3023 = vsel %vm851, %v3017, 0
      %v3026 = vsel %vm851, %v3021, 0
      %3028 = vmatprep.subr.bf16.mxu0 0
      %3029 = vmatpush1.bf16.xpose.msra.mxu0 %v3026
      %3030 = vmatprep.subr.bf16.mxu0 0
      %3031 = vmatpush1.bf16.xpose.msra.mxu0 0
      %3032 = vmatprep.subr.bf16.mxu0 0
      %3033 = vmatpush1.bf16.xpose.msra.mxu0 0
      %3034 = vmatprep.subr.bf16.mxu0 0
      %3035 = vmatpush1.bf16.xpose.msra.mxu0 0
      %3036 = vmatprep.subr.bf16.mxu0 0
      %3037 = vmatpush1.bf16.xpose.msra.mxu0 0
      %3038 = vmatprep.subr.bf16.mxu0 0
      %3039 = vmatpush1.bf16.xpose.msra.mxu0 0
      %3040 = vmatprep.subr.bf16.mxu0 0
      %3041 = vmatpush1.bf16.xpose.msra.mxu0 0
      %3042 = vmatprep.subr.bf16.mxu0 0
      %3043 = vmatpush1.bf16.xpose.msra.mxu0 0
      %3044 = vmatprep.subr.bf16.mxu0 0
      %3045 = vmatpush1.bf16.xpose.msra.mxu0 0
      %3046 = vmatprep.subr.bf16.mxu0 0
      %3047 = vmatpush1.bf16.xpose.msra.mxu0 0
      %3048 = vmatprep.subr.bf16.mxu0 0
      %3049 = vmatpush1.bf16.xpose.msra.mxu0 0
      %3050 = vmatprep.subr.bf16.mxu0 0
      %3051 = vmatpush1.bf16.xpose.msra.mxu0 0
      %3052 = vmatprep.subr.bf16.mxu0 0
      %3053 = vmatpush1.bf16.xpose.msra.mxu0 0
      %3054 = vmatprep.subr.bf16.mxu0 0
      %3055 = vmatpush1.bf16.xpose.msra.mxu0 0
      %3056 = vmatprep.subr.bf16.mxu0 0
      %3057 = vmatpush1.bf16.xpose.msra.mxu0 0
      %3058 = vmatprep.subr.bf16.mxu0 0
      %3059 = vmatpush1.bf16.xpose.msra.mxu0 0
      %3060 = vmatprep.mubr.bf16.mxu0 0
      %3061 = vmatmul.mubr.bf16.gmra.mrb[0].mxu0 %v3023
      %v3062 = vpop.f32.mrb[0].mxu0
      %v3063 = vadd.f32 0.0, %v3062
      %v3064 = vpop.f32.mrb[0].mxu0
      %v3065 = vpop.f32.mrb[0].mxu0
      %v3066 = vpop.f32.mrb[0].mxu0
      %3067 = vdwg.mxu0
      %v3069 = vunpack.c.l.b16 %v415
      %v3070 = vpack.c.b16 %v3069, %v3069
      %3071 = vrot.lane.b32.xlu0 %v3070, 120
      %v3072 = vpop.permute.xlu0 %3071
      %v3073 = vunpack.c.l.b16 %v635
      %v3074 = vpack.c.b16 %v3073, %v3073
      %3075 = vrot.lane.b32.xlu0 %v3074, 120
      %v3076 = vpop.permute.xlu0 %3075
      %v3078 = vsel %vm851, %v3072, 0
      %v3081 = vsel %vm851, %v3076, 0
      %3083 = vmatprep.subr.bf16.mxu0 0
      %3084 = vmatpush1.bf16.xpose.msra.mxu0 %v3081
      %3085 = vmatprep.subr.bf16.mxu0 0
      %3086 = vmatpush1.bf16.xpose.msra.mxu0 0
      %3087 = vmatprep.subr.bf16.mxu0 0
      %3088 = vmatpush1.bf16.xpose.msra.mxu0 0
      %3089 = vmatprep.subr.bf16.mxu0 0
      %3090 = vmatpush1.bf16.xpose.msra.mxu0 0
      %3091 = vmatprep.subr.bf16.mxu0 0
      %3092 = vmatpush1.bf16.xpose.msra.mxu0 0
      %3093 = vmatprep.subr.bf16.mxu0 0
      %3094 = vmatpush1.bf16.xpose.msra.mxu0 0
      %3095 = vmatprep.subr.bf16.mxu0 0
      %3096 = vmatpush1.bf16.xpose.msra.mxu0 0
      %3097 = vmatprep.subr.bf16.mxu0 0
      %3098 = vmatpush1.bf16.xpose.msra.mxu0 0
      %3099 = vmatprep.subr.bf16.mxu0 0
      %3100 = vmatpush1.bf16.xpose.msra.mxu0 0
      %3101 = vmatprep.subr.bf16.mxu0 0
      %3102 = vmatpush1.bf16.xpose.msra.mxu0 0
      %3103 = vmatprep.subr.bf16.mxu0 0
      %3104 = vmatpush1.bf16.xpose.msra.mxu0 0
      %3105 = vmatprep.subr.bf16.mxu0 0
      %3106 = vmatpush1.bf16.xpose.msra.mxu0 0
      %3107 = vmatprep.subr.bf16.mxu0 0
      %3108 = vmatpush1.bf16.xpose.msra.mxu0 0
      %3109 = vmatprep.subr.bf16.mxu0 0
      %3110 = vmatpush1.bf16.xpose.msra.mxu0 0
      %3111 = vmatprep.subr.bf16.mxu0 0
      %3112 = vmatpush1.bf16.xpose.msra.mxu0 0
      %3113 = vmatprep.subr.bf16.mxu0 0
      %3114 = vmatpush1.bf16.xpose.msra.mxu0 0
      %3115 = vmatprep.mubr.bf16.mxu0 0
      %3116 = vmatmul.mubr.bf16.gmra.mrb[0].mxu0 %v3078
      %v3117 = vpop.f32.mrb[0].mxu0
      %v3118 = vadd.f32 0.0, %v3117
      %v3119 = vpop.f32.mrb[0].mxu0
      %v3120 = vpop.f32.mrb[0].mxu0
      %v3121 = vpop.f32.mrb[0].mxu0
      %3122 = vdwg.mxu0
      %v3124 = vunpack.c.l.b16 %v449
      %v3125 = vpack.c.b16 %v3124, %v3124
      %3126 = vrot.lane.b32.xlu0 %v3125, 120
      %v3127 = vpop.permute.xlu0 %3126
      %v3128 = vunpack.c.l.b16 %v638
      %v3129 = vpack.c.b16 %v3128, %v3128
      %3130 = vrot.lane.b32.xlu0 %v3129, 120
      %v3131 = vpop.permute.xlu0 %3130
      %v3133 = vsel %vm851, %v3127, 0
      %v3136 = vsel %vm851, %v3131, 0
      %3138 = vmatprep.subr.bf16.mxu0 0
      %3139 = vmatpush1.bf16.xpose.msra.mxu0 %v3136
      %3140 = vmatprep.subr.bf16.mxu0 0
      %3141 = vmatpush1.bf16.xpose.msra.mxu0 0
      %3142 = vmatprep.subr.bf16.mxu0 0
      %3143 = vmatpush1.bf16.xpose.msra.mxu0 0
      %3144 = vmatprep.subr.bf16.mxu0 0
      %3145 = vmatpush1.bf16.xpose.msra.mxu0 0
      %3146 = vmatprep.subr.bf16.mxu0 0
      %3147 = vmatpush1.bf16.xpose.msra.mxu0 0
      %3148 = vmatprep.subr.bf16.mxu0 0
      %3149 = vmatpush1.bf16.xpose.msra.mxu0 0
      %3150 = vmatprep.subr.bf16.mxu0 0
      %3151 = vmatpush1.bf16.xpose.msra.mxu0 0
      %3152 = vmatprep.subr.bf16.mxu0 0
      %3153 = vmatpush1.bf16.xpose.msra.mxu0 0
      %3154 = vmatprep.subr.bf16.mxu0 0
      %3155 = vmatpush1.bf16.xpose.msra.mxu0 0
      %3156 = vmatprep.subr.bf16.mxu0 0
      %3157 = vmatpush1.bf16.xpose.msra.mxu0 0
      %3158 = vmatprep.subr.bf16.mxu0 0
      %3159 = vmatpush1.bf16.xpose.msra.mxu0 0
      %3160 = vmatprep.subr.bf16.mxu0 0
      %3161 = vmatpush1.bf16.xpose.msra.mxu0 0
      %3162 = vmatprep.subr.bf16.mxu0 0
      %3163 = vmatpush1.bf16.xpose.msra.mxu0 0
      %3164 = vmatprep.subr.bf16.mxu0 0
      %3165 = vmatpush1.bf16.xpose.msra.mxu0 0
      %3166 = vmatprep.subr.bf16.mxu0 0
      %3167 = vmatpush1.bf16.xpose.msra.mxu0 0
      %3168 = vmatprep.subr.bf16.mxu0 0
      %3169 = vmatpush1.bf16.xpose.msra.mxu0 0
      %3170 = vmatprep.mubr.bf16.mxu0 0
      %3171 = vmatmul.mubr.bf16.gmra.mrb[0].mxu0 %v3133
      %v3172 = vpop.f32.mrb[0].mxu0
      %v3173 = vadd.f32 0.0, %v3172
      %v3174 = vpop.f32.mrb[0].mxu0
      %v3175 = vpop.f32.mrb[0].mxu0
      %v3176 = vpop.f32.mrb[0].mxu0
      %3177 = vdwg.mxu0
      %v3179 = vunpack.c.l.b16 %v414
      %v3180 = vpack.c.b16 %v3179, %v3179
      %3181 = vrot.lane.b32.xlu0 %v3180, 120
      %v3182 = vpop.permute.xlu0 %3181
      %v3183 = vunpack.c.l.b16 %v641
      %v3184 = vpack.c.b16 %v3183, %v3183
      %3185 = vrot.lane.b32.xlu0 %v3184, 120
      %v3186 = vpop.permute.xlu0 %3185
      %v3188 = vsel %vm851, %v3182, 0
      %v3191 = vsel %vm851, %v3186, 0
      %3193 = vmatprep.subr.bf16.mxu0 0
      %3194 = vmatpush1.bf16.xpose.msra.mxu0 %v3191
      %3195 = vmatprep.subr.bf16.mxu0 0
      %3196 = vmatpush1.bf16.xpose.msra.mxu0 0
      %3197 = vmatprep.subr.bf16.mxu0 0
      %3198 = vmatpush1.bf16.xpose.msra.mxu0 0
      %3199 = vmatprep.subr.bf16.mxu0 0
      %3200 = vmatpush1.bf16.xpose.msra.mxu0 0
      %3201 = vmatprep.subr.bf16.mxu0 0
      %3202 = vmatpush1.bf16.xpose.msra.mxu0 0
      %3203 = vmatprep.subr.bf16.mxu0 0
      %3204 = vmatpush1.bf16.xpose.msra.mxu0 0
      %3205 = vmatprep.subr.bf16.mxu0 0
      %3206 = vmatpush1.bf16.xpose.msra.mxu0 0
      %3207 = vmatprep.subr.bf16.mxu0 0
      %3208 = vmatpush1.bf16.xpose.msra.mxu0 0
      %3209 = vmatprep.subr.bf16.mxu0 0
      %3210 = vmatpush1.bf16.xpose.msra.mxu0 0
      %3211 = vmatprep.subr.bf16.mxu0 0
      %3212 = vmatpush1.bf16.xpose.msra.mxu0 0
      %3213 = vmatprep.subr.bf16.mxu0 0
      %3214 = vmatpush1.bf16.xpose.msra.mxu0 0
      %3215 = vmatprep.subr.bf16.mxu0 0
      %3216 = vmatpush1.bf16.xpose.msra.mxu0 0
      %3217 = vmatprep.subr.bf16.mxu0 0
      %3218 = vmatpush1.bf16.xpose.msra.mxu0 0
      %3219 = vmatprep.subr.bf16.mxu0 0
      %3220 = vmatpush1.bf16.xpose.msra.mxu0 0
      %3221 = vmatprep.subr.bf16.mxu0 0
      %3222 = vmatpush1.bf16.xpose.msra.mxu0 0
      %3223 = vmatprep.subr.bf16.mxu0 0
      %3224 = vmatpush1.bf16.xpose.msra.mxu0 0
      %3225 = vmatprep.mubr.bf16.mxu0 0
      %3226 = vmatmul.mubr.bf16.gmra.mrb[0].mxu0 %v3188
      %v3227 = vpop.f32.mrb[0].mxu0
      %v3228 = vadd.f32 0.0, %v3227
      %v3229 = vpop.f32.mrb[0].mxu0
      %v3230 = vpop.f32.mrb[0].mxu0
      %v3231 = vpop.f32.mrb[0].mxu0
      %3232 = vdwg.mxu0
      %v3234 = vunpack.c.l.b16 %v448
      %v3235 = vpack.c.b16 %v3234, %v3234
      %3236 = vrot.lane.b32.xlu0 %v3235, 120
      %v3237 = vpop.permute.xlu0 %3236
      %v3238 = vunpack.c.l.b16 %v644
      %v3239 = vpack.c.b16 %v3238, %v3238
      %3240 = vrot.lane.b32.xlu0 %v3239, 120
      %v3241 = vpop.permute.xlu0 %3240
      %v3243 = vsel %vm851, %v3237, 0
      %v3246 = vsel %vm851, %v3241, 0
      %3248 = vmatprep.subr.bf16.mxu0 0
      %3249 = vmatpush1.bf16.xpose.msra.mxu0 %v3246
      %3250 = vmatprep.subr.bf16.mxu0 0
      %3251 = vmatpush1.bf16.xpose.msra.mxu0 0
      %3252 = vmatprep.subr.bf16.mxu0 0
      %3253 = vmatpush1.bf16.xpose.msra.mxu0 0
      %3254 = vmatprep.subr.bf16.mxu0 0
      %3255 = vmatpush1.bf16.xpose.msra.mxu0 0
      %3256 = vmatprep.subr.bf16.mxu0 0
      %3257 = vmatpush1.bf16.xpose.msra.mxu0 0
      %3258 = vmatprep.subr.bf16.mxu0 0
      %3259 = vmatpush1.bf16.xpose.msra.mxu0 0
      %3260 = vmatprep.subr.bf16.mxu0 0
      %3261 = vmatpush1.bf16.xpose.msra.mxu0 0
      %3262 = vmatprep.subr.bf16.mxu0 0
      %3263 = vmatpush1.bf16.xpose.msra.mxu0 0
      %3264 = vmatprep.subr.bf16.mxu0 0
      %3265 = vmatpush1.bf16.xpose.msra.mxu0 0
      %3266 = vmatprep.subr.bf16.mxu0 0
      %3267 = vmatpush1.bf16.xpose.msra.mxu0 0
      %3268 = vmatprep.subr.bf16.mxu0 0
      %3269 = vmatpush1.bf16.xpose.msra.mxu0 0
      %3270 = vmatprep.subr.bf16.mxu0 0
      %3271 = vmatpush1.bf16.xpose.msra.mxu0 0
      %3272 = vmatprep.subr.bf16.mxu0 0
      %3273 = vmatpush1.bf16.xpose.msra.mxu0 0
      %3274 = vmatprep.subr.bf16.mxu0 0
      %3275 = vmatpush1.bf16.xpose.msra.mxu0 0
      %3276 = vmatprep.subr.bf16.mxu0 0
      %3277 = vmatpush1.bf16.xpose.msra.mxu0 0
      %3278 = vmatprep.subr.bf16.mxu0 0
      %3279 = vmatpush1.bf16.xpose.msra.mxu0 0
      %3280 = vmatprep.mubr.bf16.mxu0 0
      %3281 = vmatmul.mubr.bf16.gmra.mrb[0].mxu0 %v3243
      %v3282 = vpop.f32.mrb[0].mxu0
      %v3283 = vadd.f32 0.0, %v3282
      %v3284 = vpop.f32.mrb[0].mxu0
      %v3285 = vpop.f32.mrb[0].mxu0
      %v3286 = vpop.f32.mrb[0].mxu0
      %3287 = vdwg.mxu0
      %v3289 = vunpack.c.l.b16 %v416
      %v3290 = vpack.c.b16 %v3289, %v3289
      %3291 = vrot.lane.b32.xlu0 %v3290, 120
      %v3292 = vpop.permute.xlu0 %3291
      %v3293 = vunpack.c.l.b16 %v647
      %v3294 = vpack.c.b16 %v3293, %v3293
      %3295 = vrot.lane.b32.xlu0 %v3294, 120
      %v3296 = vpop.permute.xlu0 %3295
      %v3298 = vsel %vm851, %v3292, 0
      %v3301 = vsel %vm851, %v3296, 0
      %3303 = vmatprep.subr.bf16.mxu0 0
      %3304 = vmatpush1.bf16.xpose.msra.mxu0 %v3301
      %3305 = vmatprep.subr.bf16.mxu0 0
      %3306 = vmatpush1.bf16.xpose.msra.mxu0 0
      %3307 = vmatprep.subr.bf16.mxu0 0
      %3308 = vmatpush1.bf16.xpose.msra.mxu0 0
      %3309 = vmatprep.subr.bf16.mxu0 0
      %3310 = vmatpush1.bf16.xpose.msra.mxu0 0
      %3311 = vmatprep.subr.bf16.mxu0 0
      %3312 = vmatpush1.bf16.xpose.msra.mxu0 0
      %3313 = vmatprep.subr.bf16.mxu0 0
      %3314 = vmatpush1.bf16.xpose.msra.mxu0 0
      %3315 = vmatprep.subr.bf16.mxu0 0
      %3316 = vmatpush1.bf16.xpose.msra.mxu0 0
      %3317 = vmatprep.subr.bf16.mxu0 0
      %3318 = vmatpush1.bf16.xpose.msra.mxu0 0
      %3319 = vmatprep.subr.bf16.mxu0 0
      %3320 = vmatpush1.bf16.xpose.msra.mxu0 0
      %3321 = vmatprep.subr.bf16.mxu0 0
      %3322 = vmatpush1.bf16.xpose.msra.mxu0 0
      %3323 = vmatprep.subr.bf16.mxu0 0
      %3324 = vmatpush1.bf16.xpose.msra.mxu0 0
      %3325 = vmatprep.subr.bf16.mxu0 0
      %3326 = vmatpush1.bf16.xpose.msra.mxu0 0
      %3327 = vmatprep.subr.bf16.mxu0 0
      %3328 = vmatpush1.bf16.xpose.msra.mxu0 0
      %3329 = vmatprep.subr.bf16.mxu0 0
      %3330 = vmatpush1.bf16.xpose.msra.mxu0 0
      %3331 = vmatprep.subr.bf16.mxu0 0
      %3332 = vmatpush1.bf16.xpose.msra.mxu0 0
      %3333 = vmatprep.subr.bf16.mxu0 0
      %3334 = vmatpush1.bf16.xpose.msra.mxu0 0
      %3335 = vmatprep.mubr.bf16.mxu0 0
      %3336 = vmatmul.mubr.bf16.gmra.mrb[0].mxu0 %v3298
      %v3337 = vpop.f32.mrb[0].mxu0
      %v3338 = vadd.f32 0.0, %v3337
      %v3339 = vpop.f32.mrb[0].mxu0
      %v3340 = vpop.f32.mrb[0].mxu0
      %v3341 = vpop.f32.mrb[0].mxu0
      %3342 = vdwg.mxu0
      %v3344 = vunpack.c.l.b16 %v450
      %v3345 = vpack.c.b16 %v3344, %v3344
      %3346 = vrot.lane.b32.xlu0 %v3345, 120
      %v3347 = vpop.permute.xlu0 %3346
      %v3348 = vunpack.c.l.b16 %v650
      %v3349 = vpack.c.b16 %v3348, %v3348
      %3350 = vrot.lane.b32.xlu0 %v3349, 120
      %v3351 = vpop.permute.xlu0 %3350
      %v3353 = vsel %vm851, %v3347, 0
      %v3356 = vsel %vm851, %v3351, 0
      %3358 = vmatprep.subr.bf16.mxu0 0
      %3359 = vmatpush1.bf16.xpose.msra.mxu0 %v3356
      %3360 = vmatprep.subr.bf16.mxu0 0
      %3361 = vmatpush1.bf16.xpose.msra.mxu0 0
      %3362 = vmatprep.subr.bf16.mxu0 0
      %3363 = vmatpush1.bf16.xpose.msra.mxu0 0
      %3364 = vmatprep.subr.bf16.mxu0 0
      %3365 = vmatpush1.bf16.xpose.msra.mxu0 0
      %3366 = vmatprep.subr.bf16.mxu0 0
      %3367 = vmatpush1.bf16.xpose.msra.mxu0 0
      %3368 = vmatprep.subr.bf16.mxu0 0
      %3369 = vmatpush1.bf16.xpose.msra.mxu0 0
      %3370 = vmatprep.subr.bf16.mxu0 0
      %3371 = vmatpush1.bf16.xpose.msra.mxu0 0
      %3372 = vmatprep.subr.bf16.mxu0 0
      %3373 = vmatpush1.bf16.xpose.msra.mxu0 0
      %3374 = vmatprep.subr.bf16.mxu0 0
      %3375 = vmatpush1.bf16.xpose.msra.mxu0 0
      %3376 = vmatprep.subr.bf16.mxu0 0
      %3377 = vmatpush1.bf16.xpose.msra.mxu0 0
      %3378 = vmatprep.subr.bf16.mxu0 0
      %3379 = vmatpush1.bf16.xpose.msra.mxu0 0
      %3380 = vmatprep.subr.bf16.mxu0 0
      %3381 = vmatpush1.bf16.xpose.msra.mxu0 0
      %3382 = vmatprep.subr.bf16.mxu0 0
      %3383 = vmatpush1.bf16.xpose.msra.mxu0 0
      %3384 = vmatprep.subr.bf16.mxu0 0
      %3385 = vmatpush1.bf16.xpose.msra.mxu0 0
      %3386 = vmatprep.subr.bf16.mxu0 0
      %3387 = vmatpush1.bf16.xpose.msra.mxu0 0
      %3388 = vmatprep.subr.bf16.mxu0 0
      %3389 = vmatpush1.bf16.xpose.msra.mxu0 0
      %3390 = vmatprep.mubr.bf16.mxu0 0
      %3391 = vmatmul.mubr.bf16.gmra.mrb[0].mxu0 %v3353
      %v3392 = vpop.f32.mrb[0].mxu0
      %v3393 = vadd.f32 0.0, %v3392
      %v3394 = vpop.f32.mrb[0].mxu0
      %v3395 = vpop.f32.mrb[0].mxu0
      %v3396 = vpop.f32.mrb[0].mxu0
      %3397 = vdwg.mxu0
      %v3398 = vsel %vm1588, %v2568, -inf
      %3399 = vmax.xlane.f32.xlu0 %v3398
      %v3400 = vpop.xlane.xlu0 %3399
      %v3401 = vsel %vm1588, %v2623, -inf
      %3402 = vmax.xlane.f32.xlu0 %v3401
      %v3403 = vpop.xlane.xlu0 %3402
      %v3404 = vsel %vm1588, %v2678, -inf
      %3405 = vmax.xlane.f32.xlu0 %v3404
      %v3406 = vpop.xlane.xlu0 %3405
      %v3407 = vsel %vm1588, %v2733, -inf
      %3408 = vmax.xlane.f32.xlu0 %v3407
      %v3409 = vpop.xlane.xlu0 %3408
      %v3410 = vsel %vm1588, %v2788, -inf
      %3411 = vmax.xlane.f32.xlu0 %v3410
      %v3412 = vpop.xlane.xlu0 %3411
      %v3413 = vsel %vm1588, %v2843, -inf
      %3414 = vmax.xlane.f32.xlu0 %v3413
      %v3415 = vpop.xlane.xlu0 %3414
      %v3416 = vsel %vm1588, %v2898, -inf
      %3417 = vmax.xlane.f32.xlu0 %v3416
      %v3418 = vpop.xlane.xlu0 %3417
      %v3419 = vsel %vm1588, %v2953, -inf
      %3420 = vmax.xlane.f32.xlu0 %v3419
      %v3421 = vpop.xlane.xlu0 %3420
      %v3422 = vsel %vm1588, %v3008, -inf
      %3423 = vmax.xlane.f32.xlu0 %v3422
      %v3424 = vpop.xlane.xlu0 %3423
      %v3425 = vsel %vm1588, %v3063, -inf
      %3426 = vmax.xlane.f32.xlu0 %v3425
      %v3427 = vpop.xlane.xlu0 %3426
      %v3428 = vsel %vm1588, %v3118, -inf
      %3429 = vmax.xlane.f32.xlu0 %v3428
      %v3430 = vpop.xlane.xlu0 %3429
      %v3431 = vsel %vm1588, %v3173, -inf
      %3432 = vmax.xlane.f32.xlu0 %v3431
      %v3433 = vpop.xlane.xlu0 %3432
      %v3434 = vsel %vm1588, %v3228, -inf
      %3435 = vmax.xlane.f32.xlu0 %v3434
      %v3436 = vpop.xlane.xlu0 %3435
      %v3437 = vsel %vm1588, %v3283, -inf
      %3438 = vmax.xlane.f32.xlu0 %v3437
      %v3439 = vpop.xlane.xlu0 %3438
      %v3440 = vsel %vm1588, %v3338, -inf
      %3441 = vmax.xlane.f32.xlu0 %v3440
      %v3442 = vpop.xlane.xlu0 %3441
      %v3443 = vsel %vm1588, %v3393, -inf
      %3444 = vmax.xlane.f32.xlu0 %v3443
      %v3445 = vpop.xlane.xlu0 %3444
      %v3446 = vsub.f32 %v2568, %v3400
      %v3447 = vsub.f32 %v2623, %v3403
      %v3448 = vsub.f32 %v2678, %v3406
      %v3449 = vsub.f32 %v2733, %v3409
      %v3450 = vsub.f32 %v2788, %v3412
      %v3451 = vsub.f32 %v2843, %v3415
      %v3452 = vsub.f32 %v2898, %v3418
      %v3453 = vsub.f32 %v2953, %v3421
      %v3454 = vsub.f32 %v3008, %v3424
      %v3455 = vsub.f32 %v3063, %v3427
      %v3456 = vsub.f32 %v3118, %v3430
      %v3457 = vsub.f32 %v3173, %v3433
      %v3458 = vsub.f32 %v3228, %v3436
      %v3459 = vsub.f32 %v3283, %v3439
      %v3460 = vsub.f32 %v3338, %v3442
      %v3461 = vsub.f32 %v3393, %v3445
      %v3462 = vmul.f32 %v3446, 1.442695
      %v3463 = vpow.pop %v3462
      %v3464 = vmul.f32 %v3447, 1.442695
      %v3465 = vpow.pop %v3464
      %v3466 = vmul.f32 %v3448, 1.442695
      %v3467 = vpow.pop %v3466
      %v3468 = vmul.f32 %v3449, 1.442695
      %v3469 = vpow.pop %v3468
      %v3470 = vmul.f32 %v3450, 1.442695
      %v3471 = vpow.pop %v3470
      %v3472 = vmul.f32 %v3451, 1.442695
      %v3473 = vpow.pop %v3472
      %v3474 = vmul.f32 %v3452, 1.442695
      %v3475 = vpow.pop %v3474
      %v3476 = vmul.f32 %v3453, 1.442695
      %v3477 = vpow.pop %v3476
      %v3478 = vmul.f32 %v3454, 1.442695
      %v3479 = vpow.pop %v3478
      %v3480 = vmul.f32 %v3455, 1.442695
      %v3481 = vpow.pop %v3480
      %v3482 = vmul.f32 %v3456, 1.442695
      %v3483 = vpow.pop %v3482
      %v3484 = vmul.f32 %v3457, 1.442695
      %v3485 = vpow.pop %v3484
      %v3486 = vmul.f32 %v3458, 1.442695
      %v3487 = vpow.pop %v3486
      %v3488 = vmul.f32 %v3459, 1.442695
      %v3489 = vpow.pop %v3488
      %v3490 = vmul.f32 %v3460, 1.442695
      %v3491 = vpow.pop %v3490
      %v3492 = vmul.f32 %v3461, 1.442695
      %v3493 = vpow.pop %v3492
      %v3494 = vsel %vm1588, %v3463, 0.0
      %3495 = vadd.xlane.f32.xlu0 %v3494
      %v3496 = vpop.xlane.xlu0 %3495
      %v3497 = vsel %vm1588, %v3465, 0.0
      %3498 = vadd.xlane.f32.xlu0 %v3497
      %v3499 = vpop.xlane.xlu0 %3498
      %v3500 = vsel %vm1588, %v3467, 0.0
      %3501 = vadd.xlane.f32.xlu0 %v3500
      %v3502 = vpop.xlane.xlu0 %3501
      %v3503 = vsel %vm1588, %v3469, 0.0
      %3504 = vadd.xlane.f32.xlu0 %v3503
      %v3505 = vpop.xlane.xlu0 %3504
      %v3506 = vsel %vm1588, %v3471, 0.0
      %3507 = vadd.xlane.f32.xlu0 %v3506
      %v3508 = vpop.xlane.xlu0 %3507
      %v3509 = vsel %vm1588, %v3473, 0.0
      %3510 = vadd.xlane.f32.xlu0 %v3509
      %v3511 = vpop.xlane.xlu0 %3510
      %v3512 = vsel %vm1588, %v3475, 0.0
      %3513 = vadd.xlane.f32.xlu0 %v3512
      %v3514 = vpop.xlane.xlu0 %3513
      %v3515 = vsel %vm1588, %v3477, 0.0
      %3516 = vadd.xlane.f32.xlu0 %v3515
      %v3517 = vpop.xlane.xlu0 %3516
      %v3518 = vsel %vm1588, %v3479, 0.0
      %3519 = vadd.xlane.f32.xlu0 %v3518
      %v3520 = vpop.xlane.xlu0 %3519
      %v3521 = vsel %vm1588, %v3481, 0.0
      %3522 = vadd.xlane.f32.xlu0 %v3521
      %v3523 = vpop.xlane.xlu0 %3522
      %v3524 = vsel %vm1588, %v3483, 0.0
      %3525 = vadd.xlane.f32.xlu0 %v3524
      %v3526 = vpop.xlane.xlu0 %3525
      %v3527 = vsel %vm1588, %v3485, 0.0
      %3528 = vadd.xlane.f32.xlu0 %v3527
      %v3529 = vpop.xlane.xlu0 %3528
      %v3530 = vsel %vm1588, %v3487, 0.0
      %3531 = vadd.xlane.f32.xlu0 %v3530
      %v3532 = vpop.xlane.xlu0 %3531
      %v3533 = vsel %vm1588, %v3489, 0.0
      %3534 = vadd.xlane.f32.xlu0 %v3533
      %v3535 = vpop.xlane.xlu0 %3534
      %v3536 = vsel %vm1588, %v3491, 0.0
      %3537 = vadd.xlane.f32.xlu0 %v3536
      %v3538 = vpop.xlane.xlu0 %3537
      %v3539 = vsel %vm1588, %v3493, 0.0
      %3540 = vadd.xlane.f32.xlu0 %v3539
      %v3541 = vpop.xlane.xlu0 %3540
      %v3542 = vrcp.pop %v3496
      %v3543 = vrcp.pop %v3499
      %v3544 = vrcp.pop %v3502
      %v3545 = vrcp.pop %v3505
      %v3546 = vrcp.pop %v3508
      %v3547 = vrcp.pop %v3511
      %v3548 = vrcp.pop %v3514
      %v3549 = vrcp.pop %v3517
      %v3550 = vrcp.pop %v3520
      %v3551 = vrcp.pop %v3523
      %v3552 = vrcp.pop %v3526
      %v3553 = vrcp.pop %v3529
      %v3554 = vrcp.pop %v3532
      %v3555 = vrcp.pop %v3535
      %v3556 = vrcp.pop %v3538
      %v3557 = vrcp.pop %v3541
      %v3558 = vmul.f32 %v3463, %v3542
      %v3559 = vmul.f32 %v3465, %v3543
      %v3560 = vmul.f32 %v3467, %v3544
      %v3561 = vmul.f32 %v3469, %v3545
      %v3562 = vmul.f32 %v3471, %v3546
      %v3563 = vmul.f32 %v3473, %v3547
      %v3564 = vmul.f32 %v3475, %v3548
      %v3565 = vmul.f32 %v3477, %v3549
      %v3566 = vmul.f32 %v3479, %v3550
      %v3567 = vmul.f32 %v3481, %v3551
      %v3568 = vmul.f32 %v3483, %v3552
      %v3569 = vmul.f32 %v3485, %v3553
      %v3570 = vmul.f32 %v3487, %v3554
      %v3571 = vmul.f32 %v3489, %v3555
      %v3572 = vmul.f32 %v3491, %v3556
      %v3573 = vmul.f32 %v3493, %v3557
      %v3574 = vpack.c.bf16 %v3558, %v3558
      %v3575 = vpack.c.bf16 %v3559, %v3559
      %v3576 = vpack.c.bf16 %v3560, %v3560
      %v3577 = vpack.c.bf16 %v3561, %v3561
      %v3578 = vpack.c.bf16 %v3562, %v3562
      %v3579 = vpack.c.bf16 %v3563, %v3563
      %v3580 = vpack.c.bf16 %v3564, %v3564
      %v3581 = vpack.c.bf16 %v3565, %v3565
      %v3582 = vpack.c.bf16 %v3566, %v3566
      %v3583 = vpack.c.bf16 %v3567, %v3567
      %v3584 = vpack.c.bf16 %v3568, %v3568
      %v3585 = vpack.c.bf16 %v3569, %v3569
      %v3586 = vpack.c.bf16 %v3570, %v3570
      %v3587 = vpack.c.bf16 %v3571, %v3571
      %v3588 = vpack.c.bf16 %v3572, %v3572
      %v3589 = vpack.c.bf16 %v3573, %v3573
      %v3590 = vunpack.c.l.b16 %v805
      %v3591 = vpack.c.b16 %v3590, %v3590
      %3592 = vrot.lane.b32.xlu0 %v3591, 120
      %v3593 = vpop.permute.xlu0 %3592
      %v3595 = vsel %vm851, %v3574, 0
      %v3598 = vsel %vm1784, %v3593, 0
      %3600 = vmatprep.subr.bf16.mxu0 0
      %3601 = vmatpush1.bf16.msra.mxu0 %v3598
      %3602 = vmatprep.subr.bf16.mxu0 0
      %3603 = vmatpush1.bf16.msra.mxu0 0
      %3604 = vmatprep.subr.bf16.mxu0 0
      %3605 = vmatpush1.bf16.msra.mxu0 0
      %3606 = vmatprep.subr.bf16.mxu0 0
      %3607 = vmatpush1.bf16.msra.mxu0 0
      %3608 = vmatprep.subr.bf16.mxu0 0
      %3609 = vmatpush1.bf16.msra.mxu0 0
      %3610 = vmatprep.subr.bf16.mxu0 0
      %3611 = vmatpush1.bf16.msra.mxu0 0
      %3612 = vmatprep.subr.bf16.mxu0 0
      %3613 = vmatpush1.bf16.msra.mxu0 0
      %3614 = vmatprep.subr.bf16.mxu0 0
      %3615 = vmatpush1.bf16.msra.mxu0 0
      %3616 = vmatprep.subr.bf16.mxu0 0
      %3617 = vmatpush1.bf16.msra.mxu0 0
      %3618 = vmatprep.subr.bf16.mxu0 0
      %3619 = vmatpush1.bf16.msra.mxu0 0
      %3620 = vmatprep.subr.bf16.mxu0 0
      %3621 = vmatpush1.bf16.msra.mxu0 0
      %3622 = vmatprep.subr.bf16.mxu0 0
      %3623 = vmatpush1.bf16.msra.mxu0 0
      %3624 = vmatprep.subr.bf16.mxu0 0
      %3625 = vmatpush1.bf16.msra.mxu0 0
      %3626 = vmatprep.subr.bf16.mxu0 0
      %3627 = vmatpush1.bf16.msra.mxu0 0
      %3628 = vmatprep.subr.bf16.mxu0 0
      %3629 = vmatpush1.bf16.msra.mxu0 0
      %3630 = vmatprep.subr.bf16.mxu0 0
      %3631 = vmatpush1.bf16.msra.mxu0 0
      %3632 = vmatprep.mubr.bf16.mxu0 0
      %3633 = vmatmul.mubr.bf16.gmra.mrb[0].mxu0 %v3595
      %v3634 = vpop.f32.mrb[0].mxu0
      %v3635 = vadd.f32 0.0, %v3634
      %v3636 = vpop.f32.mrb[0].mxu0
      %v3637 = vpop.f32.mrb[0].mxu0
      %v3638 = vpop.f32.mrb[0].mxu0
      %3639 = vdwg.mxu0
      %v3640 = vunpack.c.l.b16 %v808
      %v3641 = vpack.c.b16 %v3640, %v3640
      %3642 = vrot.lane.b32.xlu0 %v3641, 120
      %v3643 = vpop.permute.xlu0 %3642
      %v3645 = vsel %vm851, %v3575, 0
      %v3648 = vsel %vm1784, %v3643, 0
      %3650 = vmatprep.subr.bf16.mxu0 0
      %3651 = vmatpush1.bf16.msra.mxu0 %v3648
      %3652 = vmatprep.subr.bf16.mxu0 0
      %3653 = vmatpush1.bf16.msra.mxu0 0
      %3654 = vmatprep.subr.bf16.mxu0 0
      %3655 = vmatpush1.bf16.msra.mxu0 0
      %3656 = vmatprep.subr.bf16.mxu0 0
      %3657 = vmatpush1.bf16.msra.mxu0 0
      %3658 = vmatprep.subr.bf16.mxu0 0
      %3659 = vmatpush1.bf16.msra.mxu0 0
      %3660 = vmatprep.subr.bf16.mxu0 0
      %3661 = vmatpush1.bf16.msra.mxu0 0
      %3662 = vmatprep.subr.bf16.mxu0 0
      %3663 = vmatpush1.bf16.msra.mxu0 0
      %3664 = vmatprep.subr.bf16.mxu0 0
      %3665 = vmatpush1.bf16.msra.mxu0 0
      %3666 = vmatprep.subr.bf16.mxu0 0
      %3667 = vmatpush1.bf16.msra.mxu0 0
      %3668 = vmatprep.subr.bf16.mxu0 0
      %3669 = vmatpush1.bf16.msra.mxu0 0
      %3670 = vmatprep.subr.bf16.mxu0 0
      %3671 = vmatpush1.bf16.msra.mxu0 0
      %3672 = vmatprep.subr.bf16.mxu0 0
      %3673 = vmatpush1.bf16.msra.mxu0 0
      %3674 = vmatprep.subr.bf16.mxu0 0
      %3675 = vmatpush1.bf16.msra.mxu0 0
      %3676 = vmatprep.subr.bf16.mxu0 0
      %3677 = vmatpush1.bf16.msra.mxu0 0
      %3678 = vmatprep.subr.bf16.mxu0 0
      %3679 = vmatpush1.bf16.msra.mxu0 0
      %3680 = vmatprep.subr.bf16.mxu0 0
      %3681 = vmatpush1.bf16.msra.mxu0 0
      %3682 = vmatprep.mubr.bf16.mxu0 0
      %3683 = vmatmul.mubr.bf16.gmra.mrb[0].mxu0 %v3645
      %v3684 = vpop.f32.mrb[0].mxu0
      %v3685 = vadd.f32 0.0, %v3684
      %v3686 = vpop.f32.mrb[0].mxu0
      %v3687 = vpop.f32.mrb[0].mxu0
      %v3688 = vpop.f32.mrb[0].mxu0
      %3689 = vdwg.mxu0
      %v3690 = vunpack.c.l.b16 %v811
      %v3691 = vpack.c.b16 %v3690, %v3690
      %3692 = vrot.lane.b32.xlu0 %v3691, 120
      %v3693 = vpop.permute.xlu0 %3692
      %v3695 = vsel %vm851, %v3576, 0
      %v3698 = vsel %vm1784, %v3693, 0
      %3700 = vmatprep.subr.bf16.mxu0 0
      %3701 = vmatpush1.bf16.msra.mxu0 %v3698
      %3702 = vmatprep.subr.bf16.mxu0 0
      %3703 = vmatpush1.bf16.msra.mxu0 0
      %3704 = vmatprep.subr.bf16.mxu0 0
      %3705 = vmatpush1.bf16.msra.mxu0 0
      %3706 = vmatprep.subr.bf16.mxu0 0
      %3707 = vmatpush1.bf16.msra.mxu0 0
      %3708 = vmatprep.subr.bf16.mxu0 0
      %3709 = vmatpush1.bf16.msra.mxu0 0
      %3710 = vmatprep.subr.bf16.mxu0 0
      %3711 = vmatpush1.bf16.msra.mxu0 0
      %3712 = vmatprep.subr.bf16.mxu0 0
      %3713 = vmatpush1.bf16.msra.mxu0 0
      %3714 = vmatprep.subr.bf16.mxu0 0
      %3715 = vmatpush1.bf16.msra.mxu0 0
      %3716 = vmatprep.subr.bf16.mxu0 0
      %3717 = vmatpush1.bf16.msra.mxu0 0
      %3718 = vmatprep.subr.bf16.mxu0 0
      %3719 = vmatpush1.bf16.msra.mxu0 0
      %3720 = vmatprep.subr.bf16.mxu0 0
      %3721 = vmatpush1.bf16.msra.mxu0 0
      %3722 = vmatprep.subr.bf16.mxu0 0
      %3723 = vmatpush1.bf16.msra.mxu0 0
      %3724 = vmatprep.subr.bf16.mxu0 0
      %3725 = vmatpush1.bf16.msra.mxu0 0
      %3726 = vmatprep.subr.bf16.mxu0 0
      %3727 = vmatpush1.bf16.msra.mxu0 0
      %3728 = vmatprep.subr.bf16.mxu0 0
      %3729 = vmatpush1.bf16.msra.mxu0 0
      %3730 = vmatprep.subr.bf16.mxu0 0
      %3731 = vmatpush1.bf16.msra.mxu0 0
      %3732 = vmatprep.mubr.bf16.mxu0 0
      %3733 = vmatmul.mubr.bf16.gmra.mrb[0].mxu0 %v3695
      %v3734 = vpop.f32.mrb[0].mxu0
      %v3735 = vadd.f32 0.0, %v3734
      %v3736 = vpop.f32.mrb[0].mxu0
      %v3737 = vpop.f32.mrb[0].mxu0
      %v3738 = vpop.f32.mrb[0].mxu0
      %3739 = vdwg.mxu0
      %v3740 = vunpack.c.l.b16 %v814
      %v3741 = vpack.c.b16 %v3740, %v3740
      %3742 = vrot.lane.b32.xlu0 %v3741, 120
      %v3743 = vpop.permute.xlu0 %3742
      %v3745 = vsel %vm851, %v3577, 0
      %v3748 = vsel %vm1784, %v3743, 0
      %3750 = vmatprep.subr.bf16.mxu0 0
      %3751 = vmatpush1.bf16.msra.mxu0 %v3748
      %3752 = vmatprep.subr.bf16.mxu0 0
      %3753 = vmatpush1.bf16.msra.mxu0 0
      %3754 = vmatprep.subr.bf16.mxu0 0
      %3755 = vmatpush1.bf16.msra.mxu0 0
      %3756 = vmatprep.subr.bf16.mxu0 0
      %3757 = vmatpush1.bf16.msra.mxu0 0
      %3758 = vmatprep.subr.bf16.mxu0 0
      %3759 = vmatpush1.bf16.msra.mxu0 0
      %3760 = vmatprep.subr.bf16.mxu0 0
      %3761 = vmatpush1.bf16.msra.mxu0 0
      %3762 = vmatprep.subr.bf16.mxu0 0
      %3763 = vmatpush1.bf16.msra.mxu0 0
      %3764 = vmatprep.subr.bf16.mxu0 0
      %3765 = vmatpush1.bf16.msra.mxu0 0
      %3766 = vmatprep.subr.bf16.mxu0 0
      %3767 = vmatpush1.bf16.msra.mxu0 0
      %3768 = vmatprep.subr.bf16.mxu0 0
      %3769 = vmatpush1.bf16.msra.mxu0 0
      %3770 = vmatprep.subr.bf16.mxu0 0
      %3771 = vmatpush1.bf16.msra.mxu0 0
      %3772 = vmatprep.subr.bf16.mxu0 0
      %3773 = vmatpush1.bf16.msra.mxu0 0
      %3774 = vmatprep.subr.bf16.mxu0 0
      %3775 = vmatpush1.bf16.msra.mxu0 0
      %3776 = vmatprep.subr.bf16.mxu0 0
      %3777 = vmatpush1.bf16.msra.mxu0 0
      %3778 = vmatprep.subr.bf16.mxu0 0
      %3779 = vmatpush1.bf16.msra.mxu0 0
      %3780 = vmatprep.subr.bf16.mxu0 0
      %3781 = vmatpush1.bf16.msra.mxu0 0
      %3782 = vmatprep.mubr.bf16.mxu0 0
      %3783 = vmatmul.mubr.bf16.gmra.mrb[0].mxu0 %v3745
      %v3784 = vpop.f32.mrb[0].mxu0
      %v3785 = vadd.f32 0.0, %v3784
      %v3786 = vpop.f32.mrb[0].mxu0
      %v3787 = vpop.f32.mrb[0].mxu0
      %v3788 = vpop.f32.mrb[0].mxu0
      %3789 = vdwg.mxu0
      %v3790 = vunpack.c.l.b16 %v817
      %v3791 = vpack.c.b16 %v3790, %v3790
      %3792 = vrot.lane.b32.xlu0 %v3791, 120
      %v3793 = vpop.permute.xlu0 %3792
      %v3795 = vsel %vm851, %v3578, 0
      %v3798 = vsel %vm1784, %v3793, 0
      %3800 = vmatprep.subr.bf16.mxu0 0
      %3801 = vmatpush1.bf16.msra.mxu0 %v3798
      %3802 = vmatprep.subr.bf16.mxu0 0
      %3803 = vmatpush1.bf16.msra.mxu0 0
      %3804 = vmatprep.subr.bf16.mxu0 0
      %3805 = vmatpush1.bf16.msra.mxu0 0
      %3806 = vmatprep.subr.bf16.mxu0 0
      %3807 = vmatpush1.bf16.msra.mxu0 0
      %3808 = vmatprep.subr.bf16.mxu0 0
      %3809 = vmatpush1.bf16.msra.mxu0 0
      %3810 = vmatprep.subr.bf16.mxu0 0
      %3811 = vmatpush1.bf16.msra.mxu0 0
      %3812 = vmatprep.subr.bf16.mxu0 0
      %3813 = vmatpush1.bf16.msra.mxu0 0
      %3814 = vmatprep.subr.bf16.mxu0 0
      %3815 = vmatpush1.bf16.msra.mxu0 0
      %3816 = vmatprep.subr.bf16.mxu0 0
      %3817 = vmatpush1.bf16.msra.mxu0 0
      %3818 = vmatprep.subr.bf16.mxu0 0
      %3819 = vmatpush1.bf16.msra.mxu0 0
      %3820 = vmatprep.subr.bf16.mxu0 0
      %3821 = vmatpush1.bf16.msra.mxu0 0
      %3822 = vmatprep.subr.bf16.mxu0 0
      %3823 = vmatpush1.bf16.msra.mxu0 0
      %3824 = vmatprep.subr.bf16.mxu0 0
      %3825 = vmatpush1.bf16.msra.mxu0 0
      %3826 = vmatprep.subr.bf16.mxu0 0
      %3827 = vmatpush1.bf16.msra.mxu0 0
      %3828 = vmatprep.subr.bf16.mxu0 0
      %3829 = vmatpush1.bf16.msra.mxu0 0
      %3830 = vmatprep.subr.bf16.mxu0 0
      %3831 = vmatpush1.bf16.msra.mxu0 0
      %3832 = vmatprep.mubr.bf16.mxu0 0
      %3833 = vmatmul.mubr.bf16.gmra.mrb[0].mxu0 %v3795
      %v3834 = vpop.f32.mrb[0].mxu0
      %v3835 = vadd.f32 0.0, %v3834
      %v3836 = vpop.f32.mrb[0].mxu0
      %v3837 = vpop.f32.mrb[0].mxu0
      %v3838 = vpop.f32.mrb[0].mxu0
      %3839 = vdwg.mxu0
      %v3840 = vunpack.c.l.b16 %v820
      %v3841 = vpack.c.b16 %v3840, %v3840
      %3842 = vrot.lane.b32.xlu0 %v3841, 120
      %v3843 = vpop.permute.xlu0 %3842
      %v3845 = vsel %vm851, %v3579, 0
      %v3848 = vsel %vm1784, %v3843, 0
      %3850 = vmatprep.subr.bf16.mxu0 0
      %3851 = vmatpush1.bf16.msra.mxu0 %v3848
      %3852 = vmatprep.subr.bf16.mxu0 0
      %3853 = vmatpush1.bf16.msra.mxu0 0
      %3854 = vmatprep.subr.bf16.mxu0 0
      %3855 = vmatpush1.bf16.msra.mxu0 0
      %3856 = vmatprep.subr.bf16.mxu0 0
      %3857 = vmatpush1.bf16.msra.mxu0 0
      %3858 = vmatprep.subr.bf16.mxu0 0
      %3859 = vmatpush1.bf16.msra.mxu0 0
      %3860 = vmatprep.subr.bf16.mxu0 0
      %3861 = vmatpush1.bf16.msra.mxu0 0
      %3862 = vmatprep.subr.bf16.mxu0 0
      %3863 = vmatpush1.bf16.msra.mxu0 0
      %3864 = vmatprep.subr.bf16.mxu0 0
      %3865 = vmatpush1.bf16.msra.mxu0 0
      %3866 = vmatprep.subr.bf16.mxu0 0
      %3867 = vmatpush1.bf16.msra.mxu0 0
      %3868 = vmatprep.subr.bf16.mxu0 0
      %3869 = vmatpush1.bf16.msra.mxu0 0
      %3870 = vmatprep.subr.bf16.mxu0 0
      %3871 = vmatpush1.bf16.msra.mxu0 0
      %3872 = vmatprep.subr.bf16.mxu0 0
      %3873 = vmatpush1.bf16.msra.mxu0 0
      %3874 = vmatprep.subr.bf16.mxu0 0
      %3875 = vmatpush1.bf16.msra.mxu0 0
      %3876 = vmatprep.subr.bf16.mxu0 0
      %3877 = vmatpush1.bf16.msra.mxu0 0
      %3878 = vmatprep.subr.bf16.mxu0 0
      %3879 = vmatpush1.bf16.msra.mxu0 0
      %3880 = vmatprep.subr.bf16.mxu0 0
      %3881 = vmatpush1.bf16.msra.mxu0 0
      %3882 = vmatprep.mubr.bf16.mxu0 0
      %3883 = vmatmul.mubr.bf16.gmra.mrb[0].mxu0 %v3845
      %v3884 = vpop.f32.mrb[0].mxu0
      %v3885 = vadd.f32 0.0, %v3884
      %v3886 = vpop.f32.mrb[0].mxu0
      %v3887 = vpop.f32.mrb[0].mxu0
      %v3888 = vpop.f32.mrb[0].mxu0
      %3889 = vdwg.mxu0
      %v3890 = vunpack.c.l.b16 %v823
      %v3891 = vpack.c.b16 %v3890, %v3890
      %3892 = vrot.lane.b32.xlu0 %v3891, 120
      %v3893 = vpop.permute.xlu0 %3892
      %v3895 = vsel %vm851, %v3580, 0
      %v3898 = vsel %vm1784, %v3893, 0
      %3900 = vmatprep.subr.bf16.mxu0 0
      %3901 = vmatpush1.bf16.msra.mxu0 %v3898
      %3902 = vmatprep.subr.bf16.mxu0 0
      %3903 = vmatpush1.bf16.msra.mxu0 0
      %3904 = vmatprep.subr.bf16.mxu0 0
      %3905 = vmatpush1.bf16.msra.mxu0 0
      %3906 = vmatprep.subr.bf16.mxu0 0
      %3907 = vmatpush1.bf16.msra.mxu0 0
      %3908 = vmatprep.subr.bf16.mxu0 0
      %3909 = vmatpush1.bf16.msra.mxu0 0
      %3910 = vmatprep.subr.bf16.mxu0 0
      %3911 = vmatpush1.bf16.msra.mxu0 0
      %3912 = vmatprep.subr.bf16.mxu0 0
      %3913 = vmatpush1.bf16.msra.mxu0 0
      %3914 = vmatprep.subr.bf16.mxu0 0
      %3915 = vmatpush1.bf16.msra.mxu0 0
      %3916 = vmatprep.subr.bf16.mxu0 0
      %3917 = vmatpush1.bf16.msra.mxu0 0
      %3918 = vmatprep.subr.bf16.mxu0 0
      %3919 = vmatpush1.bf16.msra.mxu0 0
      %3920 = vmatprep.subr.bf16.mxu0 0
      %3921 = vmatpush1.bf16.msra.mxu0 0
      %3922 = vmatprep.subr.bf16.mxu0 0
      %3923 = vmatpush1.bf16.msra.mxu0 0
      %3924 = vmatprep.subr.bf16.mxu0 0
      %3925 = vmatpush1.bf16.msra.mxu0 0
      %3926 = vmatprep.subr.bf16.mxu0 0
      %3927 = vmatpush1.bf16.msra.mxu0 0
      %3928 = vmatprep.subr.bf16.mxu0 0
      %3929 = vmatpush1.bf16.msra.mxu0 0
      %3930 = vmatprep.subr.bf16.mxu0 0
      %3931 = vmatpush1.bf16.msra.mxu0 0
      %3932 = vmatprep.mubr.bf16.mxu0 0
      %3933 = vmatmul.mubr.bf16.gmra.mrb[0].mxu0 %v3895
      %v3934 = vpop.f32.mrb[0].mxu0
      %v3935 = vadd.f32 0.0, %v3934
      %v3936 = vpop.f32.mrb[0].mxu0
      %v3937 = vpop.f32.mrb[0].mxu0
      %v3938 = vpop.f32.mrb[0].mxu0
      %3939 = vdwg.mxu0
      %v3940 = vunpack.c.l.b16 %v826
      %v3941 = vpack.c.b16 %v3940, %v3940
      %3942 = vrot.lane.b32.xlu0 %v3941, 120
      %v3943 = vpop.permute.xlu0 %3942
      %v3945 = vsel %vm851, %v3581, 0
      %v3948 = vsel %vm1784, %v3943, 0
      %3950 = vmatprep.subr.bf16.mxu0 0
      %3951 = vmatpush1.bf16.msra.mxu0 %v3948
      %3952 = vmatprep.subr.bf16.mxu0 0
      %3953 = vmatpush1.bf16.msra.mxu0 0
      %3954 = vmatprep.subr.bf16.mxu0 0
      %3955 = vmatpush1.bf16.msra.mxu0 0
      %3956 = vmatprep.subr.bf16.mxu0 0
      %3957 = vmatpush1.bf16.msra.mxu0 0
      %3958 = vmatprep.subr.bf16.mxu0 0
      %3959 = vmatpush1.bf16.msra.mxu0 0
      %3960 = vmatprep.subr.bf16.mxu0 0
      %3961 = vmatpush1.bf16.msra.mxu0 0
      %3962 = vmatprep.subr.bf16.mxu0 0
      %3963 = vmatpush1.bf16.msra.mxu0 0
      %3964 = vmatprep.subr.bf16.mxu0 0
      %3965 = vmatpush1.bf16.msra.mxu0 0
      %3966 = vmatprep.subr.bf16.mxu0 0
      %3967 = vmatpush1.bf16.msra.mxu0 0
      %3968 = vmatprep.subr.bf16.mxu0 0
      %3969 = vmatpush1.bf16.msra.mxu0 0
      %3970 = vmatprep.subr.bf16.mxu0 0
      %3971 = vmatpush1.bf16.msra.mxu0 0
      %3972 = vmatprep.subr.bf16.mxu0 0
      %3973 = vmatpush1.bf16.msra.mxu0 0
      %3974 = vmatprep.subr.bf16.mxu0 0
      %3975 = vmatpush1.bf16.msra.mxu0 0
      %3976 = vmatprep.subr.bf16.mxu0 0
      %3977 = vmatpush1.bf16.msra.mxu0 0
      %3978 = vmatprep.subr.bf16.mxu0 0
      %3979 = vmatpush1.bf16.msra.mxu0 0
      %3980 = vmatprep.subr.bf16.mxu0 0
      %3981 = vmatpush1.bf16.msra.mxu0 0
      %3982 = vmatprep.mubr.bf16.mxu0 0
      %3983 = vmatmul.mubr.bf16.gmra.mrb[0].mxu0 %v3945
      %v3984 = vpop.f32.mrb[0].mxu0
      %v3985 = vadd.f32 0.0, %v3984
      %v3986 = vpop.f32.mrb[0].mxu0
      %v3987 = vpop.f32.mrb[0].mxu0
      %v3988 = vpop.f32.mrb[0].mxu0
      %3989 = vdwg.mxu0
      %v3990 = vunpack.c.l.b16 %v829
      %v3991 = vpack.c.b16 %v3990, %v3990
      %3992 = vrot.lane.b32.xlu0 %v3991, 120
      %v3993 = vpop.permute.xlu0 %3992
      %v3995 = vsel %vm851, %v3582, 0
      %v3998 = vsel %vm1784, %v3993, 0
      %4000 = vmatprep.subr.bf16.mxu0 0
      %4001 = vmatpush1.bf16.msra.mxu0 %v3998
      %4002 = vmatprep.subr.bf16.mxu0 0
      %4003 = vmatpush1.bf16.msra.mxu0 0
      %4004 = vmatprep.subr.bf16.mxu0 0
      %4005 = vmatpush1.bf16.msra.mxu0 0
      %4006 = vmatprep.subr.bf16.mxu0 0
      %4007 = vmatpush1.bf16.msra.mxu0 0
      %4008 = vmatprep.subr.bf16.mxu0 0
      %4009 = vmatpush1.bf16.msra.mxu0 0
      %4010 = vmatprep.subr.bf16.mxu0 0
      %4011 = vmatpush1.bf16.msra.mxu0 0
      %4012 = vmatprep.subr.bf16.mxu0 0
      %4013 = vmatpush1.bf16.msra.mxu0 0
      %4014 = vmatprep.subr.bf16.mxu0 0
      %4015 = vmatpush1.bf16.msra.mxu0 0
      %4016 = vmatprep.subr.bf16.mxu0 0
      %4017 = vmatpush1.bf16.msra.mxu0 0
      %4018 = vmatprep.subr.bf16.mxu0 0
      %4019 = vmatpush1.bf16.msra.mxu0 0
      %4020 = vmatprep.subr.bf16.mxu0 0
      %4021 = vmatpush1.bf16.msra.mxu0 0
      %4022 = vmatprep.subr.bf16.mxu0 0
      %4023 = vmatpush1.bf16.msra.mxu0 0
      %4024 = vmatprep.subr.bf16.mxu0 0
      %4025 = vmatpush1.bf16.msra.mxu0 0
      %4026 = vmatprep.subr.bf16.mxu0 0
      %4027 = vmatpush1.bf16.msra.mxu0 0
      %4028 = vmatprep.subr.bf16.mxu0 0
      %4029 = vmatpush1.bf16.msra.mxu0 0
      %4030 = vmatprep.subr.bf16.mxu0 0
      %4031 = vmatpush1.bf16.msra.mxu0 0
      %4032 = vmatprep.mubr.bf16.mxu0 0
      %4033 = vmatmul.mubr.bf16.gmra.mrb[0].mxu0 %v3995
      %v4034 = vpop.f32.mrb[0].mxu0
      %v4035 = vadd.f32 0.0, %v4034
      %v4036 = vpop.f32.mrb[0].mxu0
      %v4037 = vpop.f32.mrb[0].mxu0
      %v4038 = vpop.f32.mrb[0].mxu0
      %4039 = vdwg.mxu0
      %v4040 = vunpack.c.l.b16 %v832
      %v4041 = vpack.c.b16 %v4040, %v4040
      %4042 = vrot.lane.b32.xlu0 %v4041, 120
      %v4043 = vpop.permute.xlu0 %4042
      %v4045 = vsel %vm851, %v3583, 0
      %v4048 = vsel %vm1784, %v4043, 0
      %4050 = vmatprep.subr.bf16.mxu0 0
      %4051 = vmatpush1.bf16.msra.mxu0 %v4048
      %4052 = vmatprep.subr.bf16.mxu0 0
      %4053 = vmatpush1.bf16.msra.mxu0 0
      %4054 = vmatprep.subr.bf16.mxu0 0
      %4055 = vmatpush1.bf16.msra.mxu0 0
      %4056 = vmatprep.subr.bf16.mxu0 0
      %4057 = vmatpush1.bf16.msra.mxu0 0
      %4058 = vmatprep.subr.bf16.mxu0 0
      %4059 = vmatpush1.bf16.msra.mxu0 0
      %4060 = vmatprep.subr.bf16.mxu0 0
      %4061 = vmatpush1.bf16.msra.mxu0 0
      %4062 = vmatprep.subr.bf16.mxu0 0
      %4063 = vmatpush1.bf16.msra.mxu0 0
      %4064 = vmatprep.subr.bf16.mxu0 0
      %4065 = vmatpush1.bf16.msra.mxu0 0
      %4066 = vmatprep.subr.bf16.mxu0 0
      %4067 = vmatpush1.bf16.msra.mxu0 0
      %4068 = vmatprep.subr.bf16.mxu0 0
      %4069 = vmatpush1.bf16.msra.mxu0 0
      %4070 = vmatprep.subr.bf16.mxu0 0
      %4071 = vmatpush1.bf16.msra.mxu0 0
      %4072 = vmatprep.subr.bf16.mxu0 0
      %4073 = vmatpush1.bf16.msra.mxu0 0
      %4074 = vmatprep.subr.bf16.mxu0 0
      %4075 = vmatpush1.bf16.msra.mxu0 0
      %4076 = vmatprep.subr.bf16.mxu0 0
      %4077 = vmatpush1.bf16.msra.mxu0 0
      %4078 = vmatprep.subr.bf16.mxu0 0
      %4079 = vmatpush1.bf16.msra.mxu0 0
      %4080 = vmatprep.subr.bf16.mxu0 0
      %4081 = vmatpush1.bf16.msra.mxu0 0
      %4082 = vmatprep.mubr.bf16.mxu0 0
      %4083 = vmatmul.mubr.bf16.gmra.mrb[0].mxu0 %v4045
      %v4084 = vpop.f32.mrb[0].mxu0
      %v4085 = vadd.f32 0.0, %v4084
      %v4086 = vpop.f32.mrb[0].mxu0
      %v4087 = vpop.f32.mrb[0].mxu0
      %v4088 = vpop.f32.mrb[0].mxu0
      %4089 = vdwg.mxu0
      %v4090 = vunpack.c.l.b16 %v835
      %v4091 = vpack.c.b16 %v4090, %v4090
      %4092 = vrot.lane.b32.xlu0 %v4091, 120
      %v4093 = vpop.permute.xlu0 %4092
      %v4095 = vsel %vm851, %v3584, 0
      %v4098 = vsel %vm1784, %v4093, 0
      %4100 = vmatprep.subr.bf16.mxu0 0
      %4101 = vmatpush1.bf16.msra.mxu0 %v4098
      %4102 = vmatprep.subr.bf16.mxu0 0
      %4103 = vmatpush1.bf16.msra.mxu0 0
      %4104 = vmatprep.subr.bf16.mxu0 0
      %4105 = vmatpush1.bf16.msra.mxu0 0
      %4106 = vmatprep.subr.bf16.mxu0 0
      %4107 = vmatpush1.bf16.msra.mxu0 0
      %4108 = vmatprep.subr.bf16.mxu0 0
      %4109 = vmatpush1.bf16.msra.mxu0 0
      %4110 = vmatprep.subr.bf16.mxu0 0
      %4111 = vmatpush1.bf16.msra.mxu0 0
      %4112 = vmatprep.subr.bf16.mxu0 0
      %4113 = vmatpush1.bf16.msra.mxu0 0
      %4114 = vmatprep.subr.bf16.mxu0 0
      %4115 = vmatpush1.bf16.msra.mxu0 0
      %4116 = vmatprep.subr.bf16.mxu0 0
      %4117 = vmatpush1.bf16.msra.mxu0 0
      %4118 = vmatprep.subr.bf16.mxu0 0
      %4119 = vmatpush1.bf16.msra.mxu0 0
      %4120 = vmatprep.subr.bf16.mxu0 0
      %4121 = vmatpush1.bf16.msra.mxu0 0
      %4122 = vmatprep.subr.bf16.mxu0 0
      %4123 = vmatpush1.bf16.msra.mxu0 0
      %4124 = vmatprep.subr.bf16.mxu0 0
      %4125 = vmatpush1.bf16.msra.mxu0 0
      %4126 = vmatprep.subr.bf16.mxu0 0
      %4127 = vmatpush1.bf16.msra.mxu0 0
      %4128 = vmatprep.subr.bf16.mxu0 0
      %4129 = vmatpush1.bf16.msra.mxu0 0
      %4130 = vmatprep.subr.bf16.mxu0 0
      %4131 = vmatpush1.bf16.msra.mxu0 0
      %4132 = vmatprep.mubr.bf16.mxu0 0
      %4133 = vmatmul.mubr.bf16.gmra.mrb[0].mxu0 %v4095
      %v4134 = vpop.f32.mrb[0].mxu0
      %v4135 = vadd.f32 0.0, %v4134
      %v4136 = vpop.f32.mrb[0].mxu0
      %v4137 = vpop.f32.mrb[0].mxu0
      %v4138 = vpop.f32.mrb[0].mxu0
      %4139 = vdwg.mxu0
      %v4140 = vunpack.c.l.b16 %v838
      %v4141 = vpack.c.b16 %v4140, %v4140
      %4142 = vrot.lane.b32.xlu0 %v4141, 120
      %v4143 = vpop.permute.xlu0 %4142
      %v4145 = vsel %vm851, %v3585, 0
      %v4148 = vsel %vm1784, %v4143, 0
      %4150 = vmatprep.subr.bf16.mxu0 0
      %4151 = vmatpush1.bf16.msra.mxu0 %v4148
      %4152 = vmatprep.subr.bf16.mxu0 0
      %4153 = vmatpush1.bf16.msra.mxu0 0
      %4154 = vmatprep.subr.bf16.mxu0 0
      %4155 = vmatpush1.bf16.msra.mxu0 0
      %4156 = vmatprep.subr.bf16.mxu0 0
      %4157 = vmatpush1.bf16.msra.mxu0 0
      %4158 = vmatprep.subr.bf16.mxu0 0
      %4159 = vmatpush1.bf16.msra.mxu0 0
      %4160 = vmatprep.subr.bf16.mxu0 0
      %4161 = vmatpush1.bf16.msra.mxu0 0
      %4162 = vmatprep.subr.bf16.mxu0 0
      %4163 = vmatpush1.bf16.msra.mxu0 0
      %4164 = vmatprep.subr.bf16.mxu0 0
      %4165 = vmatpush1.bf16.msra.mxu0 0
      %4166 = vmatprep.subr.bf16.mxu0 0
      %4167 = vmatpush1.bf16.msra.mxu0 0
      %4168 = vmatprep.subr.bf16.mxu0 0
      %4169 = vmatpush1.bf16.msra.mxu0 0
      %4170 = vmatprep.subr.bf16.mxu0 0
      %4171 = vmatpush1.bf16.msra.mxu0 0
      %4172 = vmatprep.subr.bf16.mxu0 0
      %4173 = vmatpush1.bf16.msra.mxu0 0
      %4174 = vmatprep.subr.bf16.mxu0 0
      %4175 = vmatpush1.bf16.msra.mxu0 0
      %4176 = vmatprep.subr.bf16.mxu0 0
      %4177 = vmatpush1.bf16.msra.mxu0 0
      %4178 = vmatprep.subr.bf16.mxu0 0
      %4179 = vmatpush1.bf16.msra.mxu0 0
      %4180 = vmatprep.subr.bf16.mxu0 0
      %4181 = vmatpush1.bf16.msra.mxu0 0
      %4182 = vmatprep.mubr.bf16.mxu0 0
      %4183 = vmatmul.mubr.bf16.gmra.mrb[0].mxu0 %v4145
      %v4184 = vpop.f32.mrb[0].mxu0
      %v4185 = vadd.f32 0.0, %v4184
      %v4186 = vpop.f32.mrb[0].mxu0
      %v4187 = vpop.f32.mrb[0].mxu0
      %v4188 = vpop.f32.mrb[0].mxu0
      %4189 = vdwg.mxu0
      %v4190 = vunpack.c.l.b16 %v841
      %v4191 = vpack.c.b16 %v4190, %v4190
      %4192 = vrot.lane.b32.xlu0 %v4191, 120
      %v4193 = vpop.permute.xlu0 %4192
      %v4195 = vsel %vm851, %v3586, 0
      %v4198 = vsel %vm1784, %v4193, 0
      %4200 = vmatprep.subr.bf16.mxu0 0
      %4201 = vmatpush1.bf16.msra.mxu0 %v4198
      %4202 = vmatprep.subr.bf16.mxu0 0
      %4203 = vmatpush1.bf16.msra.mxu0 0
      %4204 = vmatprep.subr.bf16.mxu0 0
      %4205 = vmatpush1.bf16.msra.mxu0 0
      %4206 = vmatprep.subr.bf16.mxu0 0
      %4207 = vmatpush1.bf16.msra.mxu0 0
      %4208 = vmatprep.subr.bf16.mxu0 0
      %4209 = vmatpush1.bf16.msra.mxu0 0
      %4210 = vmatprep.subr.bf16.mxu0 0
      %4211 = vmatpush1.bf16.msra.mxu0 0
      %4212 = vmatprep.subr.bf16.mxu0 0
      %4213 = vmatpush1.bf16.msra.mxu0 0
      %4214 = vmatprep.subr.bf16.mxu0 0
      %4215 = vmatpush1.bf16.msra.mxu0 0
      %4216 = vmatprep.subr.bf16.mxu0 0
      %4217 = vmatpush1.bf16.msra.mxu0 0
      %4218 = vmatprep.subr.bf16.mxu0 0
      %4219 = vmatpush1.bf16.msra.mxu0 0
      %4220 = vmatprep.subr.bf16.mxu0 0
      %4221 = vmatpush1.bf16.msra.mxu0 0
      %4222 = vmatprep.subr.bf16.mxu0 0
      %4223 = vmatpush1.bf16.msra.mxu0 0
      %4224 = vmatprep.subr.bf16.mxu0 0
      %4225 = vmatpush1.bf16.msra.mxu0 0
      %4226 = vmatprep.subr.bf16.mxu0 0
      %4227 = vmatpush1.bf16.msra.mxu0 0
      %4228 = vmatprep.subr.bf16.mxu0 0
      %4229 = vmatpush1.bf16.msra.mxu0 0
      %4230 = vmatprep.subr.bf16.mxu0 0
      %4231 = vmatpush1.bf16.msra.mxu0 0
      %4232 = vmatprep.mubr.bf16.mxu0 0
      %4233 = vmatmul.mubr.bf16.gmra.mrb[0].mxu0 %v4195
      %v4234 = vpop.f32.mrb[0].mxu0
      %v4235 = vadd.f32 0.0, %v4234
      %v4236 = vpop.f32.mrb[0].mxu0
      %v4237 = vpop.f32.mrb[0].mxu0
      %v4238 = vpop.f32.mrb[0].mxu0
      %4239 = vdwg.mxu0
      %v4240 = vunpack.c.l.b16 %v844
      %v4241 = vpack.c.b16 %v4240, %v4240
      %4242 = vrot.lane.b32.xlu0 %v4241, 120
      %v4243 = vpop.permute.xlu0 %4242
      %v4245 = vsel %vm851, %v3587, 0
      %v4248 = vsel %vm1784, %v4243, 0
      %4250 = vmatprep.subr.bf16.mxu0 0
      %4251 = vmatpush1.bf16.msra.mxu0 %v4248
      %4252 = vmatprep.subr.bf16.mxu0 0
      %4253 = vmatpush1.bf16.msra.mxu0 0
      %4254 = vmatprep.subr.bf16.mxu0 0
      %4255 = vmatpush1.bf16.msra.mxu0 0
      %4256 = vmatprep.subr.bf16.mxu0 0
      %4257 = vmatpush1.bf16.msra.mxu0 0
      %4258 = vmatprep.subr.bf16.mxu0 0
      %4259 = vmatpush1.bf16.msra.mxu0 0
      %4260 = vmatprep.subr.bf16.mxu0 0
      %4261 = vmatpush1.bf16.msra.mxu0 0
      %4262 = vmatprep.subr.bf16.mxu0 0
      %4263 = vmatpush1.bf16.msra.mxu0 0
      %4264 = vmatprep.subr.bf16.mxu0 0
      %4265 = vmatpush1.bf16.msra.mxu0 0
      %4266 = vmatprep.subr.bf16.mxu0 0
      %4267 = vmatpush1.bf16.msra.mxu0 0
      %4268 = vmatprep.subr.bf16.mxu0 0
      %4269 = vmatpush1.bf16.msra.mxu0 0
      %4270 = vmatprep.subr.bf16.mxu0 0
      %4271 = vmatpush1.bf16.msra.mxu0 0
      %4272 = vmatprep.subr.bf16.mxu0 0
      %4273 = vmatpush1.bf16.msra.mxu0 0
      %4274 = vmatprep.subr.bf16.mxu0 0
      %4275 = vmatpush1.bf16.msra.mxu0 0
      %4276 = vmatprep.subr.bf16.mxu0 0
      %4277 = vmatpush1.bf16.msra.mxu0 0
      %4278 = vmatprep.subr.bf16.mxu0 0
      %4279 = vmatpush1.bf16.msra.mxu0 0
      %4280 = vmatprep.subr.bf16.mxu0 0
      %4281 = vmatpush1.bf16.msra.mxu0 0
      %4282 = vmatprep.mubr.bf16.mxu0 0
      %4283 = vmatmul.mubr.bf16.gmra.mrb[0].mxu0 %v4245
      %v4284 = vpop.f32.mrb[0].mxu0
      %v4285 = vadd.f32 0.0, %v4284
      %v4286 = vpop.f32.mrb[0].mxu0
      %v4287 = vpop.f32.mrb[0].mxu0
      %v4288 = vpop.f32.mrb[0].mxu0
      %4289 = vdwg.mxu0
      %v4290 = vunpack.c.l.b16 %v847
      %v4291 = vpack.c.b16 %v4290, %v4290
      %4292 = vrot.lane.b32.xlu0 %v4291, 120
      %v4293 = vpop.permute.xlu0 %4292
      %v4295 = vsel %vm851, %v3588, 0
      %v4298 = vsel %vm1784, %v4293, 0
      %4300 = vmatprep.subr.bf16.mxu0 0
      %4301 = vmatpush1.bf16.msra.mxu0 %v4298
      %4302 = vmatprep.subr.bf16.mxu0 0
      %4303 = vmatpush1.bf16.msra.mxu0 0
      %4304 = vmatprep.subr.bf16.mxu0 0
      %4305 = vmatpush1.bf16.msra.mxu0 0
      %4306 = vmatprep.subr.bf16.mxu0 0
      %4307 = vmatpush1.bf16.msra.mxu0 0
      %4308 = vmatprep.subr.bf16.mxu0 0
      %4309 = vmatpush1.bf16.msra.mxu0 0
      %4310 = vmatprep.subr.bf16.mxu0 0
      %4311 = vmatpush1.bf16.msra.mxu0 0
      %4312 = vmatprep.subr.bf16.mxu0 0
      %4313 = vmatpush1.bf16.msra.mxu0 0
      %4314 = vmatprep.subr.bf16.mxu0 0
      %4315 = vmatpush1.bf16.msra.mxu0 0
      %4316 = vmatprep.subr.bf16.mxu0 0
      %4317 = vmatpush1.bf16.msra.mxu0 0
      %4318 = vmatprep.subr.bf16.mxu0 0
      %4319 = vmatpush1.bf16.msra.mxu0 0
      %4320 = vmatprep.subr.bf16.mxu0 0
      %4321 = vmatpush1.bf16.msra.mxu0 0
      %4322 = vmatprep.subr.bf16.mxu0 0
      %4323 = vmatpush1.bf16.msra.mxu0 0
      %4324 = vmatprep.subr.bf16.mxu0 0
      %4325 = vmatpush1.bf16.msra.mxu0 0
      %4326 = vmatprep.subr.bf16.mxu0 0
      %4327 = vmatpush1.bf16.msra.mxu0 0
      %4328 = vmatprep.subr.bf16.mxu0 0
      %4329 = vmatpush1.bf16.msra.mxu0 0
      %4330 = vmatprep.subr.bf16.mxu0 0
      %4331 = vmatpush1.bf16.msra.mxu0 0
      %4332 = vmatprep.mubr.bf16.mxu0 0
      %4333 = vmatmul.mubr.bf16.gmra.mrb[0].mxu0 %v4295
      %v4334 = vpop.f32.mrb[0].mxu0
      %v4335 = vadd.f32 0.0, %v4334
      %v4336 = vpop.f32.mrb[0].mxu0
      %v4337 = vpop.f32.mrb[0].mxu0
      %v4338 = vpop.f32.mrb[0].mxu0
      %4339 = vdwg.mxu0
      %v4340 = vunpack.c.l.b16 %v850
      %v4341 = vpack.c.b16 %v4340, %v4340
      %4342 = vrot.lane.b32.xlu0 %v4341, 120
      %v4343 = vpop.permute.xlu0 %4342
      %v4345 = vsel %vm851, %v3589, 0
      %v4348 = vsel %vm1784, %v4343, 0
      %4350 = vmatprep.subr.bf16.mxu0 0
      %4351 = vmatpush1.bf16.msra.mxu0 %v4348
      %4352 = vmatprep.subr.bf16.mxu0 0
      %4353 = vmatpush1.bf16.msra.mxu0 0
      %4354 = vmatprep.subr.bf16.mxu0 0
      %4355 = vmatpush1.bf16.msra.mxu0 0
      %4356 = vmatprep.subr.bf16.mxu0 0
      %4357 = vmatpush1.bf16.msra.mxu0 0
      %4358 = vmatprep.subr.bf16.mxu0 0
      %4359 = vmatpush1.bf16.msra.mxu0 0
      %4360 = vmatprep.subr.bf16.mxu0 0
      %4361 = vmatpush1.bf16.msra.mxu0 0
      %4362 = vmatprep.subr.bf16.mxu0 0
      %4363 = vmatpush1.bf16.msra.mxu0 0
      %4364 = vmatprep.subr.bf16.mxu0 0
      %4365 = vmatpush1.bf16.msra.mxu0 0
      %4366 = vmatprep.subr.bf16.mxu0 0
      %4367 = vmatpush1.bf16.msra.mxu0 0
      %4368 = vmatprep.subr.bf16.mxu0 0
      %4369 = vmatpush1.bf16.msra.mxu0 0
      %4370 = vmatprep.subr.bf16.mxu0 0
      %4371 = vmatpush1.bf16.msra.mxu0 0
      %4372 = vmatprep.subr.bf16.mxu0 0
      %4373 = vmatpush1.bf16.msra.mxu0 0
      %4374 = vmatprep.subr.bf16.mxu0 0
      %4375 = vmatpush1.bf16.msra.mxu0 0
      %4376 = vmatprep.subr.bf16.mxu0 0
      %4377 = vmatpush1.bf16.msra.mxu0 0
      %4378 = vmatprep.subr.bf16.mxu0 0
      %4379 = vmatpush1.bf16.msra.mxu0 0
      %4380 = vmatprep.subr.bf16.mxu0 0
      %4381 = vmatpush1.bf16.msra.mxu0 0
      %4382 = vmatprep.mubr.bf16.mxu0 0
      %4383 = vmatmul.mubr.bf16.gmra.mrb[0].mxu0 %v4345
      %v4384 = vpop.f32.mrb[0].mxu0
      %v4385 = vadd.f32 0.0, %v4384
      %v4386 = vpop.f32.mrb[0].mxu0
      %v4387 = vpop.f32.mrb[0].mxu0
      %v4388 = vpop.f32.mrb[0].mxu0
      %4389 = vdwg.mxu0
      %4390 = vrot.lane.b32.xlu0 %v2520, 112
      %v4391 = vpop.permute.xlu0 %4390
      %4392 = vrot.lane.b32.xlu0 %v2524, 112
      %v4393 = vpop.permute.xlu0 %4392
      %v4395 = vsel %vm851, %v4391, 0
      %v4398 = vsel %vm851, %v4393, 0
      %4400 = vmatprep.subr.bf16.mxu0 0
      %4401 = vmatpush1.bf16.xpose.msra.mxu0 %v4398
      %4402 = vmatprep.subr.bf16.mxu0 0
      %4403 = vmatpush1.bf16.xpose.msra.mxu0 0
      %4404 = vmatprep.subr.bf16.mxu0 0
      %4405 = vmatpush1.bf16.xpose.msra.mxu0 0
      %4406 = vmatprep.subr.bf16.mxu0 0
      %4407 = vmatpush1.bf16.xpose.msra.mxu0 0
      %4408 = vmatprep.subr.bf16.mxu0 0
      %4409 = vmatpush1.bf16.xpose.msra.mxu0 0
      %4410 = vmatprep.subr.bf16.mxu0 0
      %4411 = vmatpush1.bf16.xpose.msra.mxu0 0
      %4412 = vmatprep.subr.bf16.mxu0 0
      %4413 = vmatpush1.bf16.xpose.msra.mxu0 0
      %4414 = vmatprep.subr.bf16.mxu0 0
      %4415 = vmatpush1.bf16.xpose.msra.mxu0 0
      %4416 = vmatprep.subr.bf16.mxu0 0
      %4417 = vmatpush1.bf16.xpose.msra.mxu0 0
      %4418 = vmatprep.subr.bf16.mxu0 0
      %4419 = vmatpush1.bf16.xpose.msra.mxu0 0
      %4420 = vmatprep.subr.bf16.mxu0 0
      %4421 = vmatpush1.bf16.xpose.msra.mxu0 0
      %4422 = vmatprep.subr.bf16.mxu0 0
      %4423 = vmatpush1.bf16.xpose.msra.mxu0 0
      %4424 = vmatprep.subr.bf16.mxu0 0
      %4425 = vmatpush1.bf16.xpose.msra.mxu0 0
      %4426 = vmatprep.subr.bf16.mxu0 0
      %4427 = vmatpush1.bf16.xpose.msra.mxu0 0
      %4428 = vmatprep.subr.bf16.mxu0 0
      %4429 = vmatpush1.bf16.xpose.msra.mxu0 0
      %4430 = vmatprep.subr.bf16.mxu0 0
      %4431 = vmatpush1.bf16.xpose.msra.mxu0 0
      %4432 = vmatprep.mubr.bf16.mxu0 0
      %4433 = vmatmul.mubr.bf16.gmra.mrb[0].mxu0 %v4395
      %v4434 = vpop.f32.mrb[0].mxu0
      %v4435 = vadd.f32 0.0, %v4434
      %v4436 = vpop.f32.mrb[0].mxu0
      %v4437 = vpop.f32.mrb[0].mxu0
      %v4438 = vpop.f32.mrb[0].mxu0
      %4439 = vdwg.mxu0
      %4440 = vrot.lane.b32.xlu0 %v2575, 112
      %v4441 = vpop.permute.xlu0 %4440
      %4442 = vrot.lane.b32.xlu0 %v2579, 112
      %v4443 = vpop.permute.xlu0 %4442
      %v4445 = vsel %vm851, %v4441, 0
      %v4448 = vsel %vm851, %v4443, 0
      %4450 = vmatprep.subr.bf16.mxu0 0
      %4451 = vmatpush1.bf16.xpose.msra.mxu0 %v4448
      %4452 = vmatprep.subr.bf16.mxu0 0
      %4453 = vmatpush1.bf16.xpose.msra.mxu0 0
      %4454 = vmatprep.subr.bf16.mxu0 0
      %4455 = vmatpush1.bf16.xpose.msra.mxu0 0
      %4456 = vmatprep.subr.bf16.mxu0 0
      %4457 = vmatpush1.bf16.xpose.msra.mxu0 0
      %4458 = vmatprep.subr.bf16.mxu0 0
      %4459 = vmatpush1.bf16.xpose.msra.mxu0 0
      %4460 = vmatprep.subr.bf16.mxu0 0
      %4461 = vmatpush1.bf16.xpose.msra.mxu0 0
      %4462 = vmatprep.subr.bf16.mxu0 0
      %4463 = vmatpush1.bf16.xpose.msra.mxu0 0
      %4464 = vmatprep.subr.bf16.mxu0 0
      %4465 = vmatpush1.bf16.xpose.msra.mxu0 0
      %4466 = vmatprep.subr.bf16.mxu0 0
      %4467 = vmatpush1.bf16.xpose.msra.mxu0 0
      %4468 = vmatprep.subr.bf16.mxu0 0
      %4469 = vmatpush1.bf16.xpose.msra.mxu0 0
      %4470 = vmatprep.subr.bf16.mxu0 0
      %4471 = vmatpush1.bf16.xpose.msra.mxu0 0
      %4472 = vmatprep.subr.bf16.mxu0 0
      %4473 = vmatpush1.bf16.xpose.msra.mxu0 0
      %4474 = vmatprep.subr.bf16.mxu0 0
      %4475 = vmatpush1.bf16.xpose.msra.mxu0 0
      %4476 = vmatprep.subr.bf16.mxu0 0
      %4477 = vmatpush1.bf16.xpose.msra.mxu0 0
      %4478 = vmatprep.subr.bf16.mxu0 0
      %4479 = vmatpush1.bf16.xpose.msra.mxu0 0
      %4480 = vmatprep.subr.bf16.mxu0 0
      %4481 = vmatpush1.bf16.xpose.msra.mxu0 0
      %4482 = vmatprep.mubr.bf16.mxu0 0
      %4483 = vmatmul.mubr.bf16.gmra.mrb[0].mxu0 %v4445
      %v4484 = vpop.f32.mrb[0].mxu0
      %v4485 = vadd.f32 0.0, %v4484
      %v4486 = vpop.f32.mrb[0].mxu0
      %v4487 = vpop.f32.mrb[0].mxu0
      %v4488 = vpop.f32.mrb[0].mxu0
      %4489 = vdwg.mxu0
      %4490 = vrot.lane.b32.xlu0 %v2630, 112
      %v4491 = vpop.permute.xlu0 %4490
      %4492 = vrot.lane.b32.xlu0 %v2634, 112
      %v4493 = vpop.permute.xlu0 %4492
      %v4495 = vsel %vm851, %v4491, 0
      %v4498 = vsel %vm851, %v4493, 0
      %4500 = vmatprep.subr.bf16.mxu0 0
      %4501 = vmatpush1.bf16.xpose.msra.mxu0 %v4498
      %4502 = vmatprep.subr.bf16.mxu0 0
      %4503 = vmatpush1.bf16.xpose.msra.mxu0 0
      %4504 = vmatprep.subr.bf16.mxu0 0
      %4505 = vmatpush1.bf16.xpose.msra.mxu0 0
      %4506 = vmatprep.subr.bf16.mxu0 0
      %4507 = vmatpush1.bf16.xpose.msra.mxu0 0
      %4508 = vmatprep.subr.bf16.mxu0 0
      %4509 = vmatpush1.bf16.xpose.msra.mxu0 0
      %4510 = vmatprep.subr.bf16.mxu0 0
      %4511 = vmatpush1.bf16.xpose.msra.mxu0 0
      %4512 = vmatprep.subr.bf16.mxu0 0
      %4513 = vmatpush1.bf16.xpose.msra.mxu0 0
      %4514 = vmatprep.subr.bf16.mxu0 0
      %4515 = vmatpush1.bf16.xpose.msra.mxu0 0
      %4516 = vmatprep.subr.bf16.mxu0 0
      %4517 = vmatpush1.bf16.xpose.msra.mxu0 0
      %4518 = vmatprep.subr.bf16.mxu0 0
      %4519 = vmatpush1.bf16.xpose.msra.mxu0 0
      %4520 = vmatprep.subr.bf16.mxu0 0
      %4521 = vmatpush1.bf16.xpose.msra.mxu0 0
      %4522 = vmatprep.subr.bf16.mxu0 0
      %4523 = vmatpush1.bf16.xpose.msra.mxu0 0
      %4524 = vmatprep.subr.bf16.mxu0 0
      %4525 = vmatpush1.bf16.xpose.msra.mxu0 0
      %4526 = vmatprep.subr.bf16.mxu0 0
      %4527 = vmatpush1.bf16.xpose.msra.mxu0 0
      %4528 = vmatprep.subr.bf16.mxu0 0
      %4529 = vmatpush1.bf16.xpose.msra.mxu0 0
      %4530 = vmatprep.subr.bf16.mxu0 0
      %4531 = vmatpush1.bf16.xpose.msra.mxu0 0
      %4532 = vmatprep.mubr.bf16.mxu0 0
      %4533 = vmatmul.mubr.bf16.gmra.mrb[0].mxu0 %v4495
      %v4534 = vpop.f32.mrb[0].mxu0
      %v4535 = vadd.f32 0.0, %v4534
      %v4536 = vpop.f32.mrb[0].mxu0
      %v4537 = vpop.f32.mrb[0].mxu0
      %v4538 = vpop.f32.mrb[0].mxu0
      %4539 = vdwg.mxu0
      %4540 = vrot.lane.b32.xlu0 %v2685, 112
      %v4541 = vpop.permute.xlu0 %4540
      %4542 = vrot.lane.b32.xlu0 %v2689, 112
      %v4543 = vpop.permute.xlu0 %4542
      %v4545 = vsel %vm851, %v4541, 0
      %v4548 = vsel %vm851, %v4543, 0
      %4550 = vmatprep.subr.bf16.mxu0 0
      %4551 = vmatpush1.bf16.xpose.msra.mxu0 %v4548
      %4552 = vmatprep.subr.bf16.mxu0 0
      %4553 = vmatpush1.bf16.xpose.msra.mxu0 0
      %4554 = vmatprep.subr.bf16.mxu0 0
      %4555 = vmatpush1.bf16.xpose.msra.mxu0 0
      %4556 = vmatprep.subr.bf16.mxu0 0
      %4557 = vmatpush1.bf16.xpose.msra.mxu0 0
      %4558 = vmatprep.subr.bf16.mxu0 0
      %4559 = vmatpush1.bf16.xpose.msra.mxu0 0
      %4560 = vmatprep.subr.bf16.mxu0 0
      %4561 = vmatpush1.bf16.xpose.msra.mxu0 0
      %4562 = vmatprep.subr.bf16.mxu0 0
      %4563 = vmatpush1.bf16.xpose.msra.mxu0 0
      %4564 = vmatprep.subr.bf16.mxu0 0
      %4565 = vmatpush1.bf16.xpose.msra.mxu0 0
      %4566 = vmatprep.subr.bf16.mxu0 0
      %4567 = vmatpush1.bf16.xpose.msra.mxu0 0
      %4568 = vmatprep.subr.bf16.mxu0 0
      %4569 = vmatpush1.bf16.xpose.msra.mxu0 0
      %4570 = vmatprep.subr.bf16.mxu0 0
      %4571 = vmatpush1.bf16.xpose.msra.mxu0 0
      %4572 = vmatprep.subr.bf16.mxu0 0
      %4573 = vmatpush1.bf16.xpose.msra.mxu0 0
      %4574 = vmatprep.subr.bf16.mxu0 0
      %4575 = vmatpush1.bf16.xpose.msra.mxu0 0
      %4576 = vmatprep.subr.bf16.mxu0 0
      %4577 = vmatpush1.bf16.xpose.msra.mxu0 0
      %4578 = vmatprep.subr.bf16.mxu0 0
      %4579 = vmatpush1.bf16.xpose.msra.mxu0 0
      %4580 = vmatprep.subr.bf16.mxu0 0
      %4581 = vmatpush1.bf16.xpose.msra.mxu0 0
      %4582 = vmatprep.mubr.bf16.mxu0 0
      %4583 = vmatmul.mubr.bf16.gmra.mrb[0].mxu0 %v4545
      %v4584 = vpop.f32.mrb[0].mxu0
      %v4585 = vadd.f32 0.0, %v4584
      %v4586 = vpop.f32.mrb[0].mxu0
      %v4587 = vpop.f32.mrb[0].mxu0
      %v4588 = vpop.f32.mrb[0].mxu0
      %4589 = vdwg.mxu0
      %4590 = vrot.lane.b32.xlu0 %v2740, 112
      %v4591 = vpop.permute.xlu0 %4590
      %4592 = vrot.lane.b32.xlu0 %v2744, 112
      %v4593 = vpop.permute.xlu0 %4592
      %v4595 = vsel %vm851, %v4591, 0
      %v4598 = vsel %vm851, %v4593, 0
      %4600 = vmatprep.subr.bf16.mxu0 0
      %4601 = vmatpush1.bf16.xpose.msra.mxu0 %v4598
      %4602 = vmatprep.subr.bf16.mxu0 0
      %4603 = vmatpush1.bf16.xpose.msra.mxu0 0
      %4604 = vmatprep.subr.bf16.mxu0 0
      %4605 = vmatpush1.bf16.xpose.msra.mxu0 0
      %4606 = vmatprep.subr.bf16.mxu0 0
      %4607 = vmatpush1.bf16.xpose.msra.mxu0 0
      %4608 = vmatprep.subr.bf16.mxu0 0
      %4609 = vmatpush1.bf16.xpose.msra.mxu0 0
      %4610 = vmatprep.subr.bf16.mxu0 0
      %4611 = vmatpush1.bf16.xpose.msra.mxu0 0
      %4612 = vmatprep.subr.bf16.mxu0 0
      %4613 = vmatpush1.bf16.xpose.msra.mxu0 0
      %4614 = vmatprep.subr.bf16.mxu0 0
      %4615 = vmatpush1.bf16.xpose.msra.mxu0 0
      %4616 = vmatprep.subr.bf16.mxu0 0
      %4617 = vmatpush1.bf16.xpose.msra.mxu0 0
      %4618 = vmatprep.subr.bf16.mxu0 0
      %4619 = vmatpush1.bf16.xpose.msra.mxu0 0
      %4620 = vmatprep.subr.bf16.mxu0 0
      %4621 = vmatpush1.bf16.xpose.msra.mxu0 0
      %4622 = vmatprep.subr.bf16.mxu0 0
      %4623 = vmatpush1.bf16.xpose.msra.mxu0 0
      %4624 = vmatprep.subr.bf16.mxu0 0
      %4625 = vmatpush1.bf16.xpose.msra.mxu0 0
      %4626 = vmatprep.subr.bf16.mxu0 0
      %4627 = vmatpush1.bf16.xpose.msra.mxu0 0
      %4628 = vmatprep.subr.bf16.mxu0 0
      %4629 = vmatpush1.bf16.xpose.msra.mxu0 0
      %4630 = vmatprep.subr.bf16.mxu0 0
      %4631 = vmatpush1.bf16.xpose.msra.mxu0 0
      %4632 = vmatprep.mubr.bf16.mxu0 0
      %4633 = vmatmul.mubr.bf16.gmra.mrb[0].mxu0 %v4595
      %v4634 = vpop.f32.mrb[0].mxu0
      %v4635 = vadd.f32 0.0, %v4634
      %v4636 = vpop.f32.mrb[0].mxu0
      %v4637 = vpop.f32.mrb[0].mxu0
      %v4638 = vpop.f32.mrb[0].mxu0
      %4639 = vdwg.mxu0
      %4640 = vrot.lane.b32.xlu0 %v2795, 112
      %v4641 = vpop.permute.xlu0 %4640
      %4642 = vrot.lane.b32.xlu0 %v2799, 112
      %v4643 = vpop.permute.xlu0 %4642
      %v4645 = vsel %vm851, %v4641, 0
      %v4648 = vsel %vm851, %v4643, 0
      %4650 = vmatprep.subr.bf16.mxu0 0
      %4651 = vmatpush1.bf16.xpose.msra.mxu0 %v4648
      %4652 = vmatprep.subr.bf16.mxu0 0
      %4653 = vmatpush1.bf16.xpose.msra.mxu0 0
      %4654 = vmatprep.subr.bf16.mxu0 0
      %4655 = vmatpush1.bf16.xpose.msra.mxu0 0
      %4656 = vmatprep.subr.bf16.mxu0 0
      %4657 = vmatpush1.bf16.xpose.msra.mxu0 0
      %4658 = vmatprep.subr.bf16.mxu0 0
      %4659 = vmatpush1.bf16.xpose.msra.mxu0 0
      %4660 = vmatprep.subr.bf16.mxu0 0
      %4661 = vmatpush1.bf16.xpose.msra.mxu0 0
      %4662 = vmatprep.subr.bf16.mxu0 0
      %4663 = vmatpush1.bf16.xpose.msra.mxu0 0
      %4664 = vmatprep.subr.bf16.mxu0 0
      %4665 = vmatpush1.bf16.xpose.msra.mxu0 0
      %4666 = vmatprep.subr.bf16.mxu0 0
      %4667 = vmatpush1.bf16.xpose.msra.mxu0 0
      %4668 = vmatprep.subr.bf16.mxu0 0
      %4669 = vmatpush1.bf16.xpose.msra.mxu0 0
      %4670 = vmatprep.subr.bf16.mxu0 0
      %4671 = vmatpush1.bf16.xpose.msra.mxu0 0
      %4672 = vmatprep.subr.bf16.mxu0 0
      %4673 = vmatpush1.bf16.xpose.msra.mxu0 0
      %4674 = vmatprep.subr.bf16.mxu0 0
      %4675 = vmatpush1.bf16.xpose.msra.mxu0 0
      %4676 = vmatprep.subr.bf16.mxu0 0
      %4677 = vmatpush1.bf16.xpose.msra.mxu0 0
      %4678 = vmatprep.subr.bf16.mxu0 0
      %4679 = vmatpush1.bf16.xpose.msra.mxu0 0
      %4680 = vmatprep.subr.bf16.mxu0 0
      %4681 = vmatpush1.bf16.xpose.msra.mxu0 0
      %4682 = vmatprep.mubr.bf16.mxu0 0
      %4683 = vmatmul.mubr.bf16.gmra.mrb[0].mxu0 %v4645
      %v4684 = vpop.f32.mrb[0].mxu0
      %v4685 = vadd.f32 0.0, %v4684
      %v4686 = vpop.f32.mrb[0].mxu0
      %v4687 = vpop.f32.mrb[0].mxu0
      %v4688 = vpop.f32.mrb[0].mxu0
      %4689 = vdwg.mxu0
      %4690 = vrot.lane.b32.xlu0 %v2850, 112
      %v4691 = vpop.permute.xlu0 %4690
      %4692 = vrot.lane.b32.xlu0 %v2854, 112
      %v4693 = vpop.permute.xlu0 %4692
      %v4695 = vsel %vm851, %v4691, 0
      %v4698 = vsel %vm851, %v4693, 0
      %4700 = vmatprep.subr.bf16.mxu0 0
      %4701 = vmatpush1.bf16.xpose.msra.mxu0 %v4698
      %4702 = vmatprep.subr.bf16.mxu0 0
      %4703 = vmatpush1.bf16.xpose.msra.mxu0 0
      %4704 = vmatprep.subr.bf16.mxu0 0
      %4705 = vmatpush1.bf16.xpose.msra.mxu0 0
      %4706 = vmatprep.subr.bf16.mxu0 0
      %4707 = vmatpush1.bf16.xpose.msra.mxu0 0
      %4708 = vmatprep.subr.bf16.mxu0 0
      %4709 = vmatpush1.bf16.xpose.msra.mxu0 0
      %4710 = vmatprep.subr.bf16.mxu0 0
      %4711 = vmatpush1.bf16.xpose.msra.mxu0 0
      %4712 = vmatprep.subr.bf16.mxu0 0
      %4713 = vmatpush1.bf16.xpose.msra.mxu0 0
      %4714 = vmatprep.subr.bf16.mxu0 0
      %4715 = vmatpush1.bf16.xpose.msra.mxu0 0
      %4716 = vmatprep.subr.bf16.mxu0 0
      %4717 = vmatpush1.bf16.xpose.msra.mxu0 0
      %4718 = vmatprep.subr.bf16.mxu0 0
      %4719 = vmatpush1.bf16.xpose.msra.mxu0 0
      %4720 = vmatprep.subr.bf16.mxu0 0
      %4721 = vmatpush1.bf16.xpose.msra.mxu0 0
      %4722 = vmatprep.subr.bf16.mxu0 0
      %4723 = vmatpush1.bf16.xpose.msra.mxu0 0
      %4724 = vmatprep.subr.bf16.mxu0 0
      %4725 = vmatpush1.bf16.xpose.msra.mxu0 0
      %4726 = vmatprep.subr.bf16.mxu0 0
      %4727 = vmatpush1.bf16.xpose.msra.mxu0 0
      %4728 = vmatprep.subr.bf16.mxu0 0
      %4729 = vmatpush1.bf16.xpose.msra.mxu0 0
      %4730 = vmatprep.subr.bf16.mxu0 0
      %4731 = vmatpush1.bf16.xpose.msra.mxu0 0
      %4732 = vmatprep.mubr.bf16.mxu0 0
      %4733 = vmatmul.mubr.bf16.gmra.mrb[0].mxu0 %v4695
      %v4734 = vpop.f32.mrb[0].mxu0
      %v4735 = vadd.f32 0.0, %v4734
      %v4736 = vpop.f32.mrb[0].mxu0
      %v4737 = vpop.f32.mrb[0].mxu0
      %v4738 = vpop.f32.mrb[0].mxu0
      %4739 = vdwg.mxu0
      %4740 = vrot.lane.b32.xlu0 %v2905, 112
      %v4741 = vpop.permute.xlu0 %4740
      %4742 = vrot.lane.b32.xlu0 %v2909, 112
      %v4743 = vpop.permute.xlu0 %4742
      %v4745 = vsel %vm851, %v4741, 0
      %v4748 = vsel %vm851, %v4743, 0
      %4750 = vmatprep.subr.bf16.mxu0 0
      %4751 = vmatpush1.bf16.xpose.msra.mxu0 %v4748
      %4752 = vmatprep.subr.bf16.mxu0 0
      %4753 = vmatpush1.bf16.xpose.msra.mxu0 0
      %4754 = vmatprep.subr.bf16.mxu0 0
      %4755 = vmatpush1.bf16.xpose.msra.mxu0 0
      %4756 = vmatprep.subr.bf16.mxu0 0
      %4757 = vmatpush1.bf16.xpose.msra.mxu0 0
      %4758 = vmatprep.subr.bf16.mxu0 0
      %4759 = vmatpush1.bf16.xpose.msra.mxu0 0
      %4760 = vmatprep.subr.bf16.mxu0 0
      %4761 = vmatpush1.bf16.xpose.msra.mxu0 0
      %4762 = vmatprep.subr.bf16.mxu0 0
      %4763 = vmatpush1.bf16.xpose.msra.mxu0 0
      %4764 = vmatprep.subr.bf16.mxu0 0
      %4765 = vmatpush1.bf16.xpose.msra.mxu0 0
      %4766 = vmatprep.subr.bf16.mxu0 0
      %4767 = vmatpush1.bf16.xpose.msra.mxu0 0
      %4768 = vmatprep.subr.bf16.mxu0 0
      %4769 = vmatpush1.bf16.xpose.msra.mxu0 0
      %4770 = vmatprep.subr.bf16.mxu0 0
      %4771 = vmatpush1.bf16.xpose.msra.mxu0 0
      %4772 = vmatprep.subr.bf16.mxu0 0
      %4773 = vmatpush1.bf16.xpose.msra.mxu0 0
      %4774 = vmatprep.subr.bf16.mxu0 0
      %4775 = vmatpush1.bf16.xpose.msra.mxu0 0
      %4776 = vmatprep.subr.bf16.mxu0 0
      %4777 = vmatpush1.bf16.xpose.msra.mxu0 0
      %4778 = vmatprep.subr.bf16.mxu0 0
      %4779 = vmatpush1.bf16.xpose.msra.mxu0 0
      %4780 = vmatprep.subr.bf16.mxu0 0
      %4781 = vmatpush1.bf16.xpose.msra.mxu0 0
      %4782 = vmatprep.mubr.bf16.mxu0 0
      %4783 = vmatmul.mubr.bf16.gmra.mrb[0].mxu0 %v4745
      %v4784 = vpop.f32.mrb[0].mxu0
      %v4785 = vadd.f32 0.0, %v4784
      %v4786 = vpop.f32.mrb[0].mxu0
      %v4787 = vpop.f32.mrb[0].mxu0
      %v4788 = vpop.f32.mrb[0].mxu0
      %4789 = vdwg.mxu0
      %4790 = vrot.lane.b32.xlu0 %v2960, 112
      %v4791 = vpop.permute.xlu0 %4790
      %4792 = vrot.lane.b32.xlu0 %v2964, 112
      %v4793 = vpop.permute.xlu0 %4792
      %v4795 = vsel %vm851, %v4791, 0
      %v4798 = vsel %vm851, %v4793, 0
      %4800 = vmatprep.subr.bf16.mxu0 0
      %4801 = vmatpush1.bf16.xpose.msra.mxu0 %v4798
      %4802 = vmatprep.subr.bf16.mxu0 0
      %4803 = vmatpush1.bf16.xpose.msra.mxu0 0
      %4804 = vmatprep.subr.bf16.mxu0 0
      %4805 = vmatpush1.bf16.xpose.msra.mxu0 0
      %4806 = vmatprep.subr.bf16.mxu0 0
      %4807 = vmatpush1.bf16.xpose.msra.mxu0 0
      %4808 = vmatprep.subr.bf16.mxu0 0
      %4809 = vmatpush1.bf16.xpose.msra.mxu0 0
      %4810 = vmatprep.subr.bf16.mxu0 0
      %4811 = vmatpush1.bf16.xpose.msra.mxu0 0
      %4812 = vmatprep.subr.bf16.mxu0 0
      %4813 = vmatpush1.bf16.xpose.msra.mxu0 0
      %4814 = vmatprep.subr.bf16.mxu0 0
      %4815 = vmatpush1.bf16.xpose.msra.mxu0 0
      %4816 = vmatprep.subr.bf16.mxu0 0
      %4817 = vmatpush1.bf16.xpose.msra.mxu0 0
      %4818 = vmatprep.subr.bf16.mxu0 0
      %4819 = vmatpush1.bf16.xpose.msra.mxu0 0
      %4820 = vmatprep.subr.bf16.mxu0 0
      %4821 = vmatpush1.bf16.xpose.msra.mxu0 0
      %4822 = vmatprep.subr.bf16.mxu0 0
      %4823 = vmatpush1.bf16.xpose.msra.mxu0 0
      %4824 = vmatprep.subr.bf16.mxu0 0
      %4825 = vmatpush1.bf16.xpose.msra.mxu0 0
      %4826 = vmatprep.subr.bf16.mxu0 0
      %4827 = vmatpush1.bf16.xpose.msra.mxu0 0
      %4828 = vmatprep.subr.bf16.mxu0 0
      %4829 = vmatpush1.bf16.xpose.msra.mxu0 0
      %4830 = vmatprep.subr.bf16.mxu0 0
      %4831 = vmatpush1.bf16.xpose.msra.mxu0 0
      %4832 = vmatprep.mubr.bf16.mxu0 0
      %4833 = vmatmul.mubr.bf16.gmra.mrb[0].mxu0 %v4795
      %v4834 = vpop.f32.mrb[0].mxu0
      %v4835 = vadd.f32 0.0, %v4834
      %v4836 = vpop.f32.mrb[0].mxu0
      %v4837 = vpop.f32.mrb[0].mxu0
      %v4838 = vpop.f32.mrb[0].mxu0
      %4839 = vdwg.mxu0
      %4840 = vrot.lane.b32.xlu0 %v3015, 112
      %v4841 = vpop.permute.xlu0 %4840
      %4842 = vrot.lane.b32.xlu0 %v3019, 112
      %v4843 = vpop.permute.xlu0 %4842
      %v4845 = vsel %vm851, %v4841, 0
      %v4848 = vsel %vm851, %v4843, 0
      %4850 = vmatprep.subr.bf16.mxu0 0
      %4851 = vmatpush1.bf16.xpose.msra.mxu0 %v4848
      %4852 = vmatprep.subr.bf16.mxu0 0
      %4853 = vmatpush1.bf16.xpose.msra.mxu0 0
      %4854 = vmatprep.subr.bf16.mxu0 0
      %4855 = vmatpush1.bf16.xpose.msra.mxu0 0
      %4856 = vmatprep.subr.bf16.mxu0 0
      %4857 = vmatpush1.bf16.xpose.msra.mxu0 0
      %4858 = vmatprep.subr.bf16.mxu0 0
      %4859 = vmatpush1.bf16.xpose.msra.mxu0 0
      %4860 = vmatprep.subr.bf16.mxu0 0
      %4861 = vmatpush1.bf16.xpose.msra.mxu0 0
      %4862 = vmatprep.subr.bf16.mxu0 0
      %4863 = vmatpush1.bf16.xpose.msra.mxu0 0
      %4864 = vmatprep.subr.bf16.mxu0 0
      %4865 = vmatpush1.bf16.xpose.msra.mxu0 0
      %4866 = vmatprep.subr.bf16.mxu0 0
      %4867 = vmatpush1.bf16.xpose.msra.mxu0 0
      %4868 = vmatprep.subr.bf16.mxu0 0
      %4869 = vmatpush1.bf16.xpose.msra.mxu0 0
      %4870 = vmatprep.subr.bf16.mxu0 0
      %4871 = vmatpush1.bf16.xpose.msra.mxu0 0
      %4872 = vmatprep.subr.bf16.mxu0 0
      %4873 = vmatpush1.bf16.xpose.msra.mxu0 0
      %4874 = vmatprep.subr.bf16.mxu0 0
      %4875 = vmatpush1.bf16.xpose.msra.mxu0 0
      %4876 = vmatprep.subr.bf16.mxu0 0
      %4877 = vmatpush1.bf16.xpose.msra.mxu0 0
      %4878 = vmatprep.subr.bf16.mxu0 0
      %4879 = vmatpush1.bf16.xpose.msra.mxu0 0
      %4880 = vmatprep.subr.bf16.mxu0 0
      %4881 = vmatpush1.bf16.xpose.msra.mxu0 0
      %4882 = vmatprep.mubr.bf16.mxu0 0
      %4883 = vmatmul.mubr.bf16.gmra.mrb[0].mxu0 %v4845
      %v4884 = vpop.f32.mrb[0].mxu0
      %v4885 = vadd.f32 0.0, %v4884
      %v4886 = vpop.f32.mrb[0].mxu0
      %v4887 = vpop.f32.mrb[0].mxu0
      %v4888 = vpop.f32.mrb[0].mxu0
      %4889 = vdwg.mxu0
      %4890 = vrot.lane.b32.xlu0 %v3070, 112
      %v4891 = vpop.permute.xlu0 %4890
      %4892 = vrot.lane.b32.xlu0 %v3074, 112
      %v4893 = vpop.permute.xlu0 %4892
      %v4895 = vsel %vm851, %v4891, 0
      %v4898 = vsel %vm851, %v4893, 0
      %4900 = vmatprep.subr.bf16.mxu0 0
      %4901 = vmatpush1.bf16.xpose.msra.mxu0 %v4898
      %4902 = vmatprep.subr.bf16.mxu0 0
      %4903 = vmatpush1.bf16.xpose.msra.mxu0 0
      %4904 = vmatprep.subr.bf16.mxu0 0
      %4905 = vmatpush1.bf16.xpose.msra.mxu0 0
      %4906 = vmatprep.subr.bf16.mxu0 0
      %4907 = vmatpush1.bf16.xpose.msra.mxu0 0
      %4908 = vmatprep.subr.bf16.mxu0 0
      %4909 = vmatpush1.bf16.xpose.msra.mxu0 0
      %4910 = vmatprep.subr.bf16.mxu0 0
      %4911 = vmatpush1.bf16.xpose.msra.mxu0 0
      %4912 = vmatprep.subr.bf16.mxu0 0
      %4913 = vmatpush1.bf16.xpose.msra.mxu0 0
      %4914 = vmatprep.subr.bf16.mxu0 0
      %4915 = vmatpush1.bf16.xpose.msra.mxu0 0
      %4916 = vmatprep.subr.bf16.mxu0 0
      %4917 = vmatpush1.bf16.xpose.msra.mxu0 0
      %4918 = vmatprep.subr.bf16.mxu0 0
      %4919 = vmatpush1.bf16.xpose.msra.mxu0 0
      %4920 = vmatprep.subr.bf16.mxu0 0
      %4921 = vmatpush1.bf16.xpose.msra.mxu0 0
      %4922 = vmatprep.subr.bf16.mxu0 0
      %4923 = vmatpush1.bf16.xpose.msra.mxu0 0
      %4924 = vmatprep.subr.bf16.mxu0 0
      %4925 = vmatpush1.bf16.xpose.msra.mxu0 0
      %4926 = vmatprep.subr.bf16.mxu0 0
      %4927 = vmatpush1.bf16.xpose.msra.mxu0 0
      %4928 = vmatprep.subr.bf16.mxu0 0
      %4929 = vmatpush1.bf16.xpose.msra.mxu0 0
      %4930 = vmatprep.subr.bf16.mxu0 0
      %4931 = vmatpush1.bf16.xpose.msra.mxu0 0
      %4932 = vmatprep.mubr.bf16.mxu0 0
      %4933 = vmatmul.mubr.bf16.gmra.mrb[0].mxu0 %v4895
      %v4934 = vpop.f32.mrb[0].mxu0
      %v4935 = vadd.f32 0.0, %v4934
      %v4936 = vpop.f32.mrb[0].mxu0
      %v4937 = vpop.f32.mrb[0].mxu0
      %v4938 = vpop.f32.mrb[0].mxu0
      %4939 = vdwg.mxu0
      %4940 = vrot.lane.b32.xlu0 %v3125, 112
      %v4941 = vpop.permute.xlu0 %4940
      %4942 = vrot.lane.b32.xlu0 %v3129, 112
      %v4943 = vpop.permute.xlu0 %4942
      %v4945 = vsel %vm851, %v4941, 0
      %v4948 = vsel %vm851, %v4943, 0
      %4950 = vmatprep.subr.bf16.mxu0 0
      %4951 = vmatpush1.bf16.xpose.msra.mxu0 %v4948
      %4952 = vmatprep.subr.bf16.mxu0 0
      %4953 = vmatpush1.bf16.xpose.msra.mxu0 0
      %4954 = vmatprep.subr.bf16.mxu0 0
      %4955 = vmatpush1.bf16.xpose.msra.mxu0 0
      %4956 = vmatprep.subr.bf16.mxu0 0
      %4957 = vmatpush1.bf16.xpose.msra.mxu0 0
      %4958 = vmatprep.subr.bf16.mxu0 0
      %4959 = vmatpush1.bf16.xpose.msra.mxu0 0
      %4960 = vmatprep.subr.bf16.mxu0 0
      %4961 = vmatpush1.bf16.xpose.msra.mxu0 0
      %4962 = vmatprep.subr.bf16.mxu0 0
      %4963 = vmatpush1.bf16.xpose.msra.mxu0 0
      %4964 = vmatprep.subr.bf16.mxu0 0
      %4965 = vmatpush1.bf16.xpose.msra.mxu0 0
      %4966 = vmatprep.subr.bf16.mxu0 0
      %4967 = vmatpush1.bf16.xpose.msra.mxu0 0
      %4968 = vmatprep.subr.bf16.mxu0 0
      %4969 = vmatpush1.bf16.xpose.msra.mxu0 0
      %4970 = vmatprep.subr.bf16.mxu0 0
      %4971 = vmatpush1.bf16.xpose.msra.mxu0 0
      %4972 = vmatprep.subr.bf16.mxu0 0
      %4973 = vmatpush1.bf16.xpose.msra.mxu0 0
      %4974 = vmatprep.subr.bf16.mxu0 0
      %4975 = vmatpush1.bf16.xpose.msra.mxu0 0
      %4976 = vmatprep.subr.bf16.mxu0 0
      %4977 = vmatpush1.bf16.xpose.msra.mxu0 0
      %4978 = vmatprep.subr.bf16.mxu0 0
      %4979 = vmatpush1.bf16.xpose.msra.mxu0 0
      %4980 = vmatprep.subr.bf16.mxu0 0
      %4981 = vmatpush1.bf16.xpose.msra.mxu0 0
      %4982 = vmatprep.mubr.bf16.mxu0 0
      %4983 = vmatmul.mubr.bf16.gmra.mrb[0].mxu0 %v4945
      %v4984 = vpop.f32.mrb[0].mxu0
      %v4985 = vadd.f32 0.0, %v4984
      %v4986 = vpop.f32.mrb[0].mxu0
      %v4987 = vpop.f32.mrb[0].mxu0
      %v4988 = vpop.f32.mrb[0].mxu0
      %4989 = vdwg.mxu0
      %4990 = vrot.lane.b32.xlu0 %v3180, 112
      %v4991 = vpop.permute.xlu0 %4990
      %4992 = vrot.lane.b32.xlu0 %v3184, 112
      %v4993 = vpop.permute.xlu0 %4992
      %v4995 = vsel %vm851, %v4991, 0
      %v4998 = vsel %vm851, %v4993, 0
      %5000 = vmatprep.subr.bf16.mxu0 0
      %5001 = vmatpush1.bf16.xpose.msra.mxu0 %v4998
      %5002 = vmatprep.subr.bf16.mxu0 0
      %5003 = vmatpush1.bf16.xpose.msra.mxu0 0
      %5004 = vmatprep.subr.bf16.mxu0 0
      %5005 = vmatpush1.bf16.xpose.msra.mxu0 0
      %5006 = vmatprep.subr.bf16.mxu0 0
      %5007 = vmatpush1.bf16.xpose.msra.mxu0 0
      %5008 = vmatprep.subr.bf16.mxu0 0
      %5009 = vmatpush1.bf16.xpose.msra.mxu0 0
      %5010 = vmatprep.subr.bf16.mxu0 0
      %5011 = vmatpush1.bf16.xpose.msra.mxu0 0
      %5012 = vmatprep.subr.bf16.mxu0 0
      %5013 = vmatpush1.bf16.xpose.msra.mxu0 0
      %5014 = vmatprep.subr.bf16.mxu0 0
      %5015 = vmatpush1.bf16.xpose.msra.mxu0 0
      %5016 = vmatprep.subr.bf16.mxu0 0
      %5017 = vmatpush1.bf16.xpose.msra.mxu0 0
      %5018 = vmatprep.subr.bf16.mxu0 0
      %5019 = vmatpush1.bf16.xpose.msra.mxu0 0
      %5020 = vmatprep.subr.bf16.mxu0 0
      %5021 = vmatpush1.bf16.xpose.msra.mxu0 0
      %5022 = vmatprep.subr.bf16.mxu0 0
      %5023 = vmatpush1.bf16.xpose.msra.mxu0 0
      %5024 = vmatprep.subr.bf16.mxu0 0
      %5025 = vmatpush1.bf16.xpose.msra.mxu0 0
      %5026 = vmatprep.subr.bf16.mxu0 0
      %5027 = vmatpush1.bf16.xpose.msra.mxu0 0
      %5028 = vmatprep.subr.bf16.mxu0 0
      %5029 = vmatpush1.bf16.xpose.msra.mxu0 0
      %5030 = vmatprep.subr.bf16.mxu0 0
      %5031 = vmatpush1.bf16.xpose.msra.mxu0 0
      %5032 = vmatprep.mubr.bf16.mxu0 0
      %5033 = vmatmul.mubr.bf16.gmra.mrb[0].mxu0 %v4995
      %v5034 = vpop.f32.mrb[0].mxu0
      %v5035 = vadd.f32 0.0, %v5034
      %v5036 = vpop.f32.mrb[0].mxu0
      %v5037 = vpop.f32.mrb[0].mxu0
      %v5038 = vpop.f32.mrb[0].mxu0
      %5039 = vdwg.mxu0
      %5040 = vrot.lane.b32.xlu0 %v3235, 112
      %v5041 = vpop.permute.xlu0 %5040
      %5042 = vrot.lane.b32.xlu0 %v3239, 112
      %v5043 = vpop.permute.xlu0 %5042
      %v5045 = vsel %vm851, %v5041, 0
      %v5048 = vsel %vm851, %v5043, 0
      %5050 = vmatprep.subr.bf16.mxu0 0
      %5051 = vmatpush1.bf16.xpose.msra.mxu0 %v5048
      %5052 = vmatprep.subr.bf16.mxu0 0
      %5053 = vmatpush1.bf16.xpose.msra.mxu0 0
      %5054 = vmatprep.subr.bf16.mxu0 0
      %5055 = vmatpush1.bf16.xpose.msra.mxu0 0
      %5056 = vmatprep.subr.bf16.mxu0 0
      %5057 = vmatpush1.bf16.xpose.msra.mxu0 0
      %5058 = vmatprep.subr.bf16.mxu0 0
      %5059 = vmatpush1.bf16.xpose.msra.mxu0 0
      %5060 = vmatprep.subr.bf16.mxu0 0
      %5061 = vmatpush1.bf16.xpose.msra.mxu0 0
      %5062 = vmatprep.subr.bf16.mxu0 0
      %5063 = vmatpush1.bf16.xpose.msra.mxu0 0
      %5064 = vmatprep.subr.bf16.mxu0 0
      %5065 = vmatpush1.bf16.xpose.msra.mxu0 0
      %5066 = vmatprep.subr.bf16.mxu0 0
      %5067 = vmatpush1.bf16.xpose.msra.mxu0 0
      %5068 = vmatprep.subr.bf16.mxu0 0
      %5069 = vmatpush1.bf16.xpose.msra.mxu0 0
      %5070 = vmatprep.subr.bf16.mxu0 0
      %5071 = vmatpush1.bf16.xpose.msra.mxu0 0
      %5072 = vmatprep.subr.bf16.mxu0 0
      %5073 = vmatpush1.bf16.xpose.msra.mxu0 0
      %5074 = vmatprep.subr.bf16.mxu0 0
      %5075 = vmatpush1.bf16.xpose.msra.mxu0 0
      %5076 = vmatprep.subr.bf16.mxu0 0
      %5077 = vmatpush1.bf16.xpose.msra.mxu0 0
      %5078 = vmatprep.subr.bf16.mxu0 0
      %5079 = vmatpush1.bf16.xpose.msra.mxu0 0
      %5080 = vmatprep.subr.bf16.mxu0 0
      %5081 = vmatpush1.bf16.xpose.msra.mxu0 0
      %5082 = vmatprep.mubr.bf16.mxu0 0
      %5083 = vmatmul.mubr.bf16.gmra.mrb[0].mxu0 %v5045
      %v5084 = vpop.f32.mrb[0].mxu0
      %v5085 = vadd.f32 0.0, %v5084
      %v5086 = vpop.f32.mrb[0].mxu0
      %v5087 = vpop.f32.mrb[0].mxu0
      %v5088 = vpop.f32.mrb[0].mxu0
      %5089 = vdwg.mxu0
      %5090 = vrot.lane.b32.xlu0 %v3290, 112
      %v5091 = vpop.permute.xlu0 %5090
      %5092 = vrot.lane.b32.xlu0 %v3294, 112
      %v5093 = vpop.permute.xlu0 %5092
      %v5095 = vsel %vm851, %v5091, 0
      %v5098 = vsel %vm851, %v5093, 0
      %5100 = vmatprep.subr.bf16.mxu0 0
      %5101 = vmatpush1.bf16.xpose.msra.mxu0 %v5098
      %5102 = vmatprep.subr.bf16.mxu0 0
      %5103 = vmatpush1.bf16.xpose.msra.mxu0 0
      %5104 = vmatprep.subr.bf16.mxu0 0
      %5105 = vmatpush1.bf16.xpose.msra.mxu0 0
      %5106 = vmatprep.subr.bf16.mxu0 0
      %5107 = vmatpush1.bf16.xpose.msra.mxu0 0
      %5108 = vmatprep.subr.bf16.mxu0 0
      %5109 = vmatpush1.bf16.xpose.msra.mxu0 0
      %5110 = vmatprep.subr.bf16.mxu0 0
      %5111 = vmatpush1.bf16.xpose.msra.mxu0 0
      %5112 = vmatprep.subr.bf16.mxu0 0
      %5113 = vmatpush1.bf16.xpose.msra.mxu0 0
      %5114 = vmatprep.subr.bf16.mxu0 0
      %5115 = vmatpush1.bf16.xpose.msra.mxu0 0
      %5116 = vmatprep.subr.bf16.mxu0 0
      %5117 = vmatpush1.bf16.xpose.msra.mxu0 0
      %5118 = vmatprep.subr.bf16.mxu0 0
      %5119 = vmatpush1.bf16.xpose.msra.mxu0 0
      %5120 = vmatprep.subr.bf16.mxu0 0
      %5121 = vmatpush1.bf16.xpose.msra.mxu0 0
      %5122 = vmatprep.subr.bf16.mxu0 0
      %5123 = vmatpush1.bf16.xpose.msra.mxu0 0
      %5124 = vmatprep.subr.bf16.mxu0 0
      %5125 = vmatpush1.bf16.xpose.msra.mxu0 0
      %5126 = vmatprep.subr.bf16.mxu0 0
      %5127 = vmatpush1.bf16.xpose.msra.mxu0 0
      %5128 = vmatprep.subr.bf16.mxu0 0
      %5129 = vmatpush1.bf16.xpose.msra.mxu0 0
      %5130 = vmatprep.subr.bf16.mxu0 0
      %5131 = vmatpush1.bf16.xpose.msra.mxu0 0
      %5132 = vmatprep.mubr.bf16.mxu0 0
      %5133 = vmatmul.mubr.bf16.gmra.mrb[0].mxu0 %v5095
      %v5134 = vpop.f32.mrb[0].mxu0
      %v5135 = vadd.f32 0.0, %v5134
      %v5136 = vpop.f32.mrb[0].mxu0
      %v5137 = vpop.f32.mrb[0].mxu0
      %v5138 = vpop.f32.mrb[0].mxu0
      %5139 = vdwg.mxu0
      %5140 = vrot.lane.b32.xlu0 %v3345, 112
      %v5141 = vpop.permute.xlu0 %5140
      %5142 = vrot.lane.b32.xlu0 %v3349, 112
      %v5143 = vpop.permute.xlu0 %5142
      %v5145 = vsel %vm851, %v5141, 0
      %v5148 = vsel %vm851, %v5143, 0
      %5150 = vmatprep.subr.bf16.mxu0 0
      %5151 = vmatpush1.bf16.xpose.msra.mxu0 %v5148
      %5152 = vmatprep.subr.bf16.mxu0 0
      %5153 = vmatpush1.bf16.xpose.msra.mxu0 0
      %5154 = vmatprep.subr.bf16.mxu0 0
      %5155 = vmatpush1.bf16.xpose.msra.mxu0 0
      %5156 = vmatprep.subr.bf16.mxu0 0
      %5157 = vmatpush1.bf16.xpose.msra.mxu0 0
      %5158 = vmatprep.subr.bf16.mxu0 0
      %5159 = vmatpush1.bf16.xpose.msra.mxu0 0
      %5160 = vmatprep.subr.bf16.mxu0 0
      %5161 = vmatpush1.bf16.xpose.msra.mxu0 0
      %5162 = vmatprep.subr.bf16.mxu0 0
      %5163 = vmatpush1.bf16.xpose.msra.mxu0 0
      %5164 = vmatprep.subr.bf16.mxu0 0
      %5165 = vmatpush1.bf16.xpose.msra.mxu0 0
      %5166 = vmatprep.subr.bf16.mxu0 0
      %5167 = vmatpush1.bf16.xpose.msra.mxu0 0
      %5168 = vmatprep.subr.bf16.mxu0 0
      %5169 = vmatpush1.bf16.xpose.msra.mxu0 0
      %5170 = vmatprep.subr.bf16.mxu0 0
      %5171 = vmatpush1.bf16.xpose.msra.mxu0 0
      %5172 = vmatprep.subr.bf16.mxu0 0
      %5173 = vmatpush1.bf16.xpose.msra.mxu0 0
      %5174 = vmatprep.subr.bf16.mxu0 0
      %5175 = vmatpush1.bf16.xpose.msra.mxu0 0
      %5176 = vmatprep.subr.bf16.mxu0 0
      %5177 = vmatpush1.bf16.xpose.msra.mxu0 0
      %5178 = vmatprep.subr.bf16.mxu0 0
      %5179 = vmatpush1.bf16.xpose.msra.mxu0 0
      %5180 = vmatprep.subr.bf16.mxu0 0
      %5181 = vmatpush1.bf16.xpose.msra.mxu0 0
      %5182 = vmatprep.mubr.bf16.mxu0 0
      %5183 = vmatmul.mubr.bf16.gmra.mrb[0].mxu0 %v5145
      %v5184 = vpop.f32.mrb[0].mxu0
      %v5185 = vadd.f32 0.0, %v5184
      %v5186 = vpop.f32.mrb[0].mxu0
      %v5187 = vpop.f32.mrb[0].mxu0
      %v5188 = vpop.f32.mrb[0].mxu0
      %5189 = vdwg.mxu0
      %v5190 = vsel %vm1588, %v4435, -inf
      %5191 = vmax.xlane.f32.xlu0 %v5190
      %v5192 = vpop.xlane.xlu0 %5191
      %v5193 = vsel %vm1588, %v4485, -inf
      %5194 = vmax.xlane.f32.xlu0 %v5193
      %v5195 = vpop.xlane.xlu0 %5194
      %v5196 = vsel %vm1588, %v4535, -inf
      %5197 = vmax.xlane.f32.xlu0 %v5196
      %v5198 = vpop.xlane.xlu0 %5197
      %v5199 = vsel %vm1588, %v4585, -inf
      %5200 = vmax.xlane.f32.xlu0 %v5199
      %v5201 = vpop.xlane.xlu0 %5200
      %v5202 = vsel %vm1588, %v4635, -inf
      %5203 = vmax.xlane.f32.xlu0 %v5202
      %v5204 = vpop.xlane.xlu0 %5203
      %v5205 = vsel %vm1588, %v4685, -inf
      %5206 = vmax.xlane.f32.xlu0 %v5205
      %v5207 = vpop.xlane.xlu0 %5206
      %v5208 = vsel %vm1588, %v4735, -inf
      %5209 = vmax.xlane.f32.xlu0 %v5208
      %v5210 = vpop.xlane.xlu0 %5209
      %v5211 = vsel %vm1588, %v4785, -inf
      %5212 = vmax.xlane.f32.xlu0 %v5211
      %v5213 = vpop.xlane.xlu0 %5212
      %v5214 = vsel %vm1588, %v4835, -inf
      %5215 = vmax.xlane.f32.xlu0 %v5214
      %v5216 = vpop.xlane.xlu0 %5215
      %v5217 = vsel %vm1588, %v4885, -inf
      %5218 = vmax.xlane.f32.xlu0 %v5217
      %v5219 = vpop.xlane.xlu0 %5218
      %v5220 = vsel %vm1588, %v4935, -inf
      %5221 = vmax.xlane.f32.xlu0 %v5220
      %v5222 = vpop.xlane.xlu0 %5221
      %v5223 = vsel %vm1588, %v4985, -inf
      %5224 = vmax.xlane.f32.xlu0 %v5223
      %v5225 = vpop.xlane.xlu0 %5224
      %v5226 = vsel %vm1588, %v5035, -inf
      %5227 = vmax.xlane.f32.xlu0 %v5226
      %v5228 = vpop.xlane.xlu0 %5227
      %v5229 = vsel %vm1588, %v5085, -inf
      %5230 = vmax.xlane.f32.xlu0 %v5229
      %v5231 = vpop.xlane.xlu0 %5230
      %v5232 = vsel %vm1588, %v5135, -inf
      %5233 = vmax.xlane.f32.xlu0 %v5232
      %v5234 = vpop.xlane.xlu0 %5233
      %v5235 = vsel %vm1588, %v5185, -inf
      %5236 = vmax.xlane.f32.xlu0 %v5235
      %v5237 = vpop.xlane.xlu0 %5236
      %v5238 = vsub.f32 %v4435, %v5192
      %v5239 = vsub.f32 %v4485, %v5195
      %v5240 = vsub.f32 %v4535, %v5198
      %v5241 = vsub.f32 %v4585, %v5201
      %v5242 = vsub.f32 %v4635, %v5204
      %v5243 = vsub.f32 %v4685, %v5207
      %v5244 = vsub.f32 %v4735, %v5210
      %v5245 = vsub.f32 %v4785, %v5213
      %v5246 = vsub.f32 %v4835, %v5216
      %v5247 = vsub.f32 %v4885, %v5219
      %v5248 = vsub.f32 %v4935, %v5222
      %v5249 = vsub.f32 %v4985, %v5225
      %v5250 = vsub.f32 %v5035, %v5228
      %v5251 = vsub.f32 %v5085, %v5231
      %v5252 = vsub.f32 %v5135, %v5234
      %v5253 = vsub.f32 %v5185, %v5237
      %v5254 = vmul.f32 %v5238, 1.442695
      %v5255 = vpow.pop %v5254
      %v5256 = vmul.f32 %v5239, 1.442695
      %v5257 = vpow.pop %v5256
      %v5258 = vmul.f32 %v5240, 1.442695
      %v5259 = vpow.pop %v5258
      %v5260 = vmul.f32 %v5241, 1.442695
      %v5261 = vpow.pop %v5260
      %v5262 = vmul.f32 %v5242, 1.442695
      %v5263 = vpow.pop %v5262
      %v5264 = vmul.f32 %v5243, 1.442695
      %v5265 = vpow.pop %v5264
      %v5266 = vmul.f32 %v5244, 1.442695
      %v5267 = vpow.pop %v5266
      %v5268 = vmul.f32 %v5245, 1.442695
      %v5269 = vpow.pop %v5268
      %v5270 = vmul.f32 %v5246, 1.442695
      %v5271 = vpow.pop %v5270
      %v5272 = vmul.f32 %v5247, 1.442695
      %v5273 = vpow.pop %v5272
      %v5274 = vmul.f32 %v5248, 1.442695
      %v5275 = vpow.pop %v5274
      %v5276 = vmul.f32 %v5249, 1.442695
      %v5277 = vpow.pop %v5276
      %v5278 = vmul.f32 %v5250, 1.442695
      %v5279 = vpow.pop %v5278
      %v5280 = vmul.f32 %v5251, 1.442695
      %v5281 = vpow.pop %v5280
      %v5282 = vmul.f32 %v5252, 1.442695
      %v5283 = vpow.pop %v5282
      %v5284 = vmul.f32 %v5253, 1.442695
      %v5285 = vpow.pop %v5284
      %v5286 = vsel %vm1588, %v5255, 0.0
      %5287 = vadd.xlane.f32.xlu0 %v5286
      %v5288 = vpop.xlane.xlu0 %5287
      %v5289 = vsel %vm1588, %v5257, 0.0
      %5290 = vadd.xlane.f32.xlu0 %v5289
      %v5291 = vpop.xlane.xlu0 %5290
      %v5292 = vsel %vm1588, %v5259, 0.0
      %5293 = vadd.xlane.f32.xlu0 %v5292
      %v5294 = vpop.xlane.xlu0 %5293
      %v5295 = vsel %vm1588, %v5261, 0.0
      %5296 = vadd.xlane.f32.xlu0 %v5295
      %v5297 = vpop.xlane.xlu0 %5296
      %v5298 = vsel %vm1588, %v5263, 0.0
      %5299 = vadd.xlane.f32.xlu0 %v5298
      %v5300 = vpop.xlane.xlu0 %5299
      %v5301 = vsel %vm1588, %v5265, 0.0
      %5302 = vadd.xlane.f32.xlu0 %v5301
      %v5303 = vpop.xlane.xlu0 %5302
      %v5304 = vsel %vm1588, %v5267, 0.0
      %5305 = vadd.xlane.f32.xlu0 %v5304
      %v5306 = vpop.xlane.xlu0 %5305
      %v5307 = vsel %vm1588, %v5269, 0.0
      %5308 = vadd.xlane.f32.xlu0 %v5307
      %v5309 = vpop.xlane.xlu0 %5308
      %v5310 = vsel %vm1588, %v5271, 0.0
      %5311 = vadd.xlane.f32.xlu0 %v5310
      %v5312 = vpop.xlane.xlu0 %5311
      %v5313 = vsel %vm1588, %v5273, 0.0
      %5314 = vadd.xlane.f32.xlu0 %v5313
      %v5315 = vpop.xlane.xlu0 %5314
      %v5316 = vsel %vm1588, %v5275, 0.0
      %5317 = vadd.xlane.f32.xlu0 %v5316
      %v5318 = vpop.xlane.xlu0 %5317
      %v5319 = vsel %vm1588, %v5277, 0.0
      %5320 = vadd.xlane.f32.xlu0 %v5319
      %v5321 = vpop.xlane.xlu0 %5320
      %v5322 = vsel %vm1588, %v5279, 0.0
      %5323 = vadd.xlane.f32.xlu0 %v5322
      %v5324 = vpop.xlane.xlu0 %5323
      %v5325 = vsel %vm1588, %v5281, 0.0
      %5326 = vadd.xlane.f32.xlu0 %v5325
      %v5327 = vpop.xlane.xlu0 %5326
      %v5328 = vsel %vm1588, %v5283, 0.0
      %5329 = vadd.xlane.f32.xlu0 %v5328
      %v5330 = vpop.xlane.xlu0 %5329
      %v5331 = vsel %vm1588, %v5285, 0.0
      %5332 = vadd.xlane.f32.xlu0 %v5331
      %v5333 = vpop.xlane.xlu0 %5332
      %v5334 = vrcp.pop %v5288
      %v5335 = vrcp.pop %v5291
      %v5336 = vrcp.pop %v5294
      %v5337 = vrcp.pop %v5297
      %v5338 = vrcp.pop %v5300
      %v5339 = vrcp.pop %v5303
      %v5340 = vrcp.pop %v5306
      %v5341 = vrcp.pop %v5309
      %v5342 = vrcp.pop %v5312
      %v5343 = vrcp.pop %v5315
      %v5344 = vrcp.pop %v5318
      %v5345 = vrcp.pop %v5321
      %v5346 = vrcp.pop %v5324
      %v5347 = vrcp.pop %v5327
      %v5348 = vrcp.pop %v5330
      %v5349 = vrcp.pop %v5333
      %v5350 = vmul.f32 %v5255, %v5334
      %v5351 = vmul.f32 %v5257, %v5335
      %v5352 = vmul.f32 %v5259, %v5336
      %v5353 = vmul.f32 %v5261, %v5337
      %v5354 = vmul.f32 %v5263, %v5338
      %v5355 = vmul.f32 %v5265, %v5339
      %v5356 = vmul.f32 %v5267, %v5340
      %v5357 = vmul.f32 %v5269, %v5341
      %v5358 = vmul.f32 %v5271, %v5342
      %v5359 = vmul.f32 %v5273, %v5343
      %v5360 = vmul.f32 %v5275, %v5344
      %v5361 = vmul.f32 %v5277, %v5345
      %v5362 = vmul.f32 %v5279, %v5346
      %v5363 = vmul.f32 %v5281, %v5347
      %v5364 = vmul.f32 %v5283, %v5348
      %v5365 = vmul.f32 %v5285, %v5349
      %v5366 = vpack.c.bf16 %v5350, %v5350
      %v5367 = vpack.c.bf16 %v5351, %v5351
      %v5368 = vpack.c.bf16 %v5352, %v5352
      %v5369 = vpack.c.bf16 %v5353, %v5353
      %v5370 = vpack.c.bf16 %v5354, %v5354
      %v5371 = vpack.c.bf16 %v5355, %v5355
      %v5372 = vpack.c.bf16 %v5356, %v5356
      %v5373 = vpack.c.bf16 %v5357, %v5357
      %v5374 = vpack.c.bf16 %v5358, %v5358
      %v5375 = vpack.c.bf16 %v5359, %v5359
      %v5376 = vpack.c.bf16 %v5360, %v5360
      %v5377 = vpack.c.bf16 %v5361, %v5361
      %v5378 = vpack.c.bf16 %v5362, %v5362
      %v5379 = vpack.c.bf16 %v5363, %v5363
      %v5380 = vpack.c.bf16 %v5364, %v5364
      %v5381 = vpack.c.bf16 %v5365, %v5365
      %5382 = vrot.lane.b32.xlu0 %v3591, 112
      %v5383 = vpop.permute.xlu0 %5382
      %v5385 = vsel %vm851, %v5366, 0
      %v5388 = vsel %vm1784, %v5383, 0
      %5390 = vmatprep.subr.bf16.mxu0 0
      %5391 = vmatpush1.bf16.msra.mxu0 %v5388
      %5392 = vmatprep.subr.bf16.mxu0 0
      %5393 = vmatpush1.bf16.msra.mxu0 0
      %5394 = vmatprep.subr.bf16.mxu0 0
      %5395 = vmatpush1.bf16.msra.mxu0 0
      %5396 = vmatprep.subr.bf16.mxu0 0
      %5397 = vmatpush1.bf16.msra.mxu0 0
      %5398 = vmatprep.subr.bf16.mxu0 0
      %5399 = vmatpush1.bf16.msra.mxu0 0
      %5400 = vmatprep.subr.bf16.mxu0 0
      %5401 = vmatpush1.bf16.msra.mxu0 0
      %5402 = vmatprep.subr.bf16.mxu0 0
      %5403 = vmatpush1.bf16.msra.mxu0 0
      %5404 = vmatprep.subr.bf16.mxu0 0
      %5405 = vmatpush1.bf16.msra.mxu0 0
      %5406 = vmatprep.subr.bf16.mxu0 0
      %5407 = vmatpush1.bf16.msra.mxu0 0
      %5408 = vmatprep.subr.bf16.mxu0 0
      %5409 = vmatpush1.bf16.msra.mxu0 0
      %5410 = vmatprep.subr.bf16.mxu0 0
      %5411 = vmatpush1.bf16.msra.mxu0 0
      %5412 = vmatprep.subr.bf16.mxu0 0
      %5413 = vmatpush1.bf16.msra.mxu0 0
      %5414 = vmatprep.subr.bf16.mxu0 0
      %5415 = vmatpush1.bf16.msra.mxu0 0
      %5416 = vmatprep.subr.bf16.mxu0 0
      %5417 = vmatpush1.bf16.msra.mxu0 0
      %5418 = vmatprep.subr.bf16.mxu0 0
      %5419 = vmatpush1.bf16.msra.mxu0 0
      %5420 = vmatprep.subr.bf16.mxu0 0
      %5421 = vmatpush1.bf16.msra.mxu0 0
      %5422 = vmatprep.mubr.bf16.mxu0 0
      %5423 = vmatmul.mubr.bf16.gmra.mrb[0].mxu0 %v5385
      %v5424 = vpop.f32.mrb[0].mxu0
      %v5425 = vadd.f32 0.0, %v5424
      %v5426 = vpop.f32.mrb[0].mxu0
      %v5427 = vpop.f32.mrb[0].mxu0
      %v5428 = vpop.f32.mrb[0].mxu0
      %5429 = vdwg.mxu0
      %5430 = vrot.lane.b32.xlu0 %v3641, 112
      %v5431 = vpop.permute.xlu0 %5430
      %v5433 = vsel %vm851, %v5367, 0
      %v5436 = vsel %vm1784, %v5431, 0
      %5438 = vmatprep.subr.bf16.mxu0 0
      %5439 = vmatpush1.bf16.msra.mxu0 %v5436
      %5440 = vmatprep.subr.bf16.mxu0 0
      %5441 = vmatpush1.bf16.msra.mxu0 0
      %5442 = vmatprep.subr.bf16.mxu0 0
      %5443 = vmatpush1.bf16.msra.mxu0 0
      %5444 = vmatprep.subr.bf16.mxu0 0
      %5445 = vmatpush1.bf16.msra.mxu0 0
      %5446 = vmatprep.subr.bf16.mxu0 0
      %5447 = vmatpush1.bf16.msra.mxu0 0
      %5448 = vmatprep.subr.bf16.mxu0 0
      %5449 = vmatpush1.bf16.msra.mxu0 0
      %5450 = vmatprep.subr.bf16.mxu0 0
      %5451 = vmatpush1.bf16.msra.mxu0 0
      %5452 = vmatprep.subr.bf16.mxu0 0
      %5453 = vmatpush1.bf16.msra.mxu0 0
      %5454 = vmatprep.subr.bf16.mxu0 0
      %5455 = vmatpush1.bf16.msra.mxu0 0
      %5456 = vmatprep.subr.bf16.mxu0 0
      %5457 = vmatpush1.bf16.msra.mxu0 0
      %5458 = vmatprep.subr.bf16.mxu0 0
      %5459 = vmatpush1.bf16.msra.mxu0 0
      %5460 = vmatprep.subr.bf16.mxu0 0
      %5461 = vmatpush1.bf16.msra.mxu0 0
      %5462 = vmatprep.subr.bf16.mxu0 0
      %5463 = vmatpush1.bf16.msra.mxu0 0
      %5464 = vmatprep.subr.bf16.mxu0 0
      %5465 = vmatpush1.bf16.msra.mxu0 0
      %5466 = vmatprep.subr.bf16.mxu0 0
      %5467 = vmatpush1.bf16.msra.mxu0 0
      %5468 = vmatprep.subr.bf16.mxu0 0
      %5469 = vmatpush1.bf16.msra.mxu0 0
      %5470 = vmatprep.mubr.bf16.mxu0 0
      %5471 = vmatmul.mubr.bf16.gmra.mrb[0].mxu0 %v5433
      %v5472 = vpop.f32.mrb[0].mxu0
      %v5473 = vadd.f32 0.0, %v5472
      %v5474 = vpop.f32.mrb[0].mxu0
      %v5475 = vpop.f32.mrb[0].mxu0
      %v5476 = vpop.f32.mrb[0].mxu0
      %5477 = vdwg.mxu0
      %5478 = vrot.lane.b32.xlu0 %v3691, 112
      %v5479 = vpop.permute.xlu0 %5478
      %v5481 = vsel %vm851, %v5368, 0
      %v5484 = vsel %vm1784, %v5479, 0
      %5486 = vmatprep.subr.bf16.mxu0 0
      %5487 = vmatpush1.bf16.msra.mxu0 %v5484
      %5488 = vmatprep.subr.bf16.mxu0 0
      %5489 = vmatpush1.bf16.msra.mxu0 0
      %5490 = vmatprep.subr.bf16.mxu0 0
      %5491 = vmatpush1.bf16.msra.mxu0 0
      %5492 = vmatprep.subr.bf16.mxu0 0
      %5493 = vmatpush1.bf16.msra.mxu0 0
      %5494 = vmatprep.subr.bf16.mxu0 0
      %5495 = vmatpush1.bf16.msra.mxu0 0
      %5496 = vmatprep.subr.bf16.mxu0 0
      %5497 = vmatpush1.bf16.msra.mxu0 0
      %5498 = vmatprep.subr.bf16.mxu0 0
      %5499 = vmatpush1.bf16.msra.mxu0 0
      %5500 = vmatprep.subr.bf16.mxu0 0
      %5501 = vmatpush1.bf16.msra.mxu0 0
      %5502 = vmatprep.subr.bf16.mxu0 0
      %5503 = vmatpush1.bf16.msra.mxu0 0
      %5504 = vmatprep.subr.bf16.mxu0 0
      %5505 = vmatpush1.bf16.msra.mxu0 0
      %5506 = vmatprep.subr.bf16.mxu0 0
      %5507 = vmatpush1.bf16.msra.mxu0 0
      %5508 = vmatprep.subr.bf16.mxu0 0
      %5509 = vmatpush1.bf16.msra.mxu0 0
      %5510 = vmatprep.subr.bf16.mxu0 0
      %5511 = vmatpush1.bf16.msra.mxu0 0
      %5512 = vmatprep.subr.bf16.mxu0 0
      %5513 = vmatpush1.bf16.msra.mxu0 0
      %5514 = vmatprep.subr.bf16.mxu0 0
      %5515 = vmatpush1.bf16.msra.mxu0 0
      %5516 = vmatprep.subr.bf16.mxu0 0
      %5517 = vmatpush1.bf16.msra.mxu0 0
      %5518 = vmatprep.mubr.bf16.mxu0 0
      %5519 = vmatmul.mubr.bf16.gmra.mrb[0].mxu0 %v5481
      %v5520 = vpop.f32.mrb[0].mxu0
      %v5521 = vadd.f32 0.0, %v5520
      %v5522 = vpop.f32.mrb[0].mxu0
      %v5523 = vpop.f32.mrb[0].mxu0
      %v5524 = vpop.f32.mrb[0].mxu0
      %5525 = vdwg.mxu0
      %5526 = vrot.lane.b32.xlu0 %v3741, 112
      %v5527 = vpop.permute.xlu0 %5526
      %v5529 = vsel %vm851, %v5369, 0
      %v5532 = vsel %vm1784, %v5527, 0
      %5534 = vmatprep.subr.bf16.mxu0 0
      %5535 = vmatpush1.bf16.msra.mxu0 %v5532
      %5536 = vmatprep.subr.bf16.mxu0 0
      %5537 = vmatpush1.bf16.msra.mxu0 0
      %5538 = vmatprep.subr.bf16.mxu0 0
      %5539 = vmatpush1.bf16.msra.mxu0 0
      %5540 = vmatprep.subr.bf16.mxu0 0
      %5541 = vmatpush1.bf16.msra.mxu0 0
      %5542 = vmatprep.subr.bf16.mxu0 0
      %5543 = vmatpush1.bf16.msra.mxu0 0
      %5544 = vmatprep.subr.bf16.mxu0 0
      %5545 = vmatpush1.bf16.msra.mxu0 0
      %5546 = vmatprep.subr.bf16.mxu0 0
      %5547 = vmatpush1.bf16.msra.mxu0 0
      %5548 = vmatprep.subr.bf16.mxu0 0
      %5549 = vmatpush1.bf16.msra.mxu0 0
      %5550 = vmatprep.subr.bf16.mxu0 0
      %5551 = vmatpush1.bf16.msra.mxu0 0
      %5552 = vmatprep.subr.bf16.mxu0 0
      %5553 = vmatpush1.bf16.msra.mxu0 0
      %5554 = vmatprep.subr.bf16.mxu0 0
      %5555 = vmatpush1.bf16.msra.mxu0 0
      %5556 = vmatprep.subr.bf16.mxu0 0
      %5557 = vmatpush1.bf16.msra.mxu0 0
      %5558 = vmatprep.subr.bf16.mxu0 0
      %5559 = vmatpush1.bf16.msra.mxu0 0
      %5560 = vmatprep.subr.bf16.mxu0 0
      %5561 = vmatpush1.bf16.msra.mxu0 0
      %5562 = vmatprep.subr.bf16.mxu0 0
      %5563 = vmatpush1.bf16.msra.mxu0 0
      %5564 = vmatprep.subr.bf16.mxu0 0
      %5565 = vmatpush1.bf16.msra.mxu0 0
      %5566 = vmatprep.mubr.bf16.mxu0 0
      %5567 = vmatmul.mubr.bf16.gmra.mrb[0].mxu0 %v5529
      %v5568 = vpop.f32.mrb[0].mxu0
      %v5569 = vadd.f32 0.0, %v5568
      %v5570 = vpop.f32.mrb[0].mxu0
      %v5571 = vpop.f32.mrb[0].mxu0
      %v5572 = vpop.f32.mrb[0].mxu0
      %5573 = vdwg.mxu0
      %5574 = vrot.lane.b32.xlu0 %v3791, 112
      %v5575 = vpop.permute.xlu0 %5574
      %v5577 = vsel %vm851, %v5370, 0
      %v5580 = vsel %vm1784, %v5575, 0
      %5582 = vmatprep.subr.bf16.mxu0 0
      %5583 = vmatpush1.bf16.msra.mxu0 %v5580
      %5584 = vmatprep.subr.bf16.mxu0 0
      %5585 = vmatpush1.bf16.msra.mxu0 0
      %5586 = vmatprep.subr.bf16.mxu0 0
      %5587 = vmatpush1.bf16.msra.mxu0 0
      %5588 = vmatprep.subr.bf16.mxu0 0
      %5589 = vmatpush1.bf16.msra.mxu0 0
      %5590 = vmatprep.subr.bf16.mxu0 0
      %5591 = vmatpush1.bf16.msra.mxu0 0
      %5592 = vmatprep.subr.bf16.mxu0 0
      %5593 = vmatpush1.bf16.msra.mxu0 0
      %5594 = vmatprep.subr.bf16.mxu0 0
      %5595 = vmatpush1.bf16.msra.mxu0 0
      %5596 = vmatprep.subr.bf16.mxu0 0
      %5597 = vmatpush1.bf16.msra.mxu0 0
      %5598 = vmatprep.subr.bf16.mxu0 0
      %5599 = vmatpush1.bf16.msra.mxu0 0
      %5600 = vmatprep.subr.bf16.mxu0 0
      %5601 = vmatpush1.bf16.msra.mxu0 0
      %5602 = vmatprep.subr.bf16.mxu0 0
      %5603 = vmatpush1.bf16.msra.mxu0 0
      %5604 = vmatprep.subr.bf16.mxu0 0
      %5605 = vmatpush1.bf16.msra.mxu0 0
      %5606 = vmatprep.subr.bf16.mxu0 0
      %5607 = vmatpush1.bf16.msra.mxu0 0
      %5608 = vmatprep.subr.bf16.mxu0 0
      %5609 = vmatpush1.bf16.msra.mxu0 0
      %5610 = vmatprep.subr.bf16.mxu0 0
      %5611 = vmatpush1.bf16.msra.mxu0 0
      %5612 = vmatprep.subr.bf16.mxu0 0
      %5613 = vmatpush1.bf16.msra.mxu0 0
      %5614 = vmatprep.mubr.bf16.mxu0 0
      %5615 = vmatmul.mubr.bf16.gmra.mrb[0].mxu0 %v5577
      %v5616 = vpop.f32.mrb[0].mxu0
      %v5617 = vadd.f32 0.0, %v5616
      %v5618 = vpop.f32.mrb[0].mxu0
      %v5619 = vpop.f32.mrb[0].mxu0
      %v5620 = vpop.f32.mrb[0].mxu0
      %5621 = vdwg.mxu0
      %5622 = vrot.lane.b32.xlu0 %v3841, 112
      %v5623 = vpop.permute.xlu0 %5622
      %v5625 = vsel %vm851, %v5371, 0
      %v5628 = vsel %vm1784, %v5623, 0
      %5630 = vmatprep.subr.bf16.mxu0 0
      %5631 = vmatpush1.bf16.msra.mxu0 %v5628
      %5632 = vmatprep.subr.bf16.mxu0 0
      %5633 = vmatpush1.bf16.msra.mxu0 0
      %5634 = vmatprep.subr.bf16.mxu0 0
      %5635 = vmatpush1.bf16.msra.mxu0 0
      %5636 = vmatprep.subr.bf16.mxu0 0
      %5637 = vmatpush1.bf16.msra.mxu0 0
      %5638 = vmatprep.subr.bf16.mxu0 0
      %5639 = vmatpush1.bf16.msra.mxu0 0
      %5640 = vmatprep.subr.bf16.mxu0 0
      %5641 = vmatpush1.bf16.msra.mxu0 0
      %5642 = vmatprep.subr.bf16.mxu0 0
      %5643 = vmatpush1.bf16.msra.mxu0 0
      %5644 = vmatprep.subr.bf16.mxu0 0
      %5645 = vmatpush1.bf16.msra.mxu0 0
      %5646 = vmatprep.subr.bf16.mxu0 0
      %5647 = vmatpush1.bf16.msra.mxu0 0
      %5648 = vmatprep.subr.bf16.mxu0 0
      %5649 = vmatpush1.bf16.msra.mxu0 0
      %5650 = vmatprep.subr.bf16.mxu0 0
      %5651 = vmatpush1.bf16.msra.mxu0 0
      %5652 = vmatprep.subr.bf16.mxu0 0
      %5653 = vmatpush1.bf16.msra.mxu0 0
      %5654 = vmatprep.subr.bf16.mxu0 0
      %5655 = vmatpush1.bf16.msra.mxu0 0
      %5656 = vmatprep.subr.bf16.mxu0 0
      %5657 = vmatpush1.bf16.msra.mxu0 0
      %5658 = vmatprep.subr.bf16.mxu0 0
      %5659 = vmatpush1.bf16.msra.mxu0 0
      %5660 = vmatprep.subr.bf16.mxu0 0
      %5661 = vmatpush1.bf16.msra.mxu0 0
      %5662 = vmatprep.mubr.bf16.mxu0 0
      %5663 = vmatmul.mubr.bf16.gmra.mrb[0].mxu0 %v5625
      %v5664 = vpop.f32.mrb[0].mxu0
      %v5665 = vadd.f32 0.0, %v5664
      %v5666 = vpop.f32.mrb[0].mxu0
      %v5667 = vpop.f32.mrb[0].mxu0
      %v5668 = vpop.f32.mrb[0].mxu0
      %5669 = vdwg.mxu0
      %5670 = vrot.lane.b32.xlu0 %v3891, 112
      %v5671 = vpop.permute.xlu0 %5670
      %v5673 = vsel %vm851, %v5372, 0
      %v5676 = vsel %vm1784, %v5671, 0
      %5678 = vmatprep.subr.bf16.mxu0 0
      %5679 = vmatpush1.bf16.msra.mxu0 %v5676
      %5680 = vmatprep.subr.bf16.mxu0 0
      %5681 = vmatpush1.bf16.msra.mxu0 0
      %5682 = vmatprep.subr.bf16.mxu0 0
      %5683 = vmatpush1.bf16.msra.mxu0 0
      %5684 = vmatprep.subr.bf16.mxu0 0
      %5685 = vmatpush1.bf16.msra.mxu0 0
      %5686 = vmatprep.subr.bf16.mxu0 0
      %5687 = vmatpush1.bf16.msra.mxu0 0
      %5688 = vmatprep.subr.bf16.mxu0 0
      %5689 = vmatpush1.bf16.msra.mxu0 0
      %5690 = vmatprep.subr.bf16.mxu0 0
      %5691 = vmatpush1.bf16.msra.mxu0 0
      %5692 = vmatprep.subr.bf16.mxu0 0
      %5693 = vmatpush1.bf16.msra.mxu0 0
      %5694 = vmatprep.subr.bf16.mxu0 0
      %5695 = vmatpush1.bf16.msra.mxu0 0
      %5696 = vmatprep.subr.bf16.mxu0 0
      %5697 = vmatpush1.bf16.msra.mxu0 0
      %5698 = vmatprep.subr.bf16.mxu0 0
      %5699 = vmatpush1.bf16.msra.mxu0 0
      %5700 = vmatprep.subr.bf16.mxu0 0
      %5701 = vmatpush1.bf16.msra.mxu0 0
      %5702 = vmatprep.subr.bf16.mxu0 0
      %5703 = vmatpush1.bf16.msra.mxu0 0
      %5704 = vmatprep.subr.bf16.mxu0 0
      %5705 = vmatpush1.bf16.msra.mxu0 0
      %5706 = vmatprep.subr.bf16.mxu0 0
      %5707 = vmatpush1.bf16.msra.mxu0 0
      %5708 = vmatprep.subr.bf16.mxu0 0
      %5709 = vmatpush1.bf16.msra.mxu0 0
      %5710 = vmatprep.mubr.bf16.mxu0 0
      %5711 = vmatmul.mubr.bf16.gmra.mrb[0].mxu0 %v5673
      %v5712 = vpop.f32.mrb[0].mxu0
      %v5713 = vadd.f32 0.0, %v5712
      %v5714 = vpop.f32.mrb[0].mxu0
      %v5715 = vpop.f32.mrb[0].mxu0
      %v5716 = vpop.f32.mrb[0].mxu0
      %5717 = vdwg.mxu0
      %5718 = vrot.lane.b32.xlu0 %v3941, 112
      %v5719 = vpop.permute.xlu0 %5718
      %v5721 = vsel %vm851, %v5373, 0
      %v5724 = vsel %vm1784, %v5719, 0
      %5726 = vmatprep.subr.bf16.mxu0 0
      %5727 = vmatpush1.bf16.msra.mxu0 %v5724
      %5728 = vmatprep.subr.bf16.mxu0 0
      %5729 = vmatpush1.bf16.msra.mxu0 0
      %5730 = vmatprep.subr.bf16.mxu0 0
      %5731 = vmatpush1.bf16.msra.mxu0 0
      %5732 = vmatprep.subr.bf16.mxu0 0
      %5733 = vmatpush1.bf16.msra.mxu0 0
      %5734 = vmatprep.subr.bf16.mxu0 0
      %5735 = vmatpush1.bf16.msra.mxu0 0
      %5736 = vmatprep.subr.bf16.mxu0 0
      %5737 = vmatpush1.bf16.msra.mxu0 0
      %5738 = vmatprep.subr.bf16.mxu0 0
      %5739 = vmatpush1.bf16.msra.mxu0 0
      %5740 = vmatprep.subr.bf16.mxu0 0
      %5741 = vmatpush1.bf16.msra.mxu0 0
      %5742 = vmatprep.subr.bf16.mxu0 0
      %5743 = vmatpush1.bf16.msra.mxu0 0
      %5744 = vmatprep.subr.bf16.mxu0 0
      %5745 = vmatpush1.bf16.msra.mxu0 0
      %5746 = vmatprep.subr.bf16.mxu0 0
      %5747 = vmatpush1.bf16.msra.mxu0 0
      %5748 = vmatprep.subr.bf16.mxu0 0
      %5749 = vmatpush1.bf16.msra.mxu0 0
      %5750 = vmatprep.subr.bf16.mxu0 0
      %5751 = vmatpush1.bf16.msra.mxu0 0
      %5752 = vmatprep.subr.bf16.mxu0 0
      %5753 = vmatpush1.bf16.msra.mxu0 0
      %5754 = vmatprep.subr.bf16.mxu0 0
      %5755 = vmatpush1.bf16.msra.mxu0 0
      %5756 = vmatprep.subr.bf16.mxu0 0
      %5757 = vmatpush1.bf16.msra.mxu0 0
      %5758 = vmatprep.mubr.bf16.mxu0 0
      %5759 = vmatmul.mubr.bf16.gmra.mrb[0].mxu0 %v5721
      %v5760 = vpop.f32.mrb[0].mxu0
      %v5761 = vadd.f32 0.0, %v5760
      %v5762 = vpop.f32.mrb[0].mxu0
      %v5763 = vpop.f32.mrb[0].mxu0
      %v5764 = vpop.f32.mrb[0].mxu0
      %5765 = vdwg.mxu0
      %5766 = vrot.lane.b32.xlu0 %v3991, 112
      %v5767 = vpop.permute.xlu0 %5766
      %v5769 = vsel %vm851, %v5374, 0
      %v5772 = vsel %vm1784, %v5767, 0
      %5774 = vmatprep.subr.bf16.mxu0 0
      %5775 = vmatpush1.bf16.msra.mxu0 %v5772
      %5776 = vmatprep.subr.bf16.mxu0 0
      %5777 = vmatpush1.bf16.msra.mxu0 0
      %5778 = vmatprep.subr.bf16.mxu0 0
      %5779 = vmatpush1.bf16.msra.mxu0 0
      %5780 = vmatprep.subr.bf16.mxu0 0
      %5781 = vmatpush1.bf16.msra.mxu0 0
      %5782 = vmatprep.subr.bf16.mxu0 0
      %5783 = vmatpush1.bf16.msra.mxu0 0
      %5784 = vmatprep.subr.bf16.mxu0 0
      %5785 = vmatpush1.bf16.msra.mxu0 0
      %5786 = vmatprep.subr.bf16.mxu0 0
      %5787 = vmatpush1.bf16.msra.mxu0 0
      %5788 = vmatprep.subr.bf16.mxu0 0
      %5789 = vmatpush1.bf16.msra.mxu0 0
      %5790 = vmatprep.subr.bf16.mxu0 0
      %5791 = vmatpush1.bf16.msra.mxu0 0
      %5792 = vmatprep.subr.bf16.mxu0 0
      %5793 = vmatpush1.bf16.msra.mxu0 0
      %5794 = vmatprep.subr.bf16.mxu0 0
      %5795 = vmatpush1.bf16.msra.mxu0 0
      %5796 = vmatprep.subr.bf16.mxu0 0
      %5797 = vmatpush1.bf16.msra.mxu0 0
      %5798 = vmatprep.subr.bf16.mxu0 0
      %5799 = vmatpush1.bf16.msra.mxu0 0
      %5800 = vmatprep.subr.bf16.mxu0 0
      %5801 = vmatpush1.bf16.msra.mxu0 0
      %5802 = vmatprep.subr.bf16.mxu0 0
      %5803 = vmatpush1.bf16.msra.mxu0 0
      %5804 = vmatprep.subr.bf16.mxu0 0
      %5805 = vmatpush1.bf16.msra.mxu0 0
      %5806 = vmatprep.mubr.bf16.mxu0 0
      %5807 = vmatmul.mubr.bf16.gmra.mrb[0].mxu0 %v5769
      %v5808 = vpop.f32.mrb[0].mxu0
      %v5809 = vadd.f32 0.0, %v5808
      %v5810 = vpop.f32.mrb[0].mxu0
      %v5811 = vpop.f32.mrb[0].mxu0
      %v5812 = vpop.f32.mrb[0].mxu0
      %5813 = vdwg.mxu0
      %5814 = vrot.lane.b32.xlu0 %v4041, 112
      %v5815 = vpop.permute.xlu0 %5814
      %v5817 = vsel %vm851, %v5375, 0
      %v5820 = vsel %vm1784, %v5815, 0
      %5822 = vmatprep.subr.bf16.mxu0 0
      %5823 = vmatpush1.bf16.msra.mxu0 %v5820
      %5824 = vmatprep.subr.bf16.mxu0 0
      %5825 = vmatpush1.bf16.msra.mxu0 0
      %5826 = vmatprep.subr.bf16.mxu0 0
      %5827 = vmatpush1.bf16.msra.mxu0 0
      %5828 = vmatprep.subr.bf16.mxu0 0
      %5829 = vmatpush1.bf16.msra.mxu0 0
      %5830 = vmatprep.subr.bf16.mxu0 0
      %5831 = vmatpush1.bf16.msra.mxu0 0
      %5832 = vmatprep.subr.bf16.mxu0 0
      %5833 = vmatpush1.bf16.msra.mxu0 0
      %5834 = vmatprep.subr.bf16.mxu0 0
      %5835 = vmatpush1.bf16.msra.mxu0 0
      %5836 = vmatprep.subr.bf16.mxu0 0
      %5837 = vmatpush1.bf16.msra.mxu0 0
      %5838 = vmatprep.subr.bf16.mxu0 0
      %5839 = vmatpush1.bf16.msra.mxu0 0
      %5840 = vmatprep.subr.bf16.mxu0 0
      %5841 = vmatpush1.bf16.msra.mxu0 0
      %5842 = vmatprep.subr.bf16.mxu0 0
      %5843 = vmatpush1.bf16.msra.mxu0 0
      %5844 = vmatprep.subr.bf16.mxu0 0
      %5845 = vmatpush1.bf16.msra.mxu0 0
      %5846 = vmatprep.subr.bf16.mxu0 0
      %5847 = vmatpush1.bf16.msra.mxu0 0
      %5848 = vmatprep.subr.bf16.mxu0 0
      %5849 = vmatpush1.bf16.msra.mxu0 0
      %5850 = vmatprep.subr.bf16.mxu0 0
      %5851 = vmatpush1.bf16.msra.mxu0 0
      %5852 = vmatprep.subr.bf16.mxu0 0
      %5853 = vmatpush1.bf16.msra.mxu0 0
      %5854 = vmatprep.mubr.bf16.mxu0 0
      %5855 = vmatmul.mubr.bf16.gmra.mrb[0].mxu0 %v5817
      %v5856 = vpop.f32.mrb[0].mxu0
      %v5857 = vadd.f32 0.0, %v5856
      %v5858 = vpop.f32.mrb[0].mxu0
      %v5859 = vpop.f32.mrb[0].mxu0
      %v5860 = vpop.f32.mrb[0].mxu0
      %5861 = vdwg.mxu0
      %5862 = vrot.lane.b32.xlu0 %v4091, 112
      %v5863 = vpop.permute.xlu0 %5862
      %v5865 = vsel %vm851, %v5376, 0
      %v5868 = vsel %vm1784, %v5863, 0
      %5870 = vmatprep.subr.bf16.mxu0 0
      %5871 = vmatpush1.bf16.msra.mxu0 %v5868
      %5872 = vmatprep.subr.bf16.mxu0 0
      %5873 = vmatpush1.bf16.msra.mxu0 0
      %5874 = vmatprep.subr.bf16.mxu0 0
      %5875 = vmatpush1.bf16.msra.mxu0 0
      %5876 = vmatprep.subr.bf16.mxu0 0
      %5877 = vmatpush1.bf16.msra.mxu0 0
      %5878 = vmatprep.subr.bf16.mxu0 0
      %5879 = vmatpush1.bf16.msra.mxu0 0
      %5880 = vmatprep.subr.bf16.mxu0 0
      %5881 = vmatpush1.bf16.msra.mxu0 0
      %5882 = vmatprep.subr.bf16.mxu0 0
      %5883 = vmatpush1.bf16.msra.mxu0 0
      %5884 = vmatprep.subr.bf16.mxu0 0
      %5885 = vmatpush1.bf16.msra.mxu0 0
      %5886 = vmatprep.subr.bf16.mxu0 0
      %5887 = vmatpush1.bf16.msra.mxu0 0
      %5888 = vmatprep.subr.bf16.mxu0 0
      %5889 = vmatpush1.bf16.msra.mxu0 0
      %5890 = vmatprep.subr.bf16.mxu0 0
      %5891 = vmatpush1.bf16.msra.mxu0 0
      %5892 = vmatprep.subr.bf16.mxu0 0
      %5893 = vmatpush1.bf16.msra.mxu0 0
      %5894 = vmatprep.subr.bf16.mxu0 0
      %5895 = vmatpush1.bf16.msra.mxu0 0
      %5896 = vmatprep.subr.bf16.mxu0 0
      %5897 = vmatpush1.bf16.msra.mxu0 0
      %5898 = vmatprep.subr.bf16.mxu0 0
      %5899 = vmatpush1.bf16.msra.mxu0 0
      %5900 = vmatprep.subr.bf16.mxu0 0
      %5901 = vmatpush1.bf16.msra.mxu0 0
      %5902 = vmatprep.mubr.bf16.mxu0 0
      %5903 = vmatmul.mubr.bf16.gmra.mrb[0].mxu0 %v5865
      %v5904 = vpop.f32.mrb[0].mxu0
      %v5905 = vadd.f32 0.0, %v5904
      %v5906 = vpop.f32.mrb[0].mxu0
      %v5907 = vpop.f32.mrb[0].mxu0
      %v5908 = vpop.f32.mrb[0].mxu0
      %5909 = vdwg.mxu0
      %5910 = vrot.lane.b32.xlu0 %v4141, 112
      %v5911 = vpop.permute.xlu0 %5910
      %v5913 = vsel %vm851, %v5377, 0
      %v5916 = vsel %vm1784, %v5911, 0
      %5918 = vmatprep.subr.bf16.mxu0 0
      %5919 = vmatpush1.bf16.msra.mxu0 %v5916
      %5920 = vmatprep.subr.bf16.mxu0 0
      %5921 = vmatpush1.bf16.msra.mxu0 0
      %5922 = vmatprep.subr.bf16.mxu0 0
      %5923 = vmatpush1.bf16.msra.mxu0 0
      %5924 = vmatprep.subr.bf16.mxu0 0
      %5925 = vmatpush1.bf16.msra.mxu0 0
      %5926 = vmatprep.subr.bf16.mxu0 0
      %5927 = vmatpush1.bf16.msra.mxu0 0
      %5928 = vmatprep.subr.bf16.mxu0 0
      %5929 = vmatpush1.bf16.msra.mxu0 0
      %5930 = vmatprep.subr.bf16.mxu0 0
      %5931 = vmatpush1.bf16.msra.mxu0 0
      %5932 = vmatprep.subr.bf16.mxu0 0
      %5933 = vmatpush1.bf16.msra.mxu0 0
      %5934 = vmatprep.subr.bf16.mxu0 0
      %5935 = vmatpush1.bf16.msra.mxu0 0
      %5936 = vmatprep.subr.bf16.mxu0 0
      %5937 = vmatpush1.bf16.msra.mxu0 0
      %5938 = vmatprep.subr.bf16.mxu0 0
      %5939 = vmatpush1.bf16.msra.mxu0 0
      %5940 = vmatprep.subr.bf16.mxu0 0
      %5941 = vmatpush1.bf16.msra.mxu0 0
      %5942 = vmatprep.subr.bf16.mxu0 0
      %5943 = vmatpush1.bf16.msra.mxu0 0
      %5944 = vmatprep.subr.bf16.mxu0 0
      %5945 = vmatpush1.bf16.msra.mxu0 0
      %5946 = vmatprep.subr.bf16.mxu0 0
      %5947 = vmatpush1.bf16.msra.mxu0 0
      %5948 = vmatprep.subr.bf16.mxu0 0
      %5949 = vmatpush1.bf16.msra.mxu0 0
      %5950 = vmatprep.mubr.bf16.mxu0 0
      %5951 = vmatmul.mubr.bf16.gmra.mrb[0].mxu0 %v5913
      %v5952 = vpop.f32.mrb[0].mxu0
      %v5953 = vadd.f32 0.0, %v5952
      %v5954 = vpop.f32.mrb[0].mxu0
      %v5955 = vpop.f32.mrb[0].mxu0
      %v5956 = vpop.f32.mrb[0].mxu0
      %5957 = vdwg.mxu0
      %5958 = vrot.lane.b32.xlu0 %v4191, 112
      %v5959 = vpop.permute.xlu0 %5958
      %v5961 = vsel %vm851, %v5378, 0
      %v5964 = vsel %vm1784, %v5959, 0
      %5966 = vmatprep.subr.bf16.mxu0 0
      %5967 = vmatpush1.bf16.msra.mxu0 %v5964
      %5968 = vmatprep.subr.bf16.mxu0 0
      %5969 = vmatpush1.bf16.msra.mxu0 0
      %5970 = vmatprep.subr.bf16.mxu0 0
      %5971 = vmatpush1.bf16.msra.mxu0 0
      %5972 = vmatprep.subr.bf16.mxu0 0
      %5973 = vmatpush1.bf16.msra.mxu0 0
      %5974 = vmatprep.subr.bf16.mxu0 0
      %5975 = vmatpush1.bf16.msra.mxu0 0
      %5976 = vmatprep.subr.bf16.mxu0 0
      %5977 = vmatpush1.bf16.msra.mxu0 0
      %5978 = vmatprep.subr.bf16.mxu0 0
      %5979 = vmatpush1.bf16.msra.mxu0 0
      %5980 = vmatprep.subr.bf16.mxu0 0
      %5981 = vmatpush1.bf16.msra.mxu0 0
      %5982 = vmatprep.subr.bf16.mxu0 0
      %5983 = vmatpush1.bf16.msra.mxu0 0
      %5984 = vmatprep.subr.bf16.mxu0 0
      %5985 = vmatpush1.bf16.msra.mxu0 0
      %5986 = vmatprep.subr.bf16.mxu0 0
      %5987 = vmatpush1.bf16.msra.mxu0 0
      %5988 = vmatprep.subr.bf16.mxu0 0
      %5989 = vmatpush1.bf16.msra.mxu0 0
      %5990 = vmatprep.subr.bf16.mxu0 0
      %5991 = vmatpush1.bf16.msra.mxu0 0
      %5992 = vmatprep.subr.bf16.mxu0 0
      %5993 = vmatpush1.bf16.msra.mxu0 0
      %5994 = vmatprep.subr.bf16.mxu0 0
      %5995 = vmatpush1.bf16.msra.mxu0 0
      %5996 = vmatprep.subr.bf16.mxu0 0
      %5997 = vmatpush1.bf16.msra.mxu0 0
      %5998 = vmatprep.mubr.bf16.mxu0 0
      %5999 = vmatmul.mubr.bf16.gmra.mrb[0].mxu0 %v5961
      %v6000 = vpop.f32.mrb[0].mxu0
      %v6001 = vadd.f32 0.0, %v6000
      %v6002 = vpop.f32.mrb[0].mxu0
      %v6003 = vpop.f32.mrb[0].mxu0
      %v6004 = vpop.f32.mrb[0].mxu0
      %6005 = vdwg.mxu0
      %6006 = vrot.lane.b32.xlu0 %v4241, 112
      %v6007 = vpop.permute.xlu0 %6006
      %v6009 = vsel %vm851, %v5379, 0
      %v6012 = vsel %vm1784, %v6007, 0
      %6014 = vmatprep.subr.bf16.mxu0 0
      %6015 = vmatpush1.bf16.msra.mxu0 %v6012
      %6016 = vmatprep.subr.bf16.mxu0 0
      %6017 = vmatpush1.bf16.msra.mxu0 0
      %6018 = vmatprep.subr.bf16.mxu0 0
      %6019 = vmatpush1.bf16.msra.mxu0 0
      %6020 = vmatprep.subr.bf16.mxu0 0
      %6021 = vmatpush1.bf16.msra.mxu0 0
      %6022 = vmatprep.subr.bf16.mxu0 0
      %6023 = vmatpush1.bf16.msra.mxu0 0
      %6024 = vmatprep.subr.bf16.mxu0 0
      %6025 = vmatpush1.bf16.msra.mxu0 0
      %6026 = vmatprep.subr.bf16.mxu0 0
      %6027 = vmatpush1.bf16.msra.mxu0 0
      %6028 = vmatprep.subr.bf16.mxu0 0
      %6029 = vmatpush1.bf16.msra.mxu0 0
      %6030 = vmatprep.subr.bf16.mxu0 0
      %6031 = vmatpush1.bf16.msra.mxu0 0
      %6032 = vmatprep.subr.bf16.mxu0 0
      %6033 = vmatpush1.bf16.msra.mxu0 0
      %6034 = vmatprep.subr.bf16.mxu0 0
      %6035 = vmatpush1.bf16.msra.mxu0 0
      %6036 = vmatprep.subr.bf16.mxu0 0
      %6037 = vmatpush1.bf16.msra.mxu0 0
      %6038 = vmatprep.subr.bf16.mxu0 0
      %6039 = vmatpush1.bf16.msra.mxu0 0
      %6040 = vmatprep.subr.bf16.mxu0 0
      %6041 = vmatpush1.bf16.msra.mxu0 0
      %6042 = vmatprep.subr.bf16.mxu0 0
      %6043 = vmatpush1.bf16.msra.mxu0 0
      %6044 = vmatprep.subr.bf16.mxu0 0
      %6045 = vmatpush1.bf16.msra.mxu0 0
      %6046 = vmatprep.mubr.bf16.mxu0 0
      %6047 = vmatmul.mubr.bf16.gmra.mrb[0].mxu0 %v6009
      %v6048 = vpop.f32.mrb[0].mxu0
      %v6049 = vadd.f32 0.0, %v6048
      %v6050 = vpop.f32.mrb[0].mxu0
      %v6051 = vpop.f32.mrb[0].mxu0
      %v6052 = vpop.f32.mrb[0].mxu0
      %6053 = vdwg.mxu0
      %6054 = vrot.lane.b32.xlu0 %v4291, 112
      %v6055 = vpop.permute.xlu0 %6054
      %v6057 = vsel %vm851, %v5380, 0
      %v6060 = vsel %vm1784, %v6055, 0
      %6062 = vmatprep.subr.bf16.mxu0 0
      %6063 = vmatpush1.bf16.msra.mxu0 %v6060
      %6064 = vmatprep.subr.bf16.mxu0 0
      %6065 = vmatpush1.bf16.msra.mxu0 0
      %6066 = vmatprep.subr.bf16.mxu0 0
      %6067 = vmatpush1.bf16.msra.mxu0 0
      %6068 = vmatprep.subr.bf16.mxu0 0
      %6069 = vmatpush1.bf16.msra.mxu0 0
      %6070 = vmatprep.subr.bf16.mxu0 0
      %6071 = vmatpush1.bf16.msra.mxu0 0
      %6072 = vmatprep.subr.bf16.mxu0 0
      %6073 = vmatpush1.bf16.msra.mxu0 0
      %6074 = vmatprep.subr.bf16.mxu0 0
      %6075 = vmatpush1.bf16.msra.mxu0 0
      %6076 = vmatprep.subr.bf16.mxu0 0
      %6077 = vmatpush1.bf16.msra.mxu0 0
      %6078 = vmatprep.subr.bf16.mxu0 0
      %6079 = vmatpush1.bf16.msra.mxu0 0
      %6080 = vmatprep.subr.bf16.mxu0 0
      %6081 = vmatpush1.bf16.msra.mxu0 0
      %6082 = vmatprep.subr.bf16.mxu0 0
      %6083 = vmatpush1.bf16.msra.mxu0 0
      %6084 = vmatprep.subr.bf16.mxu0 0
      %6085 = vmatpush1.bf16.msra.mxu0 0
      %6086 = vmatprep.subr.bf16.mxu0 0
      %6087 = vmatpush1.bf16.msra.mxu0 0
      %6088 = vmatprep.subr.bf16.mxu0 0
      %6089 = vmatpush1.bf16.msra.mxu0 0
      %6090 = vmatprep.subr.bf16.mxu0 0
      %6091 = vmatpush1.bf16.msra.mxu0 0
      %6092 = vmatprep.subr.bf16.mxu0 0
      %6093 = vmatpush1.bf16.msra.mxu0 0
      %6094 = vmatprep.mubr.bf16.mxu0 0
      %6095 = vmatmul.mubr.bf16.gmra.mrb[0].mxu0 %v6057
      %v6096 = vpop.f32.mrb[0].mxu0
      %v6097 = vadd.f32 0.0, %v6096
      %v6098 = vpop.f32.mrb[0].mxu0
      %v6099 = vpop.f32.mrb[0].mxu0
      %v6100 = vpop.f32.mrb[0].mxu0
      %6101 = vdwg.mxu0
      %6102 = vrot.lane.b32.xlu0 %v4341, 112
      %v6103 = vpop.permute.xlu0 %6102
      %v6105 = vsel %vm851, %v5381, 0
      %v6108 = vsel %vm1784, %v6103, 0
      %6110 = vmatprep.subr.bf16.mxu0 0
      %6111 = vmatpush1.bf16.msra.mxu0 %v6108
      %6112 = vmatprep.subr.bf16.mxu0 0
      %6113 = vmatpush1.bf16.msra.mxu0 0
      %6114 = vmatprep.subr.bf16.mxu0 0
      %6115 = vmatpush1.bf16.msra.mxu0 0
      %6116 = vmatprep.subr.bf16.mxu0 0
      %6117 = vmatpush1.bf16.msra.mxu0 0
      %6118 = vmatprep.subr.bf16.mxu0 0
      %6119 = vmatpush1.bf16.msra.mxu0 0
      %6120 = vmatprep.subr.bf16.mxu0 0
      %6121 = vmatpush1.bf16.msra.mxu0 0
      %6122 = vmatprep.subr.bf16.mxu0 0
      %6123 = vmatpush1.bf16.msra.mxu0 0
      %6124 = vmatprep.subr.bf16.mxu0 0
      %6125 = vmatpush1.bf16.msra.mxu0 0
      %6126 = vmatprep.subr.bf16.mxu0 0
      %6127 = vmatpush1.bf16.msra.mxu0 0
      %6128 = vmatprep.subr.bf16.mxu0 0
      %6129 = vmatpush1.bf16.msra.mxu0 0
      %6130 = vmatprep.subr.bf16.mxu0 0
      %6131 = vmatpush1.bf16.msra.mxu0 0
      %6132 = vmatprep.subr.bf16.mxu0 0
      %6133 = vmatpush1.bf16.msra.mxu0 0
      %6134 = vmatprep.subr.bf16.mxu0 0
      %6135 = vmatpush1.bf16.msra.mxu0 0
      %6136 = vmatprep.subr.bf16.mxu0 0
      %6137 = vmatpush1.bf16.msra.mxu0 0
      %6138 = vmatprep.subr.bf16.mxu0 0
      %6139 = vmatpush1.bf16.msra.mxu0 0
      %6140 = vmatprep.subr.bf16.mxu0 0
      %6141 = vmatpush1.bf16.msra.mxu0 0
      %6142 = vmatprep.mubr.bf16.mxu0 0
      %6143 = vmatmul.mubr.bf16.gmra.mrb[0].mxu0 %v6105
      %v6144 = vpop.f32.mrb[0].mxu0
      %v6145 = vadd.f32 0.0, %v6144
      %v6146 = vpop.f32.mrb[0].mxu0
      %v6147 = vpop.f32.mrb[0].mxu0
      %v6148 = vpop.f32.mrb[0].mxu0
      %6149 = vdwg.mxu0
      %6150 = vrot.lane.b32.xlu0 %v2520, 104
      %v6151 = vpop.permute.xlu0 %6150
      %6152 = vrot.lane.b32.xlu0 %v2524, 104
      %v6153 = vpop.permute.xlu0 %6152
      %v6155 = vsel %vm851, %v6151, 0
      %v6158 = vsel %vm851, %v6153, 0
      %6160 = vmatprep.subr.bf16.mxu0 0
      %6161 = vmatpush1.bf16.xpose.msra.mxu0 %v6158
      %6162 = vmatprep.subr.bf16.mxu0 0
      %6163 = vmatpush1.bf16.xpose.msra.mxu0 0
      %6164 = vmatprep.subr.bf16.mxu0 0
      %6165 = vmatpush1.bf16.xpose.msra.mxu0 0
      %6166 = vmatprep.subr.bf16.mxu0 0
      %6167 = vmatpush1.bf16.xpose.msra.mxu0 0
      %6168 = vmatprep.subr.bf16.mxu0 0
      %6169 = vmatpush1.bf16.xpose.msra.mxu0 0
      %6170 = vmatprep.subr.bf16.mxu0 0
      %6171 = vmatpush1.bf16.xpose.msra.mxu0 0
      %6172 = vmatprep.subr.bf16.mxu0 0
      %6173 = vmatpush1.bf16.xpose.msra.mxu0 0
      %6174 = vmatprep.subr.bf16.mxu0 0
      %6175 = vmatpush1.bf16.xpose.msra.mxu0 0
      %6176 = vmatprep.subr.bf16.mxu0 0
      %6177 = vmatpush1.bf16.xpose.msra.mxu0 0
      %6178 = vmatprep.subr.bf16.mxu0 0
      %6179 = vmatpush1.bf16.xpose.msra.mxu0 0
      %6180 = vmatprep.subr.bf16.mxu0 0
      %6181 = vmatpush1.bf16.xpose.msra.mxu0 0
      %6182 = vmatprep.subr.bf16.mxu0 0
      %6183 = vmatpush1.bf16.xpose.msra.mxu0 0
      %6184 = vmatprep.subr.bf16.mxu0 0
      %6185 = vmatpush1.bf16.xpose.msra.mxu0 0
      %6186 = vmatprep.subr.bf16.mxu0 0
      %6187 = vmatpush1.bf16.xpose.msra.mxu0 0
      %6188 = vmatprep.subr.bf16.mxu0 0
      %6189 = vmatpush1.bf16.xpose.msra.mxu0 0
      %6190 = vmatprep.subr.bf16.mxu0 0
      %6191 = vmatpush1.bf16.xpose.msra.mxu0 0
      %6192 = vmatprep.mubr.bf16.mxu0 0
      %6193 = vmatmul.mubr.bf16.gmra.mrb[0].mxu0 %v6155
      %v6194 = vpop.f32.mrb[0].mxu0
      %v6195 = vadd.f32 0.0, %v6194
      %v6196 = vpop.f32.mrb[0].mxu0
      %v6197 = vpop.f32.mrb[0].mxu0
      %v6198 = vpop.f32.mrb[0].mxu0
      %6199 = vdwg.mxu0
      %6200 = vrot.lane.b32.xlu0 %v2575, 104
      %v6201 = vpop.permute.xlu0 %6200
      %6202 = vrot.lane.b32.xlu0 %v2579, 104
      %v6203 = vpop.permute.xlu0 %6202
      %v6205 = vsel %vm851, %v6201, 0
      %v6208 = vsel %vm851, %v6203, 0
      %6210 = vmatprep.subr.bf16.mxu0 0
      %6211 = vmatpush1.bf16.xpose.msra.mxu0 %v6208
      %6212 = vmatprep.subr.bf16.mxu0 0
      %6213 = vmatpush1.bf16.xpose.msra.mxu0 0
      %6214 = vmatprep.subr.bf16.mxu0 0
      %6215 = vmatpush1.bf16.xpose.msra.mxu0 0
      %6216 = vmatprep.subr.bf16.mxu0 0
      %6217 = vmatpush1.bf16.xpose.msra.mxu0 0
      %6218 = vmatprep.subr.bf16.mxu0 0
      %6219 = vmatpush1.bf16.xpose.msra.mxu0 0
      %6220 = vmatprep.subr.bf16.mxu0 0
      %6221 = vmatpush1.bf16.xpose.msra.mxu0 0
      %6222 = vmatprep.subr.bf16.mxu0 0
      %6223 = vmatpush1.bf16.xpose.msra.mxu0 0
      %6224 = vmatprep.subr.bf16.mxu0 0
      %6225 = vmatpush1.bf16.xpose.msra.mxu0 0
      %6226 = vmatprep.subr.bf16.mxu0 0
      %6227 = vmatpush1.bf16.xpose.msra.mxu0 0
      %6228 = vmatprep.subr.bf16.mxu0 0
      %6229 = vmatpush1.bf16.xpose.msra.mxu0 0
      %6230 = vmatprep.subr.bf16.mxu0 0
      %6231 = vmatpush1.bf16.xpose.msra.mxu0 0
      %6232 = vmatprep.subr.bf16.mxu0 0
      %6233 = vmatpush1.bf16.xpose.msra.mxu0 0
      %6234 = vmatprep.subr.bf16.mxu0 0
      %6235 = vmatpush1.bf16.xpose.msra.mxu0 0
      %6236 = vmatprep.subr.bf16.mxu0 0
      %6237 = vmatpush1.bf16.xpose.msra.mxu0 0
      %6238 = vmatprep.subr.bf16.mxu0 0
      %6239 = vmatpush1.bf16.xpose.msra.mxu0 0
      %6240 = vmatprep.subr.bf16.mxu0 0
      %6241 = vmatpush1.bf16.xpose.msra.mxu0 0
      %6242 = vmatprep.mubr.bf16.mxu0 0
      %6243 = vmatmul.mubr.bf16.gmra.mrb[0].mxu0 %v6205
      %v6244 = vpop.f32.mrb[0].mxu0
      %v6245 = vadd.f32 0.0, %v6244
      %v6246 = vpop.f32.mrb[0].mxu0
      %v6247 = vpop.f32.mrb[0].mxu0
      %v6248 = vpop.f32.mrb[0].mxu0
      %6249 = vdwg.mxu0
      %6250 = vrot.lane.b32.xlu0 %v2630, 104
      %v6251 = vpop.permute.xlu0 %6250
      %6252 = vrot.lane.b32.xlu0 %v2634, 104
      %v6253 = vpop.permute.xlu0 %6252
      %v6255 = vsel %vm851, %v6251, 0
      %v6258 = vsel %vm851, %v6253, 0
      %6260 = vmatprep.subr.bf16.mxu0 0
      %6261 = vmatpush1.bf16.xpose.msra.mxu0 %v6258
      %6262 = vmatprep.subr.bf16.mxu0 0
      %6263 = vmatpush1.bf16.xpose.msra.mxu0 0
      %6264 = vmatprep.subr.bf16.mxu0 0
      %6265 = vmatpush1.bf16.xpose.msra.mxu0 0
      %6266 = vmatprep.subr.bf16.mxu0 0
      %6267 = vmatpush1.bf16.xpose.msra.mxu0 0
      %6268 = vmatprep.subr.bf16.mxu0 0
      %6269 = vmatpush1.bf16.xpose.msra.mxu0 0
      %6270 = vmatprep.subr.bf16.mxu0 0
      %6271 = vmatpush1.bf16.xpose.msra.mxu0 0
      %6272 = vmatprep.subr.bf16.mxu0 0
      %6273 = vmatpush1.bf16.xpose.msra.mxu0 0
      %6274 = vmatprep.subr.bf16.mxu0 0
      %6275 = vmatpush1.bf16.xpose.msra.mxu0 0
      %6276 = vmatprep.subr.bf16.mxu0 0
      %6277 = vmatpush1.bf16.xpose.msra.mxu0 0
      %6278 = vmatprep.subr.bf16.mxu0 0
      %6279 = vmatpush1.bf16.xpose.msra.mxu0 0
      %6280 = vmatprep.subr.bf16.mxu0 0
      %6281 = vmatpush1.bf16.xpose.msra.mxu0 0
      %6282 = vmatprep.subr.bf16.mxu0 0
      %6283 = vmatpush1.bf16.xpose.msra.mxu0 0
      %6284 = vmatprep.subr.bf16.mxu0 0
      %6285 = vmatpush1.bf16.xpose.msra.mxu0 0
      %6286 = vmatprep.subr.bf16.mxu0 0
      %6287 = vmatpush1.bf16.xpose.msra.mxu0 0
      %6288 = vmatprep.subr.bf16.mxu0 0
      %6289 = vmatpush1.bf16.xpose.msra.mxu0 0
      %6290 = vmatprep.subr.bf16.mxu0 0
      %6291 = vmatpush1.bf16.xpose.msra.mxu0 0
      %6292 = vmatprep.mubr.bf16.mxu0 0
      %6293 = vmatmul.mubr.bf16.gmra.mrb[0].mxu0 %v6255
      %v6294 = vpop.f32.mrb[0].mxu0
      %v6295 = vadd.f32 0.0, %v6294
      %v6296 = vpop.f32.mrb[0].mxu0
      %v6297 = vpop.f32.mrb[0].mxu0
      %v6298 = vpop.f32.mrb[0].mxu0
      %6299 = vdwg.mxu0
      %6300 = vrot.lane.b32.xlu0 %v2685, 104
      %v6301 = vpop.permute.xlu0 %6300
      %6302 = vrot.lane.b32.xlu0 %v2689, 104
      %v6303 = vpop.permute.xlu0 %6302
      %v6305 = vsel %vm851, %v6301, 0
      %v6308 = vsel %vm851, %v6303, 0
      %6310 = vmatprep.subr.bf16.mxu0 0
      %6311 = vmatpush1.bf16.xpose.msra.mxu0 %v6308
      %6312 = vmatprep.subr.bf16.mxu0 0
      %6313 = vmatpush1.bf16.xpose.msra.mxu0 0
      %6314 = vmatprep.subr.bf16.mxu0 0
      %6315 = vmatpush1.bf16.xpose.msra.mxu0 0
      %6316 = vmatprep.subr.bf16.mxu0 0
      %6317 = vmatpush1.bf16.xpose.msra.mxu0 0
      %6318 = vmatprep.subr.bf16.mxu0 0
      %6319 = vmatpush1.bf16.xpose.msra.mxu0 0
      %6320 = vmatprep.subr.bf16.mxu0 0
      %6321 = vmatpush1.bf16.xpose.msra.mxu0 0
      %6322 = vmatprep.subr.bf16.mxu0 0
      %6323 = vmatpush1.bf16.xpose.msra.mxu0 0
      %6324 = vmatprep.subr.bf16.mxu0 0
      %6325 = vmatpush1.bf16.xpose.msra.mxu0 0
      %6326 = vmatprep.subr.bf16.mxu0 0
      %6327 = vmatpush1.bf16.xpose.msra.mxu0 0
      %6328 = vmatprep.subr.bf16.mxu0 0
      %6329 = vmatpush1.bf16.xpose.msra.mxu0 0
      %6330 = vmatprep.subr.bf16.mxu0 0
      %6331 = vmatpush1.bf16.xpose.msra.mxu0 0
      %6332 = vmatprep.subr.bf16.mxu0 0
      %6333 = vmatpush1.bf16.xpose.msra.mxu0 0
      %6334 = vmatprep.subr.bf16.mxu0 0
      %6335 = vmatpush1.bf16.xpose.msra.mxu0 0
      %6336 = vmatprep.subr.bf16.mxu0 0
      %6337 = vmatpush1.bf16.xpose.msra.mxu0 0
      %6338 = vmatprep.subr.bf16.mxu0 0
      %6339 = vmatpush1.bf16.xpose.msra.mxu0 0
      %6340 = vmatprep.subr.bf16.mxu0 0
      %6341 = vmatpush1.bf16.xpose.msra.mxu0 0
      %6342 = vmatprep.mubr.bf16.mxu0 0
      %6343 = vmatmul.mubr.bf16.gmra.mrb[0].mxu0 %v6305
      %v6344 = vpop.f32.mrb[0].mxu0
      %v6345 = vadd.f32 0.0, %v6344
      %v6346 = vpop.f32.mrb[0].mxu0
      %v6347 = vpop.f32.mrb[0].mxu0
      %v6348 = vpop.f32.mrb[0].mxu0
      %6349 = vdwg.mxu0
      %6350 = vrot.lane.b32.xlu0 %v2740, 104
      %v6351 = vpop.permute.xlu0 %6350
      %6352 = vrot.lane.b32.xlu0 %v2744, 104
      %v6353 = vpop.permute.xlu0 %6352
      %v6355 = vsel %vm851, %v6351, 0
      %v6358 = vsel %vm851, %v6353, 0
      %6360 = vmatprep.subr.bf16.mxu0 0
      %6361 = vmatpush1.bf16.xpose.msra.mxu0 %v6358
      %6362 = vmatprep.subr.bf16.mxu0 0
      %6363 = vmatpush1.bf16.xpose.msra.mxu0 0
      %6364 = vmatprep.subr.bf16.mxu0 0
      %6365 = vmatpush1.bf16.xpose.msra.mxu0 0
      %6366 = vmatprep.subr.bf16.mxu0 0
      %6367 = vmatpush1.bf16.xpose.msra.mxu0 0
      %6368 = vmatprep.subr.bf16.mxu0 0
      %6369 = vmatpush1.bf16.xpose.msra.mxu0 0
      %6370 = vmatprep.subr.bf16.mxu0 0
      %6371 = vmatpush1.bf16.xpose.msra.mxu0 0
      %6372 = vmatprep.subr.bf16.mxu0 0
      %6373 = vmatpush1.bf16.xpose.msra.mxu0 0
      %6374 = vmatprep.subr.bf16.mxu0 0
      %6375 = vmatpush1.bf16.xpose.msra.mxu0 0
      %6376 = vmatprep.subr.bf16.mxu0 0
      %6377 = vmatpush1.bf16.xpose.msra.mxu0 0
      %6378 = vmatprep.subr.bf16.mxu0 0
      %6379 = vmatpush1.bf16.xpose.msra.mxu0 0
      %6380 = vmatprep.subr.bf16.mxu0 0
      %6381 = vmatpush1.bf16.xpose.msra.mxu0 0
      %6382 = vmatprep.subr.bf16.mxu0 0
      %6383 = vmatpush1.bf16.xpose.msra.mxu0 0
      %6384 = vmatprep.subr.bf16.mxu0 0
      %6385 = vmatpush1.bf16.xpose.msra.mxu0 0
      %6386 = vmatprep.subr.bf16.mxu0 0
      %6387 = vmatpush1.bf16.xpose.msra.mxu0 0
      %6388 = vmatprep.subr.bf16.mxu0 0
      %6389 = vmatpush1.bf16.xpose.msra.mxu0 0
      %6390 = vmatprep.subr.bf16.mxu0 0
      %6391 = vmatpush1.bf16.xpose.msra.mxu0 0
      %6392 = vmatprep.mubr.bf16.mxu0 0
      %6393 = vmatmul.mubr.bf16.gmra.mrb[0].mxu0 %v6355
      %v6394 = vpop.f32.mrb[0].mxu0
      %v6395 = vadd.f32 0.0, %v6394
      %v6396 = vpop.f32.mrb[0].mxu0
      %v6397 = vpop.f32.mrb[0].mxu0
      %v6398 = vpop.f32.mrb[0].mxu0
      %6399 = vdwg.mxu0
      %6400 = vrot.lane.b32.xlu0 %v2795, 104
      %v6401 = vpop.permute.xlu0 %6400
      %6402 = vrot.lane.b32.xlu0 %v2799, 104
      %v6403 = vpop.permute.xlu0 %6402
      %v6405 = vsel %vm851, %v6401, 0
      %v6408 = vsel %vm851, %v6403, 0
      %6410 = vmatprep.subr.bf16.mxu0 0
      %6411 = vmatpush1.bf16.xpose.msra.mxu0 %v6408
      %6412 = vmatprep.subr.bf16.mxu0 0
      %6413 = vmatpush1.bf16.xpose.msra.mxu0 0
      %6414 = vmatprep.subr.bf16.mxu0 0
      %6415 = vmatpush1.bf16.xpose.msra.mxu0 0
      %6416 = vmatprep.subr.bf16.mxu0 0
      %6417 = vmatpush1.bf16.xpose.msra.mxu0 0
      %6418 = vmatprep.subr.bf16.mxu0 0
      %6419 = vmatpush1.bf16.xpose.msra.mxu0 0
      %6420 = vmatprep.subr.bf16.mxu0 0
      %6421 = vmatpush1.bf16.xpose.msra.mxu0 0
      %6422 = vmatprep.subr.bf16.mxu0 0
      %6423 = vmatpush1.bf16.xpose.msra.mxu0 0
      %6424 = vmatprep.subr.bf16.mxu0 0
      %6425 = vmatpush1.bf16.xpose.msra.mxu0 0
      %6426 = vmatprep.subr.bf16.mxu0 0
      %6427 = vmatpush1.bf16.xpose.msra.mxu0 0
      %6428 = vmatprep.subr.bf16.mxu0 0
      %6429 = vmatpush1.bf16.xpose.msra.mxu0 0
      %6430 = vmatprep.subr.bf16.mxu0 0
      %6431 = vmatpush1.bf16.xpose.msra.mxu0 0
      %6432 = vmatprep.subr.bf16.mxu0 0
      %6433 = vmatpush1.bf16.xpose.msra.mxu0 0
      %6434 = vmatprep.subr.bf16.mxu0 0
      %6435 = vmatpush1.bf16.xpose.msra.mxu0 0
      %6436 = vmatprep.subr.bf16.mxu0 0
      %6437 = vmatpush1.bf16.xpose.msra.mxu0 0
      %6438 = vmatprep.subr.bf16.mxu0 0
      %6439 = vmatpush1.bf16.xpose.msra.mxu0 0
      %6440 = vmatprep.subr.bf16.mxu0 0
      %6441 = vmatpush1.bf16.xpose.msra.mxu0 0
      %6442 = vmatprep.mubr.bf16.mxu0 0
      %6443 = vmatmul.mubr.bf16.gmra.mrb[0].mxu0 %v6405
      %v6444 = vpop.f32.mrb[0].mxu0
      %v6445 = vadd.f32 0.0, %v6444
      %v6446 = vpop.f32.mrb[0].mxu0
      %v6447 = vpop.f32.mrb[0].mxu0
      %v6448 = vpop.f32.mrb[0].mxu0
      %6449 = vdwg.mxu0
      %6450 = vrot.lane.b32.xlu0 %v2850, 104
      %v6451 = vpop.permute.xlu0 %6450
      %6452 = vrot.lane.b32.xlu0 %v2854, 104
      %v6453 = vpop.permute.xlu0 %6452
      %v6455 = vsel %vm851, %v6451, 0
      %v6458 = vsel %vm851, %v6453, 0
      %6460 = vmatprep.subr.bf16.mxu0 0
      %6461 = vmatpush1.bf16.xpose.msra.mxu0 %v6458
      %6462 = vmatprep.subr.bf16.mxu0 0
      %6463 = vmatpush1.bf16.xpose.msra.mxu0 0
      %6464 = vmatprep.subr.bf16.mxu0 0
      %6465 = vmatpush1.bf16.xpose.msra.mxu0 0
      %6466 = vmatprep.subr.bf16.mxu0 0
      %6467 = vmatpush1.bf16.xpose.msra.mxu0 0
      %6468 = vmatprep.subr.bf16.mxu0 0
      %6469 = vmatpush1.bf16.xpose.msra.mxu0 0
      %6470 = vmatprep.subr.bf16.mxu0 0
      %6471 = vmatpush1.bf16.xpose.msra.mxu0 0
      %6472 = vmatprep.subr.bf16.mxu0 0
      %6473 = vmatpush1.bf16.xpose.msra.mxu0 0
      %6474 = vmatprep.subr.bf16.mxu0 0
      %6475 = vmatpush1.bf16.xpose.msra.mxu0 0
      %6476 = vmatprep.subr.bf16.mxu0 0
      %6477 = vmatpush1.bf16.xpose.msra.mxu0 0
      %6478 = vmatprep.subr.bf16.mxu0 0
      %6479 = vmatpush1.bf16.xpose.msra.mxu0 0
      %6480 = vmatprep.subr.bf16.mxu0 0
      %6481 = vmatpush1.bf16.xpose.msra.mxu0 0
      %6482 = vmatprep.subr.bf16.mxu0 0
      %6483 = vmatpush1.bf16.xpose.msra.mxu0 0
      %6484 = vmatprep.subr.bf16.mxu0 0
      %6485 = vmatpush1.bf16.xpose.msra.mxu0 0
      %6486 = vmatprep.subr.bf16.mxu0 0
      %6487 = vmatpush1.bf16.xpose.msra.mxu0 0
      %6488 = vmatprep.subr.bf16.mxu0 0
      %6489 = vmatpush1.bf16.xpose.msra.mxu0 0
      %6490 = vmatprep.subr.bf16.mxu0 0
      %6491 = vmatpush1.bf16.xpose.msra.mxu0 0
      %6492 = vmatprep.mubr.bf16.mxu0 0
      %6493 = vmatmul.mubr.bf16.gmra.mrb[0].mxu0 %v6455
      %v6494 = vpop.f32.mrb[0].mxu0
      %v6495 = vadd.f32 0.0, %v6494
      %v6496 = vpop.f32.mrb[0].mxu0
      %v6497 = vpop.f32.mrb[0].mxu0
      %v6498 = vpop.f32.mrb[0].mxu0
      %6499 = vdwg.mxu0
      %6500 = vrot.lane.b32.xlu0 %v2905, 104
      %v6501 = vpop.permute.xlu0 %6500
      %6502 = vrot.lane.b32.xlu0 %v2909, 104
      %v6503 = vpop.permute.xlu0 %6502
      %v6505 = vsel %vm851, %v6501, 0
      %v6508 = vsel %vm851, %v6503, 0
      %6510 = vmatprep.subr.bf16.mxu0 0
      %6511 = vmatpush1.bf16.xpose.msra.mxu0 %v6508
      %6512 = vmatprep.subr.bf16.mxu0 0
      %6513 = vmatpush1.bf16.xpose.msra.mxu0 0
      %6514 = vmatprep.subr.bf16.mxu0 0
      %6515 = vmatpush1.bf16.xpose.msra.mxu0 0
      %6516 = vmatprep.subr.bf16.mxu0 0
      %6517 = vmatpush1.bf16.xpose.msra.mxu0 0
      %6518 = vmatprep.subr.bf16.mxu0 0
      %6519 = vmatpush1.bf16.xpose.msra.mxu0 0
      %6520 = vmatprep.subr.bf16.mxu0 0
      %6521 = vmatpush1.bf16.xpose.msra.mxu0 0
      %6522 = vmatprep.subr.bf16.mxu0 0
      %6523 = vmatpush1.bf16.xpose.msra.mxu0 0
      %6524 = vmatprep.subr.bf16.mxu0 0
      %6525 = vmatpush1.bf16.xpose.msra.mxu0 0
      %6526 = vmatprep.subr.bf16.mxu0 0
      %6527 = vmatpush1.bf16.xpose.msra.mxu0 0
      %6528 = vmatprep.subr.bf16.mxu0 0
      %6529 = vmatpush1.bf16.xpose.msra.mxu0 0
      %6530 = vmatprep.subr.bf16.mxu0 0
      %6531 = vmatpush1.bf16.xpose.msra.mxu0 0
      %6532 = vmatprep.subr.bf16.mxu0 0
      %6533 = vmatpush1.bf16.xpose.msra.mxu0 0
      %6534 = vmatprep.subr.bf16.mxu0 0
      %6535 = vmatpush1.bf16.xpose.msra.mxu0 0
      %6536 = vmatprep.subr.bf16.mxu0 0
      %6537 = vmatpush1.bf16.xpose.msra.mxu0 0
      %6538 = vmatprep.subr.bf16.mxu0 0
      %6539 = vmatpush1.bf16.xpose.msra.mxu0 0
      %6540 = vmatprep.subr.bf16.mxu0 0
      %6541 = vmatpush1.bf16.xpose.msra.mxu0 0
      %6542 = vmatprep.mubr.bf16.mxu0 0
      %6543 = vmatmul.mubr.bf16.gmra.mrb[0].mxu0 %v6505
      %v6544 = vpop.f32.mrb[0].mxu0
      %v6545 = vadd.f32 0.0, %v6544
      %v6546 = vpop.f32.mrb[0].mxu0
      %v6547 = vpop.f32.mrb[0].mxu0
      %v6548 = vpop.f32.mrb[0].mxu0
      %6549 = vdwg.mxu0
      %6550 = vrot.lane.b32.xlu0 %v2960, 104
      %v6551 = vpop.permute.xlu0 %6550
      %6552 = vrot.lane.b32.xlu0 %v2964, 104
      %v6553 = vpop.permute.xlu0 %6552
      %v6555 = vsel %vm851, %v6551, 0
      %v6558 = vsel %vm851, %v6553, 0
      %6560 = vmatprep.subr.bf16.mxu0 0
      %6561 = vmatpush1.bf16.xpose.msra.mxu0 %v6558
      %6562 = vmatprep.subr.bf16.mxu0 0
      %6563 = vmatpush1.bf16.xpose.msra.mxu0 0
      %6564 = vmatprep.subr.bf16.mxu0 0
      %6565 = vmatpush1.bf16.xpose.msra.mxu0 0
      %6566 = vmatprep.subr.bf16.mxu0 0
      %6567 = vmatpush1.bf16.xpose.msra.mxu0 0
      %6568 = vmatprep.subr.bf16.mxu0 0
      %6569 = vmatpush1.bf16.xpose.msra.mxu0 0
      %6570 = vmatprep.subr.bf16.mxu0 0
      %6571 = vmatpush1.bf16.xpose.msra.mxu0 0
      %6572 = vmatprep.subr.bf16.mxu0 0
      %6573 = vmatpush1.bf16.xpose.msra.mxu0 0
      %6574 = vmatprep.subr.bf16.mxu0 0
      %6575 = vmatpush1.bf16.xpose.msra.mxu0 0
      %6576 = vmatprep.subr.bf16.mxu0 0
      %6577 = vmatpush1.bf16.xpose.msra.mxu0 0
      %6578 = vmatprep.subr.bf16.mxu0 0
      %6579 = vmatpush1.bf16.xpose.msra.mxu0 0
      %6580 = vmatprep.subr.bf16.mxu0 0
      %6581 = vmatpush1.bf16.xpose.msra.mxu0 0
      %6582 = vmatprep.subr.bf16.mxu0 0
      %6583 = vmatpush1.bf16.xpose.msra.mxu0 0
      %6584 = vmatprep.subr.bf16.mxu0 0
      %6585 = vmatpush1.bf16.xpose.msra.mxu0 0
      %6586 = vmatprep.subr.bf16.mxu0 0
      %6587 = vmatpush1.bf16.xpose.msra.mxu0 0
      %6588 = vmatprep.subr.bf16.mxu0 0
      %6589 = vmatpush1.bf16.xpose.msra.mxu0 0
      %6590 = vmatprep.subr.bf16.mxu0 0
      %6591 = vmatpush1.bf16.xpose.msra.mxu0 0
      %6592 = vmatprep.mubr.bf16.mxu0 0
      %6593 = vmatmul.mubr.bf16.gmra.mrb[0].mxu0 %v6555
      %v6594 = vpop.f32.mrb[0].mxu0
      %v6595 = vadd.f32 0.0, %v6594
      %v6596 = vpop.f32.mrb[0].mxu0
      %v6597 = vpop.f32.mrb[0].mxu0
      %v6598 = vpop.f32.mrb[0].mxu0
      %6599 = vdwg.mxu0
      %6600 = vrot.lane.b32.xlu0 %v3015, 104
      %v6601 = vpop.permute.xlu0 %6600
      %6602 = vrot.lane.b32.xlu0 %v3019, 104
      %v6603 = vpop.permute.xlu0 %6602
      %v6605 = vsel %vm851, %v6601, 0
      %v6608 = vsel %vm851, %v6603, 0
      %6610 = vmatprep.subr.bf16.mxu0 0
      %6611 = vmatpush1.bf16.xpose.msra.mxu0 %v6608
      %6612 = vmatprep.subr.bf16.mxu0 0
      %6613 = vmatpush1.bf16.xpose.msra.mxu0 0
      %6614 = vmatprep.subr.bf16.mxu0 0
      %6615 = vmatpush1.bf16.xpose.msra.mxu0 0
      %6616 = vmatprep.subr.bf16.mxu0 0
      %6617 = vmatpush1.bf16.xpose.msra.mxu0 0
      %6618 = vmatprep.subr.bf16.mxu0 0
      %6619 = vmatpush1.bf16.xpose.msra.mxu0 0
      %6620 = vmatprep.subr.bf16.mxu0 0
      %6621 = vmatpush1.bf16.xpose.msra.mxu0 0
      %6622 = vmatprep.subr.bf16.mxu0 0
      %6623 = vmatpush1.bf16.xpose.msra.mxu0 0
      %6624 = vmatprep.subr.bf16.mxu0 0
      %6625 = vmatpush1.bf16.xpose.msra.mxu0 0
      %6626 = vmatprep.subr.bf16.mxu0 0
      %6627 = vmatpush1.bf16.xpose.msra.mxu0 0
      %6628 = vmatprep.subr.bf16.mxu0 0
      %6629 = vmatpush1.bf16.xpose.msra.mxu0 0
      %6630 = vmatprep.subr.bf16.mxu0 0
      %6631 = vmatpush1.bf16.xpose.msra.mxu0 0
      %6632 = vmatprep.subr.bf16.mxu0 0
      %6633 = vmatpush1.bf16.xpose.msra.mxu0 0
      %6634 = vmatprep.subr.bf16.mxu0 0
      %6635 = vmatpush1.bf16.xpose.msra.mxu0 0
      %6636 = vmatprep.subr.bf16.mxu0 0
      %6637 = vmatpush1.bf16.xpose.msra.mxu0 0
      %6638 = vmatprep.subr.bf16.mxu0 0
      %6639 = vmatpush1.bf16.xpose.msra.mxu0 0
      %6640 = vmatprep.subr.bf16.mxu0 0
      %6641 = vmatpush1.bf16.xpose.msra.mxu0 0
      %6642 = vmatprep.mubr.bf16.mxu0 0
      %6643 = vmatmul.mubr.bf16.gmra.mrb[0].mxu0 %v6605
      %v6644 = vpop.f32.mrb[0].mxu0
      %v6645 = vadd.f32 0.0, %v6644
      %v6646 = vpop.f32.mrb[0].mxu0
      %v6647 = vpop.f32.mrb[0].mxu0
      %v6648 = vpop.f32.mrb[0].mxu0
      %6649 = vdwg.mxu0
      %6650 = vrot.lane.b32.xlu0 %v3070, 104
      %v6651 = vpop.permute.xlu0 %6650
      %6652 = vrot.lane.b32.xlu0 %v3074, 104
      %v6653 = vpop.permute.xlu0 %6652
      %v6655 = vsel %vm851, %v6651, 0
      %v6658 = vsel %vm851, %v6653, 0
      %6660 = vmatprep.subr.bf16.mxu0 0
      %6661 = vmatpush1.bf16.xpose.msra.mxu0 %v6658
      %6662 = vmatprep.subr.bf16.mxu0 0
      %6663 = vmatpush1.bf16.xpose.msra.mxu0 0
      %6664 = vmatprep.subr.bf16.mxu0 0
      %6665 = vmatpush1.bf16.xpose.msra.mxu0 0
      %6666 = vmatprep.subr.bf16.mxu0 0
      %6667 = vmatpush1.bf16.xpose.msra.mxu0 0
      %6668 = vmatprep.subr.bf16.mxu0 0
      %6669 = vmatpush1.bf16.xpose.msra.mxu0 0
      %6670 = vmatprep.subr.bf16.mxu0 0
      %6671 = vmatpush1.bf16.xpose.msra.mxu0 0
      %6672 = vmatprep.subr.bf16.mxu0 0
      %6673 = vmatpush1.bf16.xpose.msra.mxu0 0
      %6674 = vmatprep.subr.bf16.mxu0 0
      %6675 = vmatpush1.bf16.xpose.msra.mxu0 0
      %6676 = vmatprep.subr.bf16.mxu0 0
      %6677 = vmatpush1.bf16.xpose.msra.mxu0 0
      %6678 = vmatprep.subr.bf16.mxu0 0
      %6679 = vmatpush1.bf16.xpose.msra.mxu0 0
      %6680 = vmatprep.subr.bf16.mxu0 0
      %6681 = vmatpush1.bf16.xpose.msra.mxu0 0
      %6682 = vmatprep.subr.bf16.mxu0 0
      %6683 = vmatpush1.bf16.xpose.msra.mxu0 0
      %6684 = vmatprep.subr.bf16.mxu0 0
      %6685 = vmatpush1.bf16.xpose.msra.mxu0 0
      %6686 = vmatprep.subr.bf16.mxu0 0
      %6687 = vmatpush1.bf16.xpose.msra.mxu0 0
      %6688 = vmatprep.subr.bf16.mxu0 0
      %6689 = vmatpush1.bf16.xpose.msra.mxu0 0
      %6690 = vmatprep.subr.bf16.mxu0 0
      %6691 = vmatpush1.bf16.xpose.msra.mxu0 0
      %6692 = vmatprep.mubr.bf16.mxu0 0
      %6693 = vmatmul.mubr.bf16.gmra.mrb[0].mxu0 %v6655
      %v6694 = vpop.f32.mrb[0].mxu0
      %v6695 = vadd.f32 0.0, %v6694
      %v6696 = vpop.f32.mrb[0].mxu0
      %v6697 = vpop.f32.mrb[0].mxu0
      %v6698 = vpop.f32.mrb[0].mxu0
      %6699 = vdwg.mxu0
      %6700 = vrot.lane.b32.xlu0 %v3125, 104
      %v6701 = vpop.permute.xlu0 %6700
      %6702 = vrot.lane.b32.xlu0 %v3129, 104
      %v6703 = vpop.permute.xlu0 %6702
      %v6705 = vsel %vm851, %v6701, 0
      %v6708 = vsel %vm851, %v6703, 0
      %6710 = vmatprep.subr.bf16.mxu0 0
      %6711 = vmatpush1.bf16.xpose.msra.mxu0 %v6708
      %6712 = vmatprep.subr.bf16.mxu0 0
      %6713 = vmatpush1.bf16.xpose.msra.mxu0 0
      %6714 = vmatprep.subr.bf16.mxu0 0
      %6715 = vmatpush1.bf16.xpose.msra.mxu0 0
      %6716 = vmatprep.subr.bf16.mxu0 0
      %6717 = vmatpush1.bf16.xpose.msra.mxu0 0
      %6718 = vmatprep.subr.bf16.mxu0 0
      %6719 = vmatpush1.bf16.xpose.msra.mxu0 0
      %6720 = vmatprep.subr.bf16.mxu0 0
      %6721 = vmatpush1.bf16.xpose.msra.mxu0 0
      %6722 = vmatprep.subr.bf16.mxu0 0
      %6723 = vmatpush1.bf16.xpose.msra.mxu0 0
      %6724 = vmatprep.subr.bf16.mxu0 0
      %6725 = vmatpush1.bf16.xpose.msra.mxu0 0
      %6726 = vmatprep.subr.bf16.mxu0 0
      %6727 = vmatpush1.bf16.xpose.msra.mxu0 0
      %6728 = vmatprep.subr.bf16.mxu0 0
      %6729 = vmatpush1.bf16.xpose.msra.mxu0 0
      %6730 = vmatprep.subr.bf16.mxu0 0
      %6731 = vmatpush1.bf16.xpose.msra.mxu0 0
      %6732 = vmatprep.subr.bf16.mxu0 0
      %6733 = vmatpush1.bf16.xpose.msra.mxu0 0
      %6734 = vmatprep.subr.bf16.mxu0 0
      %6735 = vmatpush1.bf16.xpose.msra.mxu0 0
      %6736 = vmatprep.subr.bf16.mxu0 0
      %6737 = vmatpush1.bf16.xpose.msra.mxu0 0
      %6738 = vmatprep.subr.bf16.mxu0 0
      %6739 = vmatpush1.bf16.xpose.msra.mxu0 0
      %6740 = vmatprep.subr.bf16.mxu0 0
      %6741 = vmatpush1.bf16.xpose.msra.mxu0 0
      %6742 = vmatprep.mubr.bf16.mxu0 0
      %6743 = vmatmul.mubr.bf16.gmra.mrb[0].mxu0 %v6705
      %v6744 = vpop.f32.mrb[0].mxu0
      %v6745 = vadd.f32 0.0, %v6744
      %v6746 = vpop.f32.mrb[0].mxu0
      %v6747 = vpop.f32.mrb[0].mxu0
      %v6748 = vpop.f32.mrb[0].mxu0
      %6749 = vdwg.mxu0
      %6750 = vrot.lane.b32.xlu0 %v3180, 104
      %v6751 = vpop.permute.xlu0 %6750
      %6752 = vrot.lane.b32.xlu0 %v3184, 104
      %v6753 = vpop.permute.xlu0 %6752
      %v6755 = vsel %vm851, %v6751, 0
      %v6758 = vsel %vm851, %v6753, 0
      %6760 = vmatprep.subr.bf16.mxu0 0
      %6761 = vmatpush1.bf16.xpose.msra.mxu0 %v6758
      %6762 = vmatprep.subr.bf16.mxu0 0
      %6763 = vmatpush1.bf16.xpose.msra.mxu0 0
      %6764 = vmatprep.subr.bf16.mxu0 0
      %6765 = vmatpush1.bf16.xpose.msra.mxu0 0
      %6766 = vmatprep.subr.bf16.mxu0 0
      %6767 = vmatpush1.bf16.xpose.msra.mxu0 0
      %6768 = vmatprep.subr.bf16.mxu0 0
      %6769 = vmatpush1.bf16.xpose.msra.mxu0 0
      %6770 = vmatprep.subr.bf16.mxu0 0
      %6771 = vmatpush1.bf16.xpose.msra.mxu0 0
      %6772 = vmatprep.subr.bf16.mxu0 0
      %6773 = vmatpush1.bf16.xpose.msra.mxu0 0
      %6774 = vmatprep.subr.bf16.mxu0 0
      %6775 = vmatpush1.bf16.xpose.msra.mxu0 0
      %6776 = vmatprep.subr.bf16.mxu0 0
      %6777 = vmatpush1.bf16.xpose.msra.mxu0 0
      %6778 = vmatprep.subr.bf16.mxu0 0
      %6779 = vmatpush1.bf16.xpose.msra.mxu0 0
      %6780 = vmatprep.subr.bf16.mxu0 0
      %6781 = vmatpush1.bf16.xpose.msra.mxu0 0
      %6782 = vmatprep.subr.bf16.mxu0 0
      %6783 = vmatpush1.bf16.xpose.msra.mxu0 0
      %6784 = vmatprep.subr.bf16.mxu0 0
      %6785 = vmatpush1.bf16.xpose.msra.mxu0 0
      %6786 = vmatprep.subr.bf16.mxu0 0
      %6787 = vmatpush1.bf16.xpose.msra.mxu0 0
      %6788 = vmatprep.subr.bf16.mxu0 0
      %6789 = vmatpush1.bf16.xpose.msra.mxu0 0
      %6790 = vmatprep.subr.bf16.mxu0 0
      %6791 = vmatpush1.bf16.xpose.msra.mxu0 0
      %6792 = vmatprep.mubr.bf16.mxu0 0
      %6793 = vmatmul.mubr.bf16.gmra.mrb[0].mxu0 %v6755
      %v6794 = vpop.f32.mrb[0].mxu0
      %v6795 = vadd.f32 0.0, %v6794
      %v6796 = vpop.f32.mrb[0].mxu0
      %v6797 = vpop.f32.mrb[0].mxu0
      %v6798 = vpop.f32.mrb[0].mxu0
      %6799 = vdwg.mxu0
      %6800 = vrot.lane.b32.xlu0 %v3235, 104
      %v6801 = vpop.permute.xlu0 %6800
      %6802 = vrot.lane.b32.xlu0 %v3239, 104
      %v6803 = vpop.permute.xlu0 %6802
      %v6805 = vsel %vm851, %v6801, 0
      %v6808 = vsel %vm851, %v6803, 0
      %6810 = vmatprep.subr.bf16.mxu0 0
      %6811 = vmatpush1.bf16.xpose.msra.mxu0 %v6808
      %6812 = vmatprep.subr.bf16.mxu0 0
      %6813 = vmatpush1.bf16.xpose.msra.mxu0 0
      %6814 = vmatprep.subr.bf16.mxu0 0
      %6815 = vmatpush1.bf16.xpose.msra.mxu0 0
      %6816 = vmatprep.subr.bf16.mxu0 0
      %6817 = vmatpush1.bf16.xpose.msra.mxu0 0
      %6818 = vmatprep.subr.bf16.mxu0 0
      %6819 = vmatpush1.bf16.xpose.msra.mxu0 0
      %6820 = vmatprep.subr.bf16.mxu0 0
      %6821 = vmatpush1.bf16.xpose.msra.mxu0 0
      %6822 = vmatprep.subr.bf16.mxu0 0
      %6823 = vmatpush1.bf16.xpose.msra.mxu0 0
      %6824 = vmatprep.subr.bf16.mxu0 0
      %6825 = vmatpush1.bf16.xpose.msra.mxu0 0
      %6826 = vmatprep.subr.bf16.mxu0 0
      %6827 = vmatpush1.bf16.xpose.msra.mxu0 0
      %6828 = vmatprep.subr.bf16.mxu0 0
      %6829 = vmatpush1.bf16.xpose.msra.mxu0 0
      %6830 = vmatprep.subr.bf16.mxu0 0
      %6831 = vmatpush1.bf16.xpose.msra.mxu0 0
      %6832 = vmatprep.subr.bf16.mxu0 0
      %6833 = vmatpush1.bf16.xpose.msra.mxu0 0
      %6834 = vmatprep.subr.bf16.mxu0 0
      %6835 = vmatpush1.bf16.xpose.msra.mxu0 0
      %6836 = vmatprep.subr.bf16.mxu0 0
      %6837 = vmatpush1.bf16.xpose.msra.mxu0 0
      %6838 = vmatprep.subr.bf16.mxu0 0
      %6839 = vmatpush1.bf16.xpose.msra.mxu0 0
      %6840 = vmatprep.subr.bf16.mxu0 0
      %6841 = vmatpush1.bf16.xpose.msra.mxu0 0
      %6842 = vmatprep.mubr.bf16.mxu0 0
      %6843 = vmatmul.mubr.bf16.gmra.mrb[0].mxu0 %v6805
      %v6844 = vpop.f32.mrb[0].mxu0
      %v6845 = vadd.f32 0.0, %v6844
      %v6846 = vpop.f32.mrb[0].mxu0
      %v6847 = vpop.f32.mrb[0].mxu0
      %v6848 = vpop.f32.mrb[0].mxu0
      %6849 = vdwg.mxu0
      %6850 = vrot.lane.b32.xlu0 %v3290, 104
      %v6851 = vpop.permute.xlu0 %6850
      %6852 = vrot.lane.b32.xlu0 %v3294, 104
      %v6853 = vpop.permute.xlu0 %6852
      %v6855 = vsel %vm851, %v6851, 0
      %v6858 = vsel %vm851, %v6853, 0
      %6860 = vmatprep.subr.bf16.mxu0 0
      %6861 = vmatpush1.bf16.xpose.msra.mxu0 %v6858
      %6862 = vmatprep.subr.bf16.mxu0 0
      %6863 = vmatpush1.bf16.xpose.msra.mxu0 0
      %6864 = vmatprep.subr.bf16.mxu0 0
      %6865 = vmatpush1.bf16.xpose.msra.mxu0 0
      %6866 = vmatprep.subr.bf16.mxu0 0
      %6867 = vmatpush1.bf16.xpose.msra.mxu0 0
      %6868 = vmatprep.subr.bf16.mxu0 0
      %6869 = vmatpush1.bf16.xpose.msra.mxu0 0
      %6870 = vmatprep.subr.bf16.mxu0 0
      %6871 = vmatpush1.bf16.xpose.msra.mxu0 0
      %6872 = vmatprep.subr.bf16.mxu0 0
      %6873 = vmatpush1.bf16.xpose.msra.mxu0 0
      %6874 = vmatprep.subr.bf16.mxu0 0
      %6875 = vmatpush1.bf16.xpose.msra.mxu0 0
      %6876 = vmatprep.subr.bf16.mxu0 0
      %6877 = vmatpush1.bf16.xpose.msra.mxu0 0
      %6878 = vmatprep.subr.bf16.mxu0 0
      %6879 = vmatpush1.bf16.xpose.msra.mxu0 0
      %6880 = vmatprep.subr.bf16.mxu0 0
      %6881 = vmatpush1.bf16.xpose.msra.mxu0 0
      %6882 = vmatprep.subr.bf16.mxu0 0
      %6883 = vmatpush1.bf16.xpose.msra.mxu0 0
      %6884 = vmatprep.subr.bf16.mxu0 0
      %6885 = vmatpush1.bf16.xpose.msra.mxu0 0
      %6886 = vmatprep.subr.bf16.mxu0 0
      %6887 = vmatpush1.bf16.xpose.msra.mxu0 0
      %6888 = vmatprep.subr.bf16.mxu0 0
      %6889 = vmatpush1.bf16.xpose.msra.mxu0 0
      %6890 = vmatprep.subr.bf16.mxu0 0
      %6891 = vmatpush1.bf16.xpose.msra.mxu0 0
      %6892 = vmatprep.mubr.bf16.mxu0 0
      %6893 = vmatmul.mubr.bf16.gmra.mrb[0].mxu0 %v6855
      %v6894 = vpop.f32.mrb[0].mxu0
      %v6895 = vadd.f32 0.0, %v6894
      %v6896 = vpop.f32.mrb[0].mxu0
      %v6897 = vpop.f32.mrb[0].mxu0
      %v6898 = vpop.f32.mrb[0].mxu0
      %6899 = vdwg.mxu0
      %6900 = vrot.lane.b32.xlu0 %v3345, 104
      %v6901 = vpop.permute.xlu0 %6900
      %6902 = vrot.lane.b32.xlu0 %v3349, 104
      %v6903 = vpop.permute.xlu0 %6902
      %v6905 = vsel %vm851, %v6901, 0
      %v6908 = vsel %vm851, %v6903, 0
      %6910 = vmatprep.subr.bf16.mxu0 0
      %6911 = vmatpush1.bf16.xpose.msra.mxu0 %v6908
      %6912 = vmatprep.subr.bf16.mxu0 0
      %6913 = vmatpush1.bf16.xpose.msra.mxu0 0
      %6914 = vmatprep.subr.bf16.mxu0 0
      %6915 = vmatpush1.bf16.xpose.msra.mxu0 0
      %6916 = vmatprep.subr.bf16.mxu0 0
      %6917 = vmatpush1.bf16.xpose.msra.mxu0 0
      %6918 = vmatprep.subr.bf16.mxu0 0
      %6919 = vmatpush1.bf16.xpose.msra.mxu0 0
      %6920 = vmatprep.subr.bf16.mxu0 0
      %6921 = vmatpush1.bf16.xpose.msra.mxu0 0
      %6922 = vmatprep.subr.bf16.mxu0 0
      %6923 = vmatpush1.bf16.xpose.msra.mxu0 0
      %6924 = vmatprep.subr.bf16.mxu0 0
      %6925 = vmatpush1.bf16.xpose.msra.mxu0 0
      %6926 = vmatprep.subr.bf16.mxu0 0
      %6927 = vmatpush1.bf16.xpose.msra.mxu0 0
      %6928 = vmatprep.subr.bf16.mxu0 0
      %6929 = vmatpush1.bf16.xpose.msra.mxu0 0
      %6930 = vmatprep.subr.bf16.mxu0 0
      %6931 = vmatpush1.bf16.xpose.msra.mxu0 0
      %6932 = vmatprep.subr.bf16.mxu0 0
      %6933 = vmatpush1.bf16.xpose.msra.mxu0 0
      %6934 = vmatprep.subr.bf16.mxu0 0
      %6935 = vmatpush1.bf16.xpose.msra.mxu0 0
      %6936 = vmatprep.subr.bf16.mxu0 0
      %6937 = vmatpush1.bf16.xpose.msra.mxu0 0
      %6938 = vmatprep.subr.bf16.mxu0 0
      %6939 = vmatpush1.bf16.xpose.msra.mxu0 0
      %6940 = vmatprep.subr.bf16.mxu0 0
      %6941 = vmatpush1.bf16.xpose.msra.mxu0 0
      %6942 = vmatprep.mubr.bf16.mxu0 0
      %6943 = vmatmul.mubr.bf16.gmra.mrb[0].mxu0 %v6905
      %v6944 = vpop.f32.mrb[0].mxu0
      %v6945 = vadd.f32 0.0, %v6944
      %v6946 = vpop.f32.mrb[0].mxu0
      %v6947 = vpop.f32.mrb[0].mxu0
      %v6948 = vpop.f32.mrb[0].mxu0
      %6949 = vdwg.mxu0
      %v6950 = vsel %vm1588, %v6195, -inf
      %6951 = vmax.xlane.f32.xlu0 %v6950
      %v6952 = vpop.xlane.xlu0 %6951
      %v6953 = vsel %vm1588, %v6245, -inf
      %6954 = vmax.xlane.f32.xlu0 %v6953
      %v6955 = vpop.xlane.xlu0 %6954
      %v6956 = vsel %vm1588, %v6295, -inf
      %6957 = vmax.xlane.f32.xlu0 %v6956
      %v6958 = vpop.xlane.xlu0 %6957
      %v6959 = vsel %vm1588, %v6345, -inf
      %6960 = vmax.xlane.f32.xlu0 %v6959
      %v6961 = vpop.xlane.xlu0 %6960
      %v6962 = vsel %vm1588, %v6395, -inf
      %6963 = vmax.xlane.f32.xlu0 %v6962
      %v6964 = vpop.xlane.xlu0 %6963
      %v6965 = vsel %vm1588, %v6445, -inf
      %6966 = vmax.xlane.f32.xlu0 %v6965
      %v6967 = vpop.xlane.xlu0 %6966
      %v6968 = vsel %vm1588, %v6495, -inf
      %6969 = vmax.xlane.f32.xlu0 %v6968
      %v6970 = vpop.xlane.xlu0 %6969
      %v6971 = vsel %vm1588, %v6545, -inf
      %6972 = vmax.xlane.f32.xlu0 %v6971
      %v6973 = vpop.xlane.xlu0 %6972
      %v6974 = vsel %vm1588, %v6595, -inf
      %6975 = vmax.xlane.f32.xlu0 %v6974
      %v6976 = vpop.xlane.xlu0 %6975
      %v6977 = vsel %vm1588, %v6645, -inf
      %6978 = vmax.xlane.f32.xlu0 %v6977
      %v6979 = vpop.xlane.xlu0 %6978
      %v6980 = vsel %vm1588, %v6695, -inf
      %6981 = vmax.xlane.f32.xlu0 %v6980
      %v6982 = vpop.xlane.xlu0 %6981
      %v6983 = vsel %vm1588, %v6745, -inf
      %6984 = vmax.xlane.f32.xlu0 %v6983
      %v6985 = vpop.xlane.xlu0 %6984
      %v6986 = vsel %vm1588, %v6795, -inf
      %6987 = vmax.xlane.f32.xlu0 %v6986
      %v6988 = vpop.xlane.xlu0 %6987
      %v6989 = vsel %vm1588, %v6845, -inf
      %6990 = vmax.xlane.f32.xlu0 %v6989
      %v6991 = vpop.xlane.xlu0 %6990
      %v6992 = vsel %vm1588, %v6895, -inf
      %6993 = vmax.xlane.f32.xlu0 %v6992
      %v6994 = vpop.xlane.xlu0 %6993
      %v6995 = vsel %vm1588, %v6945, -inf
      %6996 = vmax.xlane.f32.xlu0 %v6995
      %v6997 = vpop.xlane.xlu0 %6996
      %v6998 = vsub.f32 %v6195, %v6952
      %v6999 = vsub.f32 %v6245, %v6955
      %v7000 = vsub.f32 %v6295, %v6958
      %v7001 = vsub.f32 %v6345, %v6961
      %v7002 = vsub.f32 %v6395, %v6964
      %v7003 = vsub.f32 %v6445, %v6967
      %v7004 = vsub.f32 %v6495, %v6970
      %v7005 = vsub.f32 %v6545, %v6973
      %v7006 = vsub.f32 %v6595, %v6976
      %v7007 = vsub.f32 %v6645, %v6979
      %v7008 = vsub.f32 %v6695, %v6982
      %v7009 = vsub.f32 %v6745, %v6985
      %v7010 = vsub.f32 %v6795, %v6988
      %v7011 = vsub.f32 %v6845, %v6991
      %v7012 = vsub.f32 %v6895, %v6994
      %v7013 = vsub.f32 %v6945, %v6997
      %v7014 = vmul.f32 %v6998, 1.442695
      %v7015 = vpow.pop %v7014
      %v7016 = vmul.f32 %v6999, 1.442695
      %v7017 = vpow.pop %v7016
      %v7018 = vmul.f32 %v7000, 1.442695
      %v7019 = vpow.pop %v7018
      %v7020 = vmul.f32 %v7001, 1.442695
      %v7021 = vpow.pop %v7020
      %v7022 = vmul.f32 %v7002, 1.442695
      %v7023 = vpow.pop %v7022
      %v7024 = vmul.f32 %v7003, 1.442695
      %v7025 = vpow.pop %v7024
      %v7026 = vmul.f32 %v7004, 1.442695
      %v7027 = vpow.pop %v7026
      %v7028 = vmul.f32 %v7005, 1.442695
      %v7029 = vpow.pop %v7028
      %v7030 = vmul.f32 %v7006, 1.442695
      %v7031 = vpow.pop %v7030
      %v7032 = vmul.f32 %v7007, 1.442695
      %v7033 = vpow.pop %v7032
      %v7034 = vmul.f32 %v7008, 1.442695
      %v7035 = vpow.pop %v7034
      %v7036 = vmul.f32 %v7009, 1.442695
      %v7037 = vpow.pop %v7036
      %v7038 = vmul.f32 %v7010, 1.442695
      %v7039 = vpow.pop %v7038
      %v7040 = vmul.f32 %v7011, 1.442695
      %v7041 = vpow.pop %v7040
      %v7042 = vmul.f32 %v7012, 1.442695
      %v7043 = vpow.pop %v7042
      %v7044 = vmul.f32 %v7013, 1.442695
      %v7045 = vpow.pop %v7044
      %v7046 = vsel %vm1588, %v7015, 0.0
      %7047 = vadd.xlane.f32.xlu0 %v7046
      %v7048 = vpop.xlane.xlu0 %7047
      %v7049 = vsel %vm1588, %v7017, 0.0
      %7050 = vadd.xlane.f32.xlu0 %v7049
      %v7051 = vpop.xlane.xlu0 %7050
      %v7052 = vsel %vm1588, %v7019, 0.0
      %7053 = vadd.xlane.f32.xlu0 %v7052
      %v7054 = vpop.xlane.xlu0 %7053
      %v7055 = vsel %vm1588, %v7021, 0.0
      %7056 = vadd.xlane.f32.xlu0 %v7055
      %v7057 = vpop.xlane.xlu0 %7056
      %v7058 = vsel %vm1588, %v7023, 0.0
      %7059 = vadd.xlane.f32.xlu0 %v7058
      %v7060 = vpop.xlane.xlu0 %7059
      %v7061 = vsel %vm1588, %v7025, 0.0
      %7062 = vadd.xlane.f32.xlu0 %v7061
      %v7063 = vpop.xlane.xlu0 %7062
      %v7064 = vsel %vm1588, %v7027, 0.0
      %7065 = vadd.xlane.f32.xlu0 %v7064
      %v7066 = vpop.xlane.xlu0 %7065
      %v7067 = vsel %vm1588, %v7029, 0.0
      %7068 = vadd.xlane.f32.xlu0 %v7067
      %v7069 = vpop.xlane.xlu0 %7068
      %v7070 = vsel %vm1588, %v7031, 0.0
      %7071 = vadd.xlane.f32.xlu0 %v7070
      %v7072 = vpop.xlane.xlu0 %7071
      %v7073 = vsel %vm1588, %v7033, 0.0
      %7074 = vadd.xlane.f32.xlu0 %v7073
      %v7075 = vpop.xlane.xlu0 %7074
      %v7076 = vsel %vm1588, %v7035, 0.0
      %7077 = vadd.xlane.f32.xlu0 %v7076
      %v7078 = vpop.xlane.xlu0 %7077
      %v7079 = vsel %vm1588, %v7037, 0.0
      %7080 = vadd.xlane.f32.xlu0 %v7079
      %v7081 = vpop.xlane.xlu0 %7080
      %v7082 = vsel %vm1588, %v7039, 0.0
      %7083 = vadd.xlane.f32.xlu0 %v7082
      %v7084 = vpop.xlane.xlu0 %7083
      %v7085 = vsel %vm1588, %v7041, 0.0
      %7086 = vadd.xlane.f32.xlu0 %v7085
      %v7087 = vpop.xlane.xlu0 %7086
      %v7088 = vsel %vm1588, %v7043, 0.0
      %7089 = vadd.xlane.f32.xlu0 %v7088
      %v7090 = vpop.xlane.xlu0 %7089
      %v7091 = vsel %vm1588, %v7045, 0.0
      %7092 = vadd.xlane.f32.xlu0 %v7091
      %v7093 = vpop.xlane.xlu0 %7092
      %v7094 = vrcp.pop %v7048
      %v7095 = vrcp.pop %v7051
      %v7096 = vrcp.pop %v7054
      %v7097 = vrcp.pop %v7057
      %v7098 = vrcp.pop %v7060
      %v7099 = vrcp.pop %v7063
      %v7100 = vrcp.pop %v7066
      %v7101 = vrcp.pop %v7069
      %v7102 = vrcp.pop %v7072
      %v7103 = vrcp.pop %v7075
      %v7104 = vrcp.pop %v7078
      %v7105 = vrcp.pop %v7081
      %v7106 = vrcp.pop %v7084
      %v7107 = vrcp.pop %v7087
      %v7108 = vrcp.pop %v7090
      %v7109 = vrcp.pop %v7093
      %v7110 = vmul.f32 %v7015, %v7094
      %v7111 = vmul.f32 %v7017, %v7095
      %v7112 = vmul.f32 %v7019, %v7096
      %v7113 = vmul.f32 %v7021, %v7097
      %v7114 = vmul.f32 %v7023, %v7098
      %v7115 = vmul.f32 %v7025, %v7099
      %v7116 = vmul.f32 %v7027, %v7100
      %v7117 = vmul.f32 %v7029, %v7101
      %v7118 = vmul.f32 %v7031, %v7102
      %v7119 = vmul.f32 %v7033, %v7103
      %v7120 = vmul.f32 %v7035, %v7104
      %v7121 = vmul.f32 %v7037, %v7105
      %v7122 = vmul.f32 %v7039, %v7106
      %v7123 = vmul.f32 %v7041, %v7107
      %v7124 = vmul.f32 %v7043, %v7108
      %v7125 = vmul.f32 %v7045, %v7109
      %v7126 = vpack.c.bf16 %v7110, %v7110
      %v7127 = vpack.c.bf16 %v7111, %v7111
      %v7128 = vpack.c.bf16 %v7112, %v7112
      %v7129 = vpack.c.bf16 %v7113, %v7113
      %v7130 = vpack.c.bf16 %v7114, %v7114
      %v7131 = vpack.c.bf16 %v7115, %v7115
      %v7132 = vpack.c.bf16 %v7116, %v7116
      %v7133 = vpack.c.bf16 %v7117, %v7117
      %v7134 = vpack.c.bf16 %v7118, %v7118
      %v7135 = vpack.c.bf16 %v7119, %v7119
      %v7136 = vpack.c.bf16 %v7120, %v7120
      %v7137 = vpack.c.bf16 %v7121, %v7121
      %v7138 = vpack.c.bf16 %v7122, %v7122
      %v7139 = vpack.c.bf16 %v7123, %v7123
      %v7140 = vpack.c.bf16 %v7124, %v7124
      %v7141 = vpack.c.bf16 %v7125, %v7125
      %7142 = vrot.lane.b32.xlu0 %v3591, 104
      %v7143 = vpop.permute.xlu0 %7142
      %v7145 = vsel %vm851, %v7126, 0
      %v7148 = vsel %vm1784, %v7143, 0
      %7150 = vmatprep.subr.bf16.mxu0 0
      %7151 = vmatpush1.bf16.msra.mxu0 %v7148
      %7152 = vmatprep.subr.bf16.mxu0 0
      %7153 = vmatpush1.bf16.msra.mxu0 0
      %7154 = vmatprep.subr.bf16.mxu0 0
      %7155 = vmatpush1.bf16.msra.mxu0 0
      %7156 = vmatprep.subr.bf16.mxu0 0
      %7157 = vmatpush1.bf16.msra.mxu0 0
      %7158 = vmatprep.subr.bf16.mxu0 0
      %7159 = vmatpush1.bf16.msra.mxu0 0
      %7160 = vmatprep.subr.bf16.mxu0 0
      %7161 = vmatpush1.bf16.msra.mxu0 0
      %7162 = vmatprep.subr.bf16.mxu0 0
      %7163 = vmatpush1.bf16.msra.mxu0 0
      %7164 = vmatprep.subr.bf16.mxu0 0
      %7165 = vmatpush1.bf16.msra.mxu0 0
      %7166 = vmatprep.subr.bf16.mxu0 0
      %7167 = vmatpush1.bf16.msra.mxu0 0
      %7168 = vmatprep.subr.bf16.mxu0 0
      %7169 = vmatpush1.bf16.msra.mxu0 0
      %7170 = vmatprep.subr.bf16.mxu0 0
      %7171 = vmatpush1.bf16.msra.mxu0 0
      %7172 = vmatprep.subr.bf16.mxu0 0
      %7173 = vmatpush1.bf16.msra.mxu0 0
      %7174 = vmatprep.subr.bf16.mxu0 0
      %7175 = vmatpush1.bf16.msra.mxu0 0
      %7176 = vmatprep.subr.bf16.mxu0 0
      %7177 = vmatpush1.bf16.msra.mxu0 0
      %7178 = vmatprep.subr.bf16.mxu0 0
      %7179 = vmatpush1.bf16.msra.mxu0 0
      %7180 = vmatprep.subr.bf16.mxu0 0
      %7181 = vmatpush1.bf16.msra.mxu0 0
      %7182 = vmatprep.mubr.bf16.mxu0 0
      %7183 = vmatmul.mubr.bf16.gmra.mrb[0].mxu0 %v7145
      %v7184 = vpop.f32.mrb[0].mxu0
      %v7185 = vadd.f32 0.0, %v7184
      %v7186 = vpop.f32.mrb[0].mxu0
      %v7187 = vpop.f32.mrb[0].mxu0
      %v7188 = vpop.f32.mrb[0].mxu0
      %7189 = vdwg.mxu0
      %7190 = vrot.lane.b32.xlu0 %v3641, 104
      %v7191 = vpop.permute.xlu0 %7190
      %v7193 = vsel %vm851, %v7127, 0
      %v7196 = vsel %vm1784, %v7191, 0
      %7198 = vmatprep.subr.bf16.mxu0 0
      %7199 = vmatpush1.bf16.msra.mxu0 %v7196
      %7200 = vmatprep.subr.bf16.mxu0 0
      %7201 = vmatpush1.bf16.msra.mxu0 0
      %7202 = vmatprep.subr.bf16.mxu0 0
      %7203 = vmatpush1.bf16.msra.mxu0 0
      %7204 = vmatprep.subr.bf16.mxu0 0
      %7205 = vmatpush1.bf16.msra.mxu0 0
      %7206 = vmatprep.subr.bf16.mxu0 0
      %7207 = vmatpush1.bf16.msra.mxu0 0
      %7208 = vmatprep.subr.bf16.mxu0 0
      %7209 = vmatpush1.bf16.msra.mxu0 0
      %7210 = vmatprep.subr.bf16.mxu0 0
      %7211 = vmatpush1.bf16.msra.mxu0 0
      %7212 = vmatprep.subr.bf16.mxu0 0
      %7213 = vmatpush1.bf16.msra.mxu0 0
      %7214 = vmatprep.subr.bf16.mxu0 0
      %7215 = vmatpush1.bf16.msra.mxu0 0
      %7216 = vmatprep.subr.bf16.mxu0 0
      %7217 = vmatpush1.bf16.msra.mxu0 0
      %7218 = vmatprep.subr.bf16.mxu0 0
      %7219 = vmatpush1.bf16.msra.mxu0 0
      %7220 = vmatprep.subr.bf16.mxu0 0
      %7221 = vmatpush1.bf16.msra.mxu0 0
      %7222 = vmatprep.subr.bf16.mxu0 0
      %7223 = vmatpush1.bf16.msra.mxu0 0
      %7224 = vmatprep.subr.bf16.mxu0 0
      %7225 = vmatpush1.bf16.msra.mxu0 0
      %7226 = vmatprep.subr.bf16.mxu0 0
      %7227 = vmatpush1.bf16.msra.mxu0 0
      %7228 = vmatprep.subr.bf16.mxu0 0
      %7229 = vmatpush1.bf16.msra.mxu0 0
      %7230 = vmatprep.mubr.bf16.mxu0 0
      %7231 = vmatmul.mubr.bf16.gmra.mrb[0].mxu0 %v7193
      %v7232 = vpop.f32.mrb[0].mxu0
      %v7233 = vadd.f32 0.0, %v7232
      %v7234 = vpop.f32.mrb[0].mxu0
      %v7235 = vpop.f32.mrb[0].mxu0
      %v7236 = vpop.f32.mrb[0].mxu0
      %7237 = vdwg.mxu0
      %7238 = vrot.lane.b32.xlu0 %v3691, 104
      %v7239 = vpop.permute.xlu0 %7238
      %v7241 = vsel %vm851, %v7128, 0
      %v7244 = vsel %vm1784, %v7239, 0
      %7246 = vmatprep.subr.bf16.mxu0 0
      %7247 = vmatpush1.bf16.msra.mxu0 %v7244
      %7248 = vmatprep.subr.bf16.mxu0 0
      %7249 = vmatpush1.bf16.msra.mxu0 0
      %7250 = vmatprep.subr.bf16.mxu0 0
      %7251 = vmatpush1.bf16.msra.mxu0 0
      %7252 = vmatprep.subr.bf16.mxu0 0
      %7253 = vmatpush1.bf16.msra.mxu0 0
      %7254 = vmatprep.subr.bf16.mxu0 0
      %7255 = vmatpush1.bf16.msra.mxu0 0
      %7256 = vmatprep.subr.bf16.mxu0 0
      %7257 = vmatpush1.bf16.msra.mxu0 0
      %7258 = vmatprep.subr.bf16.mxu0 0
      %7259 = vmatpush1.bf16.msra.mxu0 0
      %7260 = vmatprep.subr.bf16.mxu0 0
      %7261 = vmatpush1.bf16.msra.mxu0 0
      %7262 = vmatprep.subr.bf16.mxu0 0
      %7263 = vmatpush1.bf16.msra.mxu0 0
      %7264 = vmatprep.subr.bf16.mxu0 0
      %7265 = vmatpush1.bf16.msra.mxu0 0
      %7266 = vmatprep.subr.bf16.mxu0 0
      %7267 = vmatpush1.bf16.msra.mxu0 0
      %7268 = vmatprep.subr.bf16.mxu0 0
      %7269 = vmatpush1.bf16.msra.mxu0 0
      %7270 = vmatprep.subr.bf16.mxu0 0
      %7271 = vmatpush1.bf16.msra.mxu0 0
      %7272 = vmatprep.subr.bf16.mxu0 0
      %7273 = vmatpush1.bf16.msra.mxu0 0
      %7274 = vmatprep.subr.bf16.mxu0 0
      %7275 = vmatpush1.bf16.msra.mxu0 0
      %7276 = vmatprep.subr.bf16.mxu0 0
      %7277 = vmatpush1.bf16.msra.mxu0 0
      %7278 = vmatprep.mubr.bf16.mxu0 0
      %7279 = vmatmul.mubr.bf16.gmra.mrb[0].mxu0 %v7241
      %v7280 = vpop.f32.mrb[0].mxu0
      %v7281 = vadd.f32 0.0, %v7280
      %v7282 = vpop.f32.mrb[0].mxu0
      %v7283 = vpop.f32.mrb[0].mxu0
      %v7284 = vpop.f32.mrb[0].mxu0
      %7285 = vdwg.mxu0
      %7286 = vrot.lane.b32.xlu0 %v3741, 104
      %v7287 = vpop.permute.xlu0 %7286
      %v7289 = vsel %vm851, %v7129, 0
      %v7292 = vsel %vm1784, %v7287, 0
      %7294 = vmatprep.subr.bf16.mxu0 0
      %7295 = vmatpush1.bf16.msra.mxu0 %v7292
      %7296 = vmatprep.subr.bf16.mxu0 0
      %7297 = vmatpush1.bf16.msra.mxu0 0
      %7298 = vmatprep.subr.bf16.mxu0 0
      %7299 = vmatpush1.bf16.msra.mxu0 0
      %7300 = vmatprep.subr.bf16.mxu0 0
      %7301 = vmatpush1.bf16.msra.mxu0 0
      %7302 = vmatprep.subr.bf16.mxu0 0
      %7303 = vmatpush1.bf16.msra.mxu0 0
      %7304 = vmatprep.subr.bf16.mxu0 0
      %7305 = vmatpush1.bf16.msra.mxu0 0
      %7306 = vmatprep.subr.bf16.mxu0 0
      %7307 = vmatpush1.bf16.msra.mxu0 0
      %7308 = vmatprep.subr.bf16.mxu0 0
      %7309 = vmatpush1.bf16.msra.mxu0 0
      %7310 = vmatprep.subr.bf16.mxu0 0
      %7311 = vmatpush1.bf16.msra.mxu0 0
      %7312 = vmatprep.subr.bf16.mxu0 0
      %7313 = vmatpush1.bf16.msra.mxu0 0
      %7314 = vmatprep.subr.bf16.mxu0 0
      %7315 = vmatpush1.bf16.msra.mxu0 0
      %7316 = vmatprep.subr.bf16.mxu0 0
      %7317 = vmatpush1.bf16.msra.mxu0 0
      %7318 = vmatprep.subr.bf16.mxu0 0
      %7319 = vmatpush1.bf16.msra.mxu0 0
      %7320 = vmatprep.subr.bf16.mxu0 0
      %7321 = vmatpush1.bf16.msra.mxu0 0
      %7322 = vmatprep.subr.bf16.mxu0 0
      %7323 = vmatpush1.bf16.msra.mxu0 0
      %7324 = vmatprep.subr.bf16.mxu0 0
      %7325 = vmatpush1.bf16.msra.mxu0 0
      %7326 = vmatprep.mubr.bf16.mxu0 0
      %7327 = vmatmul.mubr.bf16.gmra.mrb[0].mxu0 %v7289
      %v7328 = vpop.f32.mrb[0].mxu0
      %v7329 = vadd.f32 0.0, %v7328
      %v7330 = vpop.f32.mrb[0].mxu0
      %v7331 = vpop.f32.mrb[0].mxu0
      %v7332 = vpop.f32.mrb[0].mxu0
      %7333 = vdwg.mxu0
      %7334 = vrot.lane.b32.xlu0 %v3791, 104
      %v7335 = vpop.permute.xlu0 %7334
      %v7337 = vsel %vm851, %v7130, 0
      %v7340 = vsel %vm1784, %v7335, 0
      %7342 = vmatprep.subr.bf16.mxu0 0
      %7343 = vmatpush1.bf16.msra.mxu0 %v7340
      %7344 = vmatprep.subr.bf16.mxu0 0
      %7345 = vmatpush1.bf16.msra.mxu0 0
      %7346 = vmatprep.subr.bf16.mxu0 0
      %7347 = vmatpush1.bf16.msra.mxu0 0
      %7348 = vmatprep.subr.bf16.mxu0 0
      %7349 = vmatpush1.bf16.msra.mxu0 0
      %7350 = vmatprep.subr.bf16.mxu0 0
      %7351 = vmatpush1.bf16.msra.mxu0 0
      %7352 = vmatprep.subr.bf16.mxu0 0
      %7353 = vmatpush1.bf16.msra.mxu0 0
      %7354 = vmatprep.subr.bf16.mxu0 0
      %7355 = vmatpush1.bf16.msra.mxu0 0
      %7356 = vmatprep.subr.bf16.mxu0 0
      %7357 = vmatpush1.bf16.msra.mxu0 0
      %7358 = vmatprep.subr.bf16.mxu0 0
      %7359 = vmatpush1.bf16.msra.mxu0 0
      %7360 = vmatprep.subr.bf16.mxu0 0
      %7361 = vmatpush1.bf16.msra.mxu0 0
      %7362 = vmatprep.subr.bf16.mxu0 0
      %7363 = vmatpush1.bf16.msra.mxu0 0
      %7364 = vmatprep.subr.bf16.mxu0 0
      %7365 = vmatpush1.bf16.msra.mxu0 0
      %7366 = vmatprep.subr.bf16.mxu0 0
      %7367 = vmatpush1.bf16.msra.mxu0 0
      %7368 = vmatprep.subr.bf16.mxu0 0
      %7369 = vmatpush1.bf16.msra.mxu0 0
      %7370 = vmatprep.subr.bf16.mxu0 0
      %7371 = vmatpush1.bf16.msra.mxu0 0
      %7372 = vmatprep.subr.bf16.mxu0 0
      %7373 = vmatpush1.bf16.msra.mxu0 0
      %7374 = vmatprep.mubr.bf16.mxu0 0
      %7375 = vmatmul.mubr.bf16.gmra.mrb[0].mxu0 %v7337
      %v7376 = vpop.f32.mrb[0].mxu0
      %v7377 = vadd.f32 0.0, %v7376
      %v7378 = vpop.f32.mrb[0].mxu0
      %v7379 = vpop.f32.mrb[0].mxu0
      %v7380 = vpop.f32.mrb[0].mxu0
      %7381 = vdwg.mxu0
      %7382 = vrot.lane.b32.xlu0 %v3841, 104
      %v7383 = vpop.permute.xlu0 %7382
      %v7385 = vsel %vm851, %v7131, 0
      %v7388 = vsel %vm1784, %v7383, 0
      %7390 = vmatprep.subr.bf16.mxu0 0
      %7391 = vmatpush1.bf16.msra.mxu0 %v7388
      %7392 = vmatprep.subr.bf16.mxu0 0
      %7393 = vmatpush1.bf16.msra.mxu0 0
      %7394 = vmatprep.subr.bf16.mxu0 0
      %7395 = vmatpush1.bf16.msra.mxu0 0
      %7396 = vmatprep.subr.bf16.mxu0 0
      %7397 = vmatpush1.bf16.msra.mxu0 0
      %7398 = vmatprep.subr.bf16.mxu0 0
      %7399 = vmatpush1.bf16.msra.mxu0 0
      %7400 = vmatprep.subr.bf16.mxu0 0
      %7401 = vmatpush1.bf16.msra.mxu0 0
      %7402 = vmatprep.subr.bf16.mxu0 0
      %7403 = vmatpush1.bf16.msra.mxu0 0
      %7404 = vmatprep.subr.bf16.mxu0 0
      %7405 = vmatpush1.bf16.msra.mxu0 0
      %7406 = vmatprep.subr.bf16.mxu0 0
      %7407 = vmatpush1.bf16.msra.mxu0 0
      %7408 = vmatprep.subr.bf16.mxu0 0
      %7409 = vmatpush1.bf16.msra.mxu0 0
      %7410 = vmatprep.subr.bf16.mxu0 0
      %7411 = vmatpush1.bf16.msra.mxu0 0
      %7412 = vmatprep.subr.bf16.mxu0 0
      %7413 = vmatpush1.bf16.msra.mxu0 0
      %7414 = vmatprep.subr.bf16.mxu0 0
      %7415 = vmatpush1.bf16.msra.mxu0 0
      %7416 = vmatprep.subr.bf16.mxu0 0
      %7417 = vmatpush1.bf16.msra.mxu0 0
      %7418 = vmatprep.subr.bf16.mxu0 0
      %7419 = vmatpush1.bf16.msra.mxu0 0
      %7420 = vmatprep.subr.bf16.mxu0 0
      %7421 = vmatpush1.bf16.msra.mxu0 0
      %7422 = vmatprep.mubr.bf16.mxu0 0
      %7423 = vmatmul.mubr.bf16.gmra.mrb[0].mxu0 %v7385
      %v7424 = vpop.f32.mrb[0].mxu0
      %v7425 = vadd.f32 0.0, %v7424
      %v7426 = vpop.f32.mrb[0].mxu0
      %v7427 = vpop.f32.mrb[0].mxu0
      %v7428 = vpop.f32.mrb[0].mxu0
      %7429 = vdwg.mxu0
      %7430 = vrot.lane.b32.xlu0 %v3891, 104
      %v7431 = vpop.permute.xlu0 %7430
      %v7433 = vsel %vm851, %v7132, 0
      %v7436 = vsel %vm1784, %v7431, 0
      %7438 = vmatprep.subr.bf16.mxu0 0
      %7439 = vmatpush1.bf16.msra.mxu0 %v7436
      %7440 = vmatprep.subr.bf16.mxu0 0
      %7441 = vmatpush1.bf16.msra.mxu0 0
      %7442 = vmatprep.subr.bf16.mxu0 0
      %7443 = vmatpush1.bf16.msra.mxu0 0
      %7444 = vmatprep.subr.bf16.mxu0 0
      %7445 = vmatpush1.bf16.msra.mxu0 0
      %7446 = vmatprep.subr.bf16.mxu0 0
      %7447 = vmatpush1.bf16.msra.mxu0 0
      %7448 = vmatprep.subr.bf16.mxu0 0
      %7449 = vmatpush1.bf16.msra.mxu0 0
      %7450 = vmatprep.subr.bf16.mxu0 0
      %7451 = vmatpush1.bf16.msra.mxu0 0
      %7452 = vmatprep.subr.bf16.mxu0 0
      %7453 = vmatpush1.bf16.msra.mxu0 0
      %7454 = vmatprep.subr.bf16.mxu0 0
      %7455 = vmatpush1.bf16.msra.mxu0 0
      %7456 = vmatprep.subr.bf16.mxu0 0
      %7457 = vmatpush1.bf16.msra.mxu0 0
      %7458 = vmatprep.subr.bf16.mxu0 0
      %7459 = vmatpush1.bf16.msra.mxu0 0
      %7460 = vmatprep.subr.bf16.mxu0 0
      %7461 = vmatpush1.bf16.msra.mxu0 0
      %7462 = vmatprep.subr.bf16.mxu0 0
      %7463 = vmatpush1.bf16.msra.mxu0 0
      %7464 = vmatprep.subr.bf16.mxu0 0
      %7465 = vmatpush1.bf16.msra.mxu0 0
      %7466 = vmatprep.subr.bf16.mxu0 0
      %7467 = vmatpush1.bf16.msra.mxu0 0
      %7468 = vmatprep.subr.bf16.mxu0 0
      %7469 = vmatpush1.bf16.msra.mxu0 0
      %7470 = vmatprep.mubr.bf16.mxu0 0
      %7471 = vmatmul.mubr.bf16.gmra.mrb[0].mxu0 %v7433
      %v7472 = vpop.f32.mrb[0].mxu0
      %v7473 = vadd.f32 0.0, %v7472
      %v7474 = vpop.f32.mrb[0].mxu0
      %v7475 = vpop.f32.mrb[0].mxu0
      %v7476 = vpop.f32.mrb[0].mxu0
      %7477 = vdwg.mxu0
      %7478 = vrot.lane.b32.xlu0 %v3941, 104
      %v7479 = vpop.permute.xlu0 %7478
      %v7481 = vsel %vm851, %v7133, 0
      %v7484 = vsel %vm1784, %v7479, 0
      %7486 = vmatprep.subr.bf16.mxu0 0
      %7487 = vmatpush1.bf16.msra.mxu0 %v7484
      %7488 = vmatprep.subr.bf16.mxu0 0
      %7489 = vmatpush1.bf16.msra.mxu0 0
      %7490 = vmatprep.subr.bf16.mxu0 0
      %7491 = vmatpush1.bf16.msra.mxu0 0
      %7492 = vmatprep.subr.bf16.mxu0 0
      %7493 = vmatpush1.bf16.msra.mxu0 0
      %7494 = vmatprep.subr.bf16.mxu0 0
      %7495 = vmatpush1.bf16.msra.mxu0 0
      %7496 = vmatprep.subr.bf16.mxu0 0
      %7497 = vmatpush1.bf16.msra.mxu0 0
      %7498 = vmatprep.subr.bf16.mxu0 0
      %7499 = vmatpush1.bf16.msra.mxu0 0
      %7500 = vmatprep.subr.bf16.mxu0 0
      %7501 = vmatpush1.bf16.msra.mxu0 0
      %7502 = vmatprep.subr.bf16.mxu0 0
      %7503 = vmatpush1.bf16.msra.mxu0 0
      %7504 = vmatprep.subr.bf16.mxu0 0
      %7505 = vmatpush1.bf16.msra.mxu0 0
      %7506 = vmatprep.subr.bf16.mxu0 0
      %7507 = vmatpush1.bf16.msra.mxu0 0
      %7508 = vmatprep.subr.bf16.mxu0 0
      %7509 = vmatpush1.bf16.msra.mxu0 0
      %7510 = vmatprep.subr.bf16.mxu0 0
      %7511 = vmatpush1.bf16.msra.mxu0 0
      %7512 = vmatprep.subr.bf16.mxu0 0
      %7513 = vmatpush1.bf16.msra.mxu0 0
      %7514 = vmatprep.subr.bf16.mxu0 0
      %7515 = vmatpush1.bf16.msra.mxu0 0
      %7516 = vmatprep.subr.bf16.mxu0 0
      %7517 = vmatpush1.bf16.msra.mxu0 0
      %7518 = vmatprep.mubr.bf16.mxu0 0
      %7519 = vmatmul.mubr.bf16.gmra.mrb[0].mxu0 %v7481
      %v7520 = vpop.f32.mrb[0].mxu0
      %v7521 = vadd.f32 0.0, %v7520
      %v7522 = vpop.f32.mrb[0].mxu0
      %v7523 = vpop.f32.mrb[0].mxu0
      %v7524 = vpop.f32.mrb[0].mxu0
      %7525 = vdwg.mxu0
      %7526 = vrot.lane.b32.xlu0 %v3991, 104
      %v7527 = vpop.permute.xlu0 %7526
      %v7529 = vsel %vm851, %v7134, 0
      %v7532 = vsel %vm1784, %v7527, 0
      %7534 = vmatprep.subr.bf16.mxu0 0
      %7535 = vmatpush1.bf16.msra.mxu0 %v7532
      %7536 = vmatprep.subr.bf16.mxu0 0
      %7537 = vmatpush1.bf16.msra.mxu0 0
      %7538 = vmatprep.subr.bf16.mxu0 0
      %7539 = vmatpush1.bf16.msra.mxu0 0
      %7540 = vmatprep.subr.bf16.mxu0 0
      %7541 = vmatpush1.bf16.msra.mxu0 0
      %7542 = vmatprep.subr.bf16.mxu0 0
      %7543 = vmatpush1.bf16.msra.mxu0 0
      %7544 = vmatprep.subr.bf16.mxu0 0
      %7545 = vmatpush1.bf16.msra.mxu0 0
      %7546 = vmatprep.subr.bf16.mxu0 0
      %7547 = vmatpush1.bf16.msra.mxu0 0
      %7548 = vmatprep.subr.bf16.mxu0 0
      %7549 = vmatpush1.bf16.msra.mxu0 0
      %7550 = vmatprep.subr.bf16.mxu0 0
      %7551 = vmatpush1.bf16.msra.mxu0 0
      %7552 = vmatprep.subr.bf16.mxu0 0
      %7553 = vmatpush1.bf16.msra.mxu0 0
      %7554 = vmatprep.subr.bf16.mxu0 0
      %7555 = vmatpush1.bf16.msra.mxu0 0
      %7556 = vmatprep.subr.bf16.mxu0 0
      %7557 = vmatpush1.bf16.msra.mxu0 0
      %7558 = vmatprep.subr.bf16.mxu0 0
      %7559 = vmatpush1.bf16.msra.mxu0 0
      %7560 = vmatprep.subr.bf16.mxu0 0
      %7561 = vmatpush1.bf16.msra.mxu0 0
      %7562 = vmatprep.subr.bf16.mxu0 0
      %7563 = vmatpush1.bf16.msra.mxu0 0
      %7564 = vmatprep.subr.bf16.mxu0 0
      %7565 = vmatpush1.bf16.msra.mxu0 0
      %7566 = vmatprep.mubr.bf16.mxu0 0
      %7567 = vmatmul.mubr.bf16.gmra.mrb[0].mxu0 %v7529
      %v7568 = vpop.f32.mrb[0].mxu0
      %v7569 = vadd.f32 0.0, %v7568
      %v7570 = vpop.f32.mrb[0].mxu0
      %v7571 = vpop.f32.mrb[0].mxu0
      %v7572 = vpop.f32.mrb[0].mxu0
      %7573 = vdwg.mxu0
      %7574 = vrot.lane.b32.xlu0 %v4041, 104
      %v7575 = vpop.permute.xlu0 %7574
      %v7577 = vsel %vm851, %v7135, 0
      %v7580 = vsel %vm1784, %v7575, 0
      %7582 = vmatprep.subr.bf16.mxu0 0
      %7583 = vmatpush1.bf16.msra.mxu0 %v7580
      %7584 = vmatprep.subr.bf16.mxu0 0
      %7585 = vmatpush1.bf16.msra.mxu0 0
      %7586 = vmatprep.subr.bf16.mxu0 0
      %7587 = vmatpush1.bf16.msra.mxu0 0
      %7588 = vmatprep.subr.bf16.mxu0 0
      %7589 = vmatpush1.bf16.msra.mxu0 0
      %7590 = vmatprep.subr.bf16.mxu0 0
      %7591 = vmatpush1.bf16.msra.mxu0 0
      %7592 = vmatprep.subr.bf16.mxu0 0
      %7593 = vmatpush1.bf16.msra.mxu0 0
      %7594 = vmatprep.subr.bf16.mxu0 0
      %7595 = vmatpush1.bf16.msra.mxu0 0
      %7596 = vmatprep.subr.bf16.mxu0 0
      %7597 = vmatpush1.bf16.msra.mxu0 0
      %7598 = vmatprep.subr.bf16.mxu0 0
      %7599 = vmatpush1.bf16.msra.mxu0 0
      %7600 = vmatprep.subr.bf16.mxu0 0
      %7601 = vmatpush1.bf16.msra.mxu0 0
      %7602 = vmatprep.subr.bf16.mxu0 0
      %7603 = vmatpush1.bf16.msra.mxu0 0
      %7604 = vmatprep.subr.bf16.mxu0 0
      %7605 = vmatpush1.bf16.msra.mxu0 0
      %7606 = vmatprep.subr.bf16.mxu0 0
      %7607 = vmatpush1.bf16.msra.mxu0 0
      %7608 = vmatprep.subr.bf16.mxu0 0
      %7609 = vmatpush1.bf16.msra.mxu0 0
      %7610 = vmatprep.subr.bf16.mxu0 0
      %7611 = vmatpush1.bf16.msra.mxu0 0
      %7612 = vmatprep.subr.bf16.mxu0 0
      %7613 = vmatpush1.bf16.msra.mxu0 0
      %7614 = vmatprep.mubr.bf16.mxu0 0
      %7615 = vmatmul.mubr.bf16.gmra.mrb[0].mxu0 %v7577
      %v7616 = vpop.f32.mrb[0].mxu0
      %v7617 = vadd.f32 0.0, %v7616
      %v7618 = vpop.f32.mrb[0].mxu0
      %v7619 = vpop.f32.mrb[0].mxu0
      %v7620 = vpop.f32.mrb[0].mxu0
      %7621 = vdwg.mxu0
      %7622 = vrot.lane.b32.xlu0 %v4091, 104
      %v7623 = vpop.permute.xlu0 %7622
      %v7625 = vsel %vm851, %v7136, 0
      %v7628 = vsel %vm1784, %v7623, 0
      %7630 = vmatprep.subr.bf16.mxu0 0
      %7631 = vmatpush1.bf16.msra.mxu0 %v7628
      %7632 = vmatprep.subr.bf16.mxu0 0
      %7633 = vmatpush1.bf16.msra.mxu0 0
      %7634 = vmatprep.subr.bf16.mxu0 0
      %7635 = vmatpush1.bf16.msra.mxu0 0
      %7636 = vmatprep.subr.bf16.mxu0 0
      %7637 = vmatpush1.bf16.msra.mxu0 0
      %7638 = vmatprep.subr.bf16.mxu0 0
      %7639 = vmatpush1.bf16.msra.mxu0 0
      %7640 = vmatprep.subr.bf16.mxu0 0
      %7641 = vmatpush1.bf16.msra.mxu0 0
      %7642 = vmatprep.subr.bf16.mxu0 0
      %7643 = vmatpush1.bf16.msra.mxu0 0
      %7644 = vmatprep.subr.bf16.mxu0 0
      %7645 = vmatpush1.bf16.msra.mxu0 0
      %7646 = vmatprep.subr.bf16.mxu0 0
      %7647 = vmatpush1.bf16.msra.mxu0 0
      %7648 = vmatprep.subr.bf16.mxu0 0
      %7649 = vmatpush1.bf16.msra.mxu0 0
      %7650 = vmatprep.subr.bf16.mxu0 0
      %7651 = vmatpush1.bf16.msra.mxu0 0
      %7652 = vmatprep.subr.bf16.mxu0 0
      %7653 = vmatpush1.bf16.msra.mxu0 0
      %7654 = vmatprep.subr.bf16.mxu0 0
      %7655 = vmatpush1.bf16.msra.mxu0 0
      %7656 = vmatprep.subr.bf16.mxu0 0
      %7657 = vmatpush1.bf16.msra.mxu0 0
      %7658 = vmatprep.subr.bf16.mxu0 0
      %7659 = vmatpush1.bf16.msra.mxu0 0
      %7660 = vmatprep.subr.bf16.mxu0 0
      %7661 = vmatpush1.bf16.msra.mxu0 0
      %7662 = vmatprep.mubr.bf16.mxu0 0
      %7663 = vmatmul.mubr.bf16.gmra.mrb[0].mxu0 %v7625
      %v7664 = vpop.f32.mrb[0].mxu0
      %v7665 = vadd.f32 0.0, %v7664
      %v7666 = vpop.f32.mrb[0].mxu0
      %v7667 = vpop.f32.mrb[0].mxu0
      %v7668 = vpop.f32.mrb[0].mxu0
      %7669 = vdwg.mxu0
      %7670 = vrot.lane.b32.xlu0 %v4141, 104
      %v7671 = vpop.permute.xlu0 %7670
      %v7673 = vsel %vm851, %v7137, 0
      %v7676 = vsel %vm1784, %v7671, 0
      %7678 = vmatprep.subr.bf16.mxu0 0
      %7679 = vmatpush1.bf16.msra.mxu0 %v7676
      %7680 = vmatprep.subr.bf16.mxu0 0
      %7681 = vmatpush1.bf16.msra.mxu0 0
      %7682 = vmatprep.subr.bf16.mxu0 0
      %7683 = vmatpush1.bf16.msra.mxu0 0
      %7684 = vmatprep.subr.bf16.mxu0 0
      %7685 = vmatpush1.bf16.msra.mxu0 0
      %7686 = vmatprep.subr.bf16.mxu0 0
      %7687 = vmatpush1.bf16.msra.mxu0 0
      %7688 = vmatprep.subr.bf16.mxu0 0
      %7689 = vmatpush1.bf16.msra.mxu0 0
      %7690 = vmatprep.subr.bf16.mxu0 0
      %7691 = vmatpush1.bf16.msra.mxu0 0
      %7692 = vmatprep.subr.bf16.mxu0 0
      %7693 = vmatpush1.bf16.msra.mxu0 0
      %7694 = vmatprep.subr.bf16.mxu0 0
      %7695 = vmatpush1.bf16.msra.mxu0 0
      %7696 = vmatprep.subr.bf16.mxu0 0
      %7697 = vmatpush1.bf16.msra.mxu0 0
      %7698 = vmatprep.subr.bf16.mxu0 0
      %7699 = vmatpush1.bf16.msra.mxu0 0
      %7700 = vmatprep.subr.bf16.mxu0 0
      %7701 = vmatpush1.bf16.msra.mxu0 0
      %7702 = vmatprep.subr.bf16.mxu0 0
      %7703 = vmatpush1.bf16.msra.mxu0 0
      %7704 = vmatprep.subr.bf16.mxu0 0
      %7705 = vmatpush1.bf16.msra.mxu0 0
      %7706 = vmatprep.subr.bf16.mxu0 0
      %7707 = vmatpush1.bf16.msra.mxu0 0
      %7708 = vmatprep.subr.bf16.mxu0 0
      %7709 = vmatpush1.bf16.msra.mxu0 0
      %7710 = vmatprep.mubr.bf16.mxu0 0
      %7711 = vmatmul.mubr.bf16.gmra.mrb[0].mxu0 %v7673
      %v7712 = vpop.f32.mrb[0].mxu0
      %v7713 = vadd.f32 0.0, %v7712
      %v7714 = vpop.f32.mrb[0].mxu0
      %v7715 = vpop.f32.mrb[0].mxu0
      %v7716 = vpop.f32.mrb[0].mxu0
      %7717 = vdwg.mxu0
      %7718 = vrot.lane.b32.xlu0 %v4191, 104
      %v7719 = vpop.permute.xlu0 %7718
      %v7721 = vsel %vm851, %v7138, 0
      %v7724 = vsel %vm1784, %v7719, 0
      %7726 = vmatprep.subr.bf16.mxu0 0
      %7727 = vmatpush1.bf16.msra.mxu0 %v7724
      %7728 = vmatprep.subr.bf16.mxu0 0
      %7729 = vmatpush1.bf16.msra.mxu0 0
      %7730 = vmatprep.subr.bf16.mxu0 0
      %7731 = vmatpush1.bf16.msra.mxu0 0
      %7732 = vmatprep.subr.bf16.mxu0 0
      %7733 = vmatpush1.bf16.msra.mxu0 0
      %7734 = vmatprep.subr.bf16.mxu0 0
      %7735 = vmatpush1.bf16.msra.mxu0 0
      %7736 = vmatprep.subr.bf16.mxu0 0
      %7737 = vmatpush1.bf16.msra.mxu0 0
      %7738 = vmatprep.subr.bf16.mxu0 0
      %7739 = vmatpush1.bf16.msra.mxu0 0
      %7740 = vmatprep.subr.bf16.mxu0 0
      %7741 = vmatpush1.bf16.msra.mxu0 0
      %7742 = vmatprep.subr.bf16.mxu0 0
      %7743 = vmatpush1.bf16.msra.mxu0 0
      %7744 = vmatprep.subr.bf16.mxu0 0
      %7745 = vmatpush1.bf16.msra.mxu0 0
      %7746 = vmatprep.subr.bf16.mxu0 0
      %7747 = vmatpush1.bf16.msra.mxu0 0
      %7748 = vmatprep.subr.bf16.mxu0 0
      %7749 = vmatpush1.bf16.msra.mxu0 0
      %7750 = vmatprep.subr.bf16.mxu0 0
      %7751 = vmatpush1.bf16.msra.mxu0 0
      %7752 = vmatprep.subr.bf16.mxu0 0
      %7753 = vmatpush1.bf16.msra.mxu0 0
      %7754 = vmatprep.subr.bf16.mxu0 0
      %7755 = vmatpush1.bf16.msra.mxu0 0
      %7756 = vmatprep.subr.bf16.mxu0 0
      %7757 = vmatpush1.bf16.msra.mxu0 0
      %7758 = vmatprep.mubr.bf16.mxu0 0
      %7759 = vmatmul.mubr.bf16.gmra.mrb[0].mxu0 %v7721
      %v7760 = vpop.f32.mrb[0].mxu0
      %v7761 = vadd.f32 0.0, %v7760
      %v7762 = vpop.f32.mrb[0].mxu0
      %v7763 = vpop.f32.mrb[0].mxu0
      %v7764 = vpop.f32.mrb[0].mxu0
      %7765 = vdwg.mxu0
      %7766 = vrot.lane.b32.xlu0 %v4241, 104
      %v7767 = vpop.permute.xlu0 %7766
      %v7769 = vsel %vm851, %v7139, 0
      %v7772 = vsel %vm1784, %v7767, 0
      %7774 = vmatprep.subr.bf16.mxu0 0
      %7775 = vmatpush1.bf16.msra.mxu0 %v7772
      %7776 = vmatprep.subr.bf16.mxu0 0
      %7777 = vmatpush1.bf16.msra.mxu0 0
      %7778 = vmatprep.subr.bf16.mxu0 0
      %7779 = vmatpush1.bf16.msra.mxu0 0
      %7780 = vmatprep.subr.bf16.mxu0 0
      %7781 = vmatpush1.bf16.msra.mxu0 0
      %7782 = vmatprep.subr.bf16.mxu0 0
      %7783 = vmatpush1.bf16.msra.mxu0 0
      %7784 = vmatprep.subr.bf16.mxu0 0
      %7785 = vmatpush1.bf16.msra.mxu0 0
      %7786 = vmatprep.subr.bf16.mxu0 0
      %7787 = vmatpush1.bf16.msra.mxu0 0
      %7788 = vmatprep.subr.bf16.mxu0 0
      %7789 = vmatpush1.bf16.msra.mxu0 0
      %7790 = vmatprep.subr.bf16.mxu0 0
      %7791 = vmatpush1.bf16.msra.mxu0 0
      %7792 = vmatprep.subr.bf16.mxu0 0
      %7793 = vmatpush1.bf16.msra.mxu0 0
      %7794 = vmatprep.subr.bf16.mxu0 0
      %7795 = vmatpush1.bf16.msra.mxu0 0
      %7796 = vmatprep.subr.bf16.mxu0 0
      %7797 = vmatpush1.bf16.msra.mxu0 0
      %7798 = vmatprep.subr.bf16.mxu0 0
      %7799 = vmatpush1.bf16.msra.mxu0 0
      %7800 = vmatprep.subr.bf16.mxu0 0
      %7801 = vmatpush1.bf16.msra.mxu0 0
      %7802 = vmatprep.subr.bf16.mxu0 0
      %7803 = vmatpush1.bf16.msra.mxu0 0
      %7804 = vmatprep.subr.bf16.mxu0 0
      %7805 = vmatpush1.bf16.msra.mxu0 0
      %7806 = vmatprep.mubr.bf16.mxu0 0
      %7807 = vmatmul.mubr.bf16.gmra.mrb[0].mxu0 %v7769
      %v7808 = vpop.f32.mrb[0].mxu0
      %v7809 = vadd.f32 0.0, %v7808
      %v7810 = vpop.f32.mrb[0].mxu0
      %v7811 = vpop.f32.mrb[0].mxu0
      %v7812 = vpop.f32.mrb[0].mxu0
      %7813 = vdwg.mxu0
      %7814 = vrot.lane.b32.xlu0 %v4291, 104
      %v7815 = vpop.permute.xlu0 %7814
      %v7817 = vsel %vm851, %v7140, 0
      %v7820 = vsel %vm1784, %v7815, 0
      %7822 = vmatprep.subr.bf16.mxu0 0
      %7823 = vmatpush1.bf16.msra.mxu0 %v7820
      %7824 = vmatprep.subr.bf16.mxu0 0
      %7825 = vmatpush1.bf16.msra.mxu0 0
      %7826 = vmatprep.subr.bf16.mxu0 0
      %7827 = vmatpush1.bf16.msra.mxu0 0
      %7828 = vmatprep.subr.bf16.mxu0 0
      %7829 = vmatpush1.bf16.msra.mxu0 0
      %7830 = vmatprep.subr.bf16.mxu0 0
      %7831 = vmatpush1.bf16.msra.mxu0 0
      %7832 = vmatprep.subr.bf16.mxu0 0
      %7833 = vmatpush1.bf16.msra.mxu0 0
      %7834 = vmatprep.subr.bf16.mxu0 0
      %7835 = vmatpush1.bf16.msra.mxu0 0
      %7836 = vmatprep.subr.bf16.mxu0 0
      %7837 = vmatpush1.bf16.msra.mxu0 0
      %7838 = vmatprep.subr.bf16.mxu0 0
      %7839 = vmatpush1.bf16.msra.mxu0 0
      %7840 = vmatprep.subr.bf16.mxu0 0
      %7841 = vmatpush1.bf16.msra.mxu0 0
      %7842 = vmatprep.subr.bf16.mxu0 0
      %7843 = vmatpush1.bf16.msra.mxu0 0
      %7844 = vmatprep.subr.bf16.mxu0 0
      %7845 = vmatpush1.bf16.msra.mxu0 0
      %7846 = vmatprep.subr.bf16.mxu0 0
      %7847 = vmatpush1.bf16.msra.mxu0 0
      %7848 = vmatprep.subr.bf16.mxu0 0
      %7849 = vmatpush1.bf16.msra.mxu0 0
      %7850 = vmatprep.subr.bf16.mxu0 0
      %7851 = vmatpush1.bf16.msra.mxu0 0
      %7852 = vmatprep.subr.bf16.mxu0 0
      %7853 = vmatpush1.bf16.msra.mxu0 0
      %7854 = vmatprep.mubr.bf16.mxu0 0
      %7855 = vmatmul.mubr.bf16.gmra.mrb[0].mxu0 %v7817
      %v7856 = vpop.f32.mrb[0].mxu0
      %v7857 = vadd.f32 0.0, %v7856
      %v7858 = vpop.f32.mrb[0].mxu0
      %v7859 = vpop.f32.mrb[0].mxu0
      %v7860 = vpop.f32.mrb[0].mxu0
      %7861 = vdwg.mxu0
      %7862 = vrot.lane.b32.xlu0 %v4341, 104
      %v7863 = vpop.permute.xlu0 %7862
      %v7865 = vsel %vm851, %v7141, 0
      %v7868 = vsel %vm1784, %v7863, 0
      %7870 = vmatprep.subr.bf16.mxu0 0
      %7871 = vmatpush1.bf16.msra.mxu0 %v7868
      %7872 = vmatprep.subr.bf16.mxu0 0
      %7873 = vmatpush1.bf16.msra.mxu0 0
      %7874 = vmatprep.subr.bf16.mxu0 0
      %7875 = vmatpush1.bf16.msra.mxu0 0
      %7876 = vmatprep.subr.bf16.mxu0 0
      %7877 = vmatpush1.bf16.msra.mxu0 0
      %7878 = vmatprep.subr.bf16.mxu0 0
      %7879 = vmatpush1.bf16.msra.mxu0 0
      %7880 = vmatprep.subr.bf16.mxu0 0
      %7881 = vmatpush1.bf16.msra.mxu0 0
      %7882 = vmatprep.subr.bf16.mxu0 0
      %7883 = vmatpush1.bf16.msra.mxu0 0
      %7884 = vmatprep.subr.bf16.mxu0 0
      %7885 = vmatpush1.bf16.msra.mxu0 0
      %7886 = vmatprep.subr.bf16.mxu0 0
      %7887 = vmatpush1.bf16.msra.mxu0 0
      %7888 = vmatprep.subr.bf16.mxu0 0
      %7889 = vmatpush1.bf16.msra.mxu0 0
      %7890 = vmatprep.subr.bf16.mxu0 0
      %7891 = vmatpush1.bf16.msra.mxu0 0
      %7892 = vmatprep.subr.bf16.mxu0 0
      %7893 = vmatpush1.bf16.msra.mxu0 0
      %7894 = vmatprep.subr.bf16.mxu0 0
      %7895 = vmatpush1.bf16.msra.mxu0 0
      %7896 = vmatprep.subr.bf16.mxu0 0
      %7897 = vmatpush1.bf16.msra.mxu0 0
      %7898 = vmatprep.subr.bf16.mxu0 0
      %7899 = vmatpush1.bf16.msra.mxu0 0
      %7900 = vmatprep.subr.bf16.mxu0 0
      %7901 = vmatpush1.bf16.msra.mxu0 0
      %7902 = vmatprep.mubr.bf16.mxu0 0
      %7903 = vmatmul.mubr.bf16.gmra.mrb[0].mxu0 %v7865
      %v7904 = vpop.f32.mrb[0].mxu0
      %v7905 = vadd.f32 0.0, %v7904
      %v7906 = vpop.f32.mrb[0].mxu0
      %v7907 = vpop.f32.mrb[0].mxu0
      %v7908 = vpop.f32.mrb[0].mxu0
      %7909 = vdwg.mxu0
      %7926 = vrot.lane.b32.xlu0 %v3635, 8
      %v7927 = vpop.permute.xlu0 %7926
      %7928 = vrot.lane.b32.xlu0 %v3685, 8
      %v7929 = vpop.permute.xlu0 %7928
      %7930 = vrot.lane.b32.xlu0 %v3735, 8
      %v7931 = vpop.permute.xlu0 %7930
      %7932 = vrot.lane.b32.xlu0 %v3785, 8
      %v7933 = vpop.permute.xlu0 %7932
      %7934 = vrot.lane.b32.xlu0 %v3835, 8
      %v7935 = vpop.permute.xlu0 %7934
      %7936 = vrot.lane.b32.xlu0 %v3885, 8
      %v7937 = vpop.permute.xlu0 %7936
      %7938 = vrot.lane.b32.xlu0 %v3935, 8
      %v7939 = vpop.permute.xlu0 %7938
      %7940 = vrot.lane.b32.xlu0 %v3985, 8
      %v7941 = vpop.permute.xlu0 %7940
      %7942 = vrot.lane.b32.xlu0 %v4035, 8
      %v7943 = vpop.permute.xlu0 %7942
      %7944 = vrot.lane.b32.xlu0 %v4085, 8
      %v7945 = vpop.permute.xlu0 %7944
      %7946 = vrot.lane.b32.xlu0 %v4135, 8
      %v7947 = vpop.permute.xlu0 %7946
      %7948 = vrot.lane.b32.xlu0 %v4185, 8
      %v7949 = vpop.permute.xlu0 %7948
      %7950 = vrot.lane.b32.xlu0 %v4235, 8
      %v7951 = vpop.permute.xlu0 %7950
      %7952 = vrot.lane.b32.xlu0 %v4285, 8
      %v7953 = vpop.permute.xlu0 %7952
      %7954 = vrot.lane.b32.xlu0 %v4335, 8
      %v7955 = vpop.permute.xlu0 %7954
      %7956 = vrot.lane.b32.xlu0 %v4385, 8
      %v7957 = vpop.permute.xlu0 %7956
      %7990 = vrot.lane.b32.xlu0 %v5425, 16
      %v7991 = vpop.permute.xlu0 %7990
      %7992 = vrot.lane.b32.xlu0 %v5473, 16
      %v7993 = vpop.permute.xlu0 %7992
      %7994 = vrot.lane.b32.xlu0 %v5521, 16
      %v7995 = vpop.permute.xlu0 %7994
      %7996 = vrot.lane.b32.xlu0 %v5569, 16
      %v7997 = vpop.permute.xlu0 %7996
      %7998 = vrot.lane.b32.xlu0 %v5617, 16
      %v7999 = vpop.permute.xlu0 %7998
      %8000 = vrot.lane.b32.xlu0 %v5665, 16
      %v8001 = vpop.permute.xlu0 %8000
      %8002 = vrot.lane.b32.xlu0 %v5713, 16
      %v8003 = vpop.permute.xlu0 %8002
      %8004 = vrot.lane.b32.xlu0 %v5761, 16
      %v8005 = vpop.permute.xlu0 %8004
      %8006 = vrot.lane.b32.xlu0 %v5809, 16
      %v8007 = vpop.permute.xlu0 %8006
      %8008 = vrot.lane.b32.xlu0 %v5857, 16
      %v8009 = vpop.permute.xlu0 %8008
      %8010 = vrot.lane.b32.xlu0 %v5905, 16
      %v8011 = vpop.permute.xlu0 %8010
      %8012 = vrot.lane.b32.xlu0 %v5953, 16
      %v8013 = vpop.permute.xlu0 %8012
      %8014 = vrot.lane.b32.xlu0 %v6001, 16
      %v8015 = vpop.permute.xlu0 %8014
      %8016 = vrot.lane.b32.xlu0 %v6049, 16
      %v8017 = vpop.permute.xlu0 %8016
      %8018 = vrot.lane.b32.xlu0 %v6097, 16
      %v8019 = vpop.permute.xlu0 %8018
      %8020 = vrot.lane.b32.xlu0 %v6145, 16
      %v8021 = vpop.permute.xlu0 %8020
      %8054 = vrot.lane.b32.xlu0 %v7185, 24
      %v8055 = vpop.permute.xlu0 %8054
      %8056 = vrot.lane.b32.xlu0 %v7233, 24
      %v8057 = vpop.permute.xlu0 %8056
      %8058 = vrot.lane.b32.xlu0 %v7281, 24
      %v8059 = vpop.permute.xlu0 %8058
      %8060 = vrot.lane.b32.xlu0 %v7329, 24
      %v8061 = vpop.permute.xlu0 %8060
      %8062 = vrot.lane.b32.xlu0 %v7377, 24
      %v8063 = vpop.permute.xlu0 %8062
      %8064 = vrot.lane.b32.xlu0 %v7425, 24
      %v8065 = vpop.permute.xlu0 %8064
      %8066 = vrot.lane.b32.xlu0 %v7473, 24
      %v8067 = vpop.permute.xlu0 %8066
      %8068 = vrot.lane.b32.xlu0 %v7521, 24
      %v8069 = vpop.permute.xlu0 %8068
      %8070 = vrot.lane.b32.xlu0 %v7569, 24
      %v8071 = vpop.permute.xlu0 %8070
      %8072 = vrot.lane.b32.xlu0 %v7617, 24
      %v8073 = vpop.permute.xlu0 %8072
      %8074 = vrot.lane.b32.xlu0 %v7665, 24
      %v8075 = vpop.permute.xlu0 %8074
      %8076 = vrot.lane.b32.xlu0 %v7713, 24
      %v8077 = vpop.permute.xlu0 %8076
      %8078 = vrot.lane.b32.xlu0 %v7761, 24
      %v8079 = vpop.permute.xlu0 %8078
      %8080 = vrot.lane.b32.xlu0 %v7809, 24
      %v8081 = vpop.permute.xlu0 %8080
      %8082 = vrot.lane.b32.xlu0 %v7857, 24
      %v8083 = vpop.permute.xlu0 %8082
      %8084 = vrot.lane.b32.xlu0 %v7905, 24
      %v8085 = vpop.permute.xlu0 %8084
      %v8102 = vsel %vm851, %v1823, %v7927
      %v8103 = vsel %vm851, %v1869, %v7929
      %v8104 = vsel %vm851, %v1915, %v7931
      %v8105 = vsel %vm851, %v1961, %v7933
      %v8106 = vsel %vm851, %v2007, %v7935
      %v8107 = vsel %vm851, %v2053, %v7937
      %v8108 = vsel %vm851, %v2099, %v7939
      %v8109 = vsel %vm851, %v2145, %v7941
      %v8110 = vsel %vm851, %v2191, %v7943
      %v8111 = vsel %vm851, %v2237, %v7945
      %v8112 = vsel %vm851, %v2283, %v7947
      %v8113 = vsel %vm851, %v2329, %v7949
      %v8114 = vsel %vm851, %v2375, %v7951
      %v8115 = vsel %vm851, %v2421, %v7953
      %v8116 = vsel %vm851, %v2467, %v7955
      %v8117 = vsel %vm851, %v2513, %v7957
      %vm8118 = vcmask 130048
      %v8119 = vsel %vm8118, %v8102, %v7991
      %v8120 = vsel %vm8118, %v8103, %v7993
      %v8121 = vsel %vm8118, %v8104, %v7995
      %v8122 = vsel %vm8118, %v8105, %v7997
      %v8123 = vsel %vm8118, %v8106, %v7999
      %v8124 = vsel %vm8118, %v8107, %v8001
      %v8125 = vsel %vm8118, %v8108, %v8003
      %v8126 = vsel %vm8118, %v8109, %v8005
      %v8127 = vsel %vm8118, %v8110, %v8007
      %v8128 = vsel %vm8118, %v8111, %v8009
      %v8129 = vsel %vm8118, %v8112, %v8011
      %v8130 = vsel %vm8118, %v8113, %v8013
      %v8131 = vsel %vm8118, %v8114, %v8015
      %v8132 = vsel %vm8118, %v8115, %v8017
      %v8133 = vsel %vm8118, %v8116, %v8019
      %v8134 = vsel %vm8118, %v8117, %v8021
      %vm8135 = vcmask 195584
      %v8136 = vsel %vm8135, %v8119, %v8055
      %v8137 = vsel %vm8135, %v8120, %v8057
      %v8138 = vsel %vm8135, %v8121, %v8059
      %v8139 = vsel %vm8135, %v8122, %v8061
      %v8140 = vsel %vm8135, %v8123, %v8063
      %v8141 = vsel %vm8135, %v8124, %v8065
      %v8142 = vsel %vm8135, %v8125, %v8067
      %v8143 = vsel %vm8135, %v8126, %v8069
      %v8144 = vsel %vm8135, %v8127, %v8071
      %v8145 = vsel %vm8135, %v8128, %v8073
      %v8146 = vsel %vm8135, %v8129, %v8075
      %v8147 = vsel %vm8135, %v8130, %v8077
      %v8148 = vsel %vm8135, %v8131, %v8079
      %v8149 = vsel %vm8135, %v8132, %v8081
      %v8150 = vsel %vm8135, %v8133, %v8083
      %v8151 = vsel %vm8135, %v8134, %v8085
      %v8152 = vpack.c.bf16 %v8136, %v8136
      %v8153 = vpack.c.bf16 %v8137, %v8137
      %v8154 = vpack.c.bf16 %v8138, %v8138
      %v8155 = vpack.c.bf16 %v8139, %v8139
      %v8156 = vpack.c.bf16 %v8140, %v8140
      %v8157 = vpack.c.bf16 %v8141, %v8141
      %v8158 = vpack.c.bf16 %v8142, %v8142
      %v8159 = vpack.c.bf16 %v8143, %v8143
      %v8160 = vpack.c.bf16 %v8144, %v8144
      %v8161 = vpack.c.bf16 %v8145, %v8145
      %v8162 = vpack.c.bf16 %v8146, %v8146
      %v8163 = vpack.c.bf16 %v8147, %v8147
      %v8164 = vpack.c.bf16 %v8148, %v8148
      %v8165 = vpack.c.bf16 %v8149, %v8149
      %v8166 = vpack.c.bf16 %v8150, %v8150
      %v8167 = vpack.c.bf16 %v8151, %v8151
      %v8168 = vcombine.low %v8152, %v8156
      %v8170 = vunpack.c.l.s4 1983009808
      %v8171 = vunpack.c.0.s8 %v8170
      %v8172 = vlaneseq
      %v8173 = vshrl.u32 %v8172, 7
      %v8174 = vsub.s32 %v8171, %v8173
      %v8175 = vrot.slane %v8168, %v8174
      %v8176 = vcombine.low %v8154, %v8158
      %v8178 = vunpack.c.l.s4 1983009808
      %v8179 = vunpack.c.0.s8 %v8178
      %v8180 = vlaneseq
      %v8181 = vshrl.u32 %v8180, 7
      %v8182 = vsub.s32 %v8179, %v8181
      %v8183 = vrot.slane %v8176, %v8182
      %v8184 = vcombine.low %v8160, %v8164
      %v8186 = vunpack.c.l.s4 1983009808
      %v8187 = vunpack.c.0.s8 %v8186
      %v8188 = vlaneseq
      %v8189 = vshrl.u32 %v8188, 7
      %v8190 = vsub.s32 %v8187, %v8189
      %v8191 = vrot.slane %v8184, %v8190
      %v8192 = vcombine.low %v8162, %v8166
      %v8194 = vunpack.c.l.s4 1983009808
      %v8195 = vunpack.c.0.s8 %v8194
      %v8196 = vlaneseq
      %v8197 = vshrl.u32 %v8196, 7
      %v8198 = vsub.s32 %v8195, %v8197
      %v8199 = vrot.slane %v8192, %v8198
      %v8200 = vcombine.low %v8175, %v8183
      %v8202 = vunpack.c.l.s4 1934713408
      %v8203 = vunpack.c.0.s8 %v8202
      %v8204 = vlaneseq
      %v8205 = vshrl.u32 %v8204, 7
      %v8206 = vsub.s32 %v8203, %v8205
      %v8207 = vrot.slane %v8200, %v8206
      %v8208 = vcombine.low %v8191, %v8199
      %v8210 = vunpack.c.l.s4 1934713408
      %v8211 = vunpack.c.0.s8 %v8210
      %v8212 = vlaneseq
      %v8213 = vshrl.u32 %v8212, 7
      %v8214 = vsub.s32 %v8211, %v8213
      %v8215 = vrot.slane %v8208, %v8214
      %v8216 = vcombine.low %v8207, %v8215
      %v8217 = vcombine.high %v8207, %v8215
      %v8218 = vcombine.low %v8153, %v8157
      %v8220 = vunpack.c.l.s4 1983009808
      %v8221 = vunpack.c.0.s8 %v8220
      %v8222 = vlaneseq
      %v8223 = vshrl.u32 %v8222, 7
      %v8224 = vsub.s32 %v8221, %v8223
      %v8225 = vrot.slane %v8218, %v8224
      %v8226 = vcombine.low %v8155, %v8159
      %v8228 = vunpack.c.l.s4 1983009808
      %v8229 = vunpack.c.0.s8 %v8228
      %v8230 = vlaneseq
      %v8231 = vshrl.u32 %v8230, 7
      %v8232 = vsub.s32 %v8229, %v8231
      %v8233 = vrot.slane %v8226, %v8232
      %v8234 = vcombine.low %v8161, %v8165
      %v8236 = vunpack.c.l.s4 1983009808
      %v8237 = vunpack.c.0.s8 %v8236
      %v8238 = vlaneseq
      %v8239 = vshrl.u32 %v8238, 7
      %v8240 = vsub.s32 %v8237, %v8239
      %v8241 = vrot.slane %v8234, %v8240
      %v8242 = vcombine.low %v8163, %v8167
      %v8244 = vunpack.c.l.s4 1983009808
      %v8245 = vunpack.c.0.s8 %v8244
      %v8246 = vlaneseq
      %v8247 = vshrl.u32 %v8246, 7
      %v8248 = vsub.s32 %v8245, %v8247
      %v8249 = vrot.slane %v8242, %v8248
      %v8250 = vcombine.low %v8225, %v8233
      %v8252 = vunpack.c.l.s4 1934713408
      %v8253 = vunpack.c.0.s8 %v8252
      %v8254 = vlaneseq
      %v8255 = vshrl.u32 %v8254, 7
      %v8256 = vsub.s32 %v8253, %v8255
      %v8257 = vrot.slane %v8250, %v8256
      %v8258 = vcombine.low %v8241, %v8249
      %v8260 = vunpack.c.l.s4 1934713408
      %v8261 = vunpack.c.0.s8 %v8260
      %v8262 = vlaneseq
      %v8263 = vshrl.u32 %v8262, 7
      %v8264 = vsub.s32 %v8261, %v8263
      %v8265 = vrot.slane %v8258, %v8264
      %v8266 = vcombine.low %v8257, %v8265
      %v8267 = vcombine.high %v8257, %v8265
      %v8270 = vpack.i.b16 %v8266, %v8216
      %v8271 = vshrl.u32 %v8216, 16
      %v8272 = vshrl.u32 %v8266, 16
      %v8273 = vpack.i.b16 %v8272, %v8271
      %v8276 = vpack.i.b16 %v8267, %v8217
      %v8277 = vshrl.u32 %v8217, 16
      %v8278 = vshrl.u32 %v8267, 16
      %v8279 = vpack.i.b16 %v8278, %v8277
      %v8280 = vunpack.c.l.b16 %v8270
      %v8281 = vunpack.c.h.b16 %v8270
      %v8282 = vunpack.c.l.b16 %v8273
      %v8283 = vunpack.c.h.b16 %v8273
      %v8284 = vunpack.c.l.b16 %v8276
      %v8285 = vunpack.c.h.b16 %v8276
      %v8286 = vunpack.c.l.b16 %v8279
      %v8287 = vunpack.c.h.b16 %v8279
      %v8288 = vpack.c.b16 %v8280, %v8280
      %v8289 = vpack.c.b16 %v8281, %v8281
      %v8290 = vpack.c.b16 %v8282, %v8282
      %v8291 = vpack.c.b16 %v8283, %v8283
      %v8292 = vpack.c.b16 %v8284, %v8284
      %v8293 = vpack.c.b16 %v8285, %v8285
      %v8294 = vpack.c.b16 %v8286, %v8286
      %v8295 = vpack.c.b16 %v8287, %v8287
      %vm8304 = vcmask 257024
      %8305 = vst.msk [vmem:[%s280] sm:$0xf] %vm8304, %v8288
      %8306 = vst.msk [vmem:[%s280 + $0x4] sm:$0xf] %vm8304, %v8289
      %8307 = vst.msk [vmem:[%s280 + $0x8] sm:$0xf] %vm8304, %v8290
      %8308 = vst.msk [vmem:[%s280 + $0xc] sm:$0xf] %vm8304, %v8291
      %8309 = vst.msk [vmem:[%s280 + $0x10] sm:$0xf] %vm8304, %v8292
      %8310 = vst.msk [vmem:[%s280 + $0x14] sm:$0xf] %vm8304, %v8293
      %8311 = vst.msk [vmem:[%s280 + $0x18] sm:$0xf] %vm8304, %v8294
      %8312 = vst.msk [vmem:[%s280 + $0x1c] sm:$0xf] %vm8304, %v8295
      %s8313 = smul.u32 2, %s19
      %p8314 = scmp.lt.s32.totalorder %s18, 1
      %s8315 = scalar_select %p8314, %s18, 1
      %p8316 = scmp.lt.s32.totalorder %s8313, 1
      %s8317 = scalar_select %p8316, %s8313, 1
      %s8318 = smul.addr %s8315, 8
      %s8319 = sadd.s32 %s8317, %s8318
      %s8320 = smul.addr %s8319, 4
      %s8321 = scalar_lea.vmem %s3, %s8320
      // Predicated region
      $region33: #{transform_attention.15} parent=31 // pred_check
        %p8322 = pneg %p130
      $region34: #{transform_attention.15} parent=31 // pred_check_branch
        %8324 = sbr.rel (%p8322) target = $region36
      $region35: #{transform_attention.15} parent=31 // pred_region
        %s8325 = smul.u32 2, %s19
      $region36: #{transform_attention.15} parent=31 // pred_fallthru
        _
    $region32: #{transform_attention.15} parent=5 // pred_fallthru
      _
    %p8326 = scmp.le.s32.totalorder 2, %s9
    // Predicated region
    $region37: #{transform_attention.15} parent=5 // pred_check
      %p8327 = pneg %p8326
    $region38: #{transform_attention.15} parent=5 // pred_check_branch
      %8329 = sbr.rel (%p8327) target = $region40
    $region39: #{transform_attention.15} parent=5 // pred_region
      %s8330 = ssub.s32 %s9, 2
      // Predicated region
      $region41: #{transform_attention.15} parent=39 // pred_check
        %p8331 = pneg %p136
      $region42: #{transform_attention.15} parent=39 // pred_check_branch
        %8333 = sbr.rel (%p8331) target = $region44
      $region43: #{transform_attention.15} parent=39 // pred_region
        %s8334 = smul.u32 2, %s21
        %p8335 = scmp.lt.s32.totalorder %s20, 1
        %s8336 = scalar_select %p8335, %s20, 1
        %p8337 = scmp.lt.s32.totalorder %s8334, 1
        %s8338 = scalar_select %p8337, %s8334, 1
        %s8339 = smul.addr %s8336, 8
        %s8340 = sadd.s32 %s8338, %s8339
        %s8341 = smul.addr %s8340, 4
        %s8342 = scalar_lea.vmem %s3, %s8341
      $region44: #{transform_attention.15} parent=39 // pred_fallthru
        _
    $region40: #{transform_attention.15} parent=5 // pred_fallthru
      _
  $region6: #{transform_attention.15} parent=0 // loop_footer
    %s13 = sadd.s32 1, %s9
  $region7: #{transform_attention.15} parent=0 // loop_footer_branch
    %8 = sbr.rel target = $region3
  $region8: #{transform_attention.15} parent=0 // loop_exit
    _

</llo_original>
